<compile_context>
chip_gen: v5e
topology: v5e:2x2
jax: 0.10.0
libtpu: 0.0.40
codegen_flags: <defaults>
</compile_context>

<pallas_src>
import functools

import jax
import jax.numpy as jnp
from jax.experimental import pallas as pl
from jax.experimental.pallas import tpu as pltpu


# ---------------------------------------------------------------------------
# Fused Pallas kernel: input projection + bidirectional GRU recurrence + fc/tanh
# ---------------------------------------------------------------------------
def _encoder_fused_kernel(emb_ref, wihT_ref, bih_ref, whh_ref,
                          bhn_f_ref, bhn_b_ref, wfcT_ref, bfc_ref,
                          out_ref, hid_ref, gx_ref):
    """Single-invocation fused encoder.

    PyTorch GRU gate order in the stacked weights is [r, z, n]:
        r  = sigmoid(x W_ir^T + b_ir + h W_hr^T + b_hr)
        z  = sigmoid(x W_iz^T + b_iz + h W_hz^T + b_hz)
        n  = tanh   (x W_in^T + b_in + r * (h W_hn^T + b_hn))
        h' = (1 - z) * n + z * h
    b_ih and the r/z part of b_hh are pre-folded into the input projection bias by the
    wrapper; only b_hn must stay inside the recurrence (it sits under the r * (...)).
    """
    T, B, H2 = out_ref.shape
    H = H2 // 2

    # ---- Phase 1: time-parallel input projection for BOTH directions (one bf16 MXU
    #      matmul, f32 accumulation), cached in VMEM for the whole recurrence.
    gx_ref[...] = (
        jnp.dot(emb_ref[...], wihT_ref[...], preferred_element_type=jnp.float32)
        + bih_ref[...]
    )

    whh_bd = whh_ref[...]              # (2H, 6H) bf16 block-diagonal [fwd | bwd]
    bhn_f = bhn_f_ref[...]             # (1, H) f32
    bhn_b = bhn_b_ref[...]

    def sigmoid(x):
        # Single EUP pass (tanh), instead of exp + divide.
        return 0.5 * jnp.tanh(0.5 * x) + 0.5

    def gru_gates(gx, gh, bhn, h):
        r = sigmoid(gx[:, :H] + gh[:, :H])
        z = sigmoid(gx[:, H:2 * H] + gh[:, H:2 * H])
        n = jnp.tanh(gx[:, 2 * H:] + r * (gh[:, 2 * H:] + bhn))
        return (1.0 - z) * n + z * h

    # ---- Phase 2: serial recurrence over time; one block-diag MXU matmul per step
    #      covers both directions.  Fully unrolled for LLO scheduling visibility.
    def body(t, h_cat):
        tb = T - 1 - t
        row_f = pl.multiple_of(t * B, B)
        row_b = pl.multiple_of(tb * B, B)
        gx_f = gx_ref[pl.ds(row_f, B), :3 * H]        # fwd gates at time t      (B, 3H)
        gx_b = gx_ref[pl.ds(row_b, B), 3 * H:]        # bwd gates at time T-1-t  (B, 3H)
        gh = jnp.dot(h_cat.astype(whh_bd.dtype), whh_bd,
                     preferred_element_type=jnp.float32)            # (B, 6H)
        h_f = gru_gates(gx_f, gh[:, :3 * H], bhn_f, h_cat[:, :H])
        h_b = gru_gates(gx_b, gh[:, 3 * H:], bhn_b, h_cat[:, H:])
        out_ref[t, :, :H] = h_f                       # fwd half of the 2H-wide output
        out_ref[tb, :, H:] = h_b                      # bwd half (original time order)
        return jnp.concatenate([h_f, h_b], axis=-1)   # lane-concat at 128 boundary: free

    h0 = jnp.zeros((B, 2 * H), dtype=jnp.float32)
    h_cat = jax.lax.fori_loop(0, T, body, h0, unroll=True)

    # ---- Phase 3 (epilogue): hidden = tanh([h_fwd_final || h_bwd_final] @ W_fc^T + b_fc)
    #      h_cat is already the contiguous (B, 2H) concat -> single dot, no relayout.
    hid_ref[...] = jnp.tanh(
        jnp.dot(h_cat.astype(wfcT_ref.dtype), wfcT_ref[...],
                preferred_element_type=jnp.float32)
        + bfc_ref[...]
    )


# ---------------------------------------------------------------------------
# Wrapper
# ---------------------------------------------------------------------------
@jax.jit
def attn_encoder_gru_forward(src, params):
    """Forward pass matching the PyTorch module (inference semantics).

    src: (T, B) int32 token ids.
    Returns:
        outputs: (T, B, 2*enc_hid_dim) float32
        hidden : (B, dec_hid_dim) float32
    """
    T, B = src.shape
    H = params["w_hh_f"].shape[1]
    E = params["w_ih_f"].shape[1]
    D = params["w_fc"].shape[0]

    # Embedding lookup (XLA gather glue); dropout is identity in eval mode.
    emb = jnp.take(params["embedding"], src, axis=0)                  # (T, B, E) f32
    emb2d = emb.reshape(T * B, E).astype(jnp.bfloat16)                # bf16 MXU operand

    # Pre-transpose weights (lane-dense MXU RHS, bf16, no in-kernel transposes) and
    # pre-fold b_ih + r/z-part of b_hh into the input-projection bias.
    def fold_bias(b_ih, b_hh):
        return b_ih + jnp.concatenate([b_hh[:2 * H], jnp.zeros((H,), b_hh.dtype)])

    wihT = jnp.concatenate([params["w_ih_f"].T, params["w_ih_b"].T],
                           axis=1).astype(jnp.bfloat16)               # (E, 6H)
    bih = jnp.concatenate([fold_bias(params["b_ih_f"], params["b_hh_f"]),
                           fold_bias(params["b_ih_b"], params["b_hh_b"])])[None]  # (1, 6H) f32

    zeros = jnp.zeros((H, 3 * H), jnp.float32)
    whh_bd = jnp.concatenate(
        [jnp.concatenate([params["w_hh_f"].T, zeros], axis=1),
         jnp.concatenate([zeros, params["w_hh_b"].T], axis=1)],
        axis=0).astype(jnp.bfloat16)                                  # (2H, 6H) block-diag

    bhn_f = params["b_hh_f"][2 * H:][None]                            # (1, H) f32
    bhn_b = params["b_hh_b"][2 * H:][None]
    wfcT = params["w_fc"].T.astype(jnp.bfloat16)                      # (2H, D)
    bfc = params["b_fc"][None]                                        # (1, D) f32

    vmem_spec = pl.BlockSpec(memory_space=pltpu.MemorySpace.VMEM)
    outputs, hidden = pl.pallas_call(
        _encoder_fused_kernel,
        out_shape=(
            jax.ShapeDtypeStruct((T, B, 2 * H), jnp.float32),
            jax.ShapeDtypeStruct((B, D), jnp.float32),
        ),
        in_specs=[vmem_spec] * 8,
        out_specs=(vmem_spec, vmem_spec),
        scratch_shapes=[pltpu.VMEM((T * B, 6 * H), jnp.float32)],
        compiler_params=pltpu.CompilerParams(vmem_limit_bytes=32 * 1024 * 1024),
    )(emb2d, wihT, bih, whh_bd, bhn_f, bhn_b, wfcT, bfc)
    return outputs, hidden


# ---------------------------------------------------------------------------
# Plain-JAX reference (PyTorch GRU semantics) for validation
# ---------------------------------------------------------------------------
def _reference_forward(src, params):
    T, B = src.shape
    H = params["w_hh_f"].shape[1]
    dot = functools.partial(jnp.dot, precision=jax.lax.Precision.HIGHEST)

    emb = jnp.take(params["embedding"], src, axis=0).astype(jnp.float32)

    def gru(seq, w_ih, w_hh, b_ih, b_hh):
        def step(h, x_t):
            gx = dot(x_t, w_ih.T) + b_ih
            gh = dot(h, w_hh.T) + b_hh
            r = jax.nn.sigmoid(gx[:, :H] + gh[:, :H])
            z = jax.nn.sigmoid(gx[:, H:2 * H] + gh[:, H:2 * H])
            n = jnp.tanh(gx[:, 2 * H:] + r * gh[:, 2 * H:])
            h_new = (1.0 - z) * n + z * h
            return h_new, h_new

        h0 = jnp.zeros((B, H), jnp.float32)
        h_last, outs = jax.lax.scan(step, h0, seq)
        return outs, h_last

    out_f, hf = gru(emb, params["w_ih_f"], params["w_hh_f"],
                    params["b_ih_f"], params["b_hh_f"])
    out_b_rev, hb = gru(emb[::-1], params["w_ih_b"], params["w_hh_b"],
                        params["b_ih_b"], params["b_hh_b"])
    outputs = jnp.concatenate([out_f, out_b_rev[::-1]], axis=-1)
    h_cat = jnp.concatenate([hf, hb], axis=-1)
    hidden = jnp.tanh(dot(h_cat, params["w_fc"].T) + params["b_fc"])
    return outputs, hidden


# ---------------------------------------------------------------------------
# Deterministic parameter init (shapes match nn.Embedding / nn.GRU / nn.Linear)
# ---------------------------------------------------------------------------
def init_params(key, input_dim, emb_dim, enc_hid_dim, dec_hid_dim):
    ks = jax.random.split(key, 11)
    H, E = enc_hid_dim, emb_dim

    def u(k, shape, bound):
        return jax.random.uniform(k, shape, jnp.float32, -bound, bound)

    gru_bound = float(1.0 / (H ** 0.5))
    fc_bound = float(1.0 / ((2.0 * H) ** 0.5))

    return {
        "embedding": jax.random.normal(ks[0], (input_dim, E), jnp.float32),
        # forward direction GRU weights (PyTorch layout: (3H, E) / (3H, H), gates [r, z, n])
        "w_ih_f": u(ks[1], (3 * H, E), gru_bound),
        "w_hh_f": u(ks[2], (3 * H, H), gru_bound),
        "b_ih_f": u(ks[3], (3 * H,), gru_bound),
        "b_hh_f": u(ks[4], (3 * H,), gru_bound),
        # backward direction
        "w_ih_b": u(ks[5], (3 * H, E), gru_bound),
        "w_hh_b": u(ks[6], (3 * H, H), gru_bound),
        "b_ih_b": u(ks[7], (3 * H,), gru_bound),
        "b_hh_b": u(ks[8], (3 * H,), gru_bound),
        # fc: Linear(2H -> dec_hid_dim)
        "w_fc": u(ks[9], (dec_hid_dim, 2 * H), fc_bound),
        "b_fc": u(ks[10], (dec_hid_dim,), fc_bound),
    }


if __name__ == "__main__":
    # Small, lane-aligned example: vocab=50, emb=128, enc_hid=128, dec_hid=128, T=16, B=8.
    input_dim, emb_dim, enc_hid_dim, dec_hid_dim = 50, 128, 128, 128
    T, B = 16, 8

    key = jax.random.PRNGKey(0)
    pkey, skey = jax.random.split(key)
    params = init_params(pkey, input_dim, emb_dim, enc_hid_dim, dec_hid_dim)
    src = jax.random.randint(skey, (T, B), 0, input_dim, dtype=jnp.int32)

    outputs, hidden = attn_encoder_gru_forward(src, params)
    jax.block_until_ready((outputs, hidden))

    assert outputs.shape == (T, B, 2 * enc_hid_dim), outputs.shape
    assert hidden.shape == (B, dec_hid_dim), hidden.shape

    ref_out, ref_hid = _reference_forward(src, params)
    max_out_err = float(jnp.max(jnp.abs(outputs - ref_out)))
    max_hid_err = float(jnp.max(jnp.abs(hidden - ref_hid)))
    assert jnp.allclose(outputs, ref_out, atol=5e-2, rtol=5e-2), max_out_err
    assert jnp.allclose(hidden, ref_hid, atol=5e-2, rtol=5e-2), max_hid_err

    print("KERNEL_OK")
</pallas_src>

<mosaic_0001>
module attributes {stable_mosaic.version = 11 : i64} {
  func.func @_encoder_fused_kernel(%arg0: memref<128x128xbf16, #tpu.memory_space<vmem>>, %arg1: memref<128x768xbf16, #tpu.memory_space<vmem>>, %arg2: memref<1x768xf32, #tpu.memory_space<vmem>>, %arg3: memref<256x768xbf16, #tpu.memory_space<vmem>>, %arg4: memref<1x128xf32, #tpu.memory_space<vmem>>, %arg5: memref<1x128xf32, #tpu.memory_space<vmem>>, %arg6: memref<256x128xbf16, #tpu.memory_space<vmem>>, %arg7: memref<1x128xf32, #tpu.memory_space<vmem>>, %arg8: memref<16x8x256xf32, #tpu.memory_space<vmem>>, %arg9: memref<8x128xf32, #tpu.memory_space<vmem>>, %arg10: memref<128x768xf32, #tpu.memory_space<vmem>>) attributes {dimension_semantics = [], scalar_prefetch = 0 : i64, scratch_operands = 1 : i64, tpu.core_type = #tpu.core_type<tc>} {
    %c0 = arith.constant 0 : index
    %c0_0 = arith.constant 0 : index
    %0 = vector.load %arg0[%c0, %c0_0] : memref<128x128xbf16, #tpu.memory_space<vmem>>, vector<128x128xbf16>
    %c0_1 = arith.constant 0 : index
    %c0_2 = arith.constant 0 : index
    %1 = vector.load %arg1[%c0_1, %c0_2] : memref<128x768xbf16, #tpu.memory_space<vmem>>, vector<128x768xbf16>
    %cst = arith.constant dense<0.000000e+00> : vector<128x768xf32>
    %2 = tpu.matmul %0, %1, %cst {dimension_numbers = #tpu.dot_dimension_numbers<[1], [0], [0], [1], [0, 0, 1, 1], [], []>} : vector<128x128xbf16>, vector<128x768xbf16>, vector<128x768xf32> -> vector<128x768xf32>
    %c0_3 = arith.constant 0 : index
    %c0_4 = arith.constant 0 : index
    %3 = vector.load %arg2[%c0_3, %c0_4] : memref<1x768xf32, #tpu.memory_space<vmem>>, vector<1x768xf32>
    %4 = vector.broadcast %3 : vector<1x768xf32> to vector<128x768xf32>
    %5 = arith.addf %2, %4 : vector<128x768xf32>
    %c0_5 = arith.constant 0 : index
    %c0_6 = arith.constant 0 : index
    %6 = vector.load %arg10[%c0_5, %c0_6] : memref<128x768xf32, #tpu.memory_space<vmem>>, vector<128x768xf32>
    tpu.vector_store %arg10[%c0_5, %c0_6], %5 {strides = array<i32>} : memref<128x768xf32, #tpu.memory_space<vmem>>, vector<128x768xf32>,
    %c0_7 = arith.constant 0 : index
    %c0_8 = arith.constant 0 : index
    %7 = vector.load %arg3[%c0_7, %c0_8] : memref<256x768xbf16, #tpu.memory_space<vmem>>, vector<256x768xbf16>
    %c0_9 = arith.constant 0 : index
    %c0_10 = arith.constant 0 : index
    %8 = vector.load %arg4[%c0_9, %c0_10] : memref<1x128xf32, #tpu.memory_space<vmem>>, vector<1x128xf32>
    %c0_11 = arith.constant 0 : index
    %c0_12 = arith.constant 0 : index
    %9 = vector.load %arg5[%c0_11, %c0_12] : memref<1x128xf32, #tpu.memory_space<vmem>>, vector<1x128xf32>
    %cst_13 = arith.constant 0.000000e+00 : f32
    %10 = vector.broadcast %cst_13 : f32 to vector<8x256xf32>
    %c0_i32 = arith.constant 0 : i32
    %c15_i32 = arith.constant 15 : i32
    %11 = arith.subi %c15_i32, %c0_i32 : i32
    %c8_i32 = arith.constant 8 : i32
    %12 = arith.muli %c0_i32, %c8_i32 : i32
    %13 = tpu.assume_multiple %12, 8 : i32
    %c8_i32_14 = arith.constant 8 : i32
    %14 = arith.muli %11, %c8_i32_14 : i32
    %15 = tpu.assume_multiple %14, 8 : i32
    %16 = arith.index_cast %13 : i32 to index
    %c0_15 = arith.constant 0 : index
    %17 = vector.load %arg10[%16, %c0_15] : memref<128x768xf32, #tpu.memory_space<vmem>>, vector<8x384xf32>
    %18 = arith.index_cast %15 : i32 to index
    %c384 = arith.constant 384 : index
    %19 = vector.load %arg10[%18, %c384] : memref<128x768xf32, #tpu.memory_space<vmem>>, vector<8x384xf32>
    %20 = arith.truncf %10 : vector<8x256xf32> to vector<8x256xbf16>
    %cst_16 = arith.constant dense<0.000000e+00> : vector<8x768xf32>
    %21 = tpu.matmul %20, %7, %cst_16 {dimension_numbers = #tpu.dot_dimension_numbers<[1], [0], [0], [1], [0, 0, 1, 1], [], []>} : vector<8x256xbf16>, vector<256x768xbf16>, vector<8x768xf32> -> vector<8x768xf32>
    %22 = vector.extract_strided_slice %21 {offsets = [0, 0], sizes = [8, 384], strides = [1, 1]} : vector<8x768xf32> to vector<8x384xf32>
    %23 = vector.extract_strided_slice %10 {offsets = [0, 0], sizes = [8, 128], strides = [1, 1]} : vector<8x256xf32> to vector<8x128xf32>
    %24 = vector.extract_strided_slice %17 {offsets = [0, 0], sizes = [8, 128], strides = [1, 1]} : vector<8x384xf32> to vector<8x128xf32>
    %25 = vector.extract_strided_slice %22 {offsets = [0, 0], sizes = [8, 128], strides = [1, 1]} : vector<8x384xf32> to vector<8x128xf32>
    %26 = arith.addf %24, %25 : vector<8x128xf32>
    %cst_17 = arith.constant 5.000000e-01 : f32
    %27 = vector.broadcast %cst_17 : f32 to vector<8x128xf32>
    %28 = arith.mulf %27, %26 : vector<8x128xf32>
    %29 = math.tanh %28 : vector<8x128xf32>
    %cst_18 = arith.constant 5.000000e-01 : f32
    %30 = vector.broadcast %cst_18 : f32 to vector<8x128xf32>
    %31 = arith.mulf %30, %29 : vector<8x128xf32>
    %cst_19 = arith.constant 5.000000e-01 : f32
    %32 = vector.broadcast %cst_19 : f32 to vector<8x128xf32>
    %33 = arith.addf %31, %32 : vector<8x128xf32>
    %34 = vector.extract_strided_slice %17 {offsets = [0, 128], sizes = [8, 128], strides = [1, 1]} : vector<8x384xf32> to vector<8x128xf32>
    %35 = vector.extract_strided_slice %22 {offsets = [0, 128], sizes = [8, 128], strides = [1, 1]} : vector<8x384xf32> to vector<8x128xf32>
    %36 = arith.addf %34, %35 : vector<8x128xf32>
    %cst_20 = arith.constant 5.000000e-01 : f32
    %37 = vector.broadcast %cst_20 : f32 to vector<8x128xf32>
    %38 = arith.mulf %37, %36 : vector<8x128xf32>
    %39 = math.tanh %38 : vector<8x128xf32>
    %cst_21 = arith.constant 5.000000e-01 : f32
    %40 = vector.broadcast %cst_21 : f32 to vector<8x128xf32>
    %41 = arith.mulf %40, %39 : vector<8x128xf32>
    %cst_22 = arith.constant 5.000000e-01 : f32
    %42 = vector.broadcast %cst_22 : f32 to vector<8x128xf32>
    %43 = arith.addf %41, %42 : vector<8x128xf32>
    %44 = vector.extract_strided_slice %17 {offsets = [0, 256], sizes = [8, 128], strides = [1, 1]} : vector<8x384xf32> to vector<8x128xf32>
    %45 = vector.extract_strided_slice %22 {offsets = [0, 256], sizes = [8, 128], strides = [1, 1]} : vector<8x384xf32> to vector<8x128xf32>
    %46 = vector.broadcast %8 : vector<1x128xf32> to vector<8x128xf32>
    %47 = arith.addf %45, %46 : vector<8x128xf32>
    %48 = arith.mulf %33, %47 : vector<8x128xf32>
    %49 = arith.addf %44, %48 : vector<8x128xf32>
    %50 = math.tanh %49 : vector<8x128xf32>
    %cst_23 = arith.constant 1.000000e+00 : f32
    %51 = vector.broadcast %cst_23 : f32 to vector<8x128xf32>
    %52 = arith.subf %51, %43 : vector<8x128xf32>
    %53 = arith.mulf %52, %50 : vector<8x128xf32>
    %54 = arith.mulf %43, %23 : vector<8x128xf32>
    %55 = arith.addf %53, %54 : vector<8x128xf32>
    %56 = vector.extract_strided_slice %21 {offsets = [0, 384], sizes = [8, 384], strides = [1, 1]} : vector<8x768xf32> to vector<8x384xf32>
    %57 = vector.extract_strided_slice %10 {offsets = [0, 128], sizes = [8, 128], strides = [1, 1]} : vector<8x256xf32> to vector<8x128xf32>
    %58 = vector.extract_strided_slice %19 {offsets = [0, 0], sizes = [8, 128], strides = [1, 1]} : vector<8x384xf32> to vector<8x128xf32>
    %59 = vector.extract_strided_slice %56 {offsets = [0, 0], sizes = [8, 128], strides = [1, 1]} : vector<8x384xf32> to vector<8x128xf32>
    %60 = arith.addf %58, %59 : vector<8x128xf32>
    %cst_24 = arith.constant 5.000000e-01 : f32
    %61 = vector.broadcast %cst_24 : f32 to vector<8x128xf32>
    %62 = arith.mulf %61, %60 : vector<8x128xf32>
    %63 = math.tanh %62 : vector<8x128xf32>
    %cst_25 = arith.constant 5.000000e-01 : f32
    %64 = vector.broadcast %cst_25 : f32 to vector<8x128xf32>
    %65 = arith.mulf %64, %63 : vector<8x128xf32>
    %cst_26 = arith.constant 5.000000e-01 : f32
    %66 = vector.broadcast %cst_26 : f32 to vector<8x128xf32>
    %67 = arith.addf %65, %66 : vector<8x128xf32>
    %68 = vector.extract_strided_slice %19 {offsets = [0, 128], sizes = [8, 128], strides = [1, 1]} : vector<8x384xf32> to vector<8x128xf32>
    %69 = vector.extract_strided_slice %56 {offsets = [0, 128], sizes = [8, 128], strides = [1, 1]} : vector<8x384xf32> to vector<8x128xf32>
    %70 = arith.addf %68, %69 : vector<8x128xf32>
    %cst_27 = arith.constant 5.000000e-01 : f32
    %71 = vector.broadcast %cst_27 : f32 to vector<8x128xf32>
    %72 = arith.mulf %71, %70 : vector<8x128xf32>
    %73 = math.tanh %72 : vector<8x128xf32>
    %cst_28 = arith.constant 5.000000e-01 : f32
    %74 = vector.broadcast %cst_28 : f32 to vector<8x128xf32>
    %75 = arith.mulf %74, %73 : vector<8x128xf32>
    %cst_29 = arith.constant 5.000000e-01 : f32
    %76 = vector.broadcast %cst_29 : f32 to vector<8x128xf32>
    %77 = arith.addf %75, %76 : vector<8x128xf32>
    %78 = vector.extract_strided_slice %19 {offsets = [0, 256], sizes = [8, 128], strides = [1, 1]} : vector<8x384xf32> to vector<8x128xf32>
    %79 = vector.extract_strided_slice %56 {offsets = [0, 256], sizes = [8, 128], strides = [1, 1]} : vector<8x384xf32> to vector<8x128xf32>
    %80 = vector.broadcast %9 : vector<1x128xf32> to vector<8x128xf32>
    %81 = arith.addf %79, %80 : vector<8x128xf32>
    %82 = arith.mulf %67, %81 : vector<8x128xf32>
    %83 = arith.addf %78, %82 : vector<8x128xf32>
    %84 = math.tanh %83 : vector<8x128xf32>
    %cst_30 = arith.constant 1.000000e+00 : f32
    %85 = vector.broadcast %cst_30 : f32 to vector<8x128xf32>
    %86 = arith.subf %85, %77 : vector<8x128xf32>
    %87 = arith.mulf %86, %84 : vector<8x128xf32>
    %88 = arith.mulf %77, %57 : vector<8x128xf32>
    %89 = arith.addf %87, %88 : vector<8x128xf32>
    %90 = arith.index_cast %c0_i32 : i32 to index
    %c0_31 = arith.constant 0 : index
    %c0_32 = arith.constant 0 : index
    %91 = vector.load %arg8[%90, %c0_31, %c0_32] : memref<16x8x256xf32, #tpu.memory_space<vmem>>, vector<1x8x128xf32>
    %92 = vector.shape_cast %91 : vector<1x8x128xf32> to vector<8x128xf32>
    %93 = vector.shape_cast %55 : vector<8x128xf32> to vector<1x8x128xf32>
    tpu.vector_store %arg8[%90, %c0_31, %c0_32], %93 {strides = array<i32>} : memref<16x8x256xf32, #tpu.memory_space<vmem>>, vector<1x8x128xf32>,
    %94 = arith.index_cast %11 : i32 to index
    %c0_33 = arith.constant 0 : index
    %c128 = arith.constant 128 : index
    %95 = vector.load %arg8[%94, %c0_33, %c128] : memref<16x8x256xf32, #tpu.memory_space<vmem>>, vector<1x8x128xf32>
    %96 = vector.shape_cast %95 : vector<1x8x128xf32> to vector<8x128xf32>
    %97 = vector.shape_cast %89 : vector<8x128xf32> to vector<1x8x128xf32>
    tpu.vector_store %arg8[%94, %c0_33, %c128], %97 {strides = array<i32>} : memref<16x8x256xf32, #tpu.memory_space<vmem>>, vector<1x8x128xf32>,
    %98 = tpu.concatenate %55, %89 in 1 : vector<8x128xf32>, vector<8x128xf32> -> vector<8x256xf32>
    %c1_i32 = arith.constant 1 : i32
    %c15_i32_34 = arith.constant 15 : i32
    %99 = arith.subi %c15_i32_34, %c1_i32 : i32
    %c8_i32_35 = arith.constant 8 : i32
    %100 = arith.muli %c1_i32, %c8_i32_35 : i32
    %101 = tpu.assume_multiple %100, 8 : i32
    %c8_i32_36 = arith.constant 8 : i32
    %102 = arith.muli %99, %c8_i32_36 : i32
    %103 = tpu.assume_multiple %102, 8 : i32
    %104 = arith.index_cast %101 : i32 to index
    %c0_37 = arith.constant 0 : index
    %105 = vector.load %arg10[%104, %c0_37] : memref<128x768xf32, #tpu.memory_space<vmem>>, vector<8x384xf32>
    %106 = arith.index_cast %103 : i32 to index
    %c384_38 = arith.constant 384 : index
    %107 = vector.load %arg10[%106, %c384_38] : memref<128x768xf32, #tpu.memory_space<vmem>>, vector<8x384xf32>
    %108 = arith.truncf %98 : vector<8x256xf32> to vector<8x256xbf16>
    %cst_39 = arith.constant dense<0.000000e+00> : vector<8x768xf32>
    %109 = tpu.matmul %108, %7, %cst_39 {dimension_numbers = #tpu.dot_dimension_numbers<[1], [0], [0], [1], [0, 0, 1, 1], [], []>} : vector<8x256xbf16>, vector<256x768xbf16>, vector<8x768xf32> -> vector<8x768xf32>
    %110 = vector.extract_strided_slice %109 {offsets = [0, 0], sizes = [8, 384], strides = [1, 1]} : vector<8x768xf32> to vector<8x384xf32>
    %111 = vector.extract_strided_slice %98 {offsets = [0, 0], sizes = [8, 128], strides = [1, 1]} : vector<8x256xf32> to vector<8x128xf32>
    %112 = vector.extract_strided_slice %105 {offsets = [0, 0], sizes = [8, 128], strides = [1, 1]} : vector<8x384xf32> to vector<8x128xf32>
    %113 = vector.extract_strided_slice %110 {offsets = [0, 0], sizes = [8, 128], strides = [1, 1]} : vector<8x384xf32> to vector<8x128xf32>
    %114 = arith.addf %112, %113 : vector<8x128xf32>
    %cst_40 = arith.constant 5.000000e-01 : f32
    %115 = vector.broadcast %cst_40 : f32 to vector<8x128xf32>
    %116 = arith.mulf %115, %114 : vector<8x128xf32>
    %117 = math.tanh %116 : vector<8x128xf32>
    %cst_41 = arith.constant 5.000000e-01 : f32
    %118 = vector.broadcast %cst_41 : f32 to vector<8x128xf32>
    %119 = arith.mulf %118, %117 : vector<8x128xf32>
    %cst_42 = arith.constant 5.000000e-01 : f32
    %120 = vector.broadcast %cst_42 : f32 to vector<8x128xf32>
    %121 = arith.addf %119, %120 : vector<8x128xf32>
    %122 = vector.extract_strided_slice %105 {offsets = [0, 128], sizes = [8, 128], strides = [1, 1]} : vector<8x384xf32> to vector<8x128xf32>
    %123 = vector.extract_strided_slice %110 {offsets = [0, 128], sizes = [8, 128], strides = [1, 1]} : vector<8x384xf32> to vector<8x128xf32>
    %124 = arith.addf %122, %123 : vector<8x128xf32>
    %cst_43 = arith.constant 5.000000e-01 : f32
    %125 = vector.broadcast %cst_43 : f32 to vector<8x128xf32>
    %126 = arith.mulf %125, %124 : vector<8x128xf32>
    %127 = math.tanh %126 : vector<8x128xf32>
    %cst_44 = arith.constant 5.000000e-01 : f32
    %128 = vector.broadcast %cst_44 : f32 to vector<8x128xf32>
    %129 = arith.mulf %128, %127 : vector<8x128xf32>
    %cst_45 = arith.constant 5.000000e-01 : f32
    %130 = vector.broadcast %cst_45 : f32 to vector<8x128xf32>
    %131 = arith.addf %129, %130 : vector<8x128xf32>
    %132 = vector.extract_strided_slice %105 {offsets = [0, 256], sizes = [8, 128], strides = [1, 1]} : vector<8x384xf32> to vector<8x128xf32>
    %133 = vector.extract_strided_slice %110 {offsets = [0, 256], sizes = [8, 128], strides = [1, 1]} : vector<8x384xf32> to vector<8x128xf32>
    %134 = vector.broadcast %8 : vector<1x128xf32> to vector<8x128xf32>
    %135 = arith.addf %133, %134 : vector<8x128xf32>
    %136 = arith.mulf %121, %135 : vector<8x128xf32>
    %137 = arith.addf %132, %136 : vector<8x128xf32>
    %138 = math.tanh %137 : vector<8x128xf32>
    %cst_46 = arith.constant 1.000000e+00 : f32
    %139 = vector.broadcast %cst_46 : f32 to vector<8x128xf32>
    %140 = arith.subf %139, %131 : vector<8x128xf32>
    %141 = arith.mulf %140, %138 : vector<8x128xf32>
    %142 = arith.mulf %131, %111 : vector<8x128xf32>
    %143 = arith.addf %141, %142 : vector<8x128xf32>
    %144 = vector.extract_strided_slice %109 {offsets = [0, 384], sizes = [8, 384], strides = [1, 1]} : vector<8x768xf32> to vector<8x384xf32>
    %145 = vector.extract_strided_slice %98 {offsets = [0, 128], sizes = [8, 128], strides = [1, 1]} : vector<8x256xf32> to vector<8x128xf32>
    %146 = vector.extract_strided_slice %107 {offsets = [0, 0], sizes = [8, 128], strides = [1, 1]} : vector<8x384xf32> to vector<8x128xf32>
    %147 = vector.extract_strided_slice %144 {offsets = [0, 0], sizes = [8, 128], strides = [1, 1]} : vector<8x384xf32> to vector<8x128xf32>
    %148 = arith.addf %146, %147 : vector<8x128xf32>
    %cst_47 = arith.constant 5.000000e-01 : f32
    %149 = vector.broadcast %cst_47 : f32 to vector<8x128xf32>
    %150 = arith.mulf %149, %148 : vector<8x128xf32>
    %151 = math.tanh %150 : vector<8x128xf32>
    %cst_48 = arith.constant 5.000000e-01 : f32
    %152 = vector.broadcast %cst_48 : f32 to vector<8x128xf32>
    %153 = arith.mulf %152, %151 : vector<8x128xf32>
    %cst_49 = arith.constant 5.000000e-01 : f32
    %154 = vector.broadcast %cst_49 : f32 to vector<8x128xf32>
    %155 = arith.addf %153, %154 : vector<8x128xf32>
    %156 = vector.extract_strided_slice %107 {offsets = [0, 128], sizes = [8, 128], strides = [1, 1]} : vector<8x384xf32> to vector<8x128xf32>
    %157 = vector.extract_strided_slice %144 {offsets = [0, 128], sizes = [8, 128], strides = [1, 1]} : vector<8x384xf32> to vector<8x128xf32>
    %158 = arith.addf %156, %157 : vector<8x128xf32>
    %cst_50 = arith.constant 5.000000e-01 : f32
    %159 = vector.broadcast %cst_50 : f32 to vector<8x128xf32>
    %160 = arith.mulf %159, %158 : vector<8x128xf32>
    %161 = math.tanh %160 : vector<8x128xf32>
    %cst_51 = arith.constant 5.000000e-01 : f32
    %162 = vector.broadcast %cst_51 : f32 to vector<8x128xf32>
    %163 = arith.mulf %162, %161 : vector<8x128xf32>
    %cst_52 = arith.constant 5.000000e-01 : f32
    %164 = vector.broadcast %cst_52 : f32 to vector<8x128xf32>
    %165 = arith.addf %163, %164 : vector<8x128xf32>
    %166 = vector.extract_strided_slice %107 {offsets = [0, 256], sizes = [8, 128], strides = [1, 1]} : vector<8x384xf32> to vector<8x128xf32>
    %167 = vector.extract_strided_slice %144 {offsets = [0, 256], sizes = [8, 128], strides = [1, 1]} : vector<8x384xf32> to vector<8x128xf32>
    %168 = vector.broadcast %9 : vector<1x128xf32> to vector<8x128xf32>
    %169 = arith.addf %167, %168 : vector<8x128xf32>
    %170 = arith.mulf %155, %169 : vector<8x128xf32>
    %171 = arith.addf %166, %170 : vector<8x128xf32>
    %172 = math.tanh %171 : vector<8x128xf32>
    %cst_53 = arith.constant 1.000000e+00 : f32
    %173 = vector.broadcast %cst_53 : f32 to vector<8x128xf32>
    %174 = arith.subf %173, %165 : vector<8x128xf32>
    %175 = arith.mulf %174, %172 : vector<8x128xf32>
    %176 = arith.mulf %165, %145 : vector<8x128xf32>
    %177 = arith.addf %175, %176 : vector<8x128xf32>
    %178 = arith.index_cast %c1_i32 : i32 to index
    %c0_54 = arith.constant 0 : index
    %c0_55 = arith.constant 0 : index
    %179 = vector.load %arg8[%178, %c0_54, %c0_55] : memref<16x8x256xf32, #tpu.memory_space<vmem>>, vector<1x8x128xf32>
    %180 = vector.shape_cast %179 : vector<1x8x128xf32> to vector<8x128xf32>
    %181 = vector.shape_cast %143 : vector<8x128xf32> to vector<1x8x128xf32>
    tpu.vector_store %arg8[%178, %c0_54, %c0_55], %181 {strides = array<i32>} : memref<16x8x256xf32, #tpu.memory_space<vmem>>, vector<1x8x128xf32>,
    %182 = arith.index_cast %99 : i32 to index
    %c0_56 = arith.constant 0 : index
    %c128_57 = arith.constant 128 : index
    %183 = vector.load %arg8[%182, %c0_56, %c128_57] : memref<16x8x256xf32, #tpu.memory_space<vmem>>, vector<1x8x128xf32>
    %184 = vector.shape_cast %183 : vector<1x8x128xf32> to vector<8x128xf32>
    %185 = vector.shape_cast %177 : vector<8x128xf32> to vector<1x8x128xf32>
    tpu.vector_store %arg8[%182, %c0_56, %c128_57], %185 {strides = array<i32>} : memref<16x8x256xf32, #tpu.memory_space<vmem>>, vector<1x8x128xf32>,
    %186 = tpu.concatenate %143, %177 in 1 : vector<8x128xf32>, vector<8x128xf32> -> vector<8x256xf32>
    %c2_i32 = arith.constant 2 : i32
    %c15_i32_58 = arith.constant 15 : i32
    %187 = arith.subi %c15_i32_58, %c2_i32 : i32
    %c8_i32_59 = arith.constant 8 : i32
    %188 = arith.muli %c2_i32, %c8_i32_59 : i32
    %189 = tpu.assume_multiple %188, 8 : i32
    %c8_i32_60 = arith.constant 8 : i32
    %190 = arith.muli %187, %c8_i32_60 : i32
    %191 = tpu.assume_multiple %190, 8 : i32
    %192 = arith.index_cast %189 : i32 to index
    %c0_61 = arith.constant 0 : index
    %193 = vector.load %arg10[%192, %c0_61] : memref<128x768xf32, #tpu.memory_space<vmem>>, vector<8x384xf32>
    %194 = arith.index_cast %191 : i32 to index
    %c384_62 = arith.constant 384 : index
    %195 = vector.load %arg10[%194, %c384_62] : memref<128x768xf32, #tpu.memory_space<vmem>>, vector<8x384xf32>
    %196 = arith.truncf %186 : vector<8x256xf32> to vector<8x256xbf16>
    %cst_63 = arith.constant dense<0.000000e+00> : vector<8x768xf32>
    %197 = tpu.matmul %196, %7, %cst_63 {dimension_numbers = #tpu.dot_dimension_numbers<[1], [0], [0], [1], [0, 0, 1, 1], [], []>} : vector<8x256xbf16>, vector<256x768xbf16>, vector<8x768xf32> -> vector<8x768xf32>
    %198 = vector.extract_strided_slice %197 {offsets = [0, 0], sizes = [8, 384], strides = [1, 1]} : vector<8x768xf32> to vector<8x384xf32>
    %199 = vector.extract_strided_slice %186 {offsets = [0, 0], sizes = [8, 128], strides = [1, 1]} : vector<8x256xf32> to vector<8x128xf32>
    %200 = vector.extract_strided_slice %193 {offsets = [0, 0], sizes = [8, 128], strides = [1, 1]} : vector<8x384xf32> to vector<8x128xf32>
    %201 = vector.extract_strided_slice %198 {offsets = [0, 0], sizes = [8, 128], strides = [1, 1]} : vector<8x384xf32> to vector<8x128xf32>
    %202 = arith.addf %200, %201 : vector<8x128xf32>
    %cst_64 = arith.constant 5.000000e-01 : f32
    %203 = vector.broadcast %cst_64 : f32 to vector<8x128xf32>
    %204 = arith.mulf %203, %202 : vector<8x128xf32>
    %205 = math.tanh %204 : vector<8x128xf32>
    %cst_65 = arith.constant 5.000000e-01 : f32
    %206 = vector.broadcast %cst_65 : f32 to vector<8x128xf32>
    %207 = arith.mulf %206, %205 : vector<8x128xf32>
    %cst_66 = arith.constant 5.000000e-01 : f32
    %208 = vector.broadcast %cst_66 : f32 to vector<8x128xf32>
    %209 = arith.addf %207, %208 : vector<8x128xf32>
    %210 = vector.extract_strided_slice %193 {offsets = [0, 128], sizes = [8, 128], strides = [1, 1]} : vector<8x384xf32> to vector<8x128xf32>
    %211 = vector.extract_strided_slice %198 {offsets = [0, 128], sizes = [8, 128], strides = [1, 1]} : vector<8x384xf32> to vector<8x128xf32>
    %212 = arith.addf %210, %211 : vector<8x128xf32>
    %cst_67 = arith.constant 5.000000e-01 : f32
    %213 = vector.broadcast %cst_67 : f32 to vector<8x128xf32>
    %214 = arith.mulf %213, %212 : vector<8x128xf32>
    %215 = math.tanh %214 : vector<8x128xf32>
    %cst_68 = arith.constant 5.000000e-01 : f32
    %216 = vector.broadcast %cst_68 : f32 to vector<8x128xf32>
    %217 = arith.mulf %216, %215 : vector<8x128xf32>
    %cst_69 = arith.constant 5.000000e-01 : f32
    %218 = vector.broadcast %cst_69 : f32 to vector<8x128xf32>
    %219 = arith.addf %217, %218 : vector<8x128xf32>
    %220 = vector.extract_strided_slice %193 {offsets = [0, 256], sizes = [8, 128], strides = [1, 1]} : vector<8x384xf32> to vector<8x128xf32>
    %221 = vector.extract_strided_slice %198 {offsets = [0, 256], sizes = [8, 128], strides = [1, 1]} : vector<8x384xf32> to vector<8x128xf32>
    %222 = vector.broadcast %8 : vector<1x128xf32> to vector<8x128xf32>
    %223 = arith.addf %221, %222 : vector<8x128xf32>
    %224 = arith.mulf %209, %223 : vector<8x128xf32>
    %225 = arith.addf %220, %224 : vector<8x128xf32>
    %226 = math.tanh %225 : vector<8x128xf32>
    %cst_70 = arith.constant 1.000000e+00 : f32
    %227 = vector.broadcast %cst_70 : f32 to vector<8x128xf32>
    %228 = arith.subf %227, %219 : vector<8x128xf32>
    %229 = arith.mulf %228, %226 : vector<8x128xf32>
    %230 = arith.mulf %219, %199 : vector<8x128xf32>
    %231 = arith.addf %229, %230 : vector<8x128xf32>
    %232 = vector.extract_strided_slice %197 {offsets = [0, 384], sizes = [8, 384], strides = [1, 1]} : vector<8x768xf32> to vector<8x384xf32>
    %233 = vector.extract_strided_slice %186 {offsets = [0, 128], sizes = [8, 128], strides = [1, 1]} : vector<8x256xf32> to vector<8x128xf32>
    %234 = vector.extract_strided_slice %195 {offsets = [0, 0], sizes = [8, 128], strides = [1, 1]} : vector<8x384xf32> to vector<8x128xf32>
    %235 = vector.extract_strided_slice %232 {offsets = [0, 0], sizes = [8, 128], strides = [1, 1]} : vector<8x384xf32> to vector<8x128xf32>
    %236 = arith.addf %234, %235 : vector<8x128xf32>
    %cst_71 = arith.constant 5.000000e-01 : f32
    %237 = vector.broadcast %cst_71 : f32 to vector<8x128xf32>
    %238 = arith.mulf %237, %236 : vector<8x128xf32>
    %239 = math.tanh %238 : vector<8x128xf32>
    %cst_72 = arith.constant 5.000000e-01 : f32
    %240 = vector.broadcast %cst_72 : f32 to vector<8x128xf32>
    %241 = arith.mulf %240, %239 : vector<8x128xf32>
    %cst_73 = arith.constant 5.000000e-01 : f32
    %242 = vector.broadcast %cst_73 : f32 to vector<8x128xf32>
    %243 = arith.addf %241, %242 : vector<8x128xf32>
    %244 = vector.extract_strided_slice %195 {offsets = [0, 128], sizes = [8, 128], strides = [1, 1]} : vector<8x384xf32> to vector<8x128xf32>
    %245 = vector.extract_strided_slice %232 {offsets = [0, 128], sizes = [8, 128], strides = [1, 1]} : vector<8x384xf32> to vector<8x128xf32>
    %246 = arith.addf %244, %245 : vector<8x128xf32>
    %cst_74 = arith.constant 5.000000e-01 : f32
    %247 = vector.broadcast %cst_74 : f32 to vector<8x128xf32>
    %248 = arith.mulf %247, %246 : vector<8x128xf32>
    %249 = math.tanh %248 : vector<8x128xf32>
    %cst_75 = arith.constant 5.000000e-01 : f32
    %250 = vector.broadcast %cst_75 : f32 to vector<8x128xf32>
    %251 = arith.mulf %250, %249 : vector<8x128xf32>
    %cst_76 = arith.constant 5.000000e-01 : f32
    %252 = vector.broadcast %cst_76 : f32 to vector<8x128xf32>
    %253 = arith.addf %251, %252 : vector<8x128xf32>
    %254 = vector.extract_strided_slice %195 {offsets = [0, 256], sizes = [8, 128], strides = [1, 1]} : vector<8x384xf32> to vector<8x128xf32>
    %255 = vector.extract_strided_slice %232 {offsets = [0, 256], sizes = [8, 128], strides = [1, 1]} : vector<8x384xf32> to vector<8x128xf32>
    %256 = vector.broadcast %9 : vector<1x128xf32> to vector<8x128xf32>
    %257 = arith.addf %255, %256 : vector<8x128xf32>
    %258 = arith.mulf %243, %257 : vector<8x128xf32>
    %259 = arith.addf %254, %258 : vector<8x128xf32>
    %260 = math.tanh %259 : vector<8x128xf32>
    %cst_77 = arith.constant 1.000000e+00 : f32
    %261 = vector.broadcast %cst_77 : f32 to vector<8x128xf32>
    %262 = arith.subf %261, %253 : vector<8x128xf32>
    %263 = arith.mulf %262, %260 : vector<8x128xf32>
    %264 = arith.mulf %253, %233 : vector<8x128xf32>
    %265 = arith.addf %263, %264 : vector<8x128xf32>
    %266 = arith.index_cast %c2_i32 : i32 to index
    %c0_78 = arith.constant 0 : index
    %c0_79 = arith.constant 0 : index
    %267 = vector.load %arg8[%266, %c0_78, %c0_79] : memref<16x8x256xf32, #tpu.memory_space<vmem>>, vector<1x8x128xf32>
    %268 = vector.shape_cast %267 : vector<1x8x128xf32> to vector<8x128xf32>
    %269 = vector.shape_cast %231 : vector<8x128xf32> to vector<1x8x128xf32>
    tpu.vector_store %arg8[%266, %c0_78, %c0_79], %269 {strides = array<i32>} : memref<16x8x256xf32, #tpu.memory_space<vmem>>, vector<1x8x128xf32>,
    %270 = arith.index_cast %187 : i32 to index
    %c0_80 = arith.constant 0 : index
    %c128_81 = arith.constant 128 : index
    %271 = vector.load %arg8[%270, %c0_80, %c128_81] : memref<16x8x256xf32, #tpu.memory_space<vmem>>, vector<1x8x128xf32>
    %272 = vector.shape_cast %271 : vector<1x8x128xf32> to vector<8x128xf32>
    %273 = vector.shape_cast %265 : vector<8x128xf32> to vector<1x8x128xf32>
    tpu.vector_store %arg8[%270, %c0_80, %c128_81], %273 {strides = array<i32>} : memref<16x8x256xf32, #tpu.memory_space<vmem>>, vector<1x8x128xf32>,
    %274 = tpu.concatenate %231, %265 in 1 : vector<8x128xf32>, vector<8x128xf32> -> vector<8x256xf32>
    %c3_i32 = arith.constant 3 : i32
    %c15_i32_82 = arith.constant 15 : i32
    %275 = arith.subi %c15_i32_82, %c3_i32 : i32
    %c8_i32_83 = arith.constant 8 : i32
    %276 = arith.muli %c3_i32, %c8_i32_83 : i32
    %277 = tpu.assume_multiple %276, 8 : i32
    %c8_i32_84 = arith.constant 8 : i32
    %278 = arith.muli %275, %c8_i32_84 : i32
    %279 = tpu.assume_multiple %278, 8 : i32
    %280 = arith.index_cast %277 : i32 to index
    %c0_85 = arith.constant 0 : index
    %281 = vector.load %arg10[%280, %c0_85] : memref<128x768xf32, #tpu.memory_space<vmem>>, vector<8x384xf32>
    %282 = arith.index_cast %279 : i32 to index
    %c384_86 = arith.constant 384 : index
    %283 = vector.load %arg10[%282, %c384_86] : memref<128x768xf32, #tpu.memory_space<vmem>>, vector<8x384xf32>
    %284 = arith.truncf %274 : vector<8x256xf32> to vector<8x256xbf16>
    %cst_87 = arith.constant dense<0.000000e+00> : vector<8x768xf32>
    %285 = tpu.matmul %284, %7, %cst_87 {dimension_numbers = #tpu.dot_dimension_numbers<[1], [0], [0], [1], [0, 0, 1, 1], [], []>} : vector<8x256xbf16>, vector<256x768xbf16>, vector<8x768xf32> -> vector<8x768xf32>
    %286 = vector.extract_strided_slice %285 {offsets = [0, 0], sizes = [8, 384], strides = [1, 1]} : vector<8x768xf32> to vector<8x384xf32>
    %287 = vector.extract_strided_slice %274 {offsets = [0, 0], sizes = [8, 128], strides = [1, 1]} : vector<8x256xf32> to vector<8x128xf32>
    %288 = vector.extract_strided_slice %281 {offsets = [0, 0], sizes = [8, 128], strides = [1, 1]} : vector<8x384xf32> to vector<8x128xf32>
    %289 = vector.extract_strided_slice %286 {offsets = [0, 0], sizes = [8, 128], strides = [1, 1]} : vector<8x384xf32> to vector<8x128xf32>
    %290 = arith.addf %288, %289 : vector<8x128xf32>
    %cst_88 = arith.constant 5.000000e-01 : f32
    %291 = vector.broadcast %cst_88 : f32 to vector<8x128xf32>
    %292 = arith.mulf %291, %290 : vector<8x128xf32>
    %293 = math.tanh %292 : vector<8x128xf32>
    %cst_89 = arith.constant 5.000000e-01 : f32
    %294 = vector.broadcast %cst_89 : f32 to vector<8x128xf32>
    %295 = arith.mulf %294, %293 : vector<8x128xf32>
    %cst_90 = arith.constant 5.000000e-01 : f32
    %296 = vector.broadcast %cst_90 : f32 to vector<8x128xf32>
    %297 = arith.addf %295, %296 : vector<8x128xf32>
    %298 = vector.extract_strided_slice %281 {offsets = [0, 128], sizes = [8, 128], strides = [1, 1]} : vector<8x384xf32> to vector<8x128xf32>
    %299 = vector.extract_strided_slice %286 {offsets = [0, 128], sizes = [8, 128], strides = [1, 1]} : vector<8x384xf32> to vector<8x128xf32>
    %300 = arith.addf %298, %299 : vector<8x128xf32>
    %cst_91 = arith.constant 5.000000e-01 : f32
    %301 = vector.broadcast %cst_91 : f32 to vector<8x128xf32>
    %302 = arith.mulf %301, %300 : vector<8x128xf32>
    %303 = math.tanh %302 : vector<8x128xf32>
    %cst_92 = arith.constant 5.000000e-01 : f32
    %304 = vector.broadcast %cst_92 : f32 to vector<8x128xf32>
    %305 = arith.mulf %304, %303 : vector<8x128xf32>
    %cst_93 = arith.constant 5.000000e-01 : f32
    %306 = vector.broadcast %cst_93 : f32 to vector<8x128xf32>
    %307 = arith.addf %305, %306 : vector<8x128xf32>
    %308 = vector.extract_strided_slice %281 {offsets = [0, 256], sizes = [8, 128], strides = [1, 1]} : vector<8x384xf32> to vector<8x128xf32>
    %309 = vector.extract_strided_slice %286 {offsets = [0, 256], sizes = [8, 128], strides = [1, 1]} : vector<8x384xf32> to vector<8x128xf32>
    %310 = vector.broadcast %8 : vector<1x128xf32> to vector<8x128xf32>
    %311 = arith.addf %309, %310 : vector<8x128xf32>
    %312 = arith.mulf %297, %311 : vector<8x128xf32>
    %313 = arith.addf %308, %312 : vector<8x128xf32>
    %314 = math.tanh %313 : vector<8x128xf32>
    %cst_94 = arith.constant 1.000000e+00 : f32
    %315 = vector.broadcast %cst_94 : f32 to vector<8x128xf32>
    %316 = arith.subf %315, %307 : vector<8x128xf32>
    %317 = arith.mulf %316, %314 : vector<8x128xf32>
    %318 = arith.mulf %307, %287 : vector<8x128xf32>
    %319 = arith.addf %317, %318 : vector<8x128xf32>
    %320 = vector.extract_strided_slice %285 {offsets = [0, 384], sizes = [8, 384], strides = [1, 1]} : vector<8x768xf32> to vector<8x384xf32>
    %321 = vector.extract_strided_slice %274 {offsets = [0, 128], sizes = [8, 128], strides = [1, 1]} : vector<8x256xf32> to vector<8x128xf32>
    %322 = vector.extract_strided_slice %283 {offsets = [0, 0], sizes = [8, 128], strides = [1, 1]} : vector<8x384xf32> to vector<8x128xf32>
    %323 = vector.extract_strided_slice %320 {offsets = [0, 0], sizes = [8, 128], strides = [1, 1]} : vector<8x384xf32> to vector<8x128xf32>
    %324 = arith.addf %322, %323 : vector<8x128xf32>
    %cst_95 = arith.constant 5.000000e-01 : f32
    %325 = vector.broadcast %cst_95 : f32 to vector<8x128xf32>
    %326 = arith.mulf %325, %324 : vector<8x128xf32>
    %327 = math.tanh %326 : vector<8x128xf32>
    %cst_96 = arith.constant 5.000000e-01 : f32
    %328 = vector.broadcast %cst_96 : f32 to vector<8x128xf32>
    %329 = arith.mulf %328, %327 : vector<8x128xf32>
    %cst_97 = arith.constant 5.000000e-01 : f32
    %330 = vector.broadcast %cst_97 : f32 to vector<8x128xf32>
    %331 = arith.addf %329, %330 : vector<8x128xf32>
    %332 = vector.extract_strided_slice %283 {offsets = [0, 128], sizes = [8, 128], strides = [1, 1]} : vector<8x384xf32> to vector<8x128xf32>
    %333 = vector.extract_strided_slice %320 {offsets = [0, 128], sizes = [8, 128], strides = [1, 1]} : vector<8x384xf32> to vector<8x128xf32>
    %334 = arith.addf %332, %333 : vector<8x128xf32>
    %cst_98 = arith.constant 5.000000e-01 : f32
    %335 = vector.broadcast %cst_98 : f32 to vector<8x128xf32>
    %336 = arith.mulf %335, %334 : vector<8x128xf32>
    %337 = math.tanh %336 : vector<8x128xf32>
    %cst_99 = arith.constant 5.000000e-01 : f32
    %338 = vector.broadcast %cst_99 : f32 to vector<8x128xf32>
    %339 = arith.mulf %338, %337 : vector<8x128xf32>
    %cst_100 = arith.constant 5.000000e-01 : f32
    %340 = vector.broadcast %cst_100 : f32 to vector<8x128xf32>
    %341 = arith.addf %339, %340 : vector<8x128xf32>
    %342 = vector.extract_strided_slice %283 {offsets = [0, 256], sizes = [8, 128], strides = [1, 1]} : vector<8x384xf32> to vector<8x128xf32>
    %343 = vector.extract_strided_slice %320 {offsets = [0, 256], sizes = [8, 128], strides = [1, 1]} : vector<8x384xf32> to vector<8x128xf32>
    %344 = vector.broadcast %9 : vector<1x128xf32> to vector<8x128xf32>
    %345 = arith.addf %343, %344 : vector<8x128xf32>
    %346 = arith.mulf %331, %345 : vector<8x128xf32>
    %347 = arith.addf %342, %346 : vector<8x128xf32>
    %348 = math.tanh %347 : vector<8x128xf32>
    %cst_101 = arith.constant 1.000000e+00 : f32
    %349 = vector.broadcast %cst_101 : f32 to vector<8x128xf32>
    %350 = arith.subf %349, %341 : vector<8x128xf32>
    %351 = arith.mulf %350, %348 : vector<8x128xf32>
    %352 = arith.mulf %341, %321 : vector<8x128xf32>
    %353 = arith.addf %351, %352 : vector<8x128xf32>
    %354 = arith.index_cast %c3_i32 : i32 to index
    %c0_102 = arith.constant 0 : index
    %c0_103 = arith.constant 0 : index
    %355 = vector.load %arg8[%354, %c0_102, %c0_103] : memref<16x8x256xf32, #tpu.memory_space<vmem>>, vector<1x8x128xf32>
    %356 = vector.shape_cast %355 : vector<1x8x128xf32> to vector<8x128xf32>
    %357 = vector.shape_cast %319 : vector<8x128xf32> to vector<1x8x128xf32>
    tpu.vector_store %arg8[%354, %c0_102, %c0_103], %357 {strides = array<i32>} : memref<16x8x256xf32, #tpu.memory_space<vmem>>, vector<1x8x128xf32>,
    %358 = arith.index_cast %275 : i32 to index
    %c0_104 = arith.constant 0 : index
    %c128_105 = arith.constant 128 : index
    %359 = vector.load %arg8[%358, %c0_104, %c128_105] : memref<16x8x256xf32, #tpu.memory_space<vmem>>, vector<1x8x128xf32>
    %360 = vector.shape_cast %359 : vector<1x8x128xf32> to vector<8x128xf32>
    %361 = vector.shape_cast %353 : vector<8x128xf32> to vector<1x8x128xf32>
    tpu.vector_store %arg8[%358, %c0_104, %c128_105], %361 {strides = array<i32>} : memref<16x8x256xf32, #tpu.memory_space<vmem>>, vector<1x8x128xf32>,
    %362 = tpu.concatenate %319, %353 in 1 : vector<8x128xf32>, vector<8x128xf32> -> vector<8x256xf32>
    %c4_i32 = arith.constant 4 : i32
    %c15_i32_106 = arith.constant 15 : i32
    %363 = arith.subi %c15_i32_106, %c4_i32 : i32
    %c8_i32_107 = arith.constant 8 : i32
    %364 = arith.muli %c4_i32, %c8_i32_107 : i32
    %365 = tpu.assume_multiple %364, 8 : i32
    %c8_i32_108 = arith.constant 8 : i32
    %366 = arith.muli %363, %c8_i32_108 : i32
    %367 = tpu.assume_multiple %366, 8 : i32
    %368 = arith.index_cast %365 : i32 to index
    %c0_109 = arith.constant 0 : index
    %369 = vector.load %arg10[%368, %c0_109] : memref<128x768xf32, #tpu.memory_space<vmem>>, vector<8x384xf32>
    %370 = arith.index_cast %367 : i32 to index
    %c384_110 = arith.constant 384 : index
    %371 = vector.load %arg10[%370, %c384_110] : memref<128x768xf32, #tpu.memory_space<vmem>>, vector<8x384xf32>
    %372 = arith.truncf %362 : vector<8x256xf32> to vector<8x256xbf16>
    %cst_111 = arith.constant dense<0.000000e+00> : vector<8x768xf32>
    %373 = tpu.matmul %372, %7, %cst_111 {dimension_numbers = #tpu.dot_dimension_numbers<[1], [0], [0], [1], [0, 0, 1, 1], [], []>} : vector<8x256xbf16>, vector<256x768xbf16>, vector<8x768xf32> -> vector<8x768xf32>
    %374 = vector.extract_strided_slice %373 {offsets = [0, 0], sizes = [8, 384], strides = [1, 1]} : vector<8x768xf32> to vector<8x384xf32>
    %375 = vector.extract_strided_slice %362 {offsets = [0, 0], sizes = [8, 128], strides = [1, 1]} : vector<8x256xf32> to vector<8x128xf32>
    %376 = vector.extract_strided_slice %369 {offsets = [0, 0], sizes = [8, 128], strides = [1, 1]} : vector<8x384xf32> to vector<8x128xf32>
    %377 = vector.extract_strided_slice %374 {offsets = [0, 0], sizes = [8, 128], strides = [1, 1]} : vector<8x384xf32> to vector<8x128xf32>
    %378 = arith.addf %376, %377 : vector<8x128xf32>
    %cst_112 = arith.constant 5.000000e-01 : f32
    %379 = vector.broadcast %cst_112 : f32 to vector<8x128xf32>
    %380 = arith.mulf %379, %378 : vector<8x128xf32>
    %381 = math.tanh %380 : vector<8x128xf32>
    %cst_113 = arith.constant 5.000000e-01 : f32
    %382 = vector.broadcast %cst_113 : f32 to vector<8x128xf32>
    %383 = arith.mulf %382, %381 : vector<8x128xf32>
    %cst_114 = arith.constant 5.000000e-01 : f32
    %384 = vector.broadcast %cst_114 : f32 to vector<8x128xf32>
    %385 = arith.addf %383, %384 : vector<8x128xf32>
    %386 = vector.extract_strided_slice %369 {offsets = [0, 128], sizes = [8, 128], strides = [1, 1]} : vector<8x384xf32> to vector<8x128xf32>
    %387 = vector.extract_strided_slice %374 {offsets = [0, 128], sizes = [8, 128], strides = [1, 1]} : vector<8x384xf32> to vector<8x128xf32>
    %388 = arith.addf %386, %387 : vector<8x128xf32>
    %cst_115 = arith.constant 5.000000e-01 : f32
    %389 = vector.broadcast %cst_115 : f32 to vector<8x128xf32>
    %390 = arith.mulf %389, %388 : vector<8x128xf32>
    %391 = math.tanh %390 : vector<8x128xf32>
    %cst_116 = arith.constant 5.000000e-01 : f32
    %392 = vector.broadcast %cst_116 : f32 to vector<8x128xf32>
    %393 = arith.mulf %392, %391 : vector<8x128xf32>
    %cst_117 = arith.constant 5.000000e-01 : f32
    %394 = vector.broadcast %cst_117 : f32 to vector<8x128xf32>
    %395 = arith.addf %393, %394 : vector<8x128xf32>
    %396 = vector.extract_strided_slice %369 {offsets = [0, 256], sizes = [8, 128], strides = [1, 1]} : vector<8x384xf32> to vector<8x128xf32>
    %397 = vector.extract_strided_slice %374 {offsets = [0, 256], sizes = [8, 128], strides = [1, 1]} : vector<8x384xf32> to vector<8x128xf32>
    %398 = vector.broadcast %8 : vector<1x128xf32> to vector<8x128xf32>
    %399 = arith.addf %397, %398 : vector<8x128xf32>
    %400 = arith.mulf %385, %399 : vector<8x128xf32>
    %401 = arith.addf %396, %400 : vector<8x128xf32>
    %402 = math.tanh %401 : vector<8x128xf32>
    %cst_118 = arith.constant 1.000000e+00 : f32
    %403 = vector.broadcast %cst_118 : f32 to vector<8x128xf32>
    %404 = arith.subf %403, %395 : vector<8x128xf32>
    %405 = arith.mulf %404, %402 : vector<8x128xf32>
    %406 = arith.mulf %395, %375 : vector<8x128xf32>
    %407 = arith.addf %405, %406 : vector<8x128xf32>
    %408 = vector.extract_strided_slice %373 {offsets = [0, 384], sizes = [8, 384], strides = [1, 1]} : vector<8x768xf32> to vector<8x384xf32>
    %409 = vector.extract_strided_slice %362 {offsets = [0, 128], sizes = [8, 128], strides = [1, 1]} : vector<8x256xf32> to vector<8x128xf32>
    %410 = vector.extract_strided_slice %371 {offsets = [0, 0], sizes = [8, 128], strides = [1, 1]} : vector<8x384xf32> to vector<8x128xf32>
    %411 = vector.extract_strided_slice %408 {offsets = [0, 0], sizes = [8, 128], strides = [1, 1]} : vector<8x384xf32> to vector<8x128xf32>
    %412 = arith.addf %410, %411 : vector<8x128xf32>
    %cst_119 = arith.constant 5.000000e-01 : f32
    %413 = vector.broadcast %cst_119 : f32 to vector<8x128xf32>
    %414 = arith.mulf %413, %412 : vector<8x128xf32>
    %415 = math.tanh %414 : vector<8x128xf32>
    %cst_120 = arith.constant 5.000000e-01 : f32
    %416 = vector.broadcast %cst_120 : f32 to vector<8x128xf32>
    %417 = arith.mulf %416, %415 : vector<8x128xf32>
    %cst_121 = arith.constant 5.000000e-01 : f32
    %418 = vector.broadcast %cst_121 : f32 to vector<8x128xf32>
    %419 = arith.addf %417, %418 : vector<8x128xf32>
    %420 = vector.extract_strided_slice %371 {offsets = [0, 128], sizes = [8, 128], strides = [1, 1]} : vector<8x384xf32> to vector<8x128xf32>
    %421 = vector.extract_strided_slice %408 {offsets = [0, 128], sizes = [8, 128], strides = [1, 1]} : vector<8x384xf32> to vector<8x128xf32>
    %422 = arith.addf %420, %421 : vector<8x128xf32>
    %cst_122 = arith.constant 5.000000e-01 : f32
    %423 = vector.broadcast %cst_122 : f32 to vector<8x128xf32>
    %424 = arith.mulf %423, %422 : vector<8x128xf32>
    %425 = math.tanh %424 : vector<8x128xf32>
    %cst_123 = arith.constant 5.000000e-01 : f32
    %426 = vector.broadcast %cst_123 : f32 to vector<8x128xf32>
    %427 = arith.mulf %426, %425 : vector<8x128xf32>
    %cst_124 = arith.constant 5.000000e-01 : f32
    %428 = vector.broadcast %cst_124 : f32 to vector<8x128xf32>
    %429 = arith.addf %427, %428 : vector<8x128xf32>
    %430 = vector.extract_strided_slice %371 {offsets = [0, 256], sizes = [8, 128], strides = [1, 1]} : vector<8x384xf32> to vector<8x128xf32>
    %431 = vector.extract_strided_slice %408 {offsets = [0, 256], sizes = [8, 128], strides = [1, 1]} : vector<8x384xf32> to vector<8x128xf32>
    %432 = vector.broadcast %9 : vector<1x128xf32> to vector<8x128xf32>
    %433 = arith.addf %431, %432 : vector<8x128xf32>
    %434 = arith.mulf %419, %433 : vector<8x128xf32>
    %435 = arith.addf %430, %434 : vector<8x128xf32>
    %436 = math.tanh %435 : vector<8x128xf32>
    %cst_125 = arith.constant 1.000000e+00 : f32
    %437 = vector.broadcast %cst_125 : f32 to vector<8x128xf32>
    %438 = arith.subf %437, %429 : vector<8x128xf32>
    %439 = arith.mulf %438, %436 : vector<8x128xf32>
    %440 = arith.mulf %429, %409 : vector<8x128xf32>
    %441 = arith.addf %439, %440 : vector<8x128xf32>
    %442 = arith.index_cast %c4_i32 : i32 to index
    %c0_126 = arith.constant 0 : index
    %c0_127 = arith.constant 0 : index
    %443 = vector.load %arg8[%442, %c0_126, %c0_127] : memref<16x8x256xf32, #tpu.memory_space<vmem>>, vector<1x8x128xf32>
    %444 = vector.shape_cast %443 : vector<1x8x128xf32> to vector<8x128xf32>
    %445 = vector.shape_cast %407 : vector<8x128xf32> to vector<1x8x128xf32>
    tpu.vector_store %arg8[%442, %c0_126, %c0_127], %445 {strides = array<i32>} : memref<16x8x256xf32, #tpu.memory_space<vmem>>, vector<1x8x128xf32>,
    %446 = arith.index_cast %363 : i32 to index
    %c0_128 = arith.constant 0 : index
    %c128_129 = arith.constant 128 : index
    %447 = vector.load %arg8[%446, %c0_128, %c128_129] : memref<16x8x256xf32, #tpu.memory_space<vmem>>, vector<1x8x128xf32>
    %448 = vector.shape_cast %447 : vector<1x8x128xf32> to vector<8x128xf32>
    %449 = vector.shape_cast %441 : vector<8x128xf32> to vector<1x8x128xf32>
    tpu.vector_store %arg8[%446, %c0_128, %c128_129], %449 {strides = array<i32>} : memref<16x8x256xf32, #tpu.memory_space<vmem>>, vector<1x8x128xf32>,
    %450 = tpu.concatenate %407, %441 in 1 : vector<8x128xf32>, vector<8x128xf32> -> vector<8x256xf32>
    %c5_i32 = arith.constant 5 : i32
    %c15_i32_130 = arith.constant 15 : i32
    %451 = arith.subi %c15_i32_130, %c5_i32 : i32
    %c8_i32_131 = arith.constant 8 : i32
    %452 = arith.muli %c5_i32, %c8_i32_131 : i32
    %453 = tpu.assume_multiple %452, 8 : i32
    %c8_i32_132 = arith.constant 8 : i32
    %454 = arith.muli %451, %c8_i32_132 : i32
    %455 = tpu.assume_multiple %454, 8 : i32
    %456 = arith.index_cast %453 : i32 to index
    %c0_133 = arith.constant 0 : index
    %457 = vector.load %arg10[%456, %c0_133] : memref<128x768xf32, #tpu.memory_space<vmem>>, vector<8x384xf32>
    %458 = arith.index_cast %455 : i32 to index
    %c384_134 = arith.constant 384 : index
    %459 = vector.load %arg10[%458, %c384_134] : memref<128x768xf32, #tpu.memory_space<vmem>>, vector<8x384xf32>
    %460 = arith.truncf %450 : vector<8x256xf32> to vector<8x256xbf16>
    %cst_135 = arith.constant dense<0.000000e+00> : vector<8x768xf32>
    %461 = tpu.matmul %460, %7, %cst_135 {dimension_numbers = #tpu.dot_dimension_numbers<[1], [0], [0], [1], [0, 0, 1, 1], [], []>} : vector<8x256xbf16>, vector<256x768xbf16>, vector<8x768xf32> -> vector<8x768xf32>
    %462 = vector.extract_strided_slice %461 {offsets = [0, 0], sizes = [8, 384], strides = [1, 1]} : vector<8x768xf32> to vector<8x384xf32>
    %463 = vector.extract_strided_slice %450 {offsets = [0, 0], sizes = [8, 128], strides = [1, 1]} : vector<8x256xf32> to vector<8x128xf32>
    %464 = vector.extract_strided_slice %457 {offsets = [0, 0], sizes = [8, 128], strides = [1, 1]} : vector<8x384xf32> to vector<8x128xf32>
    %465 = vector.extract_strided_slice %462 {offsets = [0, 0], sizes = [8, 128], strides = [1, 1]} : vector<8x384xf32> to vector<8x128xf32>
    %466 = arith.addf %464, %465 : vector<8x128xf32>
    %cst_136 = arith.constant 5.000000e-01 : f32
    %467 = vector.broadcast %cst_136 : f32 to vector<8x128xf32>
    %468 = arith.mulf %467, %466 : vector<8x128xf32>
    %469 = math.tanh %468 : vector<8x128xf32>
    %cst_137 = arith.constant 5.000000e-01 : f32
    %470 = vector.broadcast %cst_137 : f32 to vector<8x128xf32>
    %471 = arith.mulf %470, %469 : vector<8x128xf32>
    %cst_138 = arith.constant 5.000000e-01 : f32
    %472 = vector.broadcast %cst_138 : f32 to vector<8x128xf32>
    %473 = arith.addf %471, %472 : vector<8x128xf32>
    %474 = vector.extract_strided_slice %457 {offsets = [0, 128], sizes = [8, 128], strides = [1, 1]} : vector<8x384xf32> to vector<8x128xf32>
    %475 = vector.extract_strided_slice %462 {offsets = [0, 128], sizes = [8, 128], strides = [1, 1]} : vector<8x384xf32> to vector<8x128xf32>
    %476 = arith.addf %474, %475 : vector<8x128xf32>
    %cst_139 = arith.constant 5.000000e-01 : f32
    %477 = vector.broadcast %cst_139 : f32 to vector<8x128xf32>
    %478 = arith.mulf %477, %476 : vector<8x128xf32>
    %479 = math.tanh %478 : vector<8x128xf32>
    %cst_140 = arith.constant 5.000000e-01 : f32
    %480 = vector.broadcast %cst_140 : f32 to vector<8x128xf32>
    %481 = arith.mulf %480, %479 : vector<8x128xf32>
    %cst_141 = arith.constant 5.000000e-01 : f32
    %482 = vector.broadcast %cst_141 : f32 to vector<8x128xf32>
    %483 = arith.addf %481, %482 : vector<8x128xf32>
    %484 = vector.extract_strided_slice %457 {offsets = [0, 256], sizes = [8, 128], strides = [1, 1]} : vector<8x384xf32> to vector<8x128xf32>
    %485 = vector.extract_strided_slice %462 {offsets = [0, 256], sizes = [8, 128], strides = [1, 1]} : vector<8x384xf32> to vector<8x128xf32>
    %486 = vector.broadcast %8 : vector<1x128xf32> to vector<8x128xf32>
    %487 = arith.addf %485, %486 : vector<8x128xf32>
    %488 = arith.mulf %473, %487 : vector<8x128xf32>
    %489 = arith.addf %484, %488 : vector<8x128xf32>
    %490 = math.tanh %489 : vector<8x128xf32>
    %cst_142 = arith.constant 1.000000e+00 : f32
    %491 = vector.broadcast %cst_142 : f32 to vector<8x128xf32>
    %492 = arith.subf %491, %483 : vector<8x128xf32>
    %493 = arith.mulf %492, %490 : vector<8x128xf32>
    %494 = arith.mulf %483, %463 : vector<8x128xf32>
    %495 = arith.addf %493, %494 : vector<8x128xf32>
    %496 = vector.extract_strided_slice %461 {offsets = [0, 384], sizes = [8, 384], strides = [1, 1]} : vector<8x768xf32> to vector<8x384xf32>
    %497 = vector.extract_strided_slice %450 {offsets = [0, 128], sizes = [8, 128], strides = [1, 1]} : vector<8x256xf32> to vector<8x128xf32>
    %498 = vector.extract_strided_slice %459 {offsets = [0, 0], sizes = [8, 128], strides = [1, 1]} : vector<8x384xf32> to vector<8x128xf32>
    %499 = vector.extract_strided_slice %496 {offsets = [0, 0], sizes = [8, 128], strides = [1, 1]} : vector<8x384xf32> to vector<8x128xf32>
    %500 = arith.addf %498, %499 : vector<8x128xf32>
    %cst_143 = arith.constant 5.000000e-01 : f32
    %501 = vector.broadcast %cst_143 : f32 to vector<8x128xf32>
    %502 = arith.mulf %501, %500 : vector<8x128xf32>
    %503 = math.tanh %502 : vector<8x128xf32>
    %cst_144 = arith.constant 5.000000e-01 : f32
    %504 = vector.broadcast %cst_144 : f32 to vector<8x128xf32>
    %505 = arith.mulf %504, %503 : vector<8x128xf32>
    %cst_145 = arith.constant 5.000000e-01 : f32
    %506 = vector.broadcast %cst_145 : f32 to vector<8x128xf32>
    %507 = arith.addf %505, %506 : vector<8x128xf32>
    %508 = vector.extract_strided_slice %459 {offsets = [0, 128], sizes = [8, 128], strides = [1, 1]} : vector<8x384xf32> to vector<8x128xf32>
    %509 = vector.extract_strided_slice %496 {offsets = [0, 128], sizes = [8, 128], strides = [1, 1]} : vector<8x384xf32> to vector<8x128xf32>
    %510 = arith.addf %508, %509 : vector<8x128xf32>
    %cst_146 = arith.constant 5.000000e-01 : f32
    %511 = vector.broadcast %cst_146 : f32 to vector<8x128xf32>
    %512 = arith.mulf %511, %510 : vector<8x128xf32>
    %513 = math.tanh %512 : vector<8x128xf32>
    %cst_147 = arith.constant 5.000000e-01 : f32
    %514 = vector.broadcast %cst_147 : f32 to vector<8x128xf32>
    %515 = arith.mulf %514, %513 : vector<8x128xf32>
    %cst_148 = arith.constant 5.000000e-01 : f32
    %516 = vector.broadcast %cst_148 : f32 to vector<8x128xf32>
    %517 = arith.addf %515, %516 : vector<8x128xf32>
    %518 = vector.extract_strided_slice %459 {offsets = [0, 256], sizes = [8, 128], strides = [1, 1]} : vector<8x384xf32> to vector<8x128xf32>
    %519 = vector.extract_strided_slice %496 {offsets = [0, 256], sizes = [8, 128], strides = [1, 1]} : vector<8x384xf32> to vector<8x128xf32>
    %520 = vector.broadcast %9 : vector<1x128xf32> to vector<8x128xf32>
    %521 = arith.addf %519, %520 : vector<8x128xf32>
    %522 = arith.mulf %507, %521 : vector<8x128xf32>
    %523 = arith.addf %518, %522 : vector<8x128xf32>
    %524 = math.tanh %523 : vector<8x128xf32>
    %cst_149 = arith.constant 1.000000e+00 : f32
    %525 = vector.broadcast %cst_149 : f32 to vector<8x128xf32>
    %526 = arith.subf %525, %517 : vector<8x128xf32>
    %527 = arith.mulf %526, %524 : vector<8x128xf32>
    %528 = arith.mulf %517, %497 : vector<8x128xf32>
    %529 = arith.addf %527, %528 : vector<8x128xf32>
    %530 = arith.index_cast %c5_i32 : i32 to index
    %c0_150 = arith.constant 0 : index
    %c0_151 = arith.constant 0 : index
    %531 = vector.load %arg8[%530, %c0_150, %c0_151] : memref<16x8x256xf32, #tpu.memory_space<vmem>>, vector<1x8x128xf32>
    %532 = vector.shape_cast %531 : vector<1x8x128xf32> to vector<8x128xf32>
    %533 = vector.shape_cast %495 : vector<8x128xf32> to vector<1x8x128xf32>
    tpu.vector_store %arg8[%530, %c0_150, %c0_151], %533 {strides = array<i32>} : memref<16x8x256xf32, #tpu.memory_space<vmem>>, vector<1x8x128xf32>,
    %534 = arith.index_cast %451 : i32 to index
    %c0_152 = arith.constant 0 : index
    %c128_153 = arith.constant 128 : index
    %535 = vector.load %arg8[%534, %c0_152, %c128_153] : memref<16x8x256xf32, #tpu.memory_space<vmem>>, vector<1x8x128xf32>
    %536 = vector.shape_cast %535 : vector<1x8x128xf32> to vector<8x128xf32>
    %537 = vector.shape_cast %529 : vector<8x128xf32> to vector<1x8x128xf32>
    tpu.vector_store %arg8[%534, %c0_152, %c128_153], %537 {strides = array<i32>} : memref<16x8x256xf32, #tpu.memory_space<vmem>>, vector<1x8x128xf32>,
    %538 = tpu.concatenate %495, %529 in 1 : vector<8x128xf32>, vector<8x128xf32> -> vector<8x256xf32>
    %c6_i32 = arith.constant 6 : i32
    %c15_i32_154 = arith.constant 15 : i32
    %539 = arith.subi %c15_i32_154, %c6_i32 : i32
    %c8_i32_155 = arith.constant 8 : i32
    %540 = arith.muli %c6_i32, %c8_i32_155 : i32
    %541 = tpu.assume_multiple %540, 8 : i32
    %c8_i32_156 = arith.constant 8 : i32
    %542 = arith.muli %539, %c8_i32_156 : i32
    %543 = tpu.assume_multiple %542, 8 : i32
    %544 = arith.index_cast %541 : i32 to index
    %c0_157 = arith.constant 0 : index
    %545 = vector.load %arg10[%544, %c0_157] : memref<128x768xf32, #tpu.memory_space<vmem>>, vector<8x384xf32>
    %546 = arith.index_cast %543 : i32 to index
    %c384_158 = arith.constant 384 : index
    %547 = vector.load %arg10[%546, %c384_158] : memref<128x768xf32, #tpu.memory_space<vmem>>, vector<8x384xf32>
    %548 = arith.truncf %538 : vector<8x256xf32> to vector<8x256xbf16>
    %cst_159 = arith.constant dense<0.000000e+00> : vector<8x768xf32>
    %549 = tpu.matmul %548, %7, %cst_159 {dimension_numbers = #tpu.dot_dimension_numbers<[1], [0], [0], [1], [0, 0, 1, 1], [], []>} : vector<8x256xbf16>, vector<256x768xbf16>, vector<8x768xf32> -> vector<8x768xf32>
    %550 = vector.extract_strided_slice %549 {offsets = [0, 0], sizes = [8, 384], strides = [1, 1]} : vector<8x768xf32> to vector<8x384xf32>
    %551 = vector.extract_strided_slice %538 {offsets = [0, 0], sizes = [8, 128], strides = [1, 1]} : vector<8x256xf32> to vector<8x128xf32>
    %552 = vector.extract_strided_slice %545 {offsets = [0, 0], sizes = [8, 128], strides = [1, 1]} : vector<8x384xf32> to vector<8x128xf32>
    %553 = vector.extract_strided_slice %550 {offsets = [0, 0], sizes = [8, 128], strides = [1, 1]} : vector<8x384xf32> to vector<8x128xf32>
    %554 = arith.addf %552, %553 : vector<8x128xf32>
    %cst_160 = arith.constant 5.000000e-01 : f32
    %555 = vector.broadcast %cst_160 : f32 to vector<8x128xf32>
    %556 = arith.mulf %555, %554 : vector<8x128xf32>
    %557 = math.tanh %556 : vector<8x128xf32>
    %cst_161 = arith.constant 5.000000e-01 : f32
    %558 = vector.broadcast %cst_161 : f32 to vector<8x128xf32>
    %559 = arith.mulf %558, %557 : vector<8x128xf32>
    %cst_162 = arith.constant 5.000000e-01 : f32
    %560 = vector.broadcast %cst_162 : f32 to vector<8x128xf32>
    %561 = arith.addf %559, %560 : vector<8x128xf32>
    %562 = vector.extract_strided_slice %545 {offsets = [0, 128], sizes = [8, 128], strides = [1, 1]} : vector<8x384xf32> to vector<8x128xf32>
    %563 = vector.extract_strided_slice %550 {offsets = [0, 128], sizes = [8, 128], strides = [1, 1]} : vector<8x384xf32> to vector<8x128xf32>
    %564 = arith.addf %562, %563 : vector<8x128xf32>
    %cst_163 = arith.constant 5.000000e-01 : f32
    %565 = vector.broadcast %cst_163 : f32 to vector<8x128xf32>
    %566 = arith.mulf %565, %564 : vector<8x128xf32>
    %567 = math.tanh %566 : vector<8x128xf32>
    %cst_164 = arith.constant 5.000000e-01 : f32
    %568 = vector.broadcast %cst_164 : f32 to vector<8x128xf32>
    %569 = arith.mulf %568, %567 : vector<8x128xf32>
    %cst_165 = arith.constant 5.000000e-01 : f32
    %570 = vector.broadcast %cst_165 : f32 to vector<8x128xf32>
    %571 = arith.addf %569, %570 : vector<8x128xf32>
    %572 = vector.extract_strided_slice %545 {offsets = [0, 256], sizes = [8, 128], strides = [1, 1]} : vector<8x384xf32> to vector<8x128xf32>
    %573 = vector.extract_strided_slice %550 {offsets = [0, 256], sizes = [8, 128], strides = [1, 1]} : vector<8x384xf32> to vector<8x128xf32>
    %574 = vector.broadcast %8 : vector<1x128xf32> to vector<8x128xf32>
    %575 = arith.addf %573, %574 : vector<8x128xf32>
    %576 = arith.mulf %561, %575 : vector<8x128xf32>
    %577 = arith.addf %572, %576 : vector<8x128xf32>
    %578 = math.tanh %577 : vector<8x128xf32>
    %cst_166 = arith.constant 1.000000e+00 : f32
    %579 = vector.broadcast %cst_166 : f32 to vector<8x128xf32>
    %580 = arith.subf %579, %571 : vector<8x128xf32>
    %581 = arith.mulf %580, %578 : vector<8x128xf32>
    %582 = arith.mulf %571, %551 : vector<8x128xf32>
    %583 = arith.addf %581, %582 : vector<8x128xf32>
    %584 = vector.extract_strided_slice %549 {offsets = [0, 384], sizes = [8, 384], strides = [1, 1]} : vector<8x768xf32> to vector<8x384xf32>
    %585 = vector.extract_strided_slice %538 {offsets = [0, 128], sizes = [8, 128], strides = [1, 1]} : vector<8x256xf32> to vector<8x128xf32>
    %586 = vector.extract_strided_slice %547 {offsets = [0, 0], sizes = [8, 128], strides = [1, 1]} : vector<8x384xf32> to vector<8x128xf32>
    %587 = vector.extract_strided_slice %584 {offsets = [0, 0], sizes = [8, 128], strides = [1, 1]} : vector<8x384xf32> to vector<8x128xf32>
    %588 = arith.addf %586, %587 : vector<8x128xf32>
    %cst_167 = arith.constant 5.000000e-01 : f32
    %589 = vector.broadcast %cst_167 : f32 to vector<8x128xf32>
    %590 = arith.mulf %589, %588 : vector<8x128xf32>
    %591 = math.tanh %590 : vector<8x128xf32>
    %cst_168 = arith.constant 5.000000e-01 : f32
    %592 = vector.broadcast %cst_168 : f32 to vector<8x128xf32>
    %593 = arith.mulf %592, %591 : vector<8x128xf32>
    %cst_169 = arith.constant 5.000000e-01 : f32
    %594 = vector.broadcast %cst_169 : f32 to vector<8x128xf32>
    %595 = arith.addf %593, %594 : vector<8x128xf32>
    %596 = vector.extract_strided_slice %547 {offsets = [0, 128], sizes = [8, 128], strides = [1, 1]} : vector<8x384xf32> to vector<8x128xf32>
    %597 = vector.extract_strided_slice %584 {offsets = [0, 128], sizes = [8, 128], strides = [1, 1]} : vector<8x384xf32> to vector<8x128xf32>
    %598 = arith.addf %596, %597 : vector<8x128xf32>
    %cst_170 = arith.constant 5.000000e-01 : f32
    %599 = vector.broadcast %cst_170 : f32 to vector<8x128xf32>
    %600 = arith.mulf %599, %598 : vector<8x128xf32>
    %601 = math.tanh %600 : vector<8x128xf32>
    %cst_171 = arith.constant 5.000000e-01 : f32
    %602 = vector.broadcast %cst_171 : f32 to vector<8x128xf32>
    %603 = arith.mulf %602, %601 : vector<8x128xf32>
    %cst_172 = arith.constant 5.000000e-01 : f32
    %604 = vector.broadcast %cst_172 : f32 to vector<8x128xf32>
    %605 = arith.addf %603, %604 : vector<8x128xf32>
    %606 = vector.extract_strided_slice %547 {offsets = [0, 256], sizes = [8, 128], strides = [1, 1]} : vector<8x384xf32> to vector<8x128xf32>
    %607 = vector.extract_strided_slice %584 {offsets = [0, 256], sizes = [8, 128], strides = [1, 1]} : vector<8x384xf32> to vector<8x128xf32>
    %608 = vector.broadcast %9 : vector<1x128xf32> to vector<8x128xf32>
    %609 = arith.addf %607, %608 : vector<8x128xf32>
    %610 = arith.mulf %595, %609 : vector<8x128xf32>
    %611 = arith.addf %606, %610 : vector<8x128xf32>
    %612 = math.tanh %611 : vector<8x128xf32>
    %cst_173 = arith.constant 1.000000e+00 : f32
    %613 = vector.broadcast %cst_173 : f32 to vector<8x128xf32>
    %614 = arith.subf %613, %605 : vector<8x128xf32>
    %615 = arith.mulf %614, %612 : vector<8x128xf32>
    %616 = arith.mulf %605, %585 : vector<8x128xf32>
    %617 = arith.addf %615, %616 : vector<8x128xf32>
    %618 = arith.index_cast %c6_i32 : i32 to index
    %c0_174 = arith.constant 0 : index
    %c0_175 = arith.constant 0 : index
    %619 = vector.load %arg8[%618, %c0_174, %c0_175] : memref<16x8x256xf32, #tpu.memory_space<vmem>>, vector<1x8x128xf32>
    %620 = vector.shape_cast %619 : vector<1x8x128xf32> to vector<8x128xf32>
    %621 = vector.shape_cast %583 : vector<8x128xf32> to vector<1x8x128xf32>
    tpu.vector_store %arg8[%618, %c0_174, %c0_175], %621 {strides = array<i32>} : memref<16x8x256xf32, #tpu.memory_space<vmem>>, vector<1x8x128xf32>,
    %622 = arith.index_cast %539 : i32 to index
    %c0_176 = arith.constant 0 : index
    %c128_177 = arith.constant 128 : index
    %623 = vector.load %arg8[%622, %c0_176, %c128_177] : memref<16x8x256xf32, #tpu.memory_space<vmem>>, vector<1x8x128xf32>
    %624 = vector.shape_cast %623 : vector<1x8x128xf32> to vector<8x128xf32>
    %625 = vector.shape_cast %617 : vector<8x128xf32> to vector<1x8x128xf32>
    tpu.vector_store %arg8[%622, %c0_176, %c128_177], %625 {strides = array<i32>} : memref<16x8x256xf32, #tpu.memory_space<vmem>>, vector<1x8x128xf32>,
    %626 = tpu.concatenate %583, %617 in 1 : vector<8x128xf32>, vector<8x128xf32> -> vector<8x256xf32>
    %c7_i32 = arith.constant 7 : i32
    %c15_i32_178 = arith.constant 15 : i32
    %627 = arith.subi %c15_i32_178, %c7_i32 : i32
    %c8_i32_179 = arith.constant 8 : i32
    %628 = arith.muli %c7_i32, %c8_i32_179 : i32
    %629 = tpu.assume_multiple %628, 8 : i32
    %c8_i32_180 = arith.constant 8 : i32
    %630 = arith.muli %627, %c8_i32_180 : i32
    %631 = tpu.assume_multiple %630, 8 : i32
    %632 = arith.index_cast %629 : i32 to index
    %c0_181 = arith.constant 0 : index
    %633 = vector.load %arg10[%632, %c0_181] : memref<128x768xf32, #tpu.memory_space<vmem>>, vector<8x384xf32>
    %634 = arith.index_cast %631 : i32 to index
    %c384_182 = arith.constant 384 : index
    %635 = vector.load %arg10[%634, %c384_182] : memref<128x768xf32, #tpu.memory_space<vmem>>, vector<8x384xf32>
    %636 = arith.truncf %626 : vector<8x256xf32> to vector<8x256xbf16>
    %cst_183 = arith.constant dense<0.000000e+00> : vector<8x768xf32>
    %637 = tpu.matmul %636, %7, %cst_183 {dimension_numbers = #tpu.dot_dimension_numbers<[1], [0], [0], [1], [0, 0, 1, 1], [], []>} : vector<8x256xbf16>, vector<256x768xbf16>, vector<8x768xf32> -> vector<8x768xf32>
    %638 = vector.extract_strided_slice %637 {offsets = [0, 0], sizes = [8, 384], strides = [1, 1]} : vector<8x768xf32> to vector<8x384xf32>
    %639 = vector.extract_strided_slice %626 {offsets = [0, 0], sizes = [8, 128], strides = [1, 1]} : vector<8x256xf32> to vector<8x128xf32>
    %640 = vector.extract_strided_slice %633 {offsets = [0, 0], sizes = [8, 128], strides = [1, 1]} : vector<8x384xf32> to vector<8x128xf32>
    %641 = vector.extract_strided_slice %638 {offsets = [0, 0], sizes = [8, 128], strides = [1, 1]} : vector<8x384xf32> to vector<8x128xf32>
    %642 = arith.addf %640, %641 : vector<8x128xf32>
    %cst_184 = arith.constant 5.000000e-01 : f32
    %643 = vector.broadcast %cst_184 : f32 to vector<8x128xf32>
    %644 = arith.mulf %643, %642 : vector<8x128xf32>
    %645 = math.tanh %644 : vector<8x128xf32>
    %cst_185 = arith.constant 5.000000e-01 : f32
    %646 = vector.broadcast %cst_185 : f32 to vector<8x128xf32>
    %647 = arith.mulf %646, %645 : vector<8x128xf32>
    %cst_186 = arith.constant 5.000000e-01 : f32
    %648 = vector.broadcast %cst_186 : f32 to vector<8x128xf32>
    %649 = arith.addf %647, %648 : vector<8x128xf32>
    %650 = vector.extract_strided_slice %633 {offsets = [0, 128], sizes = [8, 128], strides = [1, 1]} : vector<8x384xf32> to vector<8x128xf32>
    %651 = vector.extract_strided_slice %638 {offsets = [0, 128], sizes = [8, 128], strides = [1, 1]} : vector<8x384xf32> to vector<8x128xf32>
    %652 = arith.addf %650, %651 : vector<8x128xf32>
    %cst_187 = arith.constant 5.000000e-01 : f32
    %653 = vector.broadcast %cst_187 : f32 to vector<8x128xf32>
    %654 = arith.mulf %653, %652 : vector<8x128xf32>
    %655 = math.tanh %654 : vector<8x128xf32>
    %cst_188 = arith.constant 5.000000e-01 : f32
    %656 = vector.broadcast %cst_188 : f32 to vector<8x128xf32>
    %657 = arith.mulf %656, %655 : vector<8x128xf32>
    %cst_189 = arith.constant 5.000000e-01 : f32
    %658 = vector.broadcast %cst_189 : f32 to vector<8x128xf32>
    %659 = arith.addf %657, %658 : vector<8x128xf32>
    %660 = vector.extract_strided_slice %633 {offsets = [0, 256], sizes = [8, 128], strides = [1, 1]} : vector<8x384xf32> to vector<8x128xf32>
    %661 = vector.extract_strided_slice %638 {offsets = [0, 256], sizes = [8, 128], strides = [1, 1]} : vector<8x384xf32> to vector<8x128xf32>
    %662 = vector.broadcast %8 : vector<1x128xf32> to vector<8x128xf32>
    %663 = arith.addf %661, %662 : vector<8x128xf32>
    %664 = arith.mulf %649, %663 : vector<8x128xf32>
    %665 = arith.addf %660, %664 : vector<8x128xf32>
    %666 = math.tanh %665 : vector<8x128xf32>
    %cst_190 = arith.constant 1.000000e+00 : f32
    %667 = vector.broadcast %cst_190 : f32 to vector<8x128xf32>
    %668 = arith.subf %667, %659 : vector<8x128xf32>
    %669 = arith.mulf %668, %666 : vector<8x128xf32>
    %670 = arith.mulf %659, %639 : vector<8x128xf32>
    %671 = arith.addf %669, %670 : vector<8x128xf32>
    %672 = vector.extract_strided_slice %637 {offsets = [0, 384], sizes = [8, 384], strides = [1, 1]} : vector<8x768xf32> to vector<8x384xf32>
    %673 = vector.extract_strided_slice %626 {offsets = [0, 128], sizes = [8, 128], strides = [1, 1]} : vector<8x256xf32> to vector<8x128xf32>
    %674 = vector.extract_strided_slice %635 {offsets = [0, 0], sizes = [8, 128], strides = [1, 1]} : vector<8x384xf32> to vector<8x128xf32>
    %675 = vector.extract_strided_slice %672 {offsets = [0, 0], sizes = [8, 128], strides = [1, 1]} : vector<8x384xf32> to vector<8x128xf32>
    %676 = arith.addf %674, %675 : vector<8x128xf32>
    %cst_191 = arith.constant 5.000000e-01 : f32
    %677 = vector.broadcast %cst_191 : f32 to vector<8x128xf32>
    %678 = arith.mulf %677, %676 : vector<8x128xf32>
    %679 = math.tanh %678 : vector<8x128xf32>
    %cst_192 = arith.constant 5.000000e-01 : f32
    %680 = vector.broadcast %cst_192 : f32 to vector<8x128xf32>
    %681 = arith.mulf %680, %679 : vector<8x128xf32>
    %cst_193 = arith.constant 5.000000e-01 : f32
    %682 = vector.broadcast %cst_193 : f32 to vector<8x128xf32>
    %683 = arith.addf %681, %682 : vector<8x128xf32>
    %684 = vector.extract_strided_slice %635 {offsets = [0, 128], sizes = [8, 128], strides = [1, 1]} : vector<8x384xf32> to vector<8x128xf32>
    %685 = vector.extract_strided_slice %672 {offsets = [0, 128], sizes = [8, 128], strides = [1, 1]} : vector<8x384xf32> to vector<8x128xf32>
    %686 = arith.addf %684, %685 : vector<8x128xf32>
    %cst_194 = arith.constant 5.000000e-01 : f32
    %687 = vector.broadcast %cst_194 : f32 to vector<8x128xf32>
    %688 = arith.mulf %687, %686 : vector<8x128xf32>
    %689 = math.tanh %688 : vector<8x128xf32>
    %cst_195 = arith.constant 5.000000e-01 : f32
    %690 = vector.broadcast %cst_195 : f32 to vector<8x128xf32>
    %691 = arith.mulf %690, %689 : vector<8x128xf32>
    %cst_196 = arith.constant 5.000000e-01 : f32
    %692 = vector.broadcast %cst_196 : f32 to vector<8x128xf32>
    %693 = arith.addf %691, %692 : vector<8x128xf32>
    %694 = vector.extract_strided_slice %635 {offsets = [0, 256], sizes = [8, 128], strides = [1, 1]} : vector<8x384xf32> to vector<8x128xf32>
    %695 = vector.extract_strided_slice %672 {offsets = [0, 256], sizes = [8, 128], strides = [1, 1]} : vector<8x384xf32> to vector<8x128xf32>
    %696 = vector.broadcast %9 : vector<1x128xf32> to vector<8x128xf32>
    %697 = arith.addf %695, %696 : vector<8x128xf32>
    %698 = arith.mulf %683, %697 : vector<8x128xf32>
    %699 = arith.addf %694, %698 : vector<8x128xf32>
    %700 = math.tanh %699 : vector<8x128xf32>
    %cst_197 = arith.constant 1.000000e+00 : f32
    %701 = vector.broadcast %cst_197 : f32 to vector<8x128xf32>
    %702 = arith.subf %701, %693 : vector<8x128xf32>
    %703 = arith.mulf %702, %700 : vector<8x128xf32>
    %704 = arith.mulf %693, %673 : vector<8x128xf32>
    %705 = arith.addf %703, %704 : vector<8x128xf32>
    %706 = arith.index_cast %c7_i32 : i32 to index
    %c0_198 = arith.constant 0 : index
    %c0_199 = arith.constant 0 : index
    %707 = vector.load %arg8[%706, %c0_198, %c0_199] : memref<16x8x256xf32, #tpu.memory_space<vmem>>, vector<1x8x128xf32>
    %708 = vector.shape_cast %707 : vector<1x8x128xf32> to vector<8x128xf32>
    %709 = vector.shape_cast %671 : vector<8x128xf32> to vector<1x8x128xf32>
    tpu.vector_store %arg8[%706, %c0_198, %c0_199], %709 {strides = array<i32>} : memref<16x8x256xf32, #tpu.memory_space<vmem>>, vector<1x8x128xf32>,
    %710 = arith.index_cast %627 : i32 to index
    %c0_200 = arith.constant 0 : index
    %c128_201 = arith.constant 128 : index
    %711 = vector.load %arg8[%710, %c0_200, %c128_201] : memref<16x8x256xf32, #tpu.memory_space<vmem>>, vector<1x8x128xf32>
    %712 = vector.shape_cast %711 : vector<1x8x128xf32> to vector<8x128xf32>
    %713 = vector.shape_cast %705 : vector<8x128xf32> to vector<1x8x128xf32>
    tpu.vector_store %arg8[%710, %c0_200, %c128_201], %713 {strides = array<i32>} : memref<16x8x256xf32, #tpu.memory_space<vmem>>, vector<1x8x128xf32>,
    %714 = tpu.concatenate %671, %705 in 1 : vector<8x128xf32>, vector<8x128xf32> -> vector<8x256xf32>
    %c8_i32_202 = arith.constant 8 : i32
    %c15_i32_203 = arith.constant 15 : i32
    %715 = arith.subi %c15_i32_203, %c8_i32_202 : i32
    %c8_i32_204 = arith.constant 8 : i32
    %716 = arith.muli %c8_i32_202, %c8_i32_204 : i32
    %717 = tpu.assume_multiple %716, 8 : i32
    %c8_i32_205 = arith.constant 8 : i32
    %718 = arith.muli %715, %c8_i32_205 : i32
    %719 = tpu.assume_multiple %718, 8 : i32
    %720 = arith.index_cast %717 : i32 to index
    %c0_206 = arith.constant 0 : index
    %721 = vector.load %arg10[%720, %c0_206] : memref<128x768xf32, #tpu.memory_space<vmem>>, vector<8x384xf32>
    %722 = arith.index_cast %719 : i32 to index
    %c384_207 = arith.constant 384 : index
    %723 = vector.load %arg10[%722, %c384_207] : memref<128x768xf32, #tpu.memory_space<vmem>>, vector<8x384xf32>
    %724 = arith.truncf %714 : vector<8x256xf32> to vector<8x256xbf16>
    %cst_208 = arith.constant dense<0.000000e+00> : vector<8x768xf32>
    %725 = tpu.matmul %724, %7, %cst_208 {dimension_numbers = #tpu.dot_dimension_numbers<[1], [0], [0], [1], [0, 0, 1, 1], [], []>} : vector<8x256xbf16>, vector<256x768xbf16>, vector<8x768xf32> -> vector<8x768xf32>
    %726 = vector.extract_strided_slice %725 {offsets = [0, 0], sizes = [8, 384], strides = [1, 1]} : vector<8x768xf32> to vector<8x384xf32>
    %727 = vector.extract_strided_slice %714 {offsets = [0, 0], sizes = [8, 128], strides = [1, 1]} : vector<8x256xf32> to vector<8x128xf32>
    %728 = vector.extract_strided_slice %721 {offsets = [0, 0], sizes = [8, 128], strides = [1, 1]} : vector<8x384xf32> to vector<8x128xf32>
    %729 = vector.extract_strided_slice %726 {offsets = [0, 0], sizes = [8, 128], strides = [1, 1]} : vector<8x384xf32> to vector<8x128xf32>
    %730 = arith.addf %728, %729 : vector<8x128xf32>
    %cst_209 = arith.constant 5.000000e-01 : f32
    %731 = vector.broadcast %cst_209 : f32 to vector<8x128xf32>
    %732 = arith.mulf %731, %730 : vector<8x128xf32>
    %733 = math.tanh %732 : vector<8x128xf32>
    %cst_210 = arith.constant 5.000000e-01 : f32
    %734 = vector.broadcast %cst_210 : f32 to vector<8x128xf32>
    %735 = arith.mulf %734, %733 : vector<8x128xf32>
    %cst_211 = arith.constant 5.000000e-01 : f32
    %736 = vector.broadcast %cst_211 : f32 to vector<8x128xf32>
    %737 = arith.addf %735, %736 : vector<8x128xf32>
    %738 = vector.extract_strided_slice %721 {offsets = [0, 128], sizes = [8, 128], strides = [1, 1]} : vector<8x384xf32> to vector<8x128xf32>
    %739 = vector.extract_strided_slice %726 {offsets = [0, 128], sizes = [8, 128], strides = [1, 1]} : vector<8x384xf32> to vector<8x128xf32>
    %740 = arith.addf %738, %739 : vector<8x128xf32>
    %cst_212 = arith.constant 5.000000e-01 : f32
    %741 = vector.broadcast %cst_212 : f32 to vector<8x128xf32>
    %742 = arith.mulf %741, %740 : vector<8x128xf32>
    %743 = math.tanh %742 : vector<8x128xf32>
    %cst_213 = arith.constant 5.000000e-01 : f32
    %744 = vector.broadcast %cst_213 : f32 to vector<8x128xf32>
    %745 = arith.mulf %744, %743 : vector<8x128xf32>
    %cst_214 = arith.constant 5.000000e-01 : f32
    %746 = vector.broadcast %cst_214 : f32 to vector<8x128xf32>
    %747 = arith.addf %745, %746 : vector<8x128xf32>
    %748 = vector.extract_strided_slice %721 {offsets = [0, 256], sizes = [8, 128], strides = [1, 1]} : vector<8x384xf32> to vector<8x128xf32>
    %749 = vector.extract_strided_slice %726 {offsets = [0, 256], sizes = [8, 128], strides = [1, 1]} : vector<8x384xf32> to vector<8x128xf32>
    %750 = vector.broadcast %8 : vector<1x128xf32> to vector<8x128xf32>
    %751 = arith.addf %749, %750 : vector<8x128xf32>
    %752 = arith.mulf %737, %751 : vector<8x128xf32>
    %753 = arith.addf %748, %752 : vector<8x128xf32>
    %754 = math.tanh %753 : vector<8x128xf32>
    %cst_215 = arith.constant 1.000000e+00 : f32
    %755 = vector.broadcast %cst_215 : f32 to vector<8x128xf32>
    %756 = arith.subf %755, %747 : vector<8x128xf32>
    %757 = arith.mulf %756, %754 : vector<8x128xf32>
    %758 = arith.mulf %747, %727 : vector<8x128xf32>
    %759 = arith.addf %757, %758 : vector<8x128xf32>
    %760 = vector.extract_strided_slice %725 {offsets = [0, 384], sizes = [8, 384], strides = [1, 1]} : vector<8x768xf32> to vector<8x384xf32>
    %761 = vector.extract_strided_slice %714 {offsets = [0, 128], sizes = [8, 128], strides = [1, 1]} : vector<8x256xf32> to vector<8x128xf32>
    %762 = vector.extract_strided_slice %723 {offsets = [0, 0], sizes = [8, 128], strides = [1, 1]} : vector<8x384xf32> to vector<8x128xf32>
    %763 = vector.extract_strided_slice %760 {offsets = [0, 0], sizes = [8, 128], strides = [1, 1]} : vector<8x384xf32> to vector<8x128xf32>
    %764 = arith.addf %762, %763 : vector<8x128xf32>
    %cst_216 = arith.constant 5.000000e-01 : f32
    %765 = vector.broadcast %cst_216 : f32 to vector<8x128xf32>
    %766 = arith.mulf %765, %764 : vector<8x128xf32>
    %767 = math.tanh %766 : vector<8x128xf32>
    %cst_217 = arith.constant 5.000000e-01 : f32
    %768 = vector.broadcast %cst_217 : f32 to vector<8x128xf32>
    %769 = arith.mulf %768, %767 : vector<8x128xf32>
    %cst_218 = arith.constant 5.000000e-01 : f32
    %770 = vector.broadcast %cst_218 : f32 to vector<8x128xf32>
    %771 = arith.addf %769, %770 : vector<8x128xf32>
    %772 = vector.extract_strided_slice %723 {offsets = [0, 128], sizes = [8, 128], strides = [1, 1]} : vector<8x384xf32> to vector<8x128xf32>
    %773 = vector.extract_strided_slice %760 {offsets = [0, 128], sizes = [8, 128], strides = [1, 1]} : vector<8x384xf32> to vector<8x128xf32>
    %774 = arith.addf %772, %773 : vector<8x128xf32>
    %cst_219 = arith.constant 5.000000e-01 : f32
    %775 = vector.broadcast %cst_219 : f32 to vector<8x128xf32>
    %776 = arith.mulf %775, %774 : vector<8x128xf32>
    %777 = math.tanh %776 : vector<8x128xf32>
    %cst_220 = arith.constant 5.000000e-01 : f32
    %778 = vector.broadcast %cst_220 : f32 to vector<8x128xf32>
    %779 = arith.mulf %778, %777 : vector<8x128xf32>
    %cst_221 = arith.constant 5.000000e-01 : f32
    %780 = vector.broadcast %cst_221 : f32 to vector<8x128xf32>
    %781 = arith.addf %779, %780 : vector<8x128xf32>
    %782 = vector.extract_strided_slice %723 {offsets = [0, 256], sizes = [8, 128], strides = [1, 1]} : vector<8x384xf32> to vector<8x128xf32>
    %783 = vector.extract_strided_slice %760 {offsets = [0, 256], sizes = [8, 128], strides = [1, 1]} : vector<8x384xf32> to vector<8x128xf32>
    %784 = vector.broadcast %9 : vector<1x128xf32> to vector<8x128xf32>
    %785 = arith.addf %783, %784 : vector<8x128xf32>
    %786 = arith.mulf %771, %785 : vector<8x128xf32>
    %787 = arith.addf %782, %786 : vector<8x128xf32>
    %788 = math.tanh %787 : vector<8x128xf32>
    %cst_222 = arith.constant 1.000000e+00 : f32
    %789 = vector.broadcast %cst_222 : f32 to vector<8x128xf32>
    %790 = arith.subf %789, %781 : vector<8x128xf32>
    %791 = arith.mulf %790, %788 : vector<8x128xf32>
    %792 = arith.mulf %781, %761 : vector<8x128xf32>
    %793 = arith.addf %791, %792 : vector<8x128xf32>
    %794 = arith.index_cast %c8_i32_202 : i32 to index
    %c0_223 = arith.constant 0 : index
    %c0_224 = arith.constant 0 : index
    %795 = vector.load %arg8[%794, %c0_223, %c0_224] : memref<16x8x256xf32, #tpu.memory_space<vmem>>, vector<1x8x128xf32>
    %796 = vector.shape_cast %795 : vector<1x8x128xf32> to vector<8x128xf32>
    %797 = vector.shape_cast %759 : vector<8x128xf32> to vector<1x8x128xf32>
    tpu.vector_store %arg8[%794, %c0_223, %c0_224], %797 {strides = array<i32>} : memref<16x8x256xf32, #tpu.memory_space<vmem>>, vector<1x8x128xf32>,
    %798 = arith.index_cast %715 : i32 to index
    %c0_225 = arith.constant 0 : index
    %c128_226 = arith.constant 128 : index
    %799 = vector.load %arg8[%798, %c0_225, %c128_226] : memref<16x8x256xf32, #tpu.memory_space<vmem>>, vector<1x8x128xf32>
    %800 = vector.shape_cast %799 : vector<1x8x128xf32> to vector<8x128xf32>
    %801 = vector.shape_cast %793 : vector<8x128xf32> to vector<1x8x128xf32>
    tpu.vector_store %arg8[%798, %c0_225, %c128_226], %801 {strides = array<i32>} : memref<16x8x256xf32, #tpu.memory_space<vmem>>, vector<1x8x128xf32>,
    %802 = tpu.concatenate %759, %793 in 1 : vector<8x128xf32>, vector<8x128xf32> -> vector<8x256xf32>
    %c9_i32 = arith.constant 9 : i32
    %c15_i32_227 = arith.constant 15 : i32
    %803 = arith.subi %c15_i32_227, %c9_i32 : i32
    %c8_i32_228 = arith.constant 8 : i32
    %804 = arith.muli %c9_i32, %c8_i32_228 : i32
    %805 = tpu.assume_multiple %804, 8 : i32
    %c8_i32_229 = arith.constant 8 : i32
    %806 = arith.muli %803, %c8_i32_229 : i32
    %807 = tpu.assume_multiple %806, 8 : i32
    %808 = arith.index_cast %805 : i32 to index
    %c0_230 = arith.constant 0 : index
    %809 = vector.load %arg10[%808, %c0_230] : memref<128x768xf32, #tpu.memory_space<vmem>>, vector<8x384xf32>
    %810 = arith.index_cast %807 : i32 to index
    %c384_231 = arith.constant 384 : index
    %811 = vector.load %arg10[%810, %c384_231] : memref<128x768xf32, #tpu.memory_space<vmem>>, vector<8x384xf32>
    %812 = arith.truncf %802 : vector<8x256xf32> to vector<8x256xbf16>
    %cst_232 = arith.constant dense<0.000000e+00> : vector<8x768xf32>
    %813 = tpu.matmul %812, %7, %cst_232 {dimension_numbers = #tpu.dot_dimension_numbers<[1], [0], [0], [1], [0, 0, 1, 1], [], []>} : vector<8x256xbf16>, vector<256x768xbf16>, vector<8x768xf32> -> vector<8x768xf32>
    %814 = vector.extract_strided_slice %813 {offsets = [0, 0], sizes = [8, 384], strides = [1, 1]} : vector<8x768xf32> to vector<8x384xf32>
    %815 = vector.extract_strided_slice %802 {offsets = [0, 0], sizes = [8, 128], strides = [1, 1]} : vector<8x256xf32> to vector<8x128xf32>
    %816 = vector.extract_strided_slice %809 {offsets = [0, 0], sizes = [8, 128], strides = [1, 1]} : vector<8x384xf32> to vector<8x128xf32>
    %817 = vector.extract_strided_slice %814 {offsets = [0, 0], sizes = [8, 128], strides = [1, 1]} : vector<8x384xf32> to vector<8x128xf32>
    %818 = arith.addf %816, %817 : vector<8x128xf32>
    %cst_233 = arith.constant 5.000000e-01 : f32
    %819 = vector.broadcast %cst_233 : f32 to vector<8x128xf32>
    %820 = arith.mulf %819, %818 : vector<8x128xf32>
    %821 = math.tanh %820 : vector<8x128xf32>
    %cst_234 = arith.constant 5.000000e-01 : f32
    %822 = vector.broadcast %cst_234 : f32 to vector<8x128xf32>
    %823 = arith.mulf %822, %821 : vector<8x128xf32>
    %cst_235 = arith.constant 5.000000e-01 : f32
    %824 = vector.broadcast %cst_235 : f32 to vector<8x128xf32>
    %825 = arith.addf %823, %824 : vector<8x128xf32>
    %826 = vector.extract_strided_slice %809 {offsets = [0, 128], sizes = [8, 128], strides = [1, 1]} : vector<8x384xf32> to vector<8x128xf32>
    %827 = vector.extract_strided_slice %814 {offsets = [0, 128], sizes = [8, 128], strides = [1, 1]} : vector<8x384xf32> to vector<8x128xf32>
    %828 = arith.addf %826, %827 : vector<8x128xf32>
    %cst_236 = arith.constant 5.000000e-01 : f32
    %829 = vector.broadcast %cst_236 : f32 to vector<8x128xf32>
    %830 = arith.mulf %829, %828 : vector<8x128xf32>
    %831 = math.tanh %830 : vector<8x128xf32>
    %cst_237 = arith.constant 5.000000e-01 : f32
    %832 = vector.broadcast %cst_237 : f32 to vector<8x128xf32>
    %833 = arith.mulf %832, %831 : vector<8x128xf32>
    %cst_238 = arith.constant 5.000000e-01 : f32
    %834 = vector.broadcast %cst_238 : f32 to vector<8x128xf32>
    %835 = arith.addf %833, %834 : vector<8x128xf32>
    %836 = vector.extract_strided_slice %809 {offsets = [0, 256], sizes = [8, 128], strides = [1, 1]} : vector<8x384xf32> to vector<8x128xf32>
    %837 = vector.extract_strided_slice %814 {offsets = [0, 256], sizes = [8, 128], strides = [1, 1]} : vector<8x384xf32> to vector<8x128xf32>
    %838 = vector.broadcast %8 : vector<1x128xf32> to vector<8x128xf32>
    %839 = arith.addf %837, %838 : vector<8x128xf32>
    %840 = arith.mulf %825, %839 : vector<8x128xf32>
    %841 = arith.addf %836, %840 : vector<8x128xf32>
    %842 = math.tanh %841 : vector<8x128xf32>
    %cst_239 = arith.constant 1.000000e+00 : f32
    %843 = vector.broadcast %cst_239 : f32 to vector<8x128xf32>
    %844 = arith.subf %843, %835 : vector<8x128xf32>
    %845 = arith.mulf %844, %842 : vector<8x128xf32>
    %846 = arith.mulf %835, %815 : vector<8x128xf32>
    %847 = arith.addf %845, %846 : vector<8x128xf32>
    %848 = vector.extract_strided_slice %813 {offsets = [0, 384], sizes = [8, 384], strides = [1, 1]} : vector<8x768xf32> to vector<8x384xf32>
    %849 = vector.extract_strided_slice %802 {offsets = [0, 128], sizes = [8, 128], strides = [1, 1]} : vector<8x256xf32> to vector<8x128xf32>
    %850 = vector.extract_strided_slice %811 {offsets = [0, 0], sizes = [8, 128], strides = [1, 1]} : vector<8x384xf32> to vector<8x128xf32>
    %851 = vector.extract_strided_slice %848 {offsets = [0, 0], sizes = [8, 128], strides = [1, 1]} : vector<8x384xf32> to vector<8x128xf32>
    %852 = arith.addf %850, %851 : vector<8x128xf32>
    %cst_240 = arith.constant 5.000000e-01 : f32
    %853 = vector.broadcast %cst_240 : f32 to vector<8x128xf32>
    %854 = arith.mulf %853, %852 : vector<8x128xf32>
    %855 = math.tanh %854 : vector<8x128xf32>
    %cst_241 = arith.constant 5.000000e-01 : f32
    %856 = vector.broadcast %cst_241 : f32 to vector<8x128xf32>
    %857 = arith.mulf %856, %855 : vector<8x128xf32>
    %cst_242 = arith.constant 5.000000e-01 : f32
    %858 = vector.broadcast %cst_242 : f32 to vector<8x128xf32>
    %859 = arith.addf %857, %858 : vector<8x128xf32>
    %860 = vector.extract_strided_slice %811 {offsets = [0, 128], sizes = [8, 128], strides = [1, 1]} : vector<8x384xf32> to vector<8x128xf32>
    %861 = vector.extract_strided_slice %848 {offsets = [0, 128], sizes = [8, 128], strides = [1, 1]} : vector<8x384xf32> to vector<8x128xf32>
    %862 = arith.addf %860, %861 : vector<8x128xf32>
    %cst_243 = arith.constant 5.000000e-01 : f32
    %863 = vector.broadcast %cst_243 : f32 to vector<8x128xf32>
    %864 = arith.mulf %863, %862 : vector<8x128xf32>
    %865 = math.tanh %864 : vector<8x128xf32>
    %cst_244 = arith.constant 5.000000e-01 : f32
    %866 = vector.broadcast %cst_244 : f32 to vector<8x128xf32>
    %867 = arith.mulf %866, %865 : vector<8x128xf32>
    %cst_245 = arith.constant 5.000000e-01 : f32
    %868 = vector.broadcast %cst_245 : f32 to vector<8x128xf32>
    %869 = arith.addf %867, %868 : vector<8x128xf32>
    %870 = vector.extract_strided_slice %811 {offsets = [0, 256], sizes = [8, 128], strides = [1, 1]} : vector<8x384xf32> to vector<8x128xf32>
    %871 = vector.extract_strided_slice %848 {offsets = [0, 256], sizes = [8, 128], strides = [1, 1]} : vector<8x384xf32> to vector<8x128xf32>
    %872 = vector.broadcast %9 : vector<1x128xf32> to vector<8x128xf32>
    %873 = arith.addf %871, %872 : vector<8x128xf32>
    %874 = arith.mulf %859, %873 : vector<8x128xf32>
    %875 = arith.addf %870, %874 : vector<8x128xf32>
    %876 = math.tanh %875 : vector<8x128xf32>
    %cst_246 = arith.constant 1.000000e+00 : f32
    %877 = vector.broadcast %cst_246 : f32 to vector<8x128xf32>
    %878 = arith.subf %877, %869 : vector<8x128xf32>
    %879 = arith.mulf %878, %876 : vector<8x128xf32>
    %880 = arith.mulf %869, %849 : vector<8x128xf32>
    %881 = arith.addf %879, %880 : vector<8x128xf32>
    %882 = arith.index_cast %c9_i32 : i32 to index
    %c0_247 = arith.constant 0 : index
    %c0_248 = arith.constant 0 : index
    %883 = vector.load %arg8[%882, %c0_247, %c0_248] : memref<16x8x256xf32, #tpu.memory_space<vmem>>, vector<1x8x128xf32>
    %884 = vector.shape_cast %883 : vector<1x8x128xf32> to vector<8x128xf32>
    %885 = vector.shape_cast %847 : vector<8x128xf32> to vector<1x8x128xf32>
    tpu.vector_store %arg8[%882, %c0_247, %c0_248], %885 {strides = array<i32>} : memref<16x8x256xf32, #tpu.memory_space<vmem>>, vector<1x8x128xf32>,
    %886 = arith.index_cast %803 : i32 to index
    %c0_249 = arith.constant 0 : index
    %c128_250 = arith.constant 128 : index
    %887 = vector.load %arg8[%886, %c0_249, %c128_250] : memref<16x8x256xf32, #tpu.memory_space<vmem>>, vector<1x8x128xf32>
    %888 = vector.shape_cast %887 : vector<1x8x128xf32> to vector<8x128xf32>
    %889 = vector.shape_cast %881 : vector<8x128xf32> to vector<1x8x128xf32>
    tpu.vector_store %arg8[%886, %c0_249, %c128_250], %889 {strides = array<i32>} : memref<16x8x256xf32, #tpu.memory_space<vmem>>, vector<1x8x128xf32>,
    %890 = tpu.concatenate %847, %881 in 1 : vector<8x128xf32>, vector<8x128xf32> -> vector<8x256xf32>
    %c10_i32 = arith.constant 10 : i32
    %c15_i32_251 = arith.constant 15 : i32
    %891 = arith.subi %c15_i32_251, %c10_i32 : i32
    %c8_i32_252 = arith.constant 8 : i32
    %892 = arith.muli %c10_i32, %c8_i32_252 : i32
    %893 = tpu.assume_multiple %892, 8 : i32
    %c8_i32_253 = arith.constant 8 : i32
    %894 = arith.muli %891, %c8_i32_253 : i32
    %895 = tpu.assume_multiple %894, 8 : i32
    %896 = arith.index_cast %893 : i32 to index
    %c0_254 = arith.constant 0 : index
    %897 = vector.load %arg10[%896, %c0_254] : memref<128x768xf32, #tpu.memory_space<vmem>>, vector<8x384xf32>
    %898 = arith.index_cast %895 : i32 to index
    %c384_255 = arith.constant 384 : index
    %899 = vector.load %arg10[%898, %c384_255] : memref<128x768xf32, #tpu.memory_space<vmem>>, vector<8x384xf32>
    %900 = arith.truncf %890 : vector<8x256xf32> to vector<8x256xbf16>
    %cst_256 = arith.constant dense<0.000000e+00> : vector<8x768xf32>
    %901 = tpu.matmul %900, %7, %cst_256 {dimension_numbers = #tpu.dot_dimension_numbers<[1], [0], [0], [1], [0, 0, 1, 1], [], []>} : vector<8x256xbf16>, vector<256x768xbf16>, vector<8x768xf32> -> vector<8x768xf32>
    %902 = vector.extract_strided_slice %901 {offsets = [0, 0], sizes = [8, 384], strides = [1, 1]} : vector<8x768xf32> to vector<8x384xf32>
    %903 = vector.extract_strided_slice %890 {offsets = [0, 0], sizes = [8, 128], strides = [1, 1]} : vector<8x256xf32> to vector<8x128xf32>
    %904 = vector.extract_strided_slice %897 {offsets = [0, 0], sizes = [8, 128], strides = [1, 1]} : vector<8x384xf32> to vector<8x128xf32>
    %905 = vector.extract_strided_slice %902 {offsets = [0, 0], sizes = [8, 128], strides = [1, 1]} : vector<8x384xf32> to vector<8x128xf32>
    %906 = arith.addf %904, %905 : vector<8x128xf32>
    %cst_257 = arith.constant 5.000000e-01 : f32
    %907 = vector.broadcast %cst_257 : f32 to vector<8x128xf32>
    %908 = arith.mulf %907, %906 : vector<8x128xf32>
    %909 = math.tanh %908 : vector<8x128xf32>
    %cst_258 = arith.constant 5.000000e-01 : f32
    %910 = vector.broadcast %cst_258 : f32 to vector<8x128xf32>
    %911 = arith.mulf %910, %909 : vector<8x128xf32>
    %cst_259 = arith.constant 5.000000e-01 : f32
    %912 = vector.broadcast %cst_259 : f32 to vector<8x128xf32>
    %913 = arith.addf %911, %912 : vector<8x128xf32>
    %914 = vector.extract_strided_slice %897 {offsets = [0, 128], sizes = [8, 128], strides = [1, 1]} : vector<8x384xf32> to vector<8x128xf32>
    %915 = vector.extract_strided_slice %902 {offsets = [0, 128], sizes = [8, 128], strides = [1, 1]} : vector<8x384xf32> to vector<8x128xf32>
    %916 = arith.addf %914, %915 : vector<8x128xf32>
    %cst_260 = arith.constant 5.000000e-01 : f32
    %917 = vector.broadcast %cst_260 : f32 to vector<8x128xf32>
    %918 = arith.mulf %917, %916 : vector<8x128xf32>
    %919 = math.tanh %918 : vector<8x128xf32>
    %cst_261 = arith.constant 5.000000e-01 : f32
    %920 = vector.broadcast %cst_261 : f32 to vector<8x128xf32>
    %921 = arith.mulf %920, %919 : vector<8x128xf32>
    %cst_262 = arith.constant 5.000000e-01 : f32
    %922 = vector.broadcast %cst_262 : f32 to vector<8x128xf32>
    %923 = arith.addf %921, %922 : vector<8x128xf32>
    %924 = vector.extract_strided_slice %897 {offsets = [0, 256], sizes = [8, 128], strides = [1, 1]} : vector<8x384xf32> to vector<8x128xf32>
    %925 = vector.extract_strided_slice %902 {offsets = [0, 256], sizes = [8, 128], strides = [1, 1]} : vector<8x384xf32> to vector<8x128xf32>
    %926 = vector.broadcast %8 : vector<1x128xf32> to vector<8x128xf32>
    %927 = arith.addf %925, %926 : vector<8x128xf32>
    %928 = arith.mulf %913, %927 : vector<8x128xf32>
    %929 = arith.addf %924, %928 : vector<8x128xf32>
    %930 = math.tanh %929 : vector<8x128xf32>
    %cst_263 = arith.constant 1.000000e+00 : f32
    %931 = vector.broadcast %cst_263 : f32 to vector<8x128xf32>
    %932 = arith.subf %931, %923 : vector<8x128xf32>
    %933 = arith.mulf %932, %930 : vector<8x128xf32>
    %934 = arith.mulf %923, %903 : vector<8x128xf32>
    %935 = arith.addf %933, %934 : vector<8x128xf32>
    %936 = vector.extract_strided_slice %901 {offsets = [0, 384], sizes = [8, 384], strides = [1, 1]} : vector<8x768xf32> to vector<8x384xf32>
    %937 = vector.extract_strided_slice %890 {offsets = [0, 128], sizes = [8, 128], strides = [1, 1]} : vector<8x256xf32> to vector<8x128xf32>
    %938 = vector.extract_strided_slice %899 {offsets = [0, 0], sizes = [8, 128], strides = [1, 1]} : vector<8x384xf32> to vector<8x128xf32>
    %939 = vector.extract_strided_slice %936 {offsets = [0, 0], sizes = [8, 128], strides = [1, 1]} : vector<8x384xf32> to vector<8x128xf32>
    %940 = arith.addf %938, %939 : vector<8x128xf32>
    %cst_264 = arith.constant 5.000000e-01 : f32
    %941 = vector.broadcast %cst_264 : f32 to vector<8x128xf32>
    %942 = arith.mulf %941, %940 : vector<8x128xf32>
    %943 = math.tanh %942 : vector<8x128xf32>
    %cst_265 = arith.constant 5.000000e-01 : f32
    %944 = vector.broadcast %cst_265 : f32 to vector<8x128xf32>
    %945 = arith.mulf %944, %943 : vector<8x128xf32>
    %cst_266 = arith.constant 5.000000e-01 : f32
    %946 = vector.broadcast %cst_266 : f32 to vector<8x128xf32>
    %947 = arith.addf %945, %946 : vector<8x128xf32>
    %948 = vector.extract_strided_slice %899 {offsets = [0, 128], sizes = [8, 128], strides = [1, 1]} : vector<8x384xf32> to vector<8x128xf32>
    %949 = vector.extract_strided_slice %936 {offsets = [0, 128], sizes = [8, 128], strides = [1, 1]} : vector<8x384xf32> to vector<8x128xf32>
    %950 = arith.addf %948, %949 : vector<8x128xf32>
    %cst_267 = arith.constant 5.000000e-01 : f32
    %951 = vector.broadcast %cst_267 : f32 to vector<8x128xf32>
    %952 = arith.mulf %951, %950 : vector<8x128xf32>
    %953 = math.tanh %952 : vector<8x128xf32>
    %cst_268 = arith.constant 5.000000e-01 : f32
    %954 = vector.broadcast %cst_268 : f32 to vector<8x128xf32>
    %955 = arith.mulf %954, %953 : vector<8x128xf32>
    %cst_269 = arith.constant 5.000000e-01 : f32
    %956 = vector.broadcast %cst_269 : f32 to vector<8x128xf32>
    %957 = arith.addf %955, %956 : vector<8x128xf32>
    %958 = vector.extract_strided_slice %899 {offsets = [0, 256], sizes = [8, 128], strides = [1, 1]} : vector<8x384xf32> to vector<8x128xf32>
    %959 = vector.extract_strided_slice %936 {offsets = [0, 256], sizes = [8, 128], strides = [1, 1]} : vector<8x384xf32> to vector<8x128xf32>
    %960 = vector.broadcast %9 : vector<1x128xf32> to vector<8x128xf32>
    %961 = arith.addf %959, %960 : vector<8x128xf32>
    %962 = arith.mulf %947, %961 : vector<8x128xf32>
    %963 = arith.addf %958, %962 : vector<8x128xf32>
    %964 = math.tanh %963 : vector<8x128xf32>
    %cst_270 = arith.constant 1.000000e+00 : f32
    %965 = vector.broadcast %cst_270 : f32 to vector<8x128xf32>
    %966 = arith.subf %965, %957 : vector<8x128xf32>
    %967 = arith.mulf %966, %964 : vector<8x128xf32>
    %968 = arith.mulf %957, %937 : vector<8x128xf32>
    %969 = arith.addf %967, %968 : vector<8x128xf32>
    %970 = arith.index_cast %c10_i32 : i32 to index
    %c0_271 = arith.constant 0 : index
    %c0_272 = arith.constant 0 : index
    %971 = vector.load %arg8[%970, %c0_271, %c0_272] : memref<16x8x256xf32, #tpu.memory_space<vmem>>, vector<1x8x128xf32>
    %972 = vector.shape_cast %971 : vector<1x8x128xf32> to vector<8x128xf32>
    %973 = vector.shape_cast %935 : vector<8x128xf32> to vector<1x8x128xf32>
    tpu.vector_store %arg8[%970, %c0_271, %c0_272], %973 {strides = array<i32>} : memref<16x8x256xf32, #tpu.memory_space<vmem>>, vector<1x8x128xf32>,
    %974 = arith.index_cast %891 : i32 to index
    %c0_273 = arith.constant 0 : index
    %c128_274 = arith.constant 128 : index
    %975 = vector.load %arg8[%974, %c0_273, %c128_274] : memref<16x8x256xf32, #tpu.memory_space<vmem>>, vector<1x8x128xf32>
    %976 = vector.shape_cast %975 : vector<1x8x128xf32> to vector<8x128xf32>
    %977 = vector.shape_cast %969 : vector<8x128xf32> to vector<1x8x128xf32>
    tpu.vector_store %arg8[%974, %c0_273, %c128_274], %977 {strides = array<i32>} : memref<16x8x256xf32, #tpu.memory_space<vmem>>, vector<1x8x128xf32>,
    %978 = tpu.concatenate %935, %969 in 1 : vector<8x128xf32>, vector<8x128xf32> -> vector<8x256xf32>
    %c11_i32 = arith.constant 11 : i32
    %c15_i32_275 = arith.constant 15 : i32
    %979 = arith.subi %c15_i32_275, %c11_i32 : i32
    %c8_i32_276 = arith.constant 8 : i32
    %980 = arith.muli %c11_i32, %c8_i32_276 : i32
    %981 = tpu.assume_multiple %980, 8 : i32
    %c8_i32_277 = arith.constant 8 : i32
    %982 = arith.muli %979, %c8_i32_277 : i32
    %983 = tpu.assume_multiple %982, 8 : i32
    %984 = arith.index_cast %981 : i32 to index
    %c0_278 = arith.constant 0 : index
    %985 = vector.load %arg10[%984, %c0_278] : memref<128x768xf32, #tpu.memory_space<vmem>>, vector<8x384xf32>
    %986 = arith.index_cast %983 : i32 to index
    %c384_279 = arith.constant 384 : index
    %987 = vector.load %arg10[%986, %c384_279] : memref<128x768xf32, #tpu.memory_space<vmem>>, vector<8x384xf32>
    %988 = arith.truncf %978 : vector<8x256xf32> to vector<8x256xbf16>
    %cst_280 = arith.constant dense<0.000000e+00> : vector<8x768xf32>
    %989 = tpu.matmul %988, %7, %cst_280 {dimension_numbers = #tpu.dot_dimension_numbers<[1], [0], [0], [1], [0, 0, 1, 1], [], []>} : vector<8x256xbf16>, vector<256x768xbf16>, vector<8x768xf32> -> vector<8x768xf32>
    %990 = vector.extract_strided_slice %989 {offsets = [0, 0], sizes = [8, 384], strides = [1, 1]} : vector<8x768xf32> to vector<8x384xf32>
    %991 = vector.extract_strided_slice %978 {offsets = [0, 0], sizes = [8, 128], strides = [1, 1]} : vector<8x256xf32> to vector<8x128xf32>
    %992 = vector.extract_strided_slice %985 {offsets = [0, 0], sizes = [8, 128], strides = [1, 1]} : vector<8x384xf32> to vector<8x128xf32>
    %993 = vector.extract_strided_slice %990 {offsets = [0, 0], sizes = [8, 128], strides = [1, 1]} : vector<8x384xf32> to vector<8x128xf32>
    %994 = arith.addf %992, %993 : vector<8x128xf32>
    %cst_281 = arith.constant 5.000000e-01 : f32
    %995 = vector.broadcast %cst_281 : f32 to vector<8x128xf32>
    %996 = arith.mulf %995, %994 : vector<8x128xf32>
    %997 = math.tanh %996 : vector<8x128xf32>
    %cst_282 = arith.constant 5.000000e-01 : f32
    %998 = vector.broadcast %cst_282 : f32 to vector<8x128xf32>
    %999 = arith.mulf %998, %997 : vector<8x128xf32>
    %cst_283 = arith.constant 5.000000e-01 : f32
    %1000 = vector.broadcast %cst_283 : f32 to vector<8x128xf32>
    %1001 = arith.addf %999, %1000 : vector<8x128xf32>
    %1002 = vector.extract_strided_slice %985 {offsets = [0, 128], sizes = [8, 128], strides = [1, 1]} : vector<8x384xf32> to vector<8x128xf32>
    %1003 = vector.extract_strided_slice %990 {offsets = [0, 128], sizes = [8, 128], strides = [1, 1]} : vector<8x384xf32> to vector<8x128xf32>
    %1004 = arith.addf %1002, %1003 : vector<8x128xf32>
    %cst_284 = arith.constant 5.000000e-01 : f32
    %1005 = vector.broadcast %cst_284 : f32 to vector<8x128xf32>
    %1006 = arith.mulf %1005, %1004 : vector<8x128xf32>
    %1007 = math.tanh %1006 : vector<8x128xf32>
    %cst_285 = arith.constant 5.000000e-01 : f32
    %1008 = vector.broadcast %cst_285 : f32 to vector<8x128xf32>
    %1009 = arith.mulf %1008, %1007 : vector<8x128xf32>
    %cst_286 = arith.constant 5.000000e-01 : f32
    %1010 = vector.broadcast %cst_286 : f32 to vector<8x128xf32>
    %1011 = arith.addf %1009, %1010 : vector<8x128xf32>
    %1012 = vector.extract_strided_slice %985 {offsets = [0, 256], sizes = [8, 128], strides = [1, 1]} : vector<8x384xf32> to vector<8x128xf32>
    %1013 = vector.extract_strided_slice %990 {offsets = [0, 256], sizes = [8, 128], strides = [1, 1]} : vector<8x384xf32> to vector<8x128xf32>
    %1014 = vector.broadcast %8 : vector<1x128xf32> to vector<8x128xf32>
    %1015 = arith.addf %1013, %1014 : vector<8x128xf32>
    %1016 = arith.mulf %1001, %1015 : vector<8x128xf32>
    %1017 = arith.addf %1012, %1016 : vector<8x128xf32>
    %1018 = math.tanh %1017 : vector<8x128xf32>
    %cst_287 = arith.constant 1.000000e+00 : f32
    %1019 = vector.broadcast %cst_287 : f32 to vector<8x128xf32>
    %1020 = arith.subf %1019, %1011 : vector<8x128xf32>
    %1021 = arith.mulf %1020, %1018 : vector<8x128xf32>
    %1022 = arith.mulf %1011, %991 : vector<8x128xf32>
    %1023 = arith.addf %1021, %1022 : vector<8x128xf32>
    %1024 = vector.extract_strided_slice %989 {offsets = [0, 384], sizes = [8, 384], strides = [1, 1]} : vector<8x768xf32> to vector<8x384xf32>
    %1025 = vector.extract_strided_slice %978 {offsets = [0, 128], sizes = [8, 128], strides = [1, 1]} : vector<8x256xf32> to vector<8x128xf32>
    %1026 = vector.extract_strided_slice %987 {offsets = [0, 0], sizes = [8, 128], strides = [1, 1]} : vector<8x384xf32> to vector<8x128xf32>
    %1027 = vector.extract_strided_slice %1024 {offsets = [0, 0], sizes = [8, 128], strides = [1, 1]} : vector<8x384xf32> to vector<8x128xf32>
    %1028 = arith.addf %1026, %1027 : vector<8x128xf32>
    %cst_288 = arith.constant 5.000000e-01 : f32
    %1029 = vector.broadcast %cst_288 : f32 to vector<8x128xf32>
    %1030 = arith.mulf %1029, %1028 : vector<8x128xf32>
    %1031 = math.tanh %1030 : vector<8x128xf32>
    %cst_289 = arith.constant 5.000000e-01 : f32
    %1032 = vector.broadcast %cst_289 : f32 to vector<8x128xf32>
    %1033 = arith.mulf %1032, %1031 : vector<8x128xf32>
    %cst_290 = arith.constant 5.000000e-01 : f32
    %1034 = vector.broadcast %cst_290 : f32 to vector<8x128xf32>
    %1035 = arith.addf %1033, %1034 : vector<8x128xf32>
    %1036 = vector.extract_strided_slice %987 {offsets = [0, 128], sizes = [8, 128], strides = [1, 1]} : vector<8x384xf32> to vector<8x128xf32>
    %1037 = vector.extract_strided_slice %1024 {offsets = [0, 128], sizes = [8, 128], strides = [1, 1]} : vector<8x384xf32> to vector<8x128xf32>
    %1038 = arith.addf %1036, %1037 : vector<8x128xf32>
    %cst_291 = arith.constant 5.000000e-01 : f32
    %1039 = vector.broadcast %cst_291 : f32 to vector<8x128xf32>
    %1040 = arith.mulf %1039, %1038 : vector<8x128xf32>
    %1041 = math.tanh %1040 : vector<8x128xf32>
    %cst_292 = arith.constant 5.000000e-01 : f32
    %1042 = vector.broadcast %cst_292 : f32 to vector<8x128xf32>
    %1043 = arith.mulf %1042, %1041 : vector<8x128xf32>
    %cst_293 = arith.constant 5.000000e-01 : f32
    %1044 = vector.broadcast %cst_293 : f32 to vector<8x128xf32>
    %1045 = arith.addf %1043, %1044 : vector<8x128xf32>
    %1046 = vector.extract_strided_slice %987 {offsets = [0, 256], sizes = [8, 128], strides = [1, 1]} : vector<8x384xf32> to vector<8x128xf32>
    %1047 = vector.extract_strided_slice %1024 {offsets = [0, 256], sizes = [8, 128], strides = [1, 1]} : vector<8x384xf32> to vector<8x128xf32>
    %1048 = vector.broadcast %9 : vector<1x128xf32> to vector<8x128xf32>
    %1049 = arith.addf %1047, %1048 : vector<8x128xf32>
    %1050 = arith.mulf %1035, %1049 : vector<8x128xf32>
    %1051 = arith.addf %1046, %1050 : vector<8x128xf32>
    %1052 = math.tanh %1051 : vector<8x128xf32>
    %cst_294 = arith.constant 1.000000e+00 : f32
    %1053 = vector.broadcast %cst_294 : f32 to vector<8x128xf32>
    %1054 = arith.subf %1053, %1045 : vector<8x128xf32>
    %1055 = arith.mulf %1054, %1052 : vector<8x128xf32>
    %1056 = arith.mulf %1045, %1025 : vector<8x128xf32>
    %1057 = arith.addf %1055, %1056 : vector<8x128xf32>
    %1058 = arith.index_cast %c11_i32 : i32 to index
    %c0_295 = arith.constant 0 : index
    %c0_296 = arith.constant 0 : index
    %1059 = vector.load %arg8[%1058, %c0_295, %c0_296] : memref<16x8x256xf32, #tpu.memory_space<vmem>>, vector<1x8x128xf32>
    %1060 = vector.shape_cast %1059 : vector<1x8x128xf32> to vector<8x128xf32>
    %1061 = vector.shape_cast %1023 : vector<8x128xf32> to vector<1x8x128xf32>
    tpu.vector_store %arg8[%1058, %c0_295, %c0_296], %1061 {strides = array<i32>} : memref<16x8x256xf32, #tpu.memory_space<vmem>>, vector<1x8x128xf32>,
    %1062 = arith.index_cast %979 : i32 to index
    %c0_297 = arith.constant 0 : index
    %c128_298 = arith.constant 128 : index
    %1063 = vector.load %arg8[%1062, %c0_297, %c128_298] : memref<16x8x256xf32, #tpu.memory_space<vmem>>, vector<1x8x128xf32>
    %1064 = vector.shape_cast %1063 : vector<1x8x128xf32> to vector<8x128xf32>
    %1065 = vector.shape_cast %1057 : vector<8x128xf32> to vector<1x8x128xf32>
    tpu.vector_store %arg8[%1062, %c0_297, %c128_298], %1065 {strides = array<i32>} : memref<16x8x256xf32, #tpu.memory_space<vmem>>, vector<1x8x128xf32>,
    %1066 = tpu.concatenate %1023, %1057 in 1 : vector<8x128xf32>, vector<8x128xf32> -> vector<8x256xf32>
    %c12_i32 = arith.constant 12 : i32
    %c15_i32_299 = arith.constant 15 : i32
    %1067 = arith.subi %c15_i32_299, %c12_i32 : i32
    %c8_i32_300 = arith.constant 8 : i32
    %1068 = arith.muli %c12_i32, %c8_i32_300 : i32
    %1069 = tpu.assume_multiple %1068, 8 : i32
    %c8_i32_301 = arith.constant 8 : i32
    %1070 = arith.muli %1067, %c8_i32_301 : i32
    %1071 = tpu.assume_multiple %1070, 8 : i32
    %1072 = arith.index_cast %1069 : i32 to index
    %c0_302 = arith.constant 0 : index
    %1073 = vector.load %arg10[%1072, %c0_302] : memref<128x768xf32, #tpu.memory_space<vmem>>, vector<8x384xf32>
    %1074 = arith.index_cast %1071 : i32 to index
    %c384_303 = arith.constant 384 : index
    %1075 = vector.load %arg10[%1074, %c384_303] : memref<128x768xf32, #tpu.memory_space<vmem>>, vector<8x384xf32>
    %1076 = arith.truncf %1066 : vector<8x256xf32> to vector<8x256xbf16>
    %cst_304 = arith.constant dense<0.000000e+00> : vector<8x768xf32>
    %1077 = tpu.matmul %1076, %7, %cst_304 {dimension_numbers = #tpu.dot_dimension_numbers<[1], [0], [0], [1], [0, 0, 1, 1], [], []>} : vector<8x256xbf16>, vector<256x768xbf16>, vector<8x768xf32> -> vector<8x768xf32>
    %1078 = vector.extract_strided_slice %1077 {offsets = [0, 0], sizes = [8, 384], strides = [1, 1]} : vector<8x768xf32> to vector<8x384xf32>
    %1079 = vector.extract_strided_slice %1066 {offsets = [0, 0], sizes = [8, 128], strides = [1, 1]} : vector<8x256xf32> to vector<8x128xf32>
    %1080 = vector.extract_strided_slice %1073 {offsets = [0, 0], sizes = [8, 128], strides = [1, 1]} : vector<8x384xf32> to vector<8x128xf32>
    %1081 = vector.extract_strided_slice %1078 {offsets = [0, 0], sizes = [8, 128], strides = [1, 1]} : vector<8x384xf32> to vector<8x128xf32>
    %1082 = arith.addf %1080, %1081 : vector<8x128xf32>
    %cst_305 = arith.constant 5.000000e-01 : f32
    %1083 = vector.broadcast %cst_305 : f32 to vector<8x128xf32>
    %1084 = arith.mulf %1083, %1082 : vector<8x128xf32>
    %1085 = math.tanh %1084 : vector<8x128xf32>
    %cst_306 = arith.constant 5.000000e-01 : f32
    %1086 = vector.broadcast %cst_306 : f32 to vector<8x128xf32>
    %1087 = arith.mulf %1086, %1085 : vector<8x128xf32>
    %cst_307 = arith.constant 5.000000e-01 : f32
    %1088 = vector.broadcast %cst_307 : f32 to vector<8x128xf32>
    %1089 = arith.addf %1087, %1088 : vector<8x128xf32>
    %1090 = vector.extract_strided_slice %1073 {offsets = [0, 128], sizes = [8, 128], strides = [1, 1]} : vector<8x384xf32> to vector<8x128xf32>
    %1091 = vector.extract_strided_slice %1078 {offsets = [0, 128], sizes = [8, 128], strides = [1, 1]} : vector<8x384xf32> to vector<8x128xf32>
    %1092 = arith.addf %1090, %1091 : vector<8x128xf32>
    %cst_308 = arith.constant 5.000000e-01 : f32
    %1093 = vector.broadcast %cst_308 : f32 to vector<8x128xf32>
    %1094 = arith.mulf %1093, %1092 : vector<8x128xf32>
    %1095 = math.tanh %1094 : vector<8x128xf32>
    %cst_309 = arith.constant 5.000000e-01 : f32
    %1096 = vector.broadcast %cst_309 : f32 to vector<8x128xf32>
    %1097 = arith.mulf %1096, %1095 : vector<8x128xf32>
    %cst_310 = arith.constant 5.000000e-01 : f32
    %1098 = vector.broadcast %cst_310 : f32 to vector<8x128xf32>
    %1099 = arith.addf %1097, %1098 : vector<8x128xf32>
    %1100 = vector.extract_strided_slice %1073 {offsets = [0, 256], sizes = [8, 128], strides = [1, 1]} : vector<8x384xf32> to vector<8x128xf32>
    %1101 = vector.extract_strided_slice %1078 {offsets = [0, 256], sizes = [8, 128], strides = [1, 1]} : vector<8x384xf32> to vector<8x128xf32>
    %1102 = vector.broadcast %8 : vector<1x128xf32> to vector<8x128xf32>
    %1103 = arith.addf %1101, %1102 : vector<8x128xf32>
    %1104 = arith.mulf %1089, %1103 : vector<8x128xf32>
    %1105 = arith.addf %1100, %1104 : vector<8x128xf32>
    %1106 = math.tanh %1105 : vector<8x128xf32>
    %cst_311 = arith.constant 1.000000e+00 : f32
    %1107 = vector.broadcast %cst_311 : f32 to vector<8x128xf32>
    %1108 = arith.subf %1107, %1099 : vector<8x128xf32>
    %1109 = arith.mulf %1108, %1106 : vector<8x128xf32>
    %1110 = arith.mulf %1099, %1079 : vector<8x128xf32>
    %1111 = arith.addf %1109, %1110 : vector<8x128xf32>
    %1112 = vector.extract_strided_slice %1077 {offsets = [0, 384], sizes = [8, 384], strides = [1, 1]} : vector<8x768xf32> to vector<8x384xf32>
    %1113 = vector.extract_strided_slice %1066 {offsets = [0, 128], sizes = [8, 128], strides = [1, 1]} : vector<8x256xf32> to vector<8x128xf32>
    %1114 = vector.extract_strided_slice %1075 {offsets = [0, 0], sizes = [8, 128], strides = [1, 1]} : vector<8x384xf32> to vector<8x128xf32>
    %1115 = vector.extract_strided_slice %1112 {offsets = [0, 0], sizes = [8, 128], strides = [1, 1]} : vector<8x384xf32> to vector<8x128xf32>
    %1116 = arith.addf %1114, %1115 : vector<8x128xf32>
    %cst_312 = arith.constant 5.000000e-01 : f32
    %1117 = vector.broadcast %cst_312 : f32 to vector<8x128xf32>
    %1118 = arith.mulf %1117, %1116 : vector<8x128xf32>
    %1119 = math.tanh %1118 : vector<8x128xf32>
    %cst_313 = arith.constant 5.000000e-01 : f32
    %1120 = vector.broadcast %cst_313 : f32 to vector<8x128xf32>
    %1121 = arith.mulf %1120, %1119 : vector<8x128xf32>
    %cst_314 = arith.constant 5.000000e-01 : f32
    %1122 = vector.broadcast %cst_314 : f32 to vector<8x128xf32>
    %1123 = arith.addf %1121, %1122 : vector<8x128xf32>
    %1124 = vector.extract_strided_slice %1075 {offsets = [0, 128], sizes = [8, 128], strides = [1, 1]} : vector<8x384xf32> to vector<8x128xf32>
    %1125 = vector.extract_strided_slice %1112 {offsets = [0, 128], sizes = [8, 128], strides = [1, 1]} : vector<8x384xf32> to vector<8x128xf32>
    %1126 = arith.addf %1124, %1125 : vector<8x128xf32>
    %cst_315 = arith.constant 5.000000e-01 : f32
    %1127 = vector.broadcast %cst_315 : f32 to vector<8x128xf32>
    %1128 = arith.mulf %1127, %1126 : vector<8x128xf32>
    %1129 = math.tanh %1128 : vector<8x128xf32>
    %cst_316 = arith.constant 5.000000e-01 : f32
    %1130 = vector.broadcast %cst_316 : f32 to vector<8x128xf32>
    %1131 = arith.mulf %1130, %1129 : vector<8x128xf32>
    %cst_317 = arith.constant 5.000000e-01 : f32
    %1132 = vector.broadcast %cst_317 : f32 to vector<8x128xf32>
    %1133 = arith.addf %1131, %1132 : vector<8x128xf32>
    %1134 = vector.extract_strided_slice %1075 {offsets = [0, 256], sizes = [8, 128], strides = [1, 1]} : vector<8x384xf32> to vector<8x128xf32>
    %1135 = vector.extract_strided_slice %1112 {offsets = [0, 256], sizes = [8, 128], strides = [1, 1]} : vector<8x384xf32> to vector<8x128xf32>
    %1136 = vector.broadcast %9 : vector<1x128xf32> to vector<8x128xf32>
    %1137 = arith.addf %1135, %1136 : vector<8x128xf32>
    %1138 = arith.mulf %1123, %1137 : vector<8x128xf32>
    %1139 = arith.addf %1134, %1138 : vector<8x128xf32>
    %1140 = math.tanh %1139 : vector<8x128xf32>
    %cst_318 = arith.constant 1.000000e+00 : f32
    %1141 = vector.broadcast %cst_318 : f32 to vector<8x128xf32>
    %1142 = arith.subf %1141, %1133 : vector<8x128xf32>
    %1143 = arith.mulf %1142, %1140 : vector<8x128xf32>
    %1144 = arith.mulf %1133, %1113 : vector<8x128xf32>
    %1145 = arith.addf %1143, %1144 : vector<8x128xf32>
    %1146 = arith.index_cast %c12_i32 : i32 to index
    %c0_319 = arith.constant 0 : index
    %c0_320 = arith.constant 0 : index
    %1147 = vector.load %arg8[%1146, %c0_319, %c0_320] : memref<16x8x256xf32, #tpu.memory_space<vmem>>, vector<1x8x128xf32>
    %1148 = vector.shape_cast %1147 : vector<1x8x128xf32> to vector<8x128xf32>
    %1149 = vector.shape_cast %1111 : vector<8x128xf32> to vector<1x8x128xf32>
    tpu.vector_store %arg8[%1146, %c0_319, %c0_320], %1149 {strides = array<i32>} : memref<16x8x256xf32, #tpu.memory_space<vmem>>, vector<1x8x128xf32>,
    %1150 = arith.index_cast %1067 : i32 to index
    %c0_321 = arith.constant 0 : index
    %c128_322 = arith.constant 128 : index
    %1151 = vector.load %arg8[%1150, %c0_321, %c128_322] : memref<16x8x256xf32, #tpu.memory_space<vmem>>, vector<1x8x128xf32>
    %1152 = vector.shape_cast %1151 : vector<1x8x128xf32> to vector<8x128xf32>
    %1153 = vector.shape_cast %1145 : vector<8x128xf32> to vector<1x8x128xf32>
    tpu.vector_store %arg8[%1150, %c0_321, %c128_322], %1153 {strides = array<i32>} : memref<16x8x256xf32, #tpu.memory_space<vmem>>, vector<1x8x128xf32>,
    %1154 = tpu.concatenate %1111, %1145 in 1 : vector<8x128xf32>, vector<8x128xf32> -> vector<8x256xf32>
    %c13_i32 = arith.constant 13 : i32
    %c15_i32_323 = arith.constant 15 : i32
    %1155 = arith.subi %c15_i32_323, %c13_i32 : i32
    %c8_i32_324 = arith.constant 8 : i32
    %1156 = arith.muli %c13_i32, %c8_i32_324 : i32
    %1157 = tpu.assume_multiple %1156, 8 : i32
    %c8_i32_325 = arith.constant 8 : i32
    %1158 = arith.muli %1155, %c8_i32_325 : i32
    %1159 = tpu.assume_multiple %1158, 8 : i32
    %1160 = arith.index_cast %1157 : i32 to index
    %c0_326 = arith.constant 0 : index
    %1161 = vector.load %arg10[%1160, %c0_326] : memref<128x768xf32, #tpu.memory_space<vmem>>, vector<8x384xf32>
    %1162 = arith.index_cast %1159 : i32 to index
    %c384_327 = arith.constant 384 : index
    %1163 = vector.load %arg10[%1162, %c384_327] : memref<128x768xf32, #tpu.memory_space<vmem>>, vector<8x384xf32>
    %1164 = arith.truncf %1154 : vector<8x256xf32> to vector<8x256xbf16>
    %cst_328 = arith.constant dense<0.000000e+00> : vector<8x768xf32>
    %1165 = tpu.matmul %1164, %7, %cst_328 {dimension_numbers = #tpu.dot_dimension_numbers<[1], [0], [0], [1], [0, 0, 1, 1], [], []>} : vector<8x256xbf16>, vector<256x768xbf16>, vector<8x768xf32> -> vector<8x768xf32>
    %1166 = vector.extract_strided_slice %1165 {offsets = [0, 0], sizes = [8, 384], strides = [1, 1]} : vector<8x768xf32> to vector<8x384xf32>
    %1167 = vector.extract_strided_slice %1154 {offsets = [0, 0], sizes = [8, 128], strides = [1, 1]} : vector<8x256xf32> to vector<8x128xf32>
    %1168 = vector.extract_strided_slice %1161 {offsets = [0, 0], sizes = [8, 128], strides = [1, 1]} : vector<8x384xf32> to vector<8x128xf32>
    %1169 = vector.extract_strided_slice %1166 {offsets = [0, 0], sizes = [8, 128], strides = [1, 1]} : vector<8x384xf32> to vector<8x128xf32>
    %1170 = arith.addf %1168, %1169 : vector<8x128xf32>
    %cst_329 = arith.constant 5.000000e-01 : f32
    %1171 = vector.broadcast %cst_329 : f32 to vector<8x128xf32>
    %1172 = arith.mulf %1171, %1170 : vector<8x128xf32>
    %1173 = math.tanh %1172 : vector<8x128xf32>
    %cst_330 = arith.constant 5.000000e-01 : f32
    %1174 = vector.broadcast %cst_330 : f32 to vector<8x128xf32>
    %1175 = arith.mulf %1174, %1173 : vector<8x128xf32>
    %cst_331 = arith.constant 5.000000e-01 : f32
    %1176 = vector.broadcast %cst_331 : f32 to vector<8x128xf32>
    %1177 = arith.addf %1175, %1176 : vector<8x128xf32>
    %1178 = vector.extract_strided_slice %1161 {offsets = [0, 128], sizes = [8, 128], strides = [1, 1]} : vector<8x384xf32> to vector<8x128xf32>
    %1179 = vector.extract_strided_slice %1166 {offsets = [0, 128], sizes = [8, 128], strides = [1, 1]} : vector<8x384xf32> to vector<8x128xf32>
    %1180 = arith.addf %1178, %1179 : vector<8x128xf32>
    %cst_332 = arith.constant 5.000000e-01 : f32
    %1181 = vector.broadcast %cst_332 : f32 to vector<8x128xf32>
    %1182 = arith.mulf %1181, %1180 : vector<8x128xf32>
    %1183 = math.tanh %1182 : vector<8x128xf32>
    %cst_333 = arith.constant 5.000000e-01 : f32
    %1184 = vector.broadcast %cst_333 : f32 to vector<8x128xf32>
    %1185 = arith.mulf %1184, %1183 : vector<8x128xf32>
    %cst_334 = arith.constant 5.000000e-01 : f32
    %1186 = vector.broadcast %cst_334 : f32 to vector<8x128xf32>
    %1187 = arith.addf %1185, %1186 : vector<8x128xf32>
    %1188 = vector.extract_strided_slice %1161 {offsets = [0, 256], sizes = [8, 128], strides = [1, 1]} : vector<8x384xf32> to vector<8x128xf32>
    %1189 = vector.extract_strided_slice %1166 {offsets = [0, 256], sizes = [8, 128], strides = [1, 1]} : vector<8x384xf32> to vector<8x128xf32>
    %1190 = vector.broadcast %8 : vector<1x128xf32> to vector<8x128xf32>
    %1191 = arith.addf %1189, %1190 : vector<8x128xf32>
    %1192 = arith.mulf %1177, %1191 : vector<8x128xf32>
    %1193 = arith.addf %1188, %1192 : vector<8x128xf32>
    %1194 = math.tanh %1193 : vector<8x128xf32>
    %cst_335 = arith.constant 1.000000e+00 : f32
    %1195 = vector.broadcast %cst_335 : f32 to vector<8x128xf32>
    %1196 = arith.subf %1195, %1187 : vector<8x128xf32>
    %1197 = arith.mulf %1196, %1194 : vector<8x128xf32>
    %1198 = arith.mulf %1187, %1167 : vector<8x128xf32>
    %1199 = arith.addf %1197, %1198 : vector<8x128xf32>
    %1200 = vector.extract_strided_slice %1165 {offsets = [0, 384], sizes = [8, 384], strides = [1, 1]} : vector<8x768xf32> to vector<8x384xf32>
    %1201 = vector.extract_strided_slice %1154 {offsets = [0, 128], sizes = [8, 128], strides = [1, 1]} : vector<8x256xf32> to vector<8x128xf32>
    %1202 = vector.extract_strided_slice %1163 {offsets = [0, 0], sizes = [8, 128], strides = [1, 1]} : vector<8x384xf32> to vector<8x128xf32>
    %1203 = vector.extract_strided_slice %1200 {offsets = [0, 0], sizes = [8, 128], strides = [1, 1]} : vector<8x384xf32> to vector<8x128xf32>
    %1204 = arith.addf %1202, %1203 : vector<8x128xf32>
    %cst_336 = arith.constant 5.000000e-01 : f32
    %1205 = vector.broadcast %cst_336 : f32 to vector<8x128xf32>
    %1206 = arith.mulf %1205, %1204 : vector<8x128xf32>
    %1207 = math.tanh %1206 : vector<8x128xf32>
    %cst_337 = arith.constant 5.000000e-01 : f32
    %1208 = vector.broadcast %cst_337 : f32 to vector<8x128xf32>
    %1209 = arith.mulf %1208, %1207 : vector<8x128xf32>
    %cst_338 = arith.constant 5.000000e-01 : f32
    %1210 = vector.broadcast %cst_338 : f32 to vector<8x128xf32>
    %1211 = arith.addf %1209, %1210 : vector<8x128xf32>
    %1212 = vector.extract_strided_slice %1163 {offsets = [0, 128], sizes = [8, 128], strides = [1, 1]} : vector<8x384xf32> to vector<8x128xf32>
    %1213 = vector.extract_strided_slice %1200 {offsets = [0, 128], sizes = [8, 128], strides = [1, 1]} : vector<8x384xf32> to vector<8x128xf32>
    %1214 = arith.addf %1212, %1213 : vector<8x128xf32>
    %cst_339 = arith.constant 5.000000e-01 : f32
    %1215 = vector.broadcast %cst_339 : f32 to vector<8x128xf32>
    %1216 = arith.mulf %1215, %1214 : vector<8x128xf32>
    %1217 = math.tanh %1216 : vector<8x128xf32>
    %cst_340 = arith.constant 5.000000e-01 : f32
    %1218 = vector.broadcast %cst_340 : f32 to vector<8x128xf32>
    %1219 = arith.mulf %1218, %1217 : vector<8x128xf32>
    %cst_341 = arith.constant 5.000000e-01 : f32
    %1220 = vector.broadcast %cst_341 : f32 to vector<8x128xf32>
    %1221 = arith.addf %1219, %1220 : vector<8x128xf32>
    %1222 = vector.extract_strided_slice %1163 {offsets = [0, 256], sizes = [8, 128], strides = [1, 1]} : vector<8x384xf32> to vector<8x128xf32>
    %1223 = vector.extract_strided_slice %1200 {offsets = [0, 256], sizes = [8, 128], strides = [1, 1]} : vector<8x384xf32> to vector<8x128xf32>
    %1224 = vector.broadcast %9 : vector<1x128xf32> to vector<8x128xf32>
    %1225 = arith.addf %1223, %1224 : vector<8x128xf32>
    %1226 = arith.mulf %1211, %1225 : vector<8x128xf32>
    %1227 = arith.addf %1222, %1226 : vector<8x128xf32>
    %1228 = math.tanh %1227 : vector<8x128xf32>
    %cst_342 = arith.constant 1.000000e+00 : f32
    %1229 = vector.broadcast %cst_342 : f32 to vector<8x128xf32>
    %1230 = arith.subf %1229, %1221 : vector<8x128xf32>
    %1231 = arith.mulf %1230, %1228 : vector<8x128xf32>
    %1232 = arith.mulf %1221, %1201 : vector<8x128xf32>
    %1233 = arith.addf %1231, %1232 : vector<8x128xf32>
    %1234 = arith.index_cast %c13_i32 : i32 to index
    %c0_343 = arith.constant 0 : index
    %c0_344 = arith.constant 0 : index
    %1235 = vector.load %arg8[%1234, %c0_343, %c0_344] : memref<16x8x256xf32, #tpu.memory_space<vmem>>, vector<1x8x128xf32>
    %1236 = vector.shape_cast %1235 : vector<1x8x128xf32> to vector<8x128xf32>
    %1237 = vector.shape_cast %1199 : vector<8x128xf32> to vector<1x8x128xf32>
    tpu.vector_store %arg8[%1234, %c0_343, %c0_344], %1237 {strides = array<i32>} : memref<16x8x256xf32, #tpu.memory_space<vmem>>, vector<1x8x128xf32>,
    %1238 = arith.index_cast %1155 : i32 to index
    %c0_345 = arith.constant 0 : index
    %c128_346 = arith.constant 128 : index
    %1239 = vector.load %arg8[%1238, %c0_345, %c128_346] : memref<16x8x256xf32, #tpu.memory_space<vmem>>, vector<1x8x128xf32>
    %1240 = vector.shape_cast %1239 : vector<1x8x128xf32> to vector<8x128xf32>
    %1241 = vector.shape_cast %1233 : vector<8x128xf32> to vector<1x8x128xf32>
    tpu.vector_store %arg8[%1238, %c0_345, %c128_346], %1241 {strides = array<i32>} : memref<16x8x256xf32, #tpu.memory_space<vmem>>, vector<1x8x128xf32>,
    %1242 = tpu.concatenate %1199, %1233 in 1 : vector<8x128xf32>, vector<8x128xf32> -> vector<8x256xf32>
    %c14_i32 = arith.constant 14 : i32
    %c15_i32_347 = arith.constant 15 : i32
    %1243 = arith.subi %c15_i32_347, %c14_i32 : i32
    %c8_i32_348 = arith.constant 8 : i32
    %1244 = arith.muli %c14_i32, %c8_i32_348 : i32
    %1245 = tpu.assume_multiple %1244, 8 : i32
    %c8_i32_349 = arith.constant 8 : i32
    %1246 = arith.muli %1243, %c8_i32_349 : i32
    %1247 = tpu.assume_multiple %1246, 8 : i32
    %1248 = arith.index_cast %1245 : i32 to index
    %c0_350 = arith.constant 0 : index
    %1249 = vector.load %arg10[%1248, %c0_350] : memref<128x768xf32, #tpu.memory_space<vmem>>, vector<8x384xf32>
    %1250 = arith.index_cast %1247 : i32 to index
    %c384_351 = arith.constant 384 : index
    %1251 = vector.load %arg10[%1250, %c384_351] : memref<128x768xf32, #tpu.memory_space<vmem>>, vector<8x384xf32>
    %1252 = arith.truncf %1242 : vector<8x256xf32> to vector<8x256xbf16>
    %cst_352 = arith.constant dense<0.000000e+00> : vector<8x768xf32>
    %1253 = tpu.matmul %1252, %7, %cst_352 {dimension_numbers = #tpu.dot_dimension_numbers<[1], [0], [0], [1], [0, 0, 1, 1], [], []>} : vector<8x256xbf16>, vector<256x768xbf16>, vector<8x768xf32> -> vector<8x768xf32>
    %1254 = vector.extract_strided_slice %1253 {offsets = [0, 0], sizes = [8, 384], strides = [1, 1]} : vector<8x768xf32> to vector<8x384xf32>
    %1255 = vector.extract_strided_slice %1242 {offsets = [0, 0], sizes = [8, 128], strides = [1, 1]} : vector<8x256xf32> to vector<8x128xf32>
    %1256 = vector.extract_strided_slice %1249 {offsets = [0, 0], sizes = [8, 128], strides = [1, 1]} : vector<8x384xf32> to vector<8x128xf32>
    %1257 = vector.extract_strided_slice %1254 {offsets = [0, 0], sizes = [8, 128], strides = [1, 1]} : vector<8x384xf32> to vector<8x128xf32>
    %1258 = arith.addf %1256, %1257 : vector<8x128xf32>
    %cst_353 = arith.constant 5.000000e-01 : f32
    %1259 = vector.broadcast %cst_353 : f32 to vector<8x128xf32>
    %1260 = arith.mulf %1259, %1258 : vector<8x128xf32>
    %1261 = math.tanh %1260 : vector<8x128xf32>
    %cst_354 = arith.constant 5.000000e-01 : f32
    %1262 = vector.broadcast %cst_354 : f32 to vector<8x128xf32>
    %1263 = arith.mulf %1262, %1261 : vector<8x128xf32>
    %cst_355 = arith.constant 5.000000e-01 : f32
    %1264 = vector.broadcast %cst_355 : f32 to vector<8x128xf32>
    %1265 = arith.addf %1263, %1264 : vector<8x128xf32>
    %1266 = vector.extract_strided_slice %1249 {offsets = [0, 128], sizes = [8, 128], strides = [1, 1]} : vector<8x384xf32> to vector<8x128xf32>
    %1267 = vector.extract_strided_slice %1254 {offsets = [0, 128], sizes = [8, 128], strides = [1, 1]} : vector<8x384xf32> to vector<8x128xf32>
    %1268 = arith.addf %1266, %1267 : vector<8x128xf32>
    %cst_356 = arith.constant 5.000000e-01 : f32
    %1269 = vector.broadcast %cst_356 : f32 to vector<8x128xf32>
    %1270 = arith.mulf %1269, %1268 : vector<8x128xf32>
    %1271 = math.tanh %1270 : vector<8x128xf32>
    %cst_357 = arith.constant 5.000000e-01 : f32
    %1272 = vector.broadcast %cst_357 : f32 to vector<8x128xf32>
    %1273 = arith.mulf %1272, %1271 : vector<8x128xf32>
    %cst_358 = arith.constant 5.000000e-01 : f32
    %1274 = vector.broadcast %cst_358 : f32 to vector<8x128xf32>
    %1275 = arith.addf %1273, %1274 : vector<8x128xf32>
    %1276 = vector.extract_strided_slice %1249 {offsets = [0, 256], sizes = [8, 128], strides = [1, 1]} : vector<8x384xf32> to vector<8x128xf32>
    %1277 = vector.extract_strided_slice %1254 {offsets = [0, 256], sizes = [8, 128], strides = [1, 1]} : vector<8x384xf32> to vector<8x128xf32>
    %1278 = vector.broadcast %8 : vector<1x128xf32> to vector<8x128xf32>
    %1279 = arith.addf %1277, %1278 : vector<8x128xf32>
    %1280 = arith.mulf %1265, %1279 : vector<8x128xf32>
    %1281 = arith.addf %1276, %1280 : vector<8x128xf32>
    %1282 = math.tanh %1281 : vector<8x128xf32>
    %cst_359 = arith.constant 1.000000e+00 : f32
    %1283 = vector.broadcast %cst_359 : f32 to vector<8x128xf32>
    %1284 = arith.subf %1283, %1275 : vector<8x128xf32>
    %1285 = arith.mulf %1284, %1282 : vector<8x128xf32>
    %1286 = arith.mulf %1275, %1255 : vector<8x128xf32>
    %1287 = arith.addf %1285, %1286 : vector<8x128xf32>
    %1288 = vector.extract_strided_slice %1253 {offsets = [0, 384], sizes = [8, 384], strides = [1, 1]} : vector<8x768xf32> to vector<8x384xf32>
    %1289 = vector.extract_strided_slice %1242 {offsets = [0, 128], sizes = [8, 128], strides = [1, 1]} : vector<8x256xf32> to vector<8x128xf32>
    %1290 = vector.extract_strided_slice %1251 {offsets = [0, 0], sizes = [8, 128], strides = [1, 1]} : vector<8x384xf32> to vector<8x128xf32>
    %1291 = vector.extract_strided_slice %1288 {offsets = [0, 0], sizes = [8, 128], strides = [1, 1]} : vector<8x384xf32> to vector<8x128xf32>
    %1292 = arith.addf %1290, %1291 : vector<8x128xf32>
    %cst_360 = arith.constant 5.000000e-01 : f32
    %1293 = vector.broadcast %cst_360 : f32 to vector<8x128xf32>
    %1294 = arith.mulf %1293, %1292 : vector<8x128xf32>
    %1295 = math.tanh %1294 : vector<8x128xf32>
    %cst_361 = arith.constant 5.000000e-01 : f32
    %1296 = vector.broadcast %cst_361 : f32 to vector<8x128xf32>
    %1297 = arith.mulf %1296, %1295 : vector<8x128xf32>
    %cst_362 = arith.constant 5.000000e-01 : f32
    %1298 = vector.broadcast %cst_362 : f32 to vector<8x128xf32>
    %1299 = arith.addf %1297, %1298 : vector<8x128xf32>
    %1300 = vector.extract_strided_slice %1251 {offsets = [0, 128], sizes = [8, 128], strides = [1, 1]} : vector<8x384xf32> to vector<8x128xf32>
    %1301 = vector.extract_strided_slice %1288 {offsets = [0, 128], sizes = [8, 128], strides = [1, 1]} : vector<8x384xf32> to vector<8x128xf32>
    %1302 = arith.addf %1300, %1301 : vector<8x128xf32>
    %cst_363 = arith.constant 5.000000e-01 : f32
    %1303 = vector.broadcast %cst_363 : f32 to vector<8x128xf32>
    %1304 = arith.mulf %1303, %1302 : vector<8x128xf32>
    %1305 = math.tanh %1304 : vector<8x128xf32>
    %cst_364 = arith.constant 5.000000e-01 : f32
    %1306 = vector.broadcast %cst_364 : f32 to vector<8x128xf32>
    %1307 = arith.mulf %1306, %1305 : vector<8x128xf32>
    %cst_365 = arith.constant 5.000000e-01 : f32
    %1308 = vector.broadcast %cst_365 : f32 to vector<8x128xf32>
    %1309 = arith.addf %1307, %1308 : vector<8x128xf32>
    %1310 = vector.extract_strided_slice %1251 {offsets = [0, 256], sizes = [8, 128], strides = [1, 1]} : vector<8x384xf32> to vector<8x128xf32>
    %1311 = vector.extract_strided_slice %1288 {offsets = [0, 256], sizes = [8, 128], strides = [1, 1]} : vector<8x384xf32> to vector<8x128xf32>
    %1312 = vector.broadcast %9 : vector<1x128xf32> to vector<8x128xf32>
    %1313 = arith.addf %1311, %1312 : vector<8x128xf32>
    %1314 = arith.mulf %1299, %1313 : vector<8x128xf32>
    %1315 = arith.addf %1310, %1314 : vector<8x128xf32>
    %1316 = math.tanh %1315 : vector<8x128xf32>
    %cst_366 = arith.constant 1.000000e+00 : f32
    %1317 = vector.broadcast %cst_366 : f32 to vector<8x128xf32>
    %1318 = arith.subf %1317, %1309 : vector<8x128xf32>
    %1319 = arith.mulf %1318, %1316 : vector<8x128xf32>
    %1320 = arith.mulf %1309, %1289 : vector<8x128xf32>
    %1321 = arith.addf %1319, %1320 : vector<8x128xf32>
    %1322 = arith.index_cast %c14_i32 : i32 to index
    %c0_367 = arith.constant 0 : index
    %c0_368 = arith.constant 0 : index
    %1323 = vector.load %arg8[%1322, %c0_367, %c0_368] : memref<16x8x256xf32, #tpu.memory_space<vmem>>, vector<1x8x128xf32>
    %1324 = vector.shape_cast %1323 : vector<1x8x128xf32> to vector<8x128xf32>
    %1325 = vector.shape_cast %1287 : vector<8x128xf32> to vector<1x8x128xf32>
    tpu.vector_store %arg8[%1322, %c0_367, %c0_368], %1325 {strides = array<i32>} : memref<16x8x256xf32, #tpu.memory_space<vmem>>, vector<1x8x128xf32>,
    %1326 = arith.index_cast %1243 : i32 to index
    %c0_369 = arith.constant 0 : index
    %c128_370 = arith.constant 128 : index
    %1327 = vector.load %arg8[%1326, %c0_369, %c128_370] : memref<16x8x256xf32, #tpu.memory_space<vmem>>, vector<1x8x128xf32>
    %1328 = vector.shape_cast %1327 : vector<1x8x128xf32> to vector<8x128xf32>
    %1329 = vector.shape_cast %1321 : vector<8x128xf32> to vector<1x8x128xf32>
    tpu.vector_store %arg8[%1326, %c0_369, %c128_370], %1329 {strides = array<i32>} : memref<16x8x256xf32, #tpu.memory_space<vmem>>, vector<1x8x128xf32>,
    %1330 = tpu.concatenate %1287, %1321 in 1 : vector<8x128xf32>, vector<8x128xf32> -> vector<8x256xf32>
    %c15_i32_371 = arith.constant 15 : i32
    %c15_i32_372 = arith.constant 15 : i32
    %1331 = arith.subi %c15_i32_372, %c15_i32_371 : i32
    %c8_i32_373 = arith.constant 8 : i32
    %1332 = arith.muli %c15_i32_371, %c8_i32_373 : i32
    %1333 = tpu.assume_multiple %1332, 8 : i32
    %c8_i32_374 = arith.constant 8 : i32
    %1334 = arith.muli %1331, %c8_i32_374 : i32
    %1335 = tpu.assume_multiple %1334, 8 : i32
    %1336 = arith.index_cast %1333 : i32 to index
    %c0_375 = arith.constant 0 : index
    %1337 = vector.load %arg10[%1336, %c0_375] : memref<128x768xf32, #tpu.memory_space<vmem>>, vector<8x384xf32>
    %1338 = arith.index_cast %1335 : i32 to index
    %c384_376 = arith.constant 384 : index
    %1339 = vector.load %arg10[%1338, %c384_376] : memref<128x768xf32, #tpu.memory_space<vmem>>, vector<8x384xf32>
    %1340 = arith.truncf %1330 : vector<8x256xf32> to vector<8x256xbf16>
    %cst_377 = arith.constant dense<0.000000e+00> : vector<8x768xf32>
    %1341 = tpu.matmul %1340, %7, %cst_377 {dimension_numbers = #tpu.dot_dimension_numbers<[1], [0], [0], [1], [0, 0, 1, 1], [], []>} : vector<8x256xbf16>, vector<256x768xbf16>, vector<8x768xf32> -> vector<8x768xf32>
    %1342 = vector.extract_strided_slice %1341 {offsets = [0, 0], sizes = [8, 384], strides = [1, 1]} : vector<8x768xf32> to vector<8x384xf32>
    %1343 = vector.extract_strided_slice %1330 {offsets = [0, 0], sizes = [8, 128], strides = [1, 1]} : vector<8x256xf32> to vector<8x128xf32>
    %1344 = vector.extract_strided_slice %1337 {offsets = [0, 0], sizes = [8, 128], strides = [1, 1]} : vector<8x384xf32> to vector<8x128xf32>
    %1345 = vector.extract_strided_slice %1342 {offsets = [0, 0], sizes = [8, 128], strides = [1, 1]} : vector<8x384xf32> to vector<8x128xf32>
    %1346 = arith.addf %1344, %1345 : vector<8x128xf32>
    %cst_378 = arith.constant 5.000000e-01 : f32
    %1347 = vector.broadcast %cst_378 : f32 to vector<8x128xf32>
    %1348 = arith.mulf %1347, %1346 : vector<8x128xf32>
    %1349 = math.tanh %1348 : vector<8x128xf32>
    %cst_379 = arith.constant 5.000000e-01 : f32
    %1350 = vector.broadcast %cst_379 : f32 to vector<8x128xf32>
    %1351 = arith.mulf %1350, %1349 : vector<8x128xf32>
    %cst_380 = arith.constant 5.000000e-01 : f32
    %1352 = vector.broadcast %cst_380 : f32 to vector<8x128xf32>
    %1353 = arith.addf %1351, %1352 : vector<8x128xf32>
    %1354 = vector.extract_strided_slice %1337 {offsets = [0, 128], sizes = [8, 128], strides = [1, 1]} : vector<8x384xf32> to vector<8x128xf32>
    %1355 = vector.extract_strided_slice %1342 {offsets = [0, 128], sizes = [8, 128], strides = [1, 1]} : vector<8x384xf32> to vector<8x128xf32>
    %1356 = arith.addf %1354, %1355 : vector<8x128xf32>
    %cst_381 = arith.constant 5.000000e-01 : f32
    %1357 = vector.broadcast %cst_381 : f32 to vector<8x128xf32>
    %1358 = arith.mulf %1357, %1356 : vector<8x128xf32>
    %1359 = math.tanh %1358 : vector<8x128xf32>
    %cst_382 = arith.constant 5.000000e-01 : f32
    %1360 = vector.broadcast %cst_382 : f32 to vector<8x128xf32>
    %1361 = arith.mulf %1360, %1359 : vector<8x128xf32>
    %cst_383 = arith.constant 5.000000e-01 : f32
    %1362 = vector.broadcast %cst_383 : f32 to vector<8x128xf32>
    %1363 = arith.addf %1361, %1362 : vector<8x128xf32>
    %1364 = vector.extract_strided_slice %1337 {offsets = [0, 256], sizes = [8, 128], strides = [1, 1]} : vector<8x384xf32> to vector<8x128xf32>
    %1365 = vector.extract_strided_slice %1342 {offsets = [0, 256], sizes = [8, 128], strides = [1, 1]} : vector<8x384xf32> to vector<8x128xf32>
    %1366 = vector.broadcast %8 : vector<1x128xf32> to vector<8x128xf32>
    %1367 = arith.addf %1365, %1366 : vector<8x128xf32>
    %1368 = arith.mulf %1353, %1367 : vector<8x128xf32>
    %1369 = arith.addf %1364, %1368 : vector<8x128xf32>
    %1370 = math.tanh %1369 : vector<8x128xf32>
    %cst_384 = arith.constant 1.000000e+00 : f32
    %1371 = vector.broadcast %cst_384 : f32 to vector<8x128xf32>
    %1372 = arith.subf %1371, %1363 : vector<8x128xf32>
    %1373 = arith.mulf %1372, %1370 : vector<8x128xf32>
    %1374 = arith.mulf %1363, %1343 : vector<8x128xf32>
    %1375 = arith.addf %1373, %1374 : vector<8x128xf32>
    %1376 = vector.extract_strided_slice %1341 {offsets = [0, 384], sizes = [8, 384], strides = [1, 1]} : vector<8x768xf32> to vector<8x384xf32>
    %1377 = vector.extract_strided_slice %1330 {offsets = [0, 128], sizes = [8, 128], strides = [1, 1]} : vector<8x256xf32> to vector<8x128xf32>
    %1378 = vector.extract_strided_slice %1339 {offsets = [0, 0], sizes = [8, 128], strides = [1, 1]} : vector<8x384xf32> to vector<8x128xf32>
    %1379 = vector.extract_strided_slice %1376 {offsets = [0, 0], sizes = [8, 128], strides = [1, 1]} : vector<8x384xf32> to vector<8x128xf32>
    %1380 = arith.addf %1378, %1379 : vector<8x128xf32>
    %cst_385 = arith.constant 5.000000e-01 : f32
    %1381 = vector.broadcast %cst_385 : f32 to vector<8x128xf32>
    %1382 = arith.mulf %1381, %1380 : vector<8x128xf32>
    %1383 = math.tanh %1382 : vector<8x128xf32>
    %cst_386 = arith.constant 5.000000e-01 : f32
    %1384 = vector.broadcast %cst_386 : f32 to vector<8x128xf32>
    %1385 = arith.mulf %1384, %1383 : vector<8x128xf32>
    %cst_387 = arith.constant 5.000000e-01 : f32
    %1386 = vector.broadcast %cst_387 : f32 to vector<8x128xf32>
    %1387 = arith.addf %1385, %1386 : vector<8x128xf32>
    %1388 = vector.extract_strided_slice %1339 {offsets = [0, 128], sizes = [8, 128], strides = [1, 1]} : vector<8x384xf32> to vector<8x128xf32>
    %1389 = vector.extract_strided_slice %1376 {offsets = [0, 128], sizes = [8, 128], strides = [1, 1]} : vector<8x384xf32> to vector<8x128xf32>
    %1390 = arith.addf %1388, %1389 : vector<8x128xf32>
    %cst_388 = arith.constant 5.000000e-01 : f32
    %1391 = vector.broadcast %cst_388 : f32 to vector<8x128xf32>
    %1392 = arith.mulf %1391, %1390 : vector<8x128xf32>
    %1393 = math.tanh %1392 : vector<8x128xf32>
    %cst_389 = arith.constant 5.000000e-01 : f32
    %1394 = vector.broadcast %cst_389 : f32 to vector<8x128xf32>
    %1395 = arith.mulf %1394, %1393 : vector<8x128xf32>
    %cst_390 = arith.constant 5.000000e-01 : f32
    %1396 = vector.broadcast %cst_390 : f32 to vector<8x128xf32>
    %1397 = arith.addf %1395, %1396 : vector<8x128xf32>
    %1398 = vector.extract_strided_slice %1339 {offsets = [0, 256], sizes = [8, 128], strides = [1, 1]} : vector<8x384xf32> to vector<8x128xf32>
    %1399 = vector.extract_strided_slice %1376 {offsets = [0, 256], sizes = [8, 128], strides = [1, 1]} : vector<8x384xf32> to vector<8x128xf32>
    %1400 = vector.broadcast %9 : vector<1x128xf32> to vector<8x128xf32>
    %1401 = arith.addf %1399, %1400 : vector<8x128xf32>
    %1402 = arith.mulf %1387, %1401 : vector<8x128xf32>
    %1403 = arith.addf %1398, %1402 : vector<8x128xf32>
    %1404 = math.tanh %1403 : vector<8x128xf32>
    %cst_391 = arith.constant 1.000000e+00 : f32
    %1405 = vector.broadcast %cst_391 : f32 to vector<8x128xf32>
    %1406 = arith.subf %1405, %1397 : vector<8x128xf32>
    %1407 = arith.mulf %1406, %1404 : vector<8x128xf32>
    %1408 = arith.mulf %1397, %1377 : vector<8x128xf32>
    %1409 = arith.addf %1407, %1408 : vector<8x128xf32>
    %1410 = arith.index_cast %c15_i32_371 : i32 to index
    %c0_392 = arith.constant 0 : index
    %c0_393 = arith.constant 0 : index
    %1411 = vector.load %arg8[%1410, %c0_392, %c0_393] : memref<16x8x256xf32, #tpu.memory_space<vmem>>, vector<1x8x128xf32>
    %1412 = vector.shape_cast %1411 : vector<1x8x128xf32> to vector<8x128xf32>
    %1413 = vector.shape_cast %1375 : vector<8x128xf32> to vector<1x8x128xf32>
    tpu.vector_store %arg8[%1410, %c0_392, %c0_393], %1413 {strides = array<i32>} : memref<16x8x256xf32, #tpu.memory_space<vmem>>, vector<1x8x128xf32>,
    %1414 = arith.index_cast %1331 : i32 to index
    %c0_394 = arith.constant 0 : index
    %c128_395 = arith.constant 128 : index
    %1415 = vector.load %arg8[%1414, %c0_394, %c128_395] : memref<16x8x256xf32, #tpu.memory_space<vmem>>, vector<1x8x128xf32>
    %1416 = vector.shape_cast %1415 : vector<1x8x128xf32> to vector<8x128xf32>
    %1417 = vector.shape_cast %1409 : vector<8x128xf32> to vector<1x8x128xf32>
    tpu.vector_store %arg8[%1414, %c0_394, %c128_395], %1417 {strides = array<i32>} : memref<16x8x256xf32, #tpu.memory_space<vmem>>, vector<1x8x128xf32>,
    %1418 = tpu.concatenate %1375, %1409 in 1 : vector<8x128xf32>, vector<8x128xf32> -> vector<8x256xf32>
    %c16_i32 = arith.constant 16 : i32
    %1419 = arith.truncf %1418 : vector<8x256xf32> to vector<8x256xbf16>
    %c0_396 = arith.constant 0 : index
    %c0_397 = arith.constant 0 : index
    %1420 = vector.load %arg6[%c0_396, %c0_397] : memref<256x128xbf16, #tpu.memory_space<vmem>>, vector<256x128xbf16>
    %cst_398 = arith.constant dense<0.000000e+00> : vector<8x128xf32>
    %1421 = tpu.matmul %1419, %1420, %cst_398 {dimension_numbers = #tpu.dot_dimension_numbers<[1], [0], [0], [1], [0, 0, 1, 1], [], []>} : vector<8x256xbf16>, vector<256x128xbf16>, vector<8x128xf32> -> vector<8x128xf32>
    %c0_399 = arith.constant 0 : index
    %c0_400 = arith.constant 0 : index
    %1422 = vector.load %arg7[%c0_399, %c0_400] : memref<1x128xf32, #tpu.memory_space<vmem>>, vector<1x128xf32>
    %1423 = vector.broadcast %1422 : vector<1x128xf32> to vector<8x128xf32>
    %1424 = arith.addf %1421, %1423 : vector<8x128xf32>
    %1425 = math.tanh %1424 : vector<8x128xf32>
    %c0_401 = arith.constant 0 : index
    %c0_402 = arith.constant 0 : index
    %1426 = vector.load %arg9[%c0_401, %c0_402] : memref<8x128xf32, #tpu.memory_space<vmem>>, vector<8x128xf32>
    tpu.vector_store %arg9[%c0_401, %c0_402], %1425 {strides = array<i32>} : memref<8x128xf32, #tpu.memory_space<vmem>>, vector<8x128xf32>,
    return
  }
}

</mosaic_0001>

<llo_original>
// kernel: attn_encoder_gru_forward.1
$region0: #{attn_encoder_gru_forward.1}
  #allocation0 [shape = 'u32[]', space=smem, size = 0x4, offset = 0x4, fixed_abs, tag = 'smem constant byte address 0x4 - core index']
  #allocation1 [shape = 'u32[72,128]{1,0:T(1,128)}', space=vmem, size = 0x9000, scoped, tag = 'internal scratch']
  #allocation2 [shape = 'f32[128,768]{1,0:T(8,128)}', space=vmem, size = 0x60000, scoped, tag = 'scratch operand']
  %s0 = inlined_call_operand.vmem [shape: bf16[128,128], index: 0, kind: input, shape index: {}]
  %s1 = inlined_call_operand.vmem [shape: bf16[128,768], index: 1, kind: input, shape index: {}]
  %s2 = inlined_call_operand.vmem [shape: f32[1,768], index: 2, kind: input, shape index: {}]
  %s3 = inlined_call_operand.vmem [shape: bf16[256,768], index: 3, kind: input, shape index: {}]
  %s4 = inlined_call_operand.vmem [shape: f32[1,128], index: 4, kind: input, shape index: {}]
  %s5 = inlined_call_operand.vmem [shape: f32[1,128], index: 5, kind: input, shape index: {}]
  %s6 = inlined_call_operand.vmem [shape: bf16[256,128], index: 6, kind: input, shape index: {}]
  %s7 = inlined_call_operand.vmem [shape: f32[1,128], index: 7, kind: input, shape index: {}]
  %s8 = inlined_call_operand.hbm [shape: f32[16,8,256], index: 8, kind: output, shape index: {0}]
  %s9 = inlined_call_operand.hbm [shape: f32[8,128], index: 9, kind: output, shape index: {1}]
  %10 = xla_tuple %s8, %s9
  %s11 = sld [smem:[#allocation0]]
  $region50: #{attn_encoder_gru_forward.1} parent=0
    _
  %s13 = ssub.s32 1, %s11
  %s14 = scalar_select 0, %s13, %s11
  $region1: #{attn_encoder_gru_forward.1} parent=0
    #allocation3 [shape = 'u8[131072]{0}', space=vmem, size = 0x20000, scoped, tag = 'output window, operand 0, single buffered']
    #allocation4 [shape = 's32[1]{0}', space=sflag, size = 0x4, scoped, tag = 'scoped memory for attn_encoder_gru_forward.1']
    #allocation5 [shape = 'u8[4096]{0}', space=vmem, size = 0x1000, scoped, tag = 'output window, operand 1, single buffered']
    #allocation6 [shape = 's32[1]{0}', space=sflag, size = 0x4, scoped, tag = 'scoped memory for attn_encoder_gru_forward.1']
    %15 = vsyncpa [#allocation4], 0
    %16 = vsyncpa [#allocation6], 0
    // Predicated region
    $region2: #{attn_encoder_gru_forward.1} parent=1 // pred_check
      _
    $region3: #{attn_encoder_gru_forward.1} parent=1 // pred_check_branch
      %18 = sbr.rel (0) target = $region5
    $region4: #{attn_encoder_gru_forward.1} parent=1 // pred_region
      _
    $region5: #{attn_encoder_gru_forward.1} parent=1 // pred_fallthru
      _
    // Predicated region
    $region6: #{attn_encoder_gru_forward.1} parent=1 // pred_check
      _
    $region7: #{attn_encoder_gru_forward.1} parent=1 // pred_check_branch
      %20 = sbr.rel (0) target = $region9
    $region8: #{attn_encoder_gru_forward.1} parent=1 // pred_region
      _
    $region9: #{attn_encoder_gru_forward.1} parent=1 // pred_fallthru
      _
    // Predicated region
    $region10: #{attn_encoder_gru_forward.1} parent=1 // pred_check
      _
    $region11: #{attn_encoder_gru_forward.1} parent=1 // pred_check_branch
      %22 = sbr.rel (0) target = $region13
    $region12: #{attn_encoder_gru_forward.1} parent=1 // pred_region
      _
    $region13: #{attn_encoder_gru_forward.1} parent=1 // pred_fallthru
      _
    // Predicated region
    $region14: #{attn_encoder_gru_forward.1} parent=1 // pred_check
      _
    $region15: #{attn_encoder_gru_forward.1} parent=1 // pred_check_branch
      %24 = sbr.rel (0) target = $region17
    $region16: #{attn_encoder_gru_forward.1} parent=1 // pred_region
      _
    $region17: #{attn_encoder_gru_forward.1} parent=1 // pred_fallthru
      _
    // Predicated region
    $region18: #{attn_encoder_gru_forward.1} parent=1 // pred_check
      _
    $region19: #{attn_encoder_gru_forward.1} parent=1 // pred_check_branch
      %26 = sbr.rel (0) target = $region21
    $region20: #{attn_encoder_gru_forward.1} parent=1 // pred_region
      _
    $region21: #{attn_encoder_gru_forward.1} parent=1 // pred_fallthru
      _
    // Predicated region
    $region22: #{attn_encoder_gru_forward.1} parent=1 // pred_check
      _
    $region23: #{attn_encoder_gru_forward.1} parent=1 // pred_check_branch
      %28 = sbr.rel (0) target = $region25
    $region24: #{attn_encoder_gru_forward.1} parent=1 // pred_region
      _
    $region25: #{attn_encoder_gru_forward.1} parent=1 // pred_fallthru
      _
    // Predicated region
    $region26: #{attn_encoder_gru_forward.1} parent=1 // pred_check
      _
    $region27: #{attn_encoder_gru_forward.1} parent=1 // pred_check_branch
      %30 = sbr.rel (0) target = $region29
    $region28: #{attn_encoder_gru_forward.1} parent=1 // pred_region
      _
    $region29: #{attn_encoder_gru_forward.1} parent=1 // pred_fallthru
      _
    // Predicated region
    $region30: #{attn_encoder_gru_forward.1} parent=1 // pred_check
      _
    $region31: #{attn_encoder_gru_forward.1} parent=1 // pred_check_branch
      %32 = sbr.rel (0) target = $region33
    $region32: #{attn_encoder_gru_forward.1} parent=1 // pred_region
      _
    $region33: #{attn_encoder_gru_forward.1} parent=1 // pred_fallthru
      _
    %v34 = vld [vmem:[%s0] sm:$0xf]
    %v35 = vld [vmem:[%s0 + $0x4] sm:$0xf]
    %v36 = vld [vmem:[%s0 + $0x8] sm:$0xf]
    %v37 = vld [vmem:[%s0 + $0xc] sm:$0xf]
    %v38 = vld [vmem:[%s0 + $0x10] sm:$0xf]
    %v39 = vld [vmem:[%s0 + $0x14] sm:$0xf]
    %v40 = vld [vmem:[%s0 + $0x18] sm:$0xf]
    %v41 = vld [vmem:[%s0 + $0x1c] sm:$0xf]
    %v42 = vld [vmem:[%s0 + $0x20] sm:$0xf]
    %v43 = vld [vmem:[%s0 + $0x24] sm:$0xf]
    %v44 = vld [vmem:[%s0 + $0x28] sm:$0xf]
    %v45 = vld [vmem:[%s0 + $0x2c] sm:$0xf]
    %v46 = vld [vmem:[%s0 + $0x30] sm:$0xf]
    %v47 = vld [vmem:[%s0 + $0x34] sm:$0xf]
    %v48 = vld [vmem:[%s0 + $0x38] sm:$0xf]
    %v49 = vld [vmem:[%s0 + $0x3c] sm:$0xf]
    %v50 = vld [vmem:[%s1] sm:$0xff]
    %v51 = vld [vmem:[%s1 + $0x8] sm:$0xff]
    %v52 = vld [vmem:[%s1 + $0x10] sm:$0xff]
    %v53 = vld [vmem:[%s1 + $0x18] sm:$0xff]
    %v54 = vld [vmem:[%s1 + $0x20] sm:$0xff]
    %v55 = vld [vmem:[%s1 + $0x28] sm:$0xff]
    %v56 = vld [vmem:[%s1 + $0x30] sm:$0xff]
    %v57 = vld [vmem:[%s1 + $0x38] sm:$0xff]
    %v58 = vld [vmem:[%s1 + $0x40] sm:$0xff]
    %v59 = vld [vmem:[%s1 + $0x48] sm:$0xff]
    %v60 = vld [vmem:[%s1 + $0x50] sm:$0xff]
    %v61 = vld [vmem:[%s1 + $0x58] sm:$0xff]
    %v62 = vld [vmem:[%s1 + $0x60] sm:$0xff]
    %v63 = vld [vmem:[%s1 + $0x68] sm:$0xff]
    %v64 = vld [vmem:[%s1 + $0x70] sm:$0xff]
    %v65 = vld [vmem:[%s1 + $0x78] sm:$0xff]
    %v66 = vld [vmem:[%s1 + $0x80] sm:$0xff]
    %v67 = vld [vmem:[%s1 + $0x88] sm:$0xff]
    %v68 = vld [vmem:[%s1 + $0x90] sm:$0xff]
    %v69 = vld [vmem:[%s1 + $0x98] sm:$0xff]
    %v70 = vld [vmem:[%s1 + $0xa0] sm:$0xff]
    %v71 = vld [vmem:[%s1 + $0xa8] sm:$0xff]
    %v72 = vld [vmem:[%s1 + $0xb0] sm:$0xff]
    %v73 = vld [vmem:[%s1 + $0xb8] sm:$0xff]
    %v74 = vld [vmem:[%s1 + $0xc0] sm:$0xff]
    %v75 = vld [vmem:[%s1 + $0xc8] sm:$0xff]
    %v76 = vld [vmem:[%s1 + $0xd0] sm:$0xff]
    %v77 = vld [vmem:[%s1 + $0xd8] sm:$0xff]
    %v78 = vld [vmem:[%s1 + $0xe0] sm:$0xff]
    %v79 = vld [vmem:[%s1 + $0xe8] sm:$0xff]
    %v80 = vld [vmem:[%s1 + $0xf0] sm:$0xff]
    %v81 = vld [vmem:[%s1 + $0xf8] sm:$0xff]
    %v82 = vld [vmem:[%s1 + $0x100] sm:$0xff]
    %v83 = vld [vmem:[%s1 + $0x108] sm:$0xff]
    %v84 = vld [vmem:[%s1 + $0x110] sm:$0xff]
    %v85 = vld [vmem:[%s1 + $0x118] sm:$0xff]
    %v86 = vld [vmem:[%s1 + $0x120] sm:$0xff]
    %v87 = vld [vmem:[%s1 + $0x128] sm:$0xff]
    %v88 = vld [vmem:[%s1 + $0x130] sm:$0xff]
    %v89 = vld [vmem:[%s1 + $0x138] sm:$0xff]
    %v90 = vld [vmem:[%s1 + $0x140] sm:$0xff]
    %v91 = vld [vmem:[%s1 + $0x148] sm:$0xff]
    %v92 = vld [vmem:[%s1 + $0x150] sm:$0xff]
    %v93 = vld [vmem:[%s1 + $0x158] sm:$0xff]
    %v94 = vld [vmem:[%s1 + $0x160] sm:$0xff]
    %v95 = vld [vmem:[%s1 + $0x168] sm:$0xff]
    %v96 = vld [vmem:[%s1 + $0x170] sm:$0xff]
    %v97 = vld [vmem:[%s1 + $0x178] sm:$0xff]
    %v98 = vld [vmem:[%s2] sm:$0x3f]
    %v100 = vperm.slane %v98, 0
    %v101 = vperm.slane %v98, 1
    %v102 = vperm.slane %v98, 2
    %v103 = vperm.slane %v98, 3
    %v104 = vperm.slane %v98, 4
    %v105 = vperm.slane %v98, 5
    %v128 = vunpack.c.l.b16 %v34
    %v129 = vunpack.c.l.b16 %v35
    %v130 = vunpack.c.l.b16 %v36
    %v131 = vunpack.c.l.b16 %v37
    %v132 = vunpack.c.l.b16 %v38
    %v133 = vunpack.c.l.b16 %v39
    %v134 = vunpack.c.l.b16 %v40
    %v135 = vunpack.c.l.b16 %v41
    %v136 = vunpack.c.l.b16 %v42
    %v137 = vunpack.c.l.b16 %v43
    %v138 = vunpack.c.l.b16 %v44
    %v139 = vunpack.c.l.b16 %v45
    %v140 = vunpack.c.l.b16 %v46
    %v141 = vunpack.c.l.b16 %v47
    %v142 = vunpack.c.l.b16 %v48
    %v143 = vunpack.c.l.b16 %v49
    %v144 = vpack.c.b16 %v129, %v128
    %v145 = vpack.c.b16 %v131, %v130
    %v146 = vpack.c.b16 %v133, %v132
    %v147 = vpack.c.b16 %v135, %v134
    %v148 = vpack.c.b16 %v137, %v136
    %v149 = vpack.c.b16 %v139, %v138
    %v150 = vpack.c.b16 %v141, %v140
    %v151 = vpack.c.b16 %v143, %v142
    %v208 = vunpack.c.l.b16 %v50
    %v209 = vunpack.c.h.b16 %v50
    %v210 = vunpack.c.l.b16 %v51
    %v211 = vunpack.c.h.b16 %v51
    %v212 = vunpack.c.l.b16 %v52
    %v213 = vunpack.c.h.b16 %v52
    %v214 = vunpack.c.l.b16 %v53
    %v215 = vunpack.c.h.b16 %v53
    %v216 = vunpack.c.l.b16 %v54
    %v217 = vunpack.c.h.b16 %v54
    %v218 = vunpack.c.l.b16 %v55
    %v219 = vunpack.c.h.b16 %v55
    %v220 = vunpack.c.l.b16 %v56
    %v221 = vunpack.c.h.b16 %v56
    %v222 = vunpack.c.l.b16 %v57
    %v223 = vunpack.c.h.b16 %v57
    %v224 = vunpack.c.l.b16 %v58
    %v225 = vunpack.c.h.b16 %v58
    %v226 = vunpack.c.l.b16 %v59
    %v227 = vunpack.c.h.b16 %v59
    %v228 = vunpack.c.l.b16 %v60
    %v229 = vunpack.c.h.b16 %v60
    %v230 = vunpack.c.l.b16 %v61
    %v231 = vunpack.c.h.b16 %v61
    %v232 = vunpack.c.l.b16 %v62
    %v233 = vunpack.c.h.b16 %v62
    %v234 = vunpack.c.l.b16 %v63
    %v235 = vunpack.c.h.b16 %v63
    %v236 = vunpack.c.l.b16 %v64
    %v237 = vunpack.c.h.b16 %v64
    %v238 = vunpack.c.l.b16 %v65
    %v239 = vunpack.c.h.b16 %v65
    %v240 = vunpack.c.l.b16 %v66
    %v241 = vunpack.c.h.b16 %v66
    %v242 = vunpack.c.l.b16 %v67
    %v243 = vunpack.c.h.b16 %v67
    %v244 = vunpack.c.l.b16 %v68
    %v245 = vunpack.c.h.b16 %v68
    %v246 = vunpack.c.l.b16 %v69
    %v247 = vunpack.c.h.b16 %v69
    %v248 = vunpack.c.l.b16 %v70
    %v249 = vunpack.c.h.b16 %v70
    %v250 = vunpack.c.l.b16 %v71
    %v251 = vunpack.c.h.b16 %v71
    %v252 = vunpack.c.l.b16 %v72
    %v253 = vunpack.c.h.b16 %v72
    %v254 = vunpack.c.l.b16 %v73
    %v255 = vunpack.c.h.b16 %v73
    %v256 = vunpack.c.l.b16 %v74
    %v257 = vunpack.c.h.b16 %v74
    %v258 = vunpack.c.l.b16 %v75
    %v259 = vunpack.c.h.b16 %v75
    %v260 = vunpack.c.l.b16 %v76
    %v261 = vunpack.c.h.b16 %v76
    %v262 = vunpack.c.l.b16 %v77
    %v263 = vunpack.c.h.b16 %v77
    %v264 = vunpack.c.l.b16 %v78
    %v265 = vunpack.c.h.b16 %v78
    %v266 = vunpack.c.l.b16 %v79
    %v267 = vunpack.c.h.b16 %v79
    %v268 = vunpack.c.l.b16 %v80
    %v269 = vunpack.c.h.b16 %v80
    %v270 = vunpack.c.l.b16 %v81
    %v271 = vunpack.c.h.b16 %v81
    %v272 = vunpack.c.l.b16 %v82
    %v273 = vunpack.c.h.b16 %v82
    %v274 = vunpack.c.l.b16 %v83
    %v275 = vunpack.c.h.b16 %v83
    %v276 = vunpack.c.l.b16 %v84
    %v277 = vunpack.c.h.b16 %v84
    %v278 = vunpack.c.l.b16 %v85
    %v279 = vunpack.c.h.b16 %v85
    %v280 = vunpack.c.l.b16 %v86
    %v281 = vunpack.c.h.b16 %v86
    %v282 = vunpack.c.l.b16 %v87
    %v283 = vunpack.c.h.b16 %v87
    %v284 = vunpack.c.l.b16 %v88
    %v285 = vunpack.c.h.b16 %v88
    %v286 = vunpack.c.l.b16 %v89
    %v287 = vunpack.c.h.b16 %v89
    %v288 = vunpack.c.l.b16 %v90
    %v289 = vunpack.c.h.b16 %v90
    %v290 = vunpack.c.l.b16 %v91
    %v291 = vunpack.c.h.b16 %v91
    %v292 = vunpack.c.l.b16 %v92
    %v293 = vunpack.c.h.b16 %v92
    %v294 = vunpack.c.l.b16 %v93
    %v295 = vunpack.c.h.b16 %v93
    %v296 = vunpack.c.l.b16 %v94
    %v297 = vunpack.c.h.b16 %v94
    %v298 = vunpack.c.l.b16 %v95
    %v299 = vunpack.c.h.b16 %v95
    %v300 = vunpack.c.l.b16 %v96
    %v301 = vunpack.c.h.b16 %v96
    %v302 = vunpack.c.l.b16 %v97
    %v303 = vunpack.c.h.b16 %v97
    %v304 = vpack.c.b16 %v214, %v208
    %v305 = vpack.c.b16 %v215, %v209
    %v306 = vpack.c.b16 %v216, %v210
    %v307 = vpack.c.b16 %v217, %v211
    %v308 = vpack.c.b16 %v218, %v212
    %v309 = vpack.c.b16 %v219, %v213
    %v310 = vpack.c.b16 %v226, %v220
    %v311 = vpack.c.b16 %v227, %v221
    %v312 = vpack.c.b16 %v228, %v222
    %v313 = vpack.c.b16 %v229, %v223
    %v314 = vpack.c.b16 %v230, %v224
    %v315 = vpack.c.b16 %v231, %v225
    %v316 = vpack.c.b16 %v238, %v232
    %v317 = vpack.c.b16 %v239, %v233
    %v318 = vpack.c.b16 %v240, %v234
    %v319 = vpack.c.b16 %v241, %v235
    %v320 = vpack.c.b16 %v242, %v236
    %v321 = vpack.c.b16 %v243, %v237
    %v322 = vpack.c.b16 %v250, %v244
    %v323 = vpack.c.b16 %v251, %v245
    %v324 = vpack.c.b16 %v252, %v246
    %v325 = vpack.c.b16 %v253, %v247
    %v326 = vpack.c.b16 %v254, %v248
    %v327 = vpack.c.b16 %v255, %v249
    %v328 = vpack.c.b16 %v262, %v256
    %v329 = vpack.c.b16 %v263, %v257
    %v330 = vpack.c.b16 %v264, %v258
    %v331 = vpack.c.b16 %v265, %v259
    %v332 = vpack.c.b16 %v266, %v260
    %v333 = vpack.c.b16 %v267, %v261
    %v334 = vpack.c.b16 %v274, %v268
    %v335 = vpack.c.b16 %v275, %v269
    %v336 = vpack.c.b16 %v276, %v270
    %v337 = vpack.c.b16 %v277, %v271
    %v338 = vpack.c.b16 %v278, %v272
    %v339 = vpack.c.b16 %v279, %v273
    %v340 = vpack.c.b16 %v286, %v280
    %v341 = vpack.c.b16 %v287, %v281
    %v342 = vpack.c.b16 %v288, %v282
    %v343 = vpack.c.b16 %v289, %v283
    %v344 = vpack.c.b16 %v290, %v284
    %v345 = vpack.c.b16 %v291, %v285
    %v346 = vpack.c.b16 %v298, %v292
    %v347 = vpack.c.b16 %v299, %v293
    %v348 = vpack.c.b16 %v300, %v294
    %v349 = vpack.c.b16 %v301, %v295
    %v350 = vpack.c.b16 %v302, %v296
    %v351 = vpack.c.b16 %v303, %v297
    %400 = vmatpush.bf16.msra.mxu0 %v346
    %401 = vmatpush.bf16.msra.mxu0 %v340
    %402 = vmatpush.bf16.msra.mxu0 %v334
    %403 = vmatpush.bf16.msra.mxu0 %v328
    %404 = vmatpush.bf16.msra.mxu0 %v322
    %405 = vmatpush.bf16.msra.mxu0 %v316
    %406 = vmatpush.bf16.msra.mxu0 %v310
    %407 = vmatpush.bf16.msra.mxu0 %v304
    %408 = vmatmul.bf16.gmra.mxu0 %v144
    %v409 = vpop.f32.mrf.mxu0
    %v410 = vadd.f32 %v100, %v409
    %v411 = vpop.f32.mrf.mxu0
    %v412 = vadd.f32 %v100, %v411
    %413 = vmatmul.bf16.gmra.mxu0 %v145
    %v414 = vpop.f32.mrf.mxu0
    %v415 = vadd.f32 %v100, %v414
    %v416 = vpop.f32.mrf.mxu0
    %v417 = vadd.f32 %v100, %v416
    %418 = vmatmul.bf16.gmra.mxu0 %v146
    %v419 = vpop.f32.mrf.mxu0
    %v420 = vadd.f32 %v100, %v419
    %v421 = vpop.f32.mrf.mxu0
    %v422 = vadd.f32 %v100, %v421
    %423 = vmatmul.bf16.gmra.mxu0 %v147
    %v424 = vpop.f32.mrf.mxu0
    %v425 = vadd.f32 %v100, %v424
    %v426 = vpop.f32.mrf.mxu0
    %v427 = vadd.f32 %v100, %v426
    %428 = vmatmul.bf16.gmra.mxu0 %v148
    %v429 = vpop.f32.mrf.mxu0
    %v430 = vadd.f32 %v100, %v429
    %v431 = vpop.f32.mrf.mxu0
    %v432 = vadd.f32 %v100, %v431
    %433 = vmatmul.bf16.gmra.mxu0 %v149
    %v434 = vpop.f32.mrf.mxu0
    %v435 = vadd.f32 %v100, %v434
    %v436 = vpop.f32.mrf.mxu0
    %v437 = vadd.f32 %v100, %v436
    %438 = vmatmul.bf16.gmra.mxu0 %v150
    %v439 = vpop.f32.mrf.mxu0
    %v440 = vadd.f32 %v100, %v439
    %v441 = vpop.f32.mrf.mxu0
    %v442 = vadd.f32 %v100, %v441
    %443 = vmatmul.bf16.gmra.mxu0 %v151
    %v444 = vpop.f32.mrf.mxu0
    %v445 = vadd.f32 %v100, %v444
    %v446 = vpop.f32.mrf.mxu0
    %v447 = vadd.f32 %v100, %v446
    %448 = vdwg.mxu0
    %449 = vmatpush.bf16.msra.mxu0 %v347
    %450 = vmatpush.bf16.msra.mxu0 %v341
    %451 = vmatpush.bf16.msra.mxu0 %v335
    %452 = vmatpush.bf16.msra.mxu0 %v329
    %453 = vmatpush.bf16.msra.mxu0 %v323
    %454 = vmatpush.bf16.msra.mxu0 %v317
    %455 = vmatpush.bf16.msra.mxu0 %v311
    %456 = vmatpush.bf16.msra.mxu0 %v305
    %457 = vmatmul.bf16.gmra.mxu0 %v144
    %v458 = vpop.f32.mrf.mxu0
    %v459 = vadd.f32 %v101, %v458
    %v460 = vpop.f32.mrf.mxu0
    %v461 = vadd.f32 %v101, %v460
    %462 = vmatmul.bf16.gmra.mxu0 %v145
    %v463 = vpop.f32.mrf.mxu0
    %v464 = vadd.f32 %v101, %v463
    %v465 = vpop.f32.mrf.mxu0
    %v466 = vadd.f32 %v101, %v465
    %467 = vmatmul.bf16.gmra.mxu0 %v146
    %v468 = vpop.f32.mrf.mxu0
    %v469 = vadd.f32 %v101, %v468
    %v470 = vpop.f32.mrf.mxu0
    %v471 = vadd.f32 %v101, %v470
    %472 = vmatmul.bf16.gmra.mxu0 %v147
    %v473 = vpop.f32.mrf.mxu0
    %v474 = vadd.f32 %v101, %v473
    %v475 = vpop.f32.mrf.mxu0
    %v476 = vadd.f32 %v101, %v475
    %477 = vmatmul.bf16.gmra.mxu0 %v148
    %v478 = vpop.f32.mrf.mxu0
    %v479 = vadd.f32 %v101, %v478
    %v480 = vpop.f32.mrf.mxu0
    %v481 = vadd.f32 %v101, %v480
    %482 = vmatmul.bf16.gmra.mxu0 %v149
    %v483 = vpop.f32.mrf.mxu0
    %v484 = vadd.f32 %v101, %v483
    %v485 = vpop.f32.mrf.mxu0
    %v486 = vadd.f32 %v101, %v485
    %487 = vmatmul.bf16.gmra.mxu0 %v150
    %v488 = vpop.f32.mrf.mxu0
    %v489 = vadd.f32 %v101, %v488
    %v490 = vpop.f32.mrf.mxu0
    %v491 = vadd.f32 %v101, %v490
    %492 = vmatmul.bf16.gmra.mxu0 %v151
    %v493 = vpop.f32.mrf.mxu0
    %v494 = vadd.f32 %v101, %v493
    %v495 = vpop.f32.mrf.mxu0
    %v496 = vadd.f32 %v101, %v495
    %497 = vdwg.mxu0
    %498 = vmatpush.bf16.msra.mxu0 %v348
    %499 = vmatpush.bf16.msra.mxu0 %v342
    %500 = vmatpush.bf16.msra.mxu0 %v336
    %501 = vmatpush.bf16.msra.mxu0 %v330
    %502 = vmatpush.bf16.msra.mxu0 %v324
    %503 = vmatpush.bf16.msra.mxu0 %v318
    %504 = vmatpush.bf16.msra.mxu0 %v312
    %505 = vmatpush.bf16.msra.mxu0 %v306
    %506 = vmatmul.bf16.gmra.mxu0 %v144
    %v507 = vpop.f32.mrf.mxu0
    %v508 = vadd.f32 %v102, %v507
    %v509 = vpop.f32.mrf.mxu0
    %v510 = vadd.f32 %v102, %v509
    %511 = vmatmul.bf16.gmra.mxu0 %v145
    %v512 = vpop.f32.mrf.mxu0
    %v513 = vadd.f32 %v102, %v512
    %v514 = vpop.f32.mrf.mxu0
    %v515 = vadd.f32 %v102, %v514
    %516 = vmatmul.bf16.gmra.mxu0 %v146
    %v517 = vpop.f32.mrf.mxu0
    %v518 = vadd.f32 %v102, %v517
    %v519 = vpop.f32.mrf.mxu0
    %v520 = vadd.f32 %v102, %v519
    %521 = vmatmul.bf16.gmra.mxu0 %v147
    %v522 = vpop.f32.mrf.mxu0
    %v523 = vadd.f32 %v102, %v522
    %v524 = vpop.f32.mrf.mxu0
    %v525 = vadd.f32 %v102, %v524
    %526 = vmatmul.bf16.gmra.mxu0 %v148
    %v527 = vpop.f32.mrf.mxu0
    %v528 = vadd.f32 %v102, %v527
    %v529 = vpop.f32.mrf.mxu0
    %v530 = vadd.f32 %v102, %v529
    %531 = vmatmul.bf16.gmra.mxu0 %v149
    %v532 = vpop.f32.mrf.mxu0
    %v533 = vadd.f32 %v102, %v532
    %v534 = vpop.f32.mrf.mxu0
    %v535 = vadd.f32 %v102, %v534
    %536 = vmatmul.bf16.gmra.mxu0 %v150
    %v537 = vpop.f32.mrf.mxu0
    %v538 = vadd.f32 %v102, %v537
    %v539 = vpop.f32.mrf.mxu0
    %v540 = vadd.f32 %v102, %v539
    %541 = vmatmul.bf16.gmra.mxu0 %v151
    %v542 = vpop.f32.mrf.mxu0
    %v543 = vadd.f32 %v102, %v542
    %v544 = vpop.f32.mrf.mxu0
    %v545 = vadd.f32 %v102, %v544
    %546 = vdwg.mxu0
    %547 = vmatpush.bf16.msra.mxu0 %v349
    %548 = vmatpush.bf16.msra.mxu0 %v343
    %549 = vmatpush.bf16.msra.mxu0 %v337
    %550 = vmatpush.bf16.msra.mxu0 %v331
    %551 = vmatpush.bf16.msra.mxu0 %v325
    %552 = vmatpush.bf16.msra.mxu0 %v319
    %553 = vmatpush.bf16.msra.mxu0 %v313
    %554 = vmatpush.bf16.msra.mxu0 %v307
    %555 = vmatmul.bf16.gmra.mxu0 %v144
    %v556 = vpop.f32.mrf.mxu0
    %v557 = vadd.f32 %v103, %v556
    %v558 = vpop.f32.mrf.mxu0
    %v559 = vadd.f32 %v103, %v558
    %560 = vmatmul.bf16.gmra.mxu0 %v145
    %v561 = vpop.f32.mrf.mxu0
    %v562 = vadd.f32 %v103, %v561
    %v563 = vpop.f32.mrf.mxu0
    %v564 = vadd.f32 %v103, %v563
    %565 = vmatmul.bf16.gmra.mxu0 %v146
    %v566 = vpop.f32.mrf.mxu0
    %v567 = vadd.f32 %v103, %v566
    %v568 = vpop.f32.mrf.mxu0
    %v569 = vadd.f32 %v103, %v568
    %570 = vmatmul.bf16.gmra.mxu0 %v147
    %v571 = vpop.f32.mrf.mxu0
    %v572 = vadd.f32 %v103, %v571
    %v573 = vpop.f32.mrf.mxu0
    %v574 = vadd.f32 %v103, %v573
    %575 = vmatmul.bf16.gmra.mxu0 %v148
    %v576 = vpop.f32.mrf.mxu0
    %v577 = vadd.f32 %v103, %v576
    %v578 = vpop.f32.mrf.mxu0
    %v579 = vadd.f32 %v103, %v578
    %580 = vmatmul.bf16.gmra.mxu0 %v149
    %v581 = vpop.f32.mrf.mxu0
    %v582 = vadd.f32 %v103, %v581
    %v583 = vpop.f32.mrf.mxu0
    %v584 = vadd.f32 %v103, %v583
    %585 = vmatmul.bf16.gmra.mxu0 %v150
    %v586 = vpop.f32.mrf.mxu0
    %v587 = vadd.f32 %v103, %v586
    %v588 = vpop.f32.mrf.mxu0
    %v589 = vadd.f32 %v103, %v588
    %590 = vmatmul.bf16.gmra.mxu0 %v151
    %v591 = vpop.f32.mrf.mxu0
    %v592 = vadd.f32 %v103, %v591
    %v593 = vpop.f32.mrf.mxu0
    %v594 = vadd.f32 %v103, %v593
    %595 = vdwg.mxu0
    %596 = vmatpush.bf16.msra.mxu0 %v350
    %597 = vmatpush.bf16.msra.mxu0 %v344
    %598 = vmatpush.bf16.msra.mxu0 %v338
    %599 = vmatpush.bf16.msra.mxu0 %v332
    %600 = vmatpush.bf16.msra.mxu0 %v326
    %601 = vmatpush.bf16.msra.mxu0 %v320
    %602 = vmatpush.bf16.msra.mxu0 %v314
    %603 = vmatpush.bf16.msra.mxu0 %v308
    %604 = vmatmul.bf16.gmra.mxu0 %v144
    %v605 = vpop.f32.mrf.mxu0
    %v606 = vadd.f32 %v104, %v605
    %v607 = vpop.f32.mrf.mxu0
    %v608 = vadd.f32 %v104, %v607
    %609 = vmatmul.bf16.gmra.mxu0 %v145
    %v610 = vpop.f32.mrf.mxu0
    %v611 = vadd.f32 %v104, %v610
    %v612 = vpop.f32.mrf.mxu0
    %v613 = vadd.f32 %v104, %v612
    %614 = vmatmul.bf16.gmra.mxu0 %v146
    %v615 = vpop.f32.mrf.mxu0
    %v616 = vadd.f32 %v104, %v615
    %v617 = vpop.f32.mrf.mxu0
    %v618 = vadd.f32 %v104, %v617
    %619 = vmatmul.bf16.gmra.mxu0 %v147
    %v620 = vpop.f32.mrf.mxu0
    %v621 = vadd.f32 %v104, %v620
    %v622 = vpop.f32.mrf.mxu0
    %v623 = vadd.f32 %v104, %v622
    %624 = vmatmul.bf16.gmra.mxu0 %v148
    %v625 = vpop.f32.mrf.mxu0
    %v626 = vadd.f32 %v104, %v625
    %v627 = vpop.f32.mrf.mxu0
    %v628 = vadd.f32 %v104, %v627
    %629 = vmatmul.bf16.gmra.mxu0 %v149
    %v630 = vpop.f32.mrf.mxu0
    %v631 = vadd.f32 %v104, %v630
    %v632 = vpop.f32.mrf.mxu0
    %v633 = vadd.f32 %v104, %v632
    %634 = vmatmul.bf16.gmra.mxu0 %v150
    %v635 = vpop.f32.mrf.mxu0
    %v636 = vadd.f32 %v104, %v635
    %v637 = vpop.f32.mrf.mxu0
    %v638 = vadd.f32 %v104, %v637
    %639 = vmatmul.bf16.gmra.mxu0 %v151
    %v640 = vpop.f32.mrf.mxu0
    %v641 = vadd.f32 %v104, %v640
    %v642 = vpop.f32.mrf.mxu0
    %v643 = vadd.f32 %v104, %v642
    %644 = vdwg.mxu0
    %645 = vmatpush.bf16.msra.mxu0 %v351
    %646 = vmatpush.bf16.msra.mxu0 %v345
    %647 = vmatpush.bf16.msra.mxu0 %v339
    %648 = vmatpush.bf16.msra.mxu0 %v333
    %649 = vmatpush.bf16.msra.mxu0 %v327
    %650 = vmatpush.bf16.msra.mxu0 %v321
    %651 = vmatpush.bf16.msra.mxu0 %v315
    %652 = vmatpush.bf16.msra.mxu0 %v309
    %653 = vmatmul.bf16.gmra.mxu0 %v144
    %v654 = vpop.f32.mrf.mxu0
    %v655 = vadd.f32 %v105, %v654
    %v656 = vpop.f32.mrf.mxu0
    %v657 = vadd.f32 %v105, %v656
    %658 = vmatmul.bf16.gmra.mxu0 %v145
    %v659 = vpop.f32.mrf.mxu0
    %v660 = vadd.f32 %v105, %v659
    %v661 = vpop.f32.mrf.mxu0
    %v662 = vadd.f32 %v105, %v661
    %663 = vmatmul.bf16.gmra.mxu0 %v146
    %v664 = vpop.f32.mrf.mxu0
    %v665 = vadd.f32 %v105, %v664
    %v666 = vpop.f32.mrf.mxu0
    %v667 = vadd.f32 %v105, %v666
    %668 = vmatmul.bf16.gmra.mxu0 %v147
    %v669 = vpop.f32.mrf.mxu0
    %v670 = vadd.f32 %v105, %v669
    %v671 = vpop.f32.mrf.mxu0
    %v672 = vadd.f32 %v105, %v671
    %673 = vmatmul.bf16.gmra.mxu0 %v148
    %v674 = vpop.f32.mrf.mxu0
    %v675 = vadd.f32 %v105, %v674
    %v676 = vpop.f32.mrf.mxu0
    %v677 = vadd.f32 %v105, %v676
    %678 = vmatmul.bf16.gmra.mxu0 %v149
    %v679 = vpop.f32.mrf.mxu0
    %v680 = vadd.f32 %v105, %v679
    %v681 = vpop.f32.mrf.mxu0
    %v682 = vadd.f32 %v105, %v681
    %683 = vmatmul.bf16.gmra.mxu0 %v150
    %v684 = vpop.f32.mrf.mxu0
    %v685 = vadd.f32 %v105, %v684
    %v686 = vpop.f32.mrf.mxu0
    %v687 = vadd.f32 %v105, %v686
    %688 = vmatmul.bf16.gmra.mxu0 %v151
    %v689 = vpop.f32.mrf.mxu0
    %v690 = vadd.f32 %v105, %v689
    %v691 = vpop.f32.mrf.mxu0
    %v692 = vadd.f32 %v105, %v691
    %693 = vdwg.mxu0
    %694 = vst [vmem:[#allocation2] sm:$0xff] %v410
    %695 = vst [vmem:[#allocation2 + $0x8] sm:$0xff] %v459
    %696 = vst [vmem:[#allocation2 + $0x10] sm:$0xff] %v508
    %697 = vst [vmem:[#allocation2 + $0x18] sm:$0xff] %v557
    %698 = vst [vmem:[#allocation2 + $0x20] sm:$0xff] %v606
    %699 = vst [vmem:[#allocation2 + $0x28] sm:$0xff] %v655
    %700 = vst [vmem:[#allocation2 + $0x30] sm:$0xff] %v412
    %701 = vst [vmem:[#allocation2 + $0x38] sm:$0xff] %v461
    %702 = vst [vmem:[#allocation2 + $0x40] sm:$0xff] %v510
    %703 = vst [vmem:[#allocation2 + $0x48] sm:$0xff] %v559
    %704 = vst [vmem:[#allocation2 + $0x50] sm:$0xff] %v608
    %705 = vst [vmem:[#allocation2 + $0x58] sm:$0xff] %v657
    %706 = vst [vmem:[#allocation2 + $0x60] sm:$0xff] %v415
    %707 = vst [vmem:[#allocation2 + $0x68] sm:$0xff] %v464
    %708 = vst [vmem:[#allocation2 + $0x70] sm:$0xff] %v513
    %709 = vst [vmem:[#allocation2 + $0x78] sm:$0xff] %v562
    %710 = vst [vmem:[#allocation2 + $0x80] sm:$0xff] %v611
    %711 = vst [vmem:[#allocation2 + $0x88] sm:$0xff] %v660
    %712 = vst [vmem:[#allocation2 + $0x90] sm:$0xff] %v417
    %713 = vst [vmem:[#allocation2 + $0x98] sm:$0xff] %v466
    %714 = vst [vmem:[#allocation2 + $0xa0] sm:$0xff] %v515
    %715 = vst [vmem:[#allocation2 + $0xa8] sm:$0xff] %v564
    %716 = vst [vmem:[#allocation2 + $0xb0] sm:$0xff] %v613
    %717 = vst [vmem:[#allocation2 + $0xb8] sm:$0xff] %v662
    %718 = vst [vmem:[#allocation2 + $0xc0] sm:$0xff] %v420
    %719 = vst [vmem:[#allocation2 + $0xc8] sm:$0xff] %v469
    %720 = vst [vmem:[#allocation2 + $0xd0] sm:$0xff] %v518
    %721 = vst [vmem:[#allocation2 + $0xd8] sm:$0xff] %v567
    %722 = vst [vmem:[#allocation2 + $0xe0] sm:$0xff] %v616
    %723 = vst [vmem:[#allocation2 + $0xe8] sm:$0xff] %v665
    %724 = vst [vmem:[#allocation2 + $0xf0] sm:$0xff] %v422
    %725 = vst [vmem:[#allocation2 + $0xf8] sm:$0xff] %v471
    %726 = vst [vmem:[#allocation2 + $0x100] sm:$0xff] %v520
    %727 = vst [vmem:[#allocation2 + $0x108] sm:$0xff] %v569
    %728 = vst [vmem:[#allocation2 + $0x110] sm:$0xff] %v618
    %729 = vst [vmem:[#allocation2 + $0x118] sm:$0xff] %v667
    %730 = vst [vmem:[#allocation2 + $0x120] sm:$0xff] %v425
    %731 = vst [vmem:[#allocation2 + $0x128] sm:$0xff] %v474
    %732 = vst [vmem:[#allocation2 + $0x130] sm:$0xff] %v523
    %733 = vst [vmem:[#allocation2 + $0x138] sm:$0xff] %v572
    %734 = vst [vmem:[#allocation2 + $0x140] sm:$0xff] %v621
    %735 = vst [vmem:[#allocation2 + $0x148] sm:$0xff] %v670
    %736 = vst [vmem:[#allocation2 + $0x150] sm:$0xff] %v427
    %737 = vst [vmem:[#allocation2 + $0x158] sm:$0xff] %v476
    %738 = vst [vmem:[#allocation2 + $0x160] sm:$0xff] %v525
    %739 = vst [vmem:[#allocation2 + $0x168] sm:$0xff] %v574
    %740 = vst [vmem:[#allocation2 + $0x170] sm:$0xff] %v623
    %741 = vst [vmem:[#allocation2 + $0x178] sm:$0xff] %v672
    %742 = vst [vmem:[#allocation2 + $0x180] sm:$0xff] %v430
    %743 = vst [vmem:[#allocation2 + $0x188] sm:$0xff] %v479
    %744 = vst [vmem:[#allocation2 + $0x190] sm:$0xff] %v528
    %745 = vst [vmem:[#allocation2 + $0x198] sm:$0xff] %v577
    %746 = vst [vmem:[#allocation2 + $0x1a0] sm:$0xff] %v626
    %747 = vst [vmem:[#allocation2 + $0x1a8] sm:$0xff] %v675
    %748 = vst [vmem:[#allocation2 + $0x1b0] sm:$0xff] %v432
    %749 = vst [vmem:[#allocation2 + $0x1b8] sm:$0xff] %v481
    %750 = vst [vmem:[#allocation2 + $0x1c0] sm:$0xff] %v530
    %751 = vst [vmem:[#allocation2 + $0x1c8] sm:$0xff] %v579
    %752 = vst [vmem:[#allocation2 + $0x1d0] sm:$0xff] %v628
    %753 = vst [vmem:[#allocation2 + $0x1d8] sm:$0xff] %v677
    %754 = vst [vmem:[#allocation2 + $0x1e0] sm:$0xff] %v435
    %755 = vst [vmem:[#allocation2 + $0x1e8] sm:$0xff] %v484
    %756 = vst [vmem:[#allocation2 + $0x1f0] sm:$0xff] %v533
    %757 = vst [vmem:[#allocation2 + $0x1f8] sm:$0xff] %v582
    %758 = vst [vmem:[#allocation2 + $0x200] sm:$0xff] %v631
    %759 = vst [vmem:[#allocation2 + $0x208] sm:$0xff] %v680
    %760 = vst [vmem:[#allocation2 + $0x210] sm:$0xff] %v437
    %761 = vst [vmem:[#allocation2 + $0x218] sm:$0xff] %v486
    %762 = vst [vmem:[#allocation2 + $0x220] sm:$0xff] %v535
    %763 = vst [vmem:[#allocation2 + $0x228] sm:$0xff] %v584
    %764 = vst [vmem:[#allocation2 + $0x230] sm:$0xff] %v633
    %765 = vst [vmem:[#allocation2 + $0x238] sm:$0xff] %v682
    %766 = vst [vmem:[#allocation2 + $0x240] sm:$0xff] %v440
    %767 = vst [vmem:[#allocation2 + $0x248] sm:$0xff] %v489
    %768 = vst [vmem:[#allocation2 + $0x250] sm:$0xff] %v538
    %769 = vst [vmem:[#allocation2 + $0x258] sm:$0xff] %v587
    %770 = vst [vmem:[#allocation2 + $0x260] sm:$0xff] %v636
    %771 = vst [vmem:[#allocation2 + $0x268] sm:$0xff] %v685
    %772 = vst [vmem:[#allocation2 + $0x270] sm:$0xff] %v442
    %773 = vst [vmem:[#allocation2 + $0x278] sm:$0xff] %v491
    %774 = vst [vmem:[#allocation2 + $0x280] sm:$0xff] %v540
    %775 = vst [vmem:[#allocation2 + $0x288] sm:$0xff] %v589
    %776 = vst [vmem:[#allocation2 + $0x290] sm:$0xff] %v638
    %777 = vst [vmem:[#allocation2 + $0x298] sm:$0xff] %v687
    %778 = vst [vmem:[#allocation2 + $0x2a0] sm:$0xff] %v445
    %779 = vst [vmem:[#allocation2 + $0x2a8] sm:$0xff] %v494
    %780 = vst [vmem:[#allocation2 + $0x2b0] sm:$0xff] %v543
    %781 = vst [vmem:[#allocation2 + $0x2b8] sm:$0xff] %v592
    %782 = vst [vmem:[#allocation2 + $0x2c0] sm:$0xff] %v641
    %783 = vst [vmem:[#allocation2 + $0x2c8] sm:$0xff] %v690
    %784 = vst [vmem:[#allocation2 + $0x2d0] sm:$0xff] %v447
    %785 = vst [vmem:[#allocation2 + $0x2d8] sm:$0xff] %v496
    %786 = vst [vmem:[#allocation2 + $0x2e0] sm:$0xff] %v545
    %787 = vst [vmem:[#allocation2 + $0x2e8] sm:$0xff] %v594
    %788 = vst [vmem:[#allocation2 + $0x2f0] sm:$0xff] %v643
    %789 = vst [vmem:[#allocation2 + $0x2f8] sm:$0xff] %v692
    %v790 = vld [vmem:[%s3] sm:$0xff]
    %v791 = vld [vmem:[%s3 + $0x8] sm:$0xff]
    %v792 = vld [vmem:[%s3 + $0x10] sm:$0xff]
    %v793 = vld [vmem:[%s3 + $0x18] sm:$0xff]
    %v794 = vld [vmem:[%s3 + $0x20] sm:$0xff]
    %v795 = vld [vmem:[%s3 + $0x28] sm:$0xff]
    %v796 = vld [vmem:[%s3 + $0x30] sm:$0xff]
    %v797 = vld [vmem:[%s3 + $0x38] sm:$0xff]
    %v798 = vld [vmem:[%s3 + $0x40] sm:$0xff]
    %v799 = vld [vmem:[%s3 + $0x48] sm:$0xff]
    %v800 = vld [vmem:[%s3 + $0x50] sm:$0xff]
    %v801 = vld [vmem:[%s3 + $0x58] sm:$0xff]
    %v802 = vld [vmem:[%s3 + $0x60] sm:$0xff]
    %v803 = vld [vmem:[%s3 + $0x68] sm:$0xff]
    %v804 = vld [vmem:[%s3 + $0x70] sm:$0xff]
    %v805 = vld [vmem:[%s3 + $0x78] sm:$0xff]
    %v806 = vld [vmem:[%s3 + $0x80] sm:$0xff]
    %v807 = vld [vmem:[%s3 + $0x88] sm:$0xff]
    %v808 = vld [vmem:[%s3 + $0x90] sm:$0xff]
    %v809 = vld [vmem:[%s3 + $0x98] sm:$0xff]
    %v810 = vld [vmem:[%s3 + $0xa0] sm:$0xff]
    %v811 = vld [vmem:[%s3 + $0xa8] sm:$0xff]
    %v812 = vld [vmem:[%s3 + $0xb0] sm:$0xff]
    %v813 = vld [vmem:[%s3 + $0xb8] sm:$0xff]
    %v814 = vld [vmem:[%s3 + $0xc0] sm:$0xff]
    %v815 = vld [vmem:[%s3 + $0xc8] sm:$0xff]
    %v816 = vld [vmem:[%s3 + $0xd0] sm:$0xff]
    %v817 = vld [vmem:[%s3 + $0xd8] sm:$0xff]
    %v818 = vld [vmem:[%s3 + $0xe0] sm:$0xff]
    %v819 = vld [vmem:[%s3 + $0xe8] sm:$0xff]
    %v820 = vld [vmem:[%s3 + $0xf0] sm:$0xff]
    %v821 = vld [vmem:[%s3 + $0xf8] sm:$0xff]
    %v822 = vld [vmem:[%s3 + $0x100] sm:$0xff]
    %v823 = vld [vmem:[%s3 + $0x108] sm:$0xff]
    %v824 = vld [vmem:[%s3 + $0x110] sm:$0xff]
    %v825 = vld [vmem:[%s3 + $0x118] sm:$0xff]
    %v826 = vld [vmem:[%s3 + $0x120] sm:$0xff]
    %v827 = vld [vmem:[%s3 + $0x128] sm:$0xff]
    %v828 = vld [vmem:[%s3 + $0x130] sm:$0xff]
    %v829 = vld [vmem:[%s3 + $0x138] sm:$0xff]
    %v830 = vld [vmem:[%s3 + $0x140] sm:$0xff]
    %v831 = vld [vmem:[%s3 + $0x148] sm:$0xff]
    %v832 = vld [vmem:[%s3 + $0x150] sm:$0xff]
    %v833 = vld [vmem:[%s3 + $0x158] sm:$0xff]
    %v834 = vld [vmem:[%s3 + $0x160] sm:$0xff]
    %v835 = vld [vmem:[%s3 + $0x168] sm:$0xff]
    %v836 = vld [vmem:[%s3 + $0x170] sm:$0xff]
    %v837 = vld [vmem:[%s3 + $0x178] sm:$0xff]
    %v838 = vld [vmem:[%s3 + $0x180] sm:$0xff]
    %v839 = vld [vmem:[%s3 + $0x188] sm:$0xff]
    %v840 = vld [vmem:[%s3 + $0x190] sm:$0xff]
    %v841 = vld [vmem:[%s3 + $0x198] sm:$0xff]
    %v842 = vld [vmem:[%s3 + $0x1a0] sm:$0xff]
    %v843 = vld [vmem:[%s3 + $0x1a8] sm:$0xff]
    %v844 = vld [vmem:[%s3 + $0x1b0] sm:$0xff]
    %v845 = vld [vmem:[%s3 + $0x1b8] sm:$0xff]
    %v846 = vld [vmem:[%s3 + $0x1c0] sm:$0xff]
    %v847 = vld [vmem:[%s3 + $0x1c8] sm:$0xff]
    %v848 = vld [vmem:[%s3 + $0x1d0] sm:$0xff]
    %v849 = vld [vmem:[%s3 + $0x1d8] sm:$0xff]
    %v850 = vld [vmem:[%s3 + $0x1e0] sm:$0xff]
    %v851 = vld [vmem:[%s3 + $0x1e8] sm:$0xff]
    %v852 = vld [vmem:[%s3 + $0x1f0] sm:$0xff]
    %v853 = vld [vmem:[%s3 + $0x1f8] sm:$0xff]
    %v854 = vld [vmem:[%s3 + $0x200] sm:$0xff]
    %v855 = vld [vmem:[%s3 + $0x208] sm:$0xff]
    %v856 = vld [vmem:[%s3 + $0x210] sm:$0xff]
    %v857 = vld [vmem:[%s3 + $0x218] sm:$0xff]
    %v858 = vld [vmem:[%s3 + $0x220] sm:$0xff]
    %v859 = vld [vmem:[%s3 + $0x228] sm:$0xff]
    %v860 = vld [vmem:[%s3 + $0x230] sm:$0xff]
    %v861 = vld [vmem:[%s3 + $0x238] sm:$0xff]
    %v862 = vld [vmem:[%s3 + $0x240] sm:$0xff]
    %v863 = vld [vmem:[%s3 + $0x248] sm:$0xff]
    %v864 = vld [vmem:[%s3 + $0x250] sm:$0xff]
    %v865 = vld [vmem:[%s3 + $0x258] sm:$0xff]
    %v866 = vld [vmem:[%s3 + $0x260] sm:$0xff]
    %v867 = vld [vmem:[%s3 + $0x268] sm:$0xff]
    %v868 = vld [vmem:[%s3 + $0x270] sm:$0xff]
    %v869 = vld [vmem:[%s3 + $0x278] sm:$0xff]
    %v870 = vld [vmem:[%s3 + $0x280] sm:$0xff]
    %v871 = vld [vmem:[%s3 + $0x288] sm:$0xff]
    %v872 = vld [vmem:[%s3 + $0x290] sm:$0xff]
    %v873 = vld [vmem:[%s3 + $0x298] sm:$0xff]
    %v874 = vld [vmem:[%s3 + $0x2a0] sm:$0xff]
    %v875 = vld [vmem:[%s3 + $0x2a8] sm:$0xff]
    %v876 = vld [vmem:[%s3 + $0x2b0] sm:$0xff]
    %v877 = vld [vmem:[%s3 + $0x2b8] sm:$0xff]
    %v878 = vld [vmem:[%s3 + $0x2c0] sm:$0xff]
    %v879 = vld [vmem:[%s3 + $0x2c8] sm:$0xff]
    %v880 = vld [vmem:[%s3 + $0x2d0] sm:$0xff]
    %v881 = vld [vmem:[%s3 + $0x2d8] sm:$0xff]
    %v882 = vld [vmem:[%s3 + $0x2e0] sm:$0xff]
    %v883 = vld [vmem:[%s3 + $0x2e8] sm:$0xff]
    %v884 = vld [vmem:[%s3 + $0x2f0] sm:$0xff]
    %v885 = vld [vmem:[%s3 + $0x2f8] sm:$0xff]
    %v886 = vld [vmem:[%s4] sm:$0x1]
    %v887 = vld [vmem:[%s5] sm:$0x1]
    %s888 = smul.u32 0, 6
    %s889 = smul.addr %s888, 8
    %s890 = scalar_lea.vmem [#allocation2], %s889
    %v891 = vld [vmem:[%s890] sm:$0xff]
    %v892 = vld [vmem:[%s890 + $0x8] sm:$0xff]
    %v893 = vld [vmem:[%s890 + $0x10] sm:$0xff]
    %s894 = smul.u32 15, 6
    %s895 = smul.addr %s894, 8
    %s896 = scalar_lea.vmem [#allocation2], %s895
    %v897 = vld [vmem:[%s896 + $0x18] sm:$0xff]
    %v898 = vld [vmem:[%s896 + $0x20] sm:$0xff]
    %v899 = vld [vmem:[%s896 + $0x28] sm:$0xff]
    %v996 = vunpack.c.l.b16 %v790
    %v997 = vunpack.c.h.b16 %v790
    %v998 = vunpack.c.l.b16 %v791
    %v999 = vunpack.c.h.b16 %v791
    %v1000 = vunpack.c.l.b16 %v792
    %v1001 = vunpack.c.h.b16 %v792
    %v1002 = vunpack.c.l.b16 %v793
    %v1003 = vunpack.c.h.b16 %v793
    %v1004 = vunpack.c.l.b16 %v794
    %v1005 = vunpack.c.h.b16 %v794
    %v1006 = vunpack.c.l.b16 %v795
    %v1007 = vunpack.c.h.b16 %v795
    %v1008 = vunpack.c.l.b16 %v796
    %v1009 = vunpack.c.h.b16 %v796
    %v1010 = vunpack.c.l.b16 %v797
    %v1011 = vunpack.c.h.b16 %v797
    %v1012 = vunpack.c.l.b16 %v798
    %v1013 = vunpack.c.h.b16 %v798
    %v1014 = vunpack.c.l.b16 %v799
    %v1015 = vunpack.c.h.b16 %v799
    %v1016 = vunpack.c.l.b16 %v800
    %v1017 = vunpack.c.h.b16 %v800
    %v1018 = vunpack.c.l.b16 %v801
    %v1019 = vunpack.c.h.b16 %v801
    %v1020 = vunpack.c.l.b16 %v802
    %v1021 = vunpack.c.h.b16 %v802
    %v1022 = vunpack.c.l.b16 %v803
    %v1023 = vunpack.c.h.b16 %v803
    %v1024 = vunpack.c.l.b16 %v804
    %v1025 = vunpack.c.h.b16 %v804
    %v1026 = vunpack.c.l.b16 %v805
    %v1027 = vunpack.c.h.b16 %v805
    %v1028 = vunpack.c.l.b16 %v806
    %v1029 = vunpack.c.h.b16 %v806
    %v1030 = vunpack.c.l.b16 %v807
    %v1031 = vunpack.c.h.b16 %v807
    %v1032 = vunpack.c.l.b16 %v808
    %v1033 = vunpack.c.h.b16 %v808
    %v1034 = vunpack.c.l.b16 %v809
    %v1035 = vunpack.c.h.b16 %v809
    %v1036 = vunpack.c.l.b16 %v810
    %v1037 = vunpack.c.h.b16 %v810
    %v1038 = vunpack.c.l.b16 %v811
    %v1039 = vunpack.c.h.b16 %v811
    %v1040 = vunpack.c.l.b16 %v812
    %v1041 = vunpack.c.h.b16 %v812
    %v1042 = vunpack.c.l.b16 %v813
    %v1043 = vunpack.c.h.b16 %v813
    %v1044 = vunpack.c.l.b16 %v814
    %v1045 = vunpack.c.h.b16 %v814
    %v1046 = vunpack.c.l.b16 %v815
    %v1047 = vunpack.c.h.b16 %v815
    %v1048 = vunpack.c.l.b16 %v816
    %v1049 = vunpack.c.h.b16 %v816
    %v1050 = vunpack.c.l.b16 %v817
    %v1051 = vunpack.c.h.b16 %v817
    %v1052 = vunpack.c.l.b16 %v818
    %v1053 = vunpack.c.h.b16 %v818
    %v1054 = vunpack.c.l.b16 %v819
    %v1055 = vunpack.c.h.b16 %v819
    %v1056 = vunpack.c.l.b16 %v820
    %v1057 = vunpack.c.h.b16 %v820
    %v1058 = vunpack.c.l.b16 %v821
    %v1059 = vunpack.c.h.b16 %v821
    %v1060 = vunpack.c.l.b16 %v822
    %v1061 = vunpack.c.h.b16 %v822
    %v1062 = vunpack.c.l.b16 %v823
    %v1063 = vunpack.c.h.b16 %v823
    %v1064 = vunpack.c.l.b16 %v824
    %v1065 = vunpack.c.h.b16 %v824
    %v1066 = vunpack.c.l.b16 %v825
    %v1067 = vunpack.c.h.b16 %v825
    %v1068 = vunpack.c.l.b16 %v826
    %v1069 = vunpack.c.h.b16 %v826
    %v1070 = vunpack.c.l.b16 %v827
    %v1071 = vunpack.c.h.b16 %v827
    %v1072 = vunpack.c.l.b16 %v828
    %v1073 = vunpack.c.h.b16 %v828
    %v1074 = vunpack.c.l.b16 %v829
    %v1075 = vunpack.c.h.b16 %v829
    %v1076 = vunpack.c.l.b16 %v830
    %v1077 = vunpack.c.h.b16 %v830
    %v1078 = vunpack.c.l.b16 %v831
    %v1079 = vunpack.c.h.b16 %v831
    %v1080 = vunpack.c.l.b16 %v832
    %v1081 = vunpack.c.h.b16 %v832
    %v1082 = vunpack.c.l.b16 %v833
    %v1083 = vunpack.c.h.b16 %v833
    %v1084 = vunpack.c.l.b16 %v834
    %v1085 = vunpack.c.h.b16 %v834
    %v1086 = vunpack.c.l.b16 %v835
    %v1087 = vunpack.c.h.b16 %v835
    %v1088 = vunpack.c.l.b16 %v836
    %v1089 = vunpack.c.h.b16 %v836
    %v1090 = vunpack.c.l.b16 %v837
    %v1091 = vunpack.c.h.b16 %v837
    %v1092 = vunpack.c.l.b16 %v838
    %v1093 = vunpack.c.h.b16 %v838
    %v1094 = vunpack.c.l.b16 %v839
    %v1095 = vunpack.c.h.b16 %v839
    %v1096 = vunpack.c.l.b16 %v840
    %v1097 = vunpack.c.h.b16 %v840
    %v1098 = vunpack.c.l.b16 %v841
    %v1099 = vunpack.c.h.b16 %v841
    %v1100 = vunpack.c.l.b16 %v842
    %v1101 = vunpack.c.h.b16 %v842
    %v1102 = vunpack.c.l.b16 %v843
    %v1103 = vunpack.c.h.b16 %v843
    %v1104 = vunpack.c.l.b16 %v844
    %v1105 = vunpack.c.h.b16 %v844
    %v1106 = vunpack.c.l.b16 %v845
    %v1107 = vunpack.c.h.b16 %v845
    %v1108 = vunpack.c.l.b16 %v846
    %v1109 = vunpack.c.h.b16 %v846
    %v1110 = vunpack.c.l.b16 %v847
    %v1111 = vunpack.c.h.b16 %v847
    %v1112 = vunpack.c.l.b16 %v848
    %v1113 = vunpack.c.h.b16 %v848
    %v1114 = vunpack.c.l.b16 %v849
    %v1115 = vunpack.c.h.b16 %v849
    %v1116 = vunpack.c.l.b16 %v850
    %v1117 = vunpack.c.h.b16 %v850
    %v1118 = vunpack.c.l.b16 %v851
    %v1119 = vunpack.c.h.b16 %v851
    %v1120 = vunpack.c.l.b16 %v852
    %v1121 = vunpack.c.h.b16 %v852
    %v1122 = vunpack.c.l.b16 %v853
    %v1123 = vunpack.c.h.b16 %v853
    %v1124 = vunpack.c.l.b16 %v854
    %v1125 = vunpack.c.h.b16 %v854
    %v1126 = vunpack.c.l.b16 %v855
    %v1127 = vunpack.c.h.b16 %v855
    %v1128 = vunpack.c.l.b16 %v856
    %v1129 = vunpack.c.h.b16 %v856
    %v1130 = vunpack.c.l.b16 %v857
    %v1131 = vunpack.c.h.b16 %v857
    %v1132 = vunpack.c.l.b16 %v858
    %v1133 = vunpack.c.h.b16 %v858
    %v1134 = vunpack.c.l.b16 %v859
    %v1135 = vunpack.c.h.b16 %v859
    %v1136 = vunpack.c.l.b16 %v860
    %v1137 = vunpack.c.h.b16 %v860
    %v1138 = vunpack.c.l.b16 %v861
    %v1139 = vunpack.c.h.b16 %v861
    %v1140 = vunpack.c.l.b16 %v862
    %v1141 = vunpack.c.h.b16 %v862
    %v1142 = vunpack.c.l.b16 %v863
    %v1143 = vunpack.c.h.b16 %v863
    %v1144 = vunpack.c.l.b16 %v864
    %v1145 = vunpack.c.h.b16 %v864
    %v1146 = vunpack.c.l.b16 %v865
    %v1147 = vunpack.c.h.b16 %v865
    %v1148 = vunpack.c.l.b16 %v866
    %v1149 = vunpack.c.h.b16 %v866
    %v1150 = vunpack.c.l.b16 %v867
    %v1151 = vunpack.c.h.b16 %v867
    %v1152 = vunpack.c.l.b16 %v868
    %v1153 = vunpack.c.h.b16 %v868
    %v1154 = vunpack.c.l.b16 %v869
    %v1155 = vunpack.c.h.b16 %v869
    %v1156 = vunpack.c.l.b16 %v870
    %v1157 = vunpack.c.h.b16 %v870
    %v1158 = vunpack.c.l.b16 %v871
    %v1159 = vunpack.c.h.b16 %v871
    %v1160 = vunpack.c.l.b16 %v872
    %v1161 = vunpack.c.h.b16 %v872
    %v1162 = vunpack.c.l.b16 %v873
    %v1163 = vunpack.c.h.b16 %v873
    %v1164 = vunpack.c.l.b16 %v874
    %v1165 = vunpack.c.h.b16 %v874
    %v1166 = vunpack.c.l.b16 %v875
    %v1167 = vunpack.c.h.b16 %v875
    %v1168 = vunpack.c.l.b16 %v876
    %v1169 = vunpack.c.h.b16 %v876
    %v1170 = vunpack.c.l.b16 %v877
    %v1171 = vunpack.c.h.b16 %v877
    %v1172 = vunpack.c.l.b16 %v878
    %v1173 = vunpack.c.h.b16 %v878
    %v1174 = vunpack.c.l.b16 %v879
    %v1175 = vunpack.c.h.b16 %v879
    %v1176 = vunpack.c.l.b16 %v880
    %v1177 = vunpack.c.h.b16 %v880
    %v1178 = vunpack.c.l.b16 %v881
    %v1179 = vunpack.c.h.b16 %v881
    %v1180 = vunpack.c.l.b16 %v882
    %v1181 = vunpack.c.h.b16 %v882
    %v1182 = vunpack.c.l.b16 %v883
    %v1183 = vunpack.c.h.b16 %v883
    %v1184 = vunpack.c.l.b16 %v884
    %v1185 = vunpack.c.h.b16 %v884
    %v1186 = vunpack.c.l.b16 %v885
    %v1187 = vunpack.c.h.b16 %v885
    %v1188 = vpack.c.b16 %v1002, %v996
    %v1189 = vpack.c.b16 %v1003, %v997
    %v1190 = vpack.c.b16 %v1004, %v998
    %v1191 = vpack.c.b16 %v1005, %v999
    %v1192 = vpack.c.b16 %v1006, %v1000
    %v1193 = vpack.c.b16 %v1007, %v1001
    %v1194 = vpack.c.b16 %v1014, %v1008
    %v1195 = vpack.c.b16 %v1015, %v1009
    %v1196 = vpack.c.b16 %v1016, %v1010
    %v1197 = vpack.c.b16 %v1017, %v1011
    %v1198 = vpack.c.b16 %v1018, %v1012
    %v1199 = vpack.c.b16 %v1019, %v1013
    %v1200 = vpack.c.b16 %v1026, %v1020
    %v1201 = vpack.c.b16 %v1027, %v1021
    %v1202 = vpack.c.b16 %v1028, %v1022
    %v1203 = vpack.c.b16 %v1029, %v1023
    %v1204 = vpack.c.b16 %v1030, %v1024
    %v1205 = vpack.c.b16 %v1031, %v1025
    %v1206 = vpack.c.b16 %v1038, %v1032
    %v1207 = vpack.c.b16 %v1039, %v1033
    %v1208 = vpack.c.b16 %v1040, %v1034
    %v1209 = vpack.c.b16 %v1041, %v1035
    %v1210 = vpack.c.b16 %v1042, %v1036
    %v1211 = vpack.c.b16 %v1043, %v1037
    %v1212 = vpack.c.b16 %v1050, %v1044
    %v1213 = vpack.c.b16 %v1051, %v1045
    %v1214 = vpack.c.b16 %v1052, %v1046
    %v1215 = vpack.c.b16 %v1053, %v1047
    %v1216 = vpack.c.b16 %v1054, %v1048
    %v1217 = vpack.c.b16 %v1055, %v1049
    %v1218 = vpack.c.b16 %v1062, %v1056
    %v1219 = vpack.c.b16 %v1063, %v1057
    %v1220 = vpack.c.b16 %v1064, %v1058
    %v1221 = vpack.c.b16 %v1065, %v1059
    %v1222 = vpack.c.b16 %v1066, %v1060
    %v1223 = vpack.c.b16 %v1067, %v1061
    %v1224 = vpack.c.b16 %v1074, %v1068
    %v1225 = vpack.c.b16 %v1075, %v1069
    %v1226 = vpack.c.b16 %v1076, %v1070
    %v1227 = vpack.c.b16 %v1077, %v1071
    %v1228 = vpack.c.b16 %v1078, %v1072
    %v1229 = vpack.c.b16 %v1079, %v1073
    %v1230 = vpack.c.b16 %v1086, %v1080
    %v1231 = vpack.c.b16 %v1087, %v1081
    %v1232 = vpack.c.b16 %v1088, %v1082
    %v1233 = vpack.c.b16 %v1089, %v1083
    %v1234 = vpack.c.b16 %v1090, %v1084
    %v1235 = vpack.c.b16 %v1091, %v1085
    %v1236 = vpack.c.b16 %v1098, %v1092
    %v1237 = vpack.c.b16 %v1099, %v1093
    %v1238 = vpack.c.b16 %v1100, %v1094
    %v1239 = vpack.c.b16 %v1101, %v1095
    %v1240 = vpack.c.b16 %v1102, %v1096
    %v1241 = vpack.c.b16 %v1103, %v1097
    %v1242 = vpack.c.b16 %v1110, %v1104
    %v1243 = vpack.c.b16 %v1111, %v1105
    %v1244 = vpack.c.b16 %v1112, %v1106
    %v1245 = vpack.c.b16 %v1113, %v1107
    %v1246 = vpack.c.b16 %v1114, %v1108
    %v1247 = vpack.c.b16 %v1115, %v1109
    %v1248 = vpack.c.b16 %v1122, %v1116
    %v1249 = vpack.c.b16 %v1123, %v1117
    %v1250 = vpack.c.b16 %v1124, %v1118
    %v1251 = vpack.c.b16 %v1125, %v1119
    %v1252 = vpack.c.b16 %v1126, %v1120
    %v1253 = vpack.c.b16 %v1127, %v1121
    %v1254 = vpack.c.b16 %v1134, %v1128
    %v1255 = vpack.c.b16 %v1135, %v1129
    %v1256 = vpack.c.b16 %v1136, %v1130
    %v1257 = vpack.c.b16 %v1137, %v1131
    %v1258 = vpack.c.b16 %v1138, %v1132
    %v1259 = vpack.c.b16 %v1139, %v1133
    %v1260 = vpack.c.b16 %v1146, %v1140
    %v1261 = vpack.c.b16 %v1147, %v1141
    %v1262 = vpack.c.b16 %v1148, %v1142
    %v1263 = vpack.c.b16 %v1149, %v1143
    %v1264 = vpack.c.b16 %v1150, %v1144
    %v1265 = vpack.c.b16 %v1151, %v1145
    %v1266 = vpack.c.b16 %v1158, %v1152
    %v1267 = vpack.c.b16 %v1159, %v1153
    %v1268 = vpack.c.b16 %v1160, %v1154
    %v1269 = vpack.c.b16 %v1161, %v1155
    %v1270 = vpack.c.b16 %v1162, %v1156
    %v1271 = vpack.c.b16 %v1163, %v1157
    %v1272 = vpack.c.b16 %v1170, %v1164
    %v1273 = vpack.c.b16 %v1171, %v1165
    %v1274 = vpack.c.b16 %v1172, %v1166
    %v1275 = vpack.c.b16 %v1173, %v1167
    %v1276 = vpack.c.b16 %v1174, %v1168
    %v1277 = vpack.c.b16 %v1175, %v1169
    %v1278 = vpack.c.b16 %v1182, %v1176
    %v1279 = vpack.c.b16 %v1183, %v1177
    %v1280 = vpack.c.b16 %v1184, %v1178
    %v1281 = vpack.c.b16 %v1185, %v1179
    %v1282 = vpack.c.b16 %v1186, %v1180
    %v1283 = vpack.c.b16 %v1187, %v1181
    %1380 = vmatpush.bf16.msra.mxu0 %v1230
    %1381 = vmatpush.bf16.msra.mxu0 %v1224
    %1382 = vmatpush.bf16.msra.mxu0 %v1218
    %1383 = vmatpush.bf16.msra.mxu0 %v1212
    %1384 = vmatpush.bf16.msra.mxu0 %v1206
    %1385 = vmatpush.bf16.msra.mxu0 %v1200
    %1386 = vmatpush.bf16.msra.mxu0 %v1194
    %1387 = vmatpush.bf16.msra.mxu0 %v1188
    %1388 = vmatmul.bf16.gmra.mxu0 0
    %v1389 = vpop.f32.mrf.mxu0
    %v1390 = vadd.f32 0.0, %v1389
    %v1391 = vpop.f32.mrf.mxu0
    %1392 = vdwg.mxu0
    %1393 = vmatpush.bf16.msra.mxu0 %v1278
    %1394 = vmatpush.bf16.msra.mxu0 %v1272
    %1395 = vmatpush.bf16.msra.mxu0 %v1266
    %1396 = vmatpush.bf16.msra.mxu0 %v1260
    %1397 = vmatpush.bf16.msra.mxu0 %v1254
    %1398 = vmatpush.bf16.msra.mxu0 %v1248
    %1399 = vmatpush.bf16.msra.mxu0 %v1242
    %1400 = vmatpush.bf16.msra.mxu0 %v1236
    %1401 = vmatmul.bf16.gmra.mxu0 0
    %v1402 = vpop.f32.mrf.mxu0
    %v1403 = vadd.f32 %v1390, %v1402
    %v1404 = vpop.f32.mrf.mxu0
    %1405 = vdwg.mxu0
    %1406 = vmatpush.bf16.msra.mxu0 %v1231
    %1407 = vmatpush.bf16.msra.mxu0 %v1225
    %1408 = vmatpush.bf16.msra.mxu0 %v1219
    %1409 = vmatpush.bf16.msra.mxu0 %v1213
    %1410 = vmatpush.bf16.msra.mxu0 %v1207
    %1411 = vmatpush.bf16.msra.mxu0 %v1201
    %1412 = vmatpush.bf16.msra.mxu0 %v1195
    %1413 = vmatpush.bf16.msra.mxu0 %v1189
    %1414 = vmatmul.bf16.gmra.mxu0 0
    %v1415 = vpop.f32.mrf.mxu0
    %v1416 = vadd.f32 0.0, %v1415
    %v1417 = vpop.f32.mrf.mxu0
    %1418 = vdwg.mxu0
    %1419 = vmatpush.bf16.msra.mxu0 %v1279
    %1420 = vmatpush.bf16.msra.mxu0 %v1273
    %1421 = vmatpush.bf16.msra.mxu0 %v1267
    %1422 = vmatpush.bf16.msra.mxu0 %v1261
    %1423 = vmatpush.bf16.msra.mxu0 %v1255
    %1424 = vmatpush.bf16.msra.mxu0 %v1249
    %1425 = vmatpush.bf16.msra.mxu0 %v1243
    %1426 = vmatpush.bf16.msra.mxu0 %v1237
    %1427 = vmatmul.bf16.gmra.mxu0 0
    %v1428 = vpop.f32.mrf.mxu0
    %v1429 = vadd.f32 %v1416, %v1428
    %v1430 = vpop.f32.mrf.mxu0
    %1431 = vdwg.mxu0
    %1432 = vmatpush.bf16.msra.mxu0 %v1232
    %1433 = vmatpush.bf16.msra.mxu0 %v1226
    %1434 = vmatpush.bf16.msra.mxu0 %v1220
    %1435 = vmatpush.bf16.msra.mxu0 %v1214
    %1436 = vmatpush.bf16.msra.mxu0 %v1208
    %1437 = vmatpush.bf16.msra.mxu0 %v1202
    %1438 = vmatpush.bf16.msra.mxu0 %v1196
    %1439 = vmatpush.bf16.msra.mxu0 %v1190
    %1440 = vmatmul.bf16.gmra.mxu0 0
    %v1441 = vpop.f32.mrf.mxu0
    %v1442 = vadd.f32 0.0, %v1441
    %v1443 = vpop.f32.mrf.mxu0
    %1444 = vdwg.mxu0
    %1445 = vmatpush.bf16.msra.mxu0 %v1280
    %1446 = vmatpush.bf16.msra.mxu0 %v1274
    %1447 = vmatpush.bf16.msra.mxu0 %v1268
    %1448 = vmatpush.bf16.msra.mxu0 %v1262
    %1449 = vmatpush.bf16.msra.mxu0 %v1256
    %1450 = vmatpush.bf16.msra.mxu0 %v1250
    %1451 = vmatpush.bf16.msra.mxu0 %v1244
    %1452 = vmatpush.bf16.msra.mxu0 %v1238
    %1453 = vmatmul.bf16.gmra.mxu0 0
    %v1454 = vpop.f32.mrf.mxu0
    %v1455 = vadd.f32 %v1442, %v1454
    %v1456 = vpop.f32.mrf.mxu0
    %1457 = vdwg.mxu0
    %1458 = vmatpush.bf16.msra.mxu0 %v1233
    %1459 = vmatpush.bf16.msra.mxu0 %v1227
    %1460 = vmatpush.bf16.msra.mxu0 %v1221
    %1461 = vmatpush.bf16.msra.mxu0 %v1215
    %1462 = vmatpush.bf16.msra.mxu0 %v1209
    %1463 = vmatpush.bf16.msra.mxu0 %v1203
    %1464 = vmatpush.bf16.msra.mxu0 %v1197
    %1465 = vmatpush.bf16.msra.mxu0 %v1191
    %1466 = vmatmul.bf16.gmra.mxu0 0
    %v1467 = vpop.f32.mrf.mxu0
    %v1468 = vadd.f32 0.0, %v1467
    %v1469 = vpop.f32.mrf.mxu0
    %1470 = vdwg.mxu0
    %1471 = vmatpush.bf16.msra.mxu0 %v1281
    %1472 = vmatpush.bf16.msra.mxu0 %v1275
    %1473 = vmatpush.bf16.msra.mxu0 %v1269
    %1474 = vmatpush.bf16.msra.mxu0 %v1263
    %1475 = vmatpush.bf16.msra.mxu0 %v1257
    %1476 = vmatpush.bf16.msra.mxu0 %v1251
    %1477 = vmatpush.bf16.msra.mxu0 %v1245
    %1478 = vmatpush.bf16.msra.mxu0 %v1239
    %1479 = vmatmul.bf16.gmra.mxu0 0
    %v1480 = vpop.f32.mrf.mxu0
    %v1481 = vadd.f32 %v1468, %v1480
    %v1482 = vpop.f32.mrf.mxu0
    %1483 = vdwg.mxu0
    %1484 = vmatpush.bf16.msra.mxu0 %v1234
    %1485 = vmatpush.bf16.msra.mxu0 %v1228
    %1486 = vmatpush.bf16.msra.mxu0 %v1222
    %1487 = vmatpush.bf16.msra.mxu0 %v1216
    %1488 = vmatpush.bf16.msra.mxu0 %v1210
    %1489 = vmatpush.bf16.msra.mxu0 %v1204
    %1490 = vmatpush.bf16.msra.mxu0 %v1198
    %1491 = vmatpush.bf16.msra.mxu0 %v1192
    %1492 = vmatmul.bf16.gmra.mxu0 0
    %v1493 = vpop.f32.mrf.mxu0
    %v1494 = vadd.f32 0.0, %v1493
    %v1495 = vpop.f32.mrf.mxu0
    %1496 = vdwg.mxu0
    %1497 = vmatpush.bf16.msra.mxu0 %v1282
    %1498 = vmatpush.bf16.msra.mxu0 %v1276
    %1499 = vmatpush.bf16.msra.mxu0 %v1270
    %1500 = vmatpush.bf16.msra.mxu0 %v1264
    %1501 = vmatpush.bf16.msra.mxu0 %v1258
    %1502 = vmatpush.bf16.msra.mxu0 %v1252
    %1503 = vmatpush.bf16.msra.mxu0 %v1246
    %1504 = vmatpush.bf16.msra.mxu0 %v1240
    %1505 = vmatmul.bf16.gmra.mxu0 0
    %v1506 = vpop.f32.mrf.mxu0
    %v1507 = vadd.f32 %v1494, %v1506
    %v1508 = vpop.f32.mrf.mxu0
    %1509 = vdwg.mxu0
    %1510 = vmatpush.bf16.msra.mxu0 %v1235
    %1511 = vmatpush.bf16.msra.mxu0 %v1229
    %1512 = vmatpush.bf16.msra.mxu0 %v1223
    %1513 = vmatpush.bf16.msra.mxu0 %v1217
    %1514 = vmatpush.bf16.msra.mxu0 %v1211
    %1515 = vmatpush.bf16.msra.mxu0 %v1205
    %1516 = vmatpush.bf16.msra.mxu0 %v1199
    %1517 = vmatpush.bf16.msra.mxu0 %v1193
    %1518 = vmatmul.bf16.gmra.mxu0 0
    %v1519 = vpop.f32.mrf.mxu0
    %v1520 = vadd.f32 0.0, %v1519
    %v1521 = vpop.f32.mrf.mxu0
    %1522 = vdwg.mxu0
    %1523 = vmatpush.bf16.msra.mxu0 %v1283
    %1524 = vmatpush.bf16.msra.mxu0 %v1277
    %1525 = vmatpush.bf16.msra.mxu0 %v1271
    %1526 = vmatpush.bf16.msra.mxu0 %v1265
    %1527 = vmatpush.bf16.msra.mxu0 %v1259
    %1528 = vmatpush.bf16.msra.mxu0 %v1253
    %1529 = vmatpush.bf16.msra.mxu0 %v1247
    %1530 = vmatpush.bf16.msra.mxu0 %v1241
    %1531 = vmatmul.bf16.gmra.mxu0 0
    %v1532 = vpop.f32.mrf.mxu0
    %v1533 = vadd.f32 %v1520, %v1532
    %v1534 = vpop.f32.mrf.mxu0
    %1535 = vdwg.mxu0
    %v1536 = vadd.f32 %v891, %v1403
    %v1537 = vmul.f32 %v1536, 0.5
    %v1538 = vtanh.pop %v1537
    %v1539 = vmul.f32 %v1538, 0.5
    %v1540 = vadd.f32 %v1539, 0.5
    %v1541 = vadd.f32 %v892, %v1429
    %v1542 = vmul.f32 %v1541, 0.5
    %v1543 = vtanh.pop %v1542
    %v1544 = vmul.f32 %v1543, 0.5
    %v1545 = vadd.f32 %v1544, 0.5
    %v1547 = vperm.slane %v886, 0
    %v1549 = vadd.f32 %v1455, %v1547
    %v1550 = vmul.f32 %v1540, %v1549
    %v1551 = vadd.f32 %v893, %v1550
    %v1552 = vtanh.pop %v1551
    %v1553 = vsub.f32 1.0, %v1545
    %v1554 = vmul.f32 %v1553, %v1552
    %v1555 = vmul.f32 %v1545, 0.0
    %v1556 = vadd.f32 %v1554, %v1555
    %v1557 = vadd.f32 %v897, %v1481
    %v1558 = vmul.f32 %v1557, 0.5
    %v1559 = vtanh.pop %v1558
    %v1560 = vmul.f32 %v1559, 0.5
    %v1561 = vadd.f32 %v1560, 0.5
    %v1562 = vadd.f32 %v898, %v1507
    %v1563 = vmul.f32 %v1562, 0.5
    %v1564 = vtanh.pop %v1563
    %v1565 = vmul.f32 %v1564, 0.5
    %v1566 = vadd.f32 %v1565, 0.5
    %v1568 = vperm.slane %v887, 0
    %v1570 = vadd.f32 %v1533, %v1568
    %v1571 = vmul.f32 %v1561, %v1570
    %v1572 = vadd.f32 %v899, %v1571
    %v1573 = vtanh.pop %v1572
    %v1574 = vsub.f32 1.0, %v1566
    %v1575 = vmul.f32 %v1574, %v1573
    %v1576 = vmul.f32 %v1566, 0.0
    %v1577 = vadd.f32 %v1575, %v1576
    %1578 = vst [vmem:[#allocation3] sm:$0xff] %v1556
    %s1579 = scalar_lea.vmem [#allocation3], 240
    %1580 = vst [vmem:[%s1579 + $0x8] sm:$0xff] %v1577
    %s1581 = smul.u32 1, 6
    %s1582 = smul.addr %s1581, 8
    %s1583 = scalar_lea.vmem [#allocation2], %s1582
    %v1584 = vld [vmem:[%s1583] sm:$0xff]
    %v1585 = vld [vmem:[%s1583 + $0x8] sm:$0xff]
    %v1586 = vld [vmem:[%s1583 + $0x10] sm:$0xff]
    %s1587 = smul.u32 14, 6
    %s1588 = smul.addr %s1587, 8
    %s1589 = scalar_lea.vmem [#allocation2], %s1588
    %v1590 = vld [vmem:[%s1589 + $0x18] sm:$0xff]
    %v1591 = vld [vmem:[%s1589 + $0x20] sm:$0xff]
    %v1592 = vld [vmem:[%s1589 + $0x28] sm:$0xff]
    %v1593 = vpack.c.bf16 %v1556, %v1556
    %v1594 = vpack.c.bf16 %v1577, %v1577
    %1595 = vmatpush.bf16.msra.mxu0 %v1230
    %1596 = vmatpush.bf16.msra.mxu0 %v1224
    %1597 = vmatpush.bf16.msra.mxu0 %v1218
    %1598 = vmatpush.bf16.msra.mxu0 %v1212
    %1599 = vmatpush.bf16.msra.mxu0 %v1206
    %1600 = vmatpush.bf16.msra.mxu0 %v1200
    %1601 = vmatpush.bf16.msra.mxu0 %v1194
    %1602 = vmatpush.bf16.msra.mxu0 %v1188
    %1603 = vmatmul.bf16.gmra.mxu0 %v1593
    %v1604 = vpop.f32.mrf.mxu0
    %v1605 = vadd.f32 0.0, %v1604
    %v1606 = vpop.f32.mrf.mxu0
    %1607 = vdwg.mxu0
    %1608 = vmatpush.bf16.msra.mxu0 %v1278
    %1609 = vmatpush.bf16.msra.mxu0 %v1272
    %1610 = vmatpush.bf16.msra.mxu0 %v1266
    %1611 = vmatpush.bf16.msra.mxu0 %v1260
    %1612 = vmatpush.bf16.msra.mxu0 %v1254
    %1613 = vmatpush.bf16.msra.mxu0 %v1248
    %1614 = vmatpush.bf16.msra.mxu0 %v1242
    %1615 = vmatpush.bf16.msra.mxu0 %v1236
    %1616 = vmatmul.bf16.gmra.mxu0 %v1594
    %v1617 = vpop.f32.mrf.mxu0
    %v1618 = vadd.f32 %v1605, %v1617
    %v1619 = vpop.f32.mrf.mxu0
    %1620 = vdwg.mxu0
    %1621 = vmatpush.bf16.msra.mxu0 %v1231
    %1622 = vmatpush.bf16.msra.mxu0 %v1225
    %1623 = vmatpush.bf16.msra.mxu0 %v1219
    %1624 = vmatpush.bf16.msra.mxu0 %v1213
    %1625 = vmatpush.bf16.msra.mxu0 %v1207
    %1626 = vmatpush.bf16.msra.mxu0 %v1201
    %1627 = vmatpush.bf16.msra.mxu0 %v1195
    %1628 = vmatpush.bf16.msra.mxu0 %v1189
    %1629 = vmatmul.bf16.gmra.mxu0 %v1593
    %v1630 = vpop.f32.mrf.mxu0
    %v1631 = vadd.f32 0.0, %v1630
    %v1632 = vpop.f32.mrf.mxu0
    %1633 = vdwg.mxu0
    %1634 = vmatpush.bf16.msra.mxu0 %v1279
    %1635 = vmatpush.bf16.msra.mxu0 %v1273
    %1636 = vmatpush.bf16.msra.mxu0 %v1267
    %1637 = vmatpush.bf16.msra.mxu0 %v1261
    %1638 = vmatpush.bf16.msra.mxu0 %v1255
    %1639 = vmatpush.bf16.msra.mxu0 %v1249
    %1640 = vmatpush.bf16.msra.mxu0 %v1243
    %1641 = vmatpush.bf16.msra.mxu0 %v1237
    %1642 = vmatmul.bf16.gmra.mxu0 %v1594
    %v1643 = vpop.f32.mrf.mxu0
    %v1644 = vadd.f32 %v1631, %v1643
    %v1645 = vpop.f32.mrf.mxu0
    %1646 = vdwg.mxu0
    %1647 = vmatpush.bf16.msra.mxu0 %v1232
    %1648 = vmatpush.bf16.msra.mxu0 %v1226
    %1649 = vmatpush.bf16.msra.mxu0 %v1220
    %1650 = vmatpush.bf16.msra.mxu0 %v1214
    %1651 = vmatpush.bf16.msra.mxu0 %v1208
    %1652 = vmatpush.bf16.msra.mxu0 %v1202
    %1653 = vmatpush.bf16.msra.mxu0 %v1196
    %1654 = vmatpush.bf16.msra.mxu0 %v1190
    %1655 = vmatmul.bf16.gmra.mxu0 %v1593
    %v1656 = vpop.f32.mrf.mxu0
    %v1657 = vadd.f32 0.0, %v1656
    %v1658 = vpop.f32.mrf.mxu0
    %1659 = vdwg.mxu0
    %1660 = vmatpush.bf16.msra.mxu0 %v1280
    %1661 = vmatpush.bf16.msra.mxu0 %v1274
    %1662 = vmatpush.bf16.msra.mxu0 %v1268
    %1663 = vmatpush.bf16.msra.mxu0 %v1262
    %1664 = vmatpush.bf16.msra.mxu0 %v1256
    %1665 = vmatpush.bf16.msra.mxu0 %v1250
    %1666 = vmatpush.bf16.msra.mxu0 %v1244
    %1667 = vmatpush.bf16.msra.mxu0 %v1238
    %1668 = vmatmul.bf16.gmra.mxu0 %v1594
    %v1669 = vpop.f32.mrf.mxu0
    %v1670 = vadd.f32 %v1657, %v1669
    %v1671 = vpop.f32.mrf.mxu0
    %1672 = vdwg.mxu0
    %1673 = vmatpush.bf16.msra.mxu0 %v1233
    %1674 = vmatpush.bf16.msra.mxu0 %v1227
    %1675 = vmatpush.bf16.msra.mxu0 %v1221
    %1676 = vmatpush.bf16.msra.mxu0 %v1215
    %1677 = vmatpush.bf16.msra.mxu0 %v1209
    %1678 = vmatpush.bf16.msra.mxu0 %v1203
    %1679 = vmatpush.bf16.msra.mxu0 %v1197
    %1680 = vmatpush.bf16.msra.mxu0 %v1191
    %1681 = vmatmul.bf16.gmra.mxu0 %v1593
    %v1682 = vpop.f32.mrf.mxu0
    %v1683 = vadd.f32 0.0, %v1682
    %v1684 = vpop.f32.mrf.mxu0
    %1685 = vdwg.mxu0
    %1686 = vmatpush.bf16.msra.mxu0 %v1281
    %1687 = vmatpush.bf16.msra.mxu0 %v1275
    %1688 = vmatpush.bf16.msra.mxu0 %v1269
    %1689 = vmatpush.bf16.msra.mxu0 %v1263
    %1690 = vmatpush.bf16.msra.mxu0 %v1257
    %1691 = vmatpush.bf16.msra.mxu0 %v1251
    %1692 = vmatpush.bf16.msra.mxu0 %v1245
    %1693 = vmatpush.bf16.msra.mxu0 %v1239
    %1694 = vmatmul.bf16.gmra.mxu0 %v1594
    %v1695 = vpop.f32.mrf.mxu0
    %v1696 = vadd.f32 %v1683, %v1695
    %v1697 = vpop.f32.mrf.mxu0
    %1698 = vdwg.mxu0
    %1699 = vmatpush.bf16.msra.mxu0 %v1234
    %1700 = vmatpush.bf16.msra.mxu0 %v1228
    %1701 = vmatpush.bf16.msra.mxu0 %v1222
    %1702 = vmatpush.bf16.msra.mxu0 %v1216
    %1703 = vmatpush.bf16.msra.mxu0 %v1210
    %1704 = vmatpush.bf16.msra.mxu0 %v1204
    %1705 = vmatpush.bf16.msra.mxu0 %v1198
    %1706 = vmatpush.bf16.msra.mxu0 %v1192
    %1707 = vmatmul.bf16.gmra.mxu0 %v1593
    %v1708 = vpop.f32.mrf.mxu0
    %v1709 = vadd.f32 0.0, %v1708
    %v1710 = vpop.f32.mrf.mxu0
    %1711 = vdwg.mxu0
    %1712 = vmatpush.bf16.msra.mxu0 %v1282
    %1713 = vmatpush.bf16.msra.mxu0 %v1276
    %1714 = vmatpush.bf16.msra.mxu0 %v1270
    %1715 = vmatpush.bf16.msra.mxu0 %v1264
    %1716 = vmatpush.bf16.msra.mxu0 %v1258
    %1717 = vmatpush.bf16.msra.mxu0 %v1252
    %1718 = vmatpush.bf16.msra.mxu0 %v1246
    %1719 = vmatpush.bf16.msra.mxu0 %v1240
    %1720 = vmatmul.bf16.gmra.mxu0 %v1594
    %v1721 = vpop.f32.mrf.mxu0
    %v1722 = vadd.f32 %v1709, %v1721
    %v1723 = vpop.f32.mrf.mxu0
    %1724 = vdwg.mxu0
    %1725 = vmatpush.bf16.msra.mxu0 %v1235
    %1726 = vmatpush.bf16.msra.mxu0 %v1229
    %1727 = vmatpush.bf16.msra.mxu0 %v1223
    %1728 = vmatpush.bf16.msra.mxu0 %v1217
    %1729 = vmatpush.bf16.msra.mxu0 %v1211
    %1730 = vmatpush.bf16.msra.mxu0 %v1205
    %1731 = vmatpush.bf16.msra.mxu0 %v1199
    %1732 = vmatpush.bf16.msra.mxu0 %v1193
    %1733 = vmatmul.bf16.gmra.mxu0 %v1593
    %v1734 = vpop.f32.mrf.mxu0
    %v1735 = vadd.f32 0.0, %v1734
    %v1736 = vpop.f32.mrf.mxu0
    %1737 = vdwg.mxu0
    %1738 = vmatpush.bf16.msra.mxu0 %v1283
    %1739 = vmatpush.bf16.msra.mxu0 %v1277
    %1740 = vmatpush.bf16.msra.mxu0 %v1271
    %1741 = vmatpush.bf16.msra.mxu0 %v1265
    %1742 = vmatpush.bf16.msra.mxu0 %v1259
    %1743 = vmatpush.bf16.msra.mxu0 %v1253
    %1744 = vmatpush.bf16.msra.mxu0 %v1247
    %1745 = vmatpush.bf16.msra.mxu0 %v1241
    %1746 = vmatmul.bf16.gmra.mxu0 %v1594
    %v1747 = vpop.f32.mrf.mxu0
    %v1748 = vadd.f32 %v1735, %v1747
    %v1749 = vpop.f32.mrf.mxu0
    %1750 = vdwg.mxu0
    %v1751 = vadd.f32 %v1584, %v1618
    %v1752 = vmul.f32 %v1751, 0.5
    %v1753 = vtanh.pop %v1752
    %v1754 = vmul.f32 %v1753, 0.5
    %v1755 = vadd.f32 %v1754, 0.5
    %v1756 = vadd.f32 %v1585, %v1644
    %v1757 = vmul.f32 %v1756, 0.5
    %v1758 = vtanh.pop %v1757
    %v1759 = vmul.f32 %v1758, 0.5
    %v1760 = vadd.f32 %v1759, 0.5
    %v1761 = vadd.f32 %v1670, %v1547
    %v1762 = vmul.f32 %v1755, %v1761
    %v1763 = vadd.f32 %v1586, %v1762
    %v1764 = vtanh.pop %v1763
    %v1765 = vsub.f32 1.0, %v1760
    %v1766 = vmul.f32 %v1765, %v1764
    %v1767 = vmul.f32 %v1760, %v1556
    %v1768 = vadd.f32 %v1766, %v1767
    %v1769 = vadd.f32 %v1590, %v1696
    %v1770 = vmul.f32 %v1769, 0.5
    %v1771 = vtanh.pop %v1770
    %v1772 = vmul.f32 %v1771, 0.5
    %v1773 = vadd.f32 %v1772, 0.5
    %v1774 = vadd.f32 %v1591, %v1722
    %v1775 = vmul.f32 %v1774, 0.5
    %v1776 = vtanh.pop %v1775
    %v1777 = vmul.f32 %v1776, 0.5
    %v1778 = vadd.f32 %v1777, 0.5
    %v1779 = vadd.f32 %v1748, %v1568
    %v1780 = vmul.f32 %v1773, %v1779
    %v1781 = vadd.f32 %v1592, %v1780
    %v1782 = vtanh.pop %v1781
    %v1783 = vsub.f32 1.0, %v1778
    %v1784 = vmul.f32 %v1783, %v1782
    %v1785 = vmul.f32 %v1778, %v1577
    %v1786 = vadd.f32 %v1784, %v1785
    %s1787 = scalar_lea.vmem [#allocation3], 16
    %1788 = vst [vmem:[%s1787] sm:$0xff] %v1768
    %s1789 = scalar_lea.vmem [#allocation3], 224
    %1790 = vst [vmem:[%s1789 + $0x8] sm:$0xff] %v1786
    %s1791 = smul.u32 2, 6
    %s1792 = smul.addr %s1791, 8
    %s1793 = scalar_lea.vmem [#allocation2], %s1792
    %v1794 = vld [vmem:[%s1793] sm:$0xff]
    %v1795 = vld [vmem:[%s1793 + $0x8] sm:$0xff]
    %v1796 = vld [vmem:[%s1793 + $0x10] sm:$0xff]
    %s1797 = smul.u32 13, 6
    %s1798 = smul.addr %s1797, 8
    %s1799 = scalar_lea.vmem [#allocation2], %s1798
    %v1800 = vld [vmem:[%s1799 + $0x18] sm:$0xff]
    %v1801 = vld [vmem:[%s1799 + $0x20] sm:$0xff]
    %v1802 = vld [vmem:[%s1799 + $0x28] sm:$0xff]
    %v1803 = vpack.c.bf16 %v1768, %v1768
    %v1804 = vpack.c.bf16 %v1786, %v1786
    %1805 = vmatpush.bf16.msra.mxu0 %v1230
    %1806 = vmatpush.bf16.msra.mxu0 %v1224
    %1807 = vmatpush.bf16.msra.mxu0 %v1218
    %1808 = vmatpush.bf16.msra.mxu0 %v1212
    %1809 = vmatpush.bf16.msra.mxu0 %v1206
    %1810 = vmatpush.bf16.msra.mxu0 %v1200
    %1811 = vmatpush.bf16.msra.mxu0 %v1194
    %1812 = vmatpush.bf16.msra.mxu0 %v1188
    %1813 = vmatmul.bf16.gmra.mxu0 %v1803
    %v1814 = vpop.f32.mrf.mxu0
    %v1815 = vadd.f32 0.0, %v1814
    %v1816 = vpop.f32.mrf.mxu0
    %1817 = vdwg.mxu0
    %1818 = vmatpush.bf16.msra.mxu0 %v1278
    %1819 = vmatpush.bf16.msra.mxu0 %v1272
    %1820 = vmatpush.bf16.msra.mxu0 %v1266
    %1821 = vmatpush.bf16.msra.mxu0 %v1260
    %1822 = vmatpush.bf16.msra.mxu0 %v1254
    %1823 = vmatpush.bf16.msra.mxu0 %v1248
    %1824 = vmatpush.bf16.msra.mxu0 %v1242
    %1825 = vmatpush.bf16.msra.mxu0 %v1236
    %1826 = vmatmul.bf16.gmra.mxu0 %v1804
    %v1827 = vpop.f32.mrf.mxu0
    %v1828 = vadd.f32 %v1815, %v1827
    %v1829 = vpop.f32.mrf.mxu0
    %1830 = vdwg.mxu0
    %1831 = vmatpush.bf16.msra.mxu0 %v1231
    %1832 = vmatpush.bf16.msra.mxu0 %v1225
    %1833 = vmatpush.bf16.msra.mxu0 %v1219
    %1834 = vmatpush.bf16.msra.mxu0 %v1213
    %1835 = vmatpush.bf16.msra.mxu0 %v1207
    %1836 = vmatpush.bf16.msra.mxu0 %v1201
    %1837 = vmatpush.bf16.msra.mxu0 %v1195
    %1838 = vmatpush.bf16.msra.mxu0 %v1189
    %1839 = vmatmul.bf16.gmra.mxu0 %v1803
    %v1840 = vpop.f32.mrf.mxu0
    %v1841 = vadd.f32 0.0, %v1840
    %v1842 = vpop.f32.mrf.mxu0
    %1843 = vdwg.mxu0
    %1844 = vmatpush.bf16.msra.mxu0 %v1279
    %1845 = vmatpush.bf16.msra.mxu0 %v1273
    %1846 = vmatpush.bf16.msra.mxu0 %v1267
    %1847 = vmatpush.bf16.msra.mxu0 %v1261
    %1848 = vmatpush.bf16.msra.mxu0 %v1255
    %1849 = vmatpush.bf16.msra.mxu0 %v1249
    %1850 = vmatpush.bf16.msra.mxu0 %v1243
    %1851 = vmatpush.bf16.msra.mxu0 %v1237
    %1852 = vmatmul.bf16.gmra.mxu0 %v1804
    %v1853 = vpop.f32.mrf.mxu0
    %v1854 = vadd.f32 %v1841, %v1853
    %v1855 = vpop.f32.mrf.mxu0
    %1856 = vdwg.mxu0
    %1857 = vmatpush.bf16.msra.mxu0 %v1232
    %1858 = vmatpush.bf16.msra.mxu0 %v1226
    %1859 = vmatpush.bf16.msra.mxu0 %v1220
    %1860 = vmatpush.bf16.msra.mxu0 %v1214
    %1861 = vmatpush.bf16.msra.mxu0 %v1208
    %1862 = vmatpush.bf16.msra.mxu0 %v1202
    %1863 = vmatpush.bf16.msra.mxu0 %v1196
    %1864 = vmatpush.bf16.msra.mxu0 %v1190
    %1865 = vmatmul.bf16.gmra.mxu0 %v1803
    %v1866 = vpop.f32.mrf.mxu0
    %v1867 = vadd.f32 0.0, %v1866
    %v1868 = vpop.f32.mrf.mxu0
    %1869 = vdwg.mxu0
    %1870 = vmatpush.bf16.msra.mxu0 %v1280
    %1871 = vmatpush.bf16.msra.mxu0 %v1274
    %1872 = vmatpush.bf16.msra.mxu0 %v1268
    %1873 = vmatpush.bf16.msra.mxu0 %v1262
    %1874 = vmatpush.bf16.msra.mxu0 %v1256
    %1875 = vmatpush.bf16.msra.mxu0 %v1250
    %1876 = vmatpush.bf16.msra.mxu0 %v1244
    %1877 = vmatpush.bf16.msra.mxu0 %v1238
    %1878 = vmatmul.bf16.gmra.mxu0 %v1804
    %v1879 = vpop.f32.mrf.mxu0
    %v1880 = vadd.f32 %v1867, %v1879
    %v1881 = vpop.f32.mrf.mxu0
    %1882 = vdwg.mxu0
    %1883 = vmatpush.bf16.msra.mxu0 %v1233
    %1884 = vmatpush.bf16.msra.mxu0 %v1227
    %1885 = vmatpush.bf16.msra.mxu0 %v1221
    %1886 = vmatpush.bf16.msra.mxu0 %v1215
    %1887 = vmatpush.bf16.msra.mxu0 %v1209
    %1888 = vmatpush.bf16.msra.mxu0 %v1203
    %1889 = vmatpush.bf16.msra.mxu0 %v1197
    %1890 = vmatpush.bf16.msra.mxu0 %v1191
    %1891 = vmatmul.bf16.gmra.mxu0 %v1803
    %v1892 = vpop.f32.mrf.mxu0
    %v1893 = vadd.f32 0.0, %v1892
    %v1894 = vpop.f32.mrf.mxu0
    %1895 = vdwg.mxu0
    %1896 = vmatpush.bf16.msra.mxu0 %v1281
    %1897 = vmatpush.bf16.msra.mxu0 %v1275
    %1898 = vmatpush.bf16.msra.mxu0 %v1269
    %1899 = vmatpush.bf16.msra.mxu0 %v1263
    %1900 = vmatpush.bf16.msra.mxu0 %v1257
    %1901 = vmatpush.bf16.msra.mxu0 %v1251
    %1902 = vmatpush.bf16.msra.mxu0 %v1245
    %1903 = vmatpush.bf16.msra.mxu0 %v1239
    %1904 = vmatmul.bf16.gmra.mxu0 %v1804
    %v1905 = vpop.f32.mrf.mxu0
    %v1906 = vadd.f32 %v1893, %v1905
    %v1907 = vpop.f32.mrf.mxu0
    %1908 = vdwg.mxu0
    %1909 = vmatpush.bf16.msra.mxu0 %v1234
    %1910 = vmatpush.bf16.msra.mxu0 %v1228
    %1911 = vmatpush.bf16.msra.mxu0 %v1222
    %1912 = vmatpush.bf16.msra.mxu0 %v1216
    %1913 = vmatpush.bf16.msra.mxu0 %v1210
    %1914 = vmatpush.bf16.msra.mxu0 %v1204
    %1915 = vmatpush.bf16.msra.mxu0 %v1198
    %1916 = vmatpush.bf16.msra.mxu0 %v1192
    %1917 = vmatmul.bf16.gmra.mxu0 %v1803
    %v1918 = vpop.f32.mrf.mxu0
    %v1919 = vadd.f32 0.0, %v1918
    %v1920 = vpop.f32.mrf.mxu0
    %1921 = vdwg.mxu0
    %1922 = vmatpush.bf16.msra.mxu0 %v1282
    %1923 = vmatpush.bf16.msra.mxu0 %v1276
    %1924 = vmatpush.bf16.msra.mxu0 %v1270
    %1925 = vmatpush.bf16.msra.mxu0 %v1264
    %1926 = vmatpush.bf16.msra.mxu0 %v1258
    %1927 = vmatpush.bf16.msra.mxu0 %v1252
    %1928 = vmatpush.bf16.msra.mxu0 %v1246
    %1929 = vmatpush.bf16.msra.mxu0 %v1240
    %1930 = vmatmul.bf16.gmra.mxu0 %v1804
    %v1931 = vpop.f32.mrf.mxu0
    %v1932 = vadd.f32 %v1919, %v1931
    %v1933 = vpop.f32.mrf.mxu0
    %1934 = vdwg.mxu0
    %1935 = vmatpush.bf16.msra.mxu0 %v1235
    %1936 = vmatpush.bf16.msra.mxu0 %v1229
    %1937 = vmatpush.bf16.msra.mxu0 %v1223
    %1938 = vmatpush.bf16.msra.mxu0 %v1217
    %1939 = vmatpush.bf16.msra.mxu0 %v1211
    %1940 = vmatpush.bf16.msra.mxu0 %v1205
    %1941 = vmatpush.bf16.msra.mxu0 %v1199
    %1942 = vmatpush.bf16.msra.mxu0 %v1193
    %1943 = vmatmul.bf16.gmra.mxu0 %v1803
    %v1944 = vpop.f32.mrf.mxu0
    %v1945 = vadd.f32 0.0, %v1944
    %v1946 = vpop.f32.mrf.mxu0
    %1947 = vdwg.mxu0
    %1948 = vmatpush.bf16.msra.mxu0 %v1283
    %1949 = vmatpush.bf16.msra.mxu0 %v1277
    %1950 = vmatpush.bf16.msra.mxu0 %v1271
    %1951 = vmatpush.bf16.msra.mxu0 %v1265
    %1952 = vmatpush.bf16.msra.mxu0 %v1259
    %1953 = vmatpush.bf16.msra.mxu0 %v1253
    %1954 = vmatpush.bf16.msra.mxu0 %v1247
    %1955 = vmatpush.bf16.msra.mxu0 %v1241
    %1956 = vmatmul.bf16.gmra.mxu0 %v1804
    %v1957 = vpop.f32.mrf.mxu0
    %v1958 = vadd.f32 %v1945, %v1957
    %v1959 = vpop.f32.mrf.mxu0
    %1960 = vdwg.mxu0
    %v1961 = vadd.f32 %v1794, %v1828
    %v1962 = vmul.f32 %v1961, 0.5
    %v1963 = vtanh.pop %v1962
    %v1964 = vmul.f32 %v1963, 0.5
    %v1965 = vadd.f32 %v1964, 0.5
    %v1966 = vadd.f32 %v1795, %v1854
    %v1967 = vmul.f32 %v1966, 0.5
    %v1968 = vtanh.pop %v1967
    %v1969 = vmul.f32 %v1968, 0.5
    %v1970 = vadd.f32 %v1969, 0.5
    %v1971 = vadd.f32 %v1880, %v1547
    %v1972 = vmul.f32 %v1965, %v1971
    %v1973 = vadd.f32 %v1796, %v1972
    %v1974 = vtanh.pop %v1973
    %v1975 = vsub.f32 1.0, %v1970
    %v1976 = vmul.f32 %v1975, %v1974
    %v1977 = vmul.f32 %v1970, %v1768
    %v1978 = vadd.f32 %v1976, %v1977
    %v1979 = vadd.f32 %v1800, %v1906
    %v1980 = vmul.f32 %v1979, 0.5
    %v1981 = vtanh.pop %v1980
    %v1982 = vmul.f32 %v1981, 0.5
    %v1983 = vadd.f32 %v1982, 0.5
    %v1984 = vadd.f32 %v1801, %v1932
    %v1985 = vmul.f32 %v1984, 0.5
    %v1986 = vtanh.pop %v1985
    %v1987 = vmul.f32 %v1986, 0.5
    %v1988 = vadd.f32 %v1987, 0.5
    %v1989 = vadd.f32 %v1958, %v1568
    %v1990 = vmul.f32 %v1983, %v1989
    %v1991 = vadd.f32 %v1802, %v1990
    %v1992 = vtanh.pop %v1991
    %v1993 = vsub.f32 1.0, %v1988
    %v1994 = vmul.f32 %v1993, %v1992
    %v1995 = vmul.f32 %v1988, %v1786
    %v1996 = vadd.f32 %v1994, %v1995
    %s1997 = scalar_lea.vmem [#allocation3], 32
    %1998 = vst [vmem:[%s1997] sm:$0xff] %v1978
    %s1999 = scalar_lea.vmem [#allocation3], 208
    %2000 = vst [vmem:[%s1999 + $0x8] sm:$0xff] %v1996
    %s2001 = smul.u32 3, 6
    %s2002 = smul.addr %s2001, 8
    %s2003 = scalar_lea.vmem [#allocation2], %s2002
    %v2004 = vld [vmem:[%s2003] sm:$0xff]
    %v2005 = vld [vmem:[%s2003 + $0x8] sm:$0xff]
    %v2006 = vld [vmem:[%s2003 + $0x10] sm:$0xff]
    %s2007 = smul.u32 12, 6
    %s2008 = smul.addr %s2007, 8
    %s2009 = scalar_lea.vmem [#allocation2], %s2008
    %v2010 = vld [vmem:[%s2009 + $0x18] sm:$0xff]
    %v2011 = vld [vmem:[%s2009 + $0x20] sm:$0xff]
    %v2012 = vld [vmem:[%s2009 + $0x28] sm:$0xff]
    %v2013 = vpack.c.bf16 %v1978, %v1978
    %v2014 = vpack.c.bf16 %v1996, %v1996
    %2015 = vmatpush.bf16.msra.mxu0 %v1230
    %2016 = vmatpush.bf16.msra.mxu0 %v1224
    %2017 = vmatpush.bf16.msra.mxu0 %v1218
    %2018 = vmatpush.bf16.msra.mxu0 %v1212
    %2019 = vmatpush.bf16.msra.mxu0 %v1206
    %2020 = vmatpush.bf16.msra.mxu0 %v1200
    %2021 = vmatpush.bf16.msra.mxu0 %v1194
    %2022 = vmatpush.bf16.msra.mxu0 %v1188
    %2023 = vmatmul.bf16.gmra.mxu0 %v2013
    %v2024 = vpop.f32.mrf.mxu0
    %v2025 = vadd.f32 0.0, %v2024
    %v2026 = vpop.f32.mrf.mxu0
    %2027 = vdwg.mxu0
    %2028 = vmatpush.bf16.msra.mxu0 %v1278
    %2029 = vmatpush.bf16.msra.mxu0 %v1272
    %2030 = vmatpush.bf16.msra.mxu0 %v1266
    %2031 = vmatpush.bf16.msra.mxu0 %v1260
    %2032 = vmatpush.bf16.msra.mxu0 %v1254
    %2033 = vmatpush.bf16.msra.mxu0 %v1248
    %2034 = vmatpush.bf16.msra.mxu0 %v1242
    %2035 = vmatpush.bf16.msra.mxu0 %v1236
    %2036 = vmatmul.bf16.gmra.mxu0 %v2014
    %v2037 = vpop.f32.mrf.mxu0
    %v2038 = vadd.f32 %v2025, %v2037
    %v2039 = vpop.f32.mrf.mxu0
    %2040 = vdwg.mxu0
    %2041 = vmatpush.bf16.msra.mxu0 %v1231
    %2042 = vmatpush.bf16.msra.mxu0 %v1225
    %2043 = vmatpush.bf16.msra.mxu0 %v1219
    %2044 = vmatpush.bf16.msra.mxu0 %v1213
    %2045 = vmatpush.bf16.msra.mxu0 %v1207
    %2046 = vmatpush.bf16.msra.mxu0 %v1201
    %2047 = vmatpush.bf16.msra.mxu0 %v1195
    %2048 = vmatpush.bf16.msra.mxu0 %v1189
    %2049 = vmatmul.bf16.gmra.mxu0 %v2013
    %v2050 = vpop.f32.mrf.mxu0
    %v2051 = vadd.f32 0.0, %v2050
    %v2052 = vpop.f32.mrf.mxu0
    %2053 = vdwg.mxu0
    %2054 = vmatpush.bf16.msra.mxu0 %v1279
    %2055 = vmatpush.bf16.msra.mxu0 %v1273
    %2056 = vmatpush.bf16.msra.mxu0 %v1267
    %2057 = vmatpush.bf16.msra.mxu0 %v1261
    %2058 = vmatpush.bf16.msra.mxu0 %v1255
    %2059 = vmatpush.bf16.msra.mxu0 %v1249
    %2060 = vmatpush.bf16.msra.mxu0 %v1243
    %2061 = vmatpush.bf16.msra.mxu0 %v1237
    %2062 = vmatmul.bf16.gmra.mxu0 %v2014
    %v2063 = vpop.f32.mrf.mxu0
    %v2064 = vadd.f32 %v2051, %v2063
    %v2065 = vpop.f32.mrf.mxu0
    %2066 = vdwg.mxu0
    %2067 = vmatpush.bf16.msra.mxu0 %v1232
    %2068 = vmatpush.bf16.msra.mxu0 %v1226
    %2069 = vmatpush.bf16.msra.mxu0 %v1220
    %2070 = vmatpush.bf16.msra.mxu0 %v1214
    %2071 = vmatpush.bf16.msra.mxu0 %v1208
    %2072 = vmatpush.bf16.msra.mxu0 %v1202
    %2073 = vmatpush.bf16.msra.mxu0 %v1196
    %2074 = vmatpush.bf16.msra.mxu0 %v1190
    %2075 = vmatmul.bf16.gmra.mxu0 %v2013
    %v2076 = vpop.f32.mrf.mxu0
    %v2077 = vadd.f32 0.0, %v2076
    %v2078 = vpop.f32.mrf.mxu0
    %2079 = vdwg.mxu0
    %2080 = vmatpush.bf16.msra.mxu0 %v1280
    %2081 = vmatpush.bf16.msra.mxu0 %v1274
    %2082 = vmatpush.bf16.msra.mxu0 %v1268
    %2083 = vmatpush.bf16.msra.mxu0 %v1262
    %2084 = vmatpush.bf16.msra.mxu0 %v1256
    %2085 = vmatpush.bf16.msra.mxu0 %v1250
    %2086 = vmatpush.bf16.msra.mxu0 %v1244
    %2087 = vmatpush.bf16.msra.mxu0 %v1238
    %2088 = vmatmul.bf16.gmra.mxu0 %v2014
    %v2089 = vpop.f32.mrf.mxu0
    %v2090 = vadd.f32 %v2077, %v2089
    %v2091 = vpop.f32.mrf.mxu0
    %2092 = vdwg.mxu0
    %2093 = vmatpush.bf16.msra.mxu0 %v1233
    %2094 = vmatpush.bf16.msra.mxu0 %v1227
    %2095 = vmatpush.bf16.msra.mxu0 %v1221
    %2096 = vmatpush.bf16.msra.mxu0 %v1215
    %2097 = vmatpush.bf16.msra.mxu0 %v1209
    %2098 = vmatpush.bf16.msra.mxu0 %v1203
    %2099 = vmatpush.bf16.msra.mxu0 %v1197
    %2100 = vmatpush.bf16.msra.mxu0 %v1191
    %2101 = vmatmul.bf16.gmra.mxu0 %v2013
    %v2102 = vpop.f32.mrf.mxu0
    %v2103 = vadd.f32 0.0, %v2102
    %v2104 = vpop.f32.mrf.mxu0
    %2105 = vdwg.mxu0
    %2106 = vmatpush.bf16.msra.mxu0 %v1281
    %2107 = vmatpush.bf16.msra.mxu0 %v1275
    %2108 = vmatpush.bf16.msra.mxu0 %v1269
    %2109 = vmatpush.bf16.msra.mxu0 %v1263
    %2110 = vmatpush.bf16.msra.mxu0 %v1257
    %2111 = vmatpush.bf16.msra.mxu0 %v1251
    %2112 = vmatpush.bf16.msra.mxu0 %v1245
    %2113 = vmatpush.bf16.msra.mxu0 %v1239
    %2114 = vmatmul.bf16.gmra.mxu0 %v2014
    %v2115 = vpop.f32.mrf.mxu0
    %v2116 = vadd.f32 %v2103, %v2115
    %v2117 = vpop.f32.mrf.mxu0
    %2118 = vdwg.mxu0
    %2119 = vmatpush.bf16.msra.mxu0 %v1234
    %2120 = vmatpush.bf16.msra.mxu0 %v1228
    %2121 = vmatpush.bf16.msra.mxu0 %v1222
    %2122 = vmatpush.bf16.msra.mxu0 %v1216
    %2123 = vmatpush.bf16.msra.mxu0 %v1210
    %2124 = vmatpush.bf16.msra.mxu0 %v1204
    %2125 = vmatpush.bf16.msra.mxu0 %v1198
    %2126 = vmatpush.bf16.msra.mxu0 %v1192
    %2127 = vmatmul.bf16.gmra.mxu0 %v2013
    %v2128 = vpop.f32.mrf.mxu0
    %v2129 = vadd.f32 0.0, %v2128
    %v2130 = vpop.f32.mrf.mxu0
    %2131 = vdwg.mxu0
    %2132 = vmatpush.bf16.msra.mxu0 %v1282
    %2133 = vmatpush.bf16.msra.mxu0 %v1276
    %2134 = vmatpush.bf16.msra.mxu0 %v1270
    %2135 = vmatpush.bf16.msra.mxu0 %v1264
    %2136 = vmatpush.bf16.msra.mxu0 %v1258
    %2137 = vmatpush.bf16.msra.mxu0 %v1252
    %2138 = vmatpush.bf16.msra.mxu0 %v1246
    %2139 = vmatpush.bf16.msra.mxu0 %v1240
    %2140 = vmatmul.bf16.gmra.mxu0 %v2014
    %v2141 = vpop.f32.mrf.mxu0
    %v2142 = vadd.f32 %v2129, %v2141
    %v2143 = vpop.f32.mrf.mxu0
    %2144 = vdwg.mxu0
    %2145 = vmatpush.bf16.msra.mxu0 %v1235
    %2146 = vmatpush.bf16.msra.mxu0 %v1229
    %2147 = vmatpush.bf16.msra.mxu0 %v1223
    %2148 = vmatpush.bf16.msra.mxu0 %v1217
    %2149 = vmatpush.bf16.msra.mxu0 %v1211
    %2150 = vmatpush.bf16.msra.mxu0 %v1205
    %2151 = vmatpush.bf16.msra.mxu0 %v1199
    %2152 = vmatpush.bf16.msra.mxu0 %v1193
    %2153 = vmatmul.bf16.gmra.mxu0 %v2013
    %v2154 = vpop.f32.mrf.mxu0
    %v2155 = vadd.f32 0.0, %v2154
    %v2156 = vpop.f32.mrf.mxu0
    %2157 = vdwg.mxu0
    %2158 = vmatpush.bf16.msra.mxu0 %v1283
    %2159 = vmatpush.bf16.msra.mxu0 %v1277
    %2160 = vmatpush.bf16.msra.mxu0 %v1271
    %2161 = vmatpush.bf16.msra.mxu0 %v1265
    %2162 = vmatpush.bf16.msra.mxu0 %v1259
    %2163 = vmatpush.bf16.msra.mxu0 %v1253
    %2164 = vmatpush.bf16.msra.mxu0 %v1247
    %2165 = vmatpush.bf16.msra.mxu0 %v1241
    %2166 = vmatmul.bf16.gmra.mxu0 %v2014
    %v2167 = vpop.f32.mrf.mxu0
    %v2168 = vadd.f32 %v2155, %v2167
    %v2169 = vpop.f32.mrf.mxu0
    %2170 = vdwg.mxu0
    %v2171 = vadd.f32 %v2004, %v2038
    %v2172 = vmul.f32 %v2171, 0.5
    %v2173 = vtanh.pop %v2172
    %v2174 = vmul.f32 %v2173, 0.5
    %v2175 = vadd.f32 %v2174, 0.5
    %v2176 = vadd.f32 %v2005, %v2064
    %v2177 = vmul.f32 %v2176, 0.5
    %v2178 = vtanh.pop %v2177
    %v2179 = vmul.f32 %v2178, 0.5
    %v2180 = vadd.f32 %v2179, 0.5
    %v2181 = vadd.f32 %v2090, %v1547
    %v2182 = vmul.f32 %v2175, %v2181
    %v2183 = vadd.f32 %v2006, %v2182
    %v2184 = vtanh.pop %v2183
    %v2185 = vsub.f32 1.0, %v2180
    %v2186 = vmul.f32 %v2185, %v2184
    %v2187 = vmul.f32 %v2180, %v1978
    %v2188 = vadd.f32 %v2186, %v2187
    %v2189 = vadd.f32 %v2010, %v2116
    %v2190 = vmul.f32 %v2189, 0.5
    %v2191 = vtanh.pop %v2190
    %v2192 = vmul.f32 %v2191, 0.5
    %v2193 = vadd.f32 %v2192, 0.5
    %v2194 = vadd.f32 %v2011, %v2142
    %v2195 = vmul.f32 %v2194, 0.5
    %v2196 = vtanh.pop %v2195
    %v2197 = vmul.f32 %v2196, 0.5
    %v2198 = vadd.f32 %v2197, 0.5
    %v2199 = vadd.f32 %v2168, %v1568
    %v2200 = vmul.f32 %v2193, %v2199
    %v2201 = vadd.f32 %v2012, %v2200
    %v2202 = vtanh.pop %v2201
    %v2203 = vsub.f32 1.0, %v2198
    %v2204 = vmul.f32 %v2203, %v2202
    %v2205 = vmul.f32 %v2198, %v1996
    %v2206 = vadd.f32 %v2204, %v2205
    %s2207 = scalar_lea.vmem [#allocation3], 48
    %2208 = vst [vmem:[%s2207] sm:$0xff] %v2188
    %s2209 = scalar_lea.vmem [#allocation3], 192
    %2210 = vst [vmem:[%s2209 + $0x8] sm:$0xff] %v2206
    %s2211 = smul.u32 4, 6
    %s2212 = smul.addr %s2211, 8
    %s2213 = scalar_lea.vmem [#allocation2], %s2212
    %v2214 = vld [vmem:[%s2213] sm:$0xff]
    %v2215 = vld [vmem:[%s2213 + $0x8] sm:$0xff]
    %v2216 = vld [vmem:[%s2213 + $0x10] sm:$0xff]
    %s2217 = smul.u32 11, 6
    %s2218 = smul.addr %s2217, 8
    %s2219 = scalar_lea.vmem [#allocation2], %s2218
    %v2220 = vld [vmem:[%s2219 + $0x18] sm:$0xff]
    %v2221 = vld [vmem:[%s2219 + $0x20] sm:$0xff]
    %v2222 = vld [vmem:[%s2219 + $0x28] sm:$0xff]
    %v2223 = vpack.c.bf16 %v2188, %v2188
    %v2224 = vpack.c.bf16 %v2206, %v2206
    %2225 = vmatpush.bf16.msra.mxu0 %v1230
    %2226 = vmatpush.bf16.msra.mxu0 %v1224
    %2227 = vmatpush.bf16.msra.mxu0 %v1218
    %2228 = vmatpush.bf16.msra.mxu0 %v1212
    %2229 = vmatpush.bf16.msra.mxu0 %v1206
    %2230 = vmatpush.bf16.msra.mxu0 %v1200
    %2231 = vmatpush.bf16.msra.mxu0 %v1194
    %2232 = vmatpush.bf16.msra.mxu0 %v1188
    %2233 = vmatmul.bf16.gmra.mxu0 %v2223
    %v2234 = vpop.f32.mrf.mxu0
    %v2235 = vadd.f32 0.0, %v2234
    %v2236 = vpop.f32.mrf.mxu0
    %2237 = vdwg.mxu0
    %2238 = vmatpush.bf16.msra.mxu0 %v1278
    %2239 = vmatpush.bf16.msra.mxu0 %v1272
    %2240 = vmatpush.bf16.msra.mxu0 %v1266
    %2241 = vmatpush.bf16.msra.mxu0 %v1260
    %2242 = vmatpush.bf16.msra.mxu0 %v1254
    %2243 = vmatpush.bf16.msra.mxu0 %v1248
    %2244 = vmatpush.bf16.msra.mxu0 %v1242
    %2245 = vmatpush.bf16.msra.mxu0 %v1236
    %2246 = vmatmul.bf16.gmra.mxu0 %v2224
    %v2247 = vpop.f32.mrf.mxu0
    %v2248 = vadd.f32 %v2235, %v2247
    %v2249 = vpop.f32.mrf.mxu0
    %2250 = vdwg.mxu0
    %2251 = vmatpush.bf16.msra.mxu0 %v1231
    %2252 = vmatpush.bf16.msra.mxu0 %v1225
    %2253 = vmatpush.bf16.msra.mxu0 %v1219
    %2254 = vmatpush.bf16.msra.mxu0 %v1213
    %2255 = vmatpush.bf16.msra.mxu0 %v1207
    %2256 = vmatpush.bf16.msra.mxu0 %v1201
    %2257 = vmatpush.bf16.msra.mxu0 %v1195
    %2258 = vmatpush.bf16.msra.mxu0 %v1189
    %2259 = vmatmul.bf16.gmra.mxu0 %v2223
    %v2260 = vpop.f32.mrf.mxu0
    %v2261 = vadd.f32 0.0, %v2260
    %v2262 = vpop.f32.mrf.mxu0
    %2263 = vdwg.mxu0
    %2264 = vmatpush.bf16.msra.mxu0 %v1279
    %2265 = vmatpush.bf16.msra.mxu0 %v1273
    %2266 = vmatpush.bf16.msra.mxu0 %v1267
    %2267 = vmatpush.bf16.msra.mxu0 %v1261
    %2268 = vmatpush.bf16.msra.mxu0 %v1255
    %2269 = vmatpush.bf16.msra.mxu0 %v1249
    %2270 = vmatpush.bf16.msra.mxu0 %v1243
    %2271 = vmatpush.bf16.msra.mxu0 %v1237
    %2272 = vmatmul.bf16.gmra.mxu0 %v2224
    %v2273 = vpop.f32.mrf.mxu0
    %v2274 = vadd.f32 %v2261, %v2273
    %v2275 = vpop.f32.mrf.mxu0
    %2276 = vdwg.mxu0
    %2277 = vmatpush.bf16.msra.mxu0 %v1232
    %2278 = vmatpush.bf16.msra.mxu0 %v1226
    %2279 = vmatpush.bf16.msra.mxu0 %v1220
    %2280 = vmatpush.bf16.msra.mxu0 %v1214
    %2281 = vmatpush.bf16.msra.mxu0 %v1208
    %2282 = vmatpush.bf16.msra.mxu0 %v1202
    %2283 = vmatpush.bf16.msra.mxu0 %v1196
    %2284 = vmatpush.bf16.msra.mxu0 %v1190
    %2285 = vmatmul.bf16.gmra.mxu0 %v2223
    %v2286 = vpop.f32.mrf.mxu0
    %v2287 = vadd.f32 0.0, %v2286
    %v2288 = vpop.f32.mrf.mxu0
    %2289 = vdwg.mxu0
    %2290 = vmatpush.bf16.msra.mxu0 %v1280
    %2291 = vmatpush.bf16.msra.mxu0 %v1274
    %2292 = vmatpush.bf16.msra.mxu0 %v1268
    %2293 = vmatpush.bf16.msra.mxu0 %v1262
    %2294 = vmatpush.bf16.msra.mxu0 %v1256
    %2295 = vmatpush.bf16.msra.mxu0 %v1250
    %2296 = vmatpush.bf16.msra.mxu0 %v1244
    %2297 = vmatpush.bf16.msra.mxu0 %v1238
    %2298 = vmatmul.bf16.gmra.mxu0 %v2224
    %v2299 = vpop.f32.mrf.mxu0
    %v2300 = vadd.f32 %v2287, %v2299
    %v2301 = vpop.f32.mrf.mxu0
    %2302 = vdwg.mxu0
    %2303 = vmatpush.bf16.msra.mxu0 %v1233
    %2304 = vmatpush.bf16.msra.mxu0 %v1227
    %2305 = vmatpush.bf16.msra.mxu0 %v1221
    %2306 = vmatpush.bf16.msra.mxu0 %v1215
    %2307 = vmatpush.bf16.msra.mxu0 %v1209
    %2308 = vmatpush.bf16.msra.mxu0 %v1203
    %2309 = vmatpush.bf16.msra.mxu0 %v1197
    %2310 = vmatpush.bf16.msra.mxu0 %v1191
    %2311 = vmatmul.bf16.gmra.mxu0 %v2223
    %v2312 = vpop.f32.mrf.mxu0
    %v2313 = vadd.f32 0.0, %v2312
    %v2314 = vpop.f32.mrf.mxu0
    %2315 = vdwg.mxu0
    %2316 = vmatpush.bf16.msra.mxu0 %v1281
    %2317 = vmatpush.bf16.msra.mxu0 %v1275
    %2318 = vmatpush.bf16.msra.mxu0 %v1269
    %2319 = vmatpush.bf16.msra.mxu0 %v1263
    %2320 = vmatpush.bf16.msra.mxu0 %v1257
    %2321 = vmatpush.bf16.msra.mxu0 %v1251
    %2322 = vmatpush.bf16.msra.mxu0 %v1245
    %2323 = vmatpush.bf16.msra.mxu0 %v1239
    %2324 = vmatmul.bf16.gmra.mxu0 %v2224
    %v2325 = vpop.f32.mrf.mxu0
    %v2326 = vadd.f32 %v2313, %v2325
    %v2327 = vpop.f32.mrf.mxu0
    %2328 = vdwg.mxu0
    %2329 = vmatpush.bf16.msra.mxu0 %v1234
    %2330 = vmatpush.bf16.msra.mxu0 %v1228
    %2331 = vmatpush.bf16.msra.mxu0 %v1222
    %2332 = vmatpush.bf16.msra.mxu0 %v1216
    %2333 = vmatpush.bf16.msra.mxu0 %v1210
    %2334 = vmatpush.bf16.msra.mxu0 %v1204
    %2335 = vmatpush.bf16.msra.mxu0 %v1198
    %2336 = vmatpush.bf16.msra.mxu0 %v1192
    %2337 = vmatmul.bf16.gmra.mxu0 %v2223
    %v2338 = vpop.f32.mrf.mxu0
    %v2339 = vadd.f32 0.0, %v2338
    %v2340 = vpop.f32.mrf.mxu0
    %2341 = vdwg.mxu0
    %2342 = vmatpush.bf16.msra.mxu0 %v1282
    %2343 = vmatpush.bf16.msra.mxu0 %v1276
    %2344 = vmatpush.bf16.msra.mxu0 %v1270
    %2345 = vmatpush.bf16.msra.mxu0 %v1264
    %2346 = vmatpush.bf16.msra.mxu0 %v1258
    %2347 = vmatpush.bf16.msra.mxu0 %v1252
    %2348 = vmatpush.bf16.msra.mxu0 %v1246
    %2349 = vmatpush.bf16.msra.mxu0 %v1240
    %2350 = vmatmul.bf16.gmra.mxu0 %v2224
    %v2351 = vpop.f32.mrf.mxu0
    %v2352 = vadd.f32 %v2339, %v2351
    %v2353 = vpop.f32.mrf.mxu0
    %2354 = vdwg.mxu0
    %2355 = vmatpush.bf16.msra.mxu0 %v1235
    %2356 = vmatpush.bf16.msra.mxu0 %v1229
    %2357 = vmatpush.bf16.msra.mxu0 %v1223
    %2358 = vmatpush.bf16.msra.mxu0 %v1217
    %2359 = vmatpush.bf16.msra.mxu0 %v1211
    %2360 = vmatpush.bf16.msra.mxu0 %v1205
    %2361 = vmatpush.bf16.msra.mxu0 %v1199
    %2362 = vmatpush.bf16.msra.mxu0 %v1193
    %2363 = vmatmul.bf16.gmra.mxu0 %v2223
    %v2364 = vpop.f32.mrf.mxu0
    %v2365 = vadd.f32 0.0, %v2364
    %v2366 = vpop.f32.mrf.mxu0
    %2367 = vdwg.mxu0
    %2368 = vmatpush.bf16.msra.mxu0 %v1283
    %2369 = vmatpush.bf16.msra.mxu0 %v1277
    %2370 = vmatpush.bf16.msra.mxu0 %v1271
    %2371 = vmatpush.bf16.msra.mxu0 %v1265
    %2372 = vmatpush.bf16.msra.mxu0 %v1259
    %2373 = vmatpush.bf16.msra.mxu0 %v1253
    %2374 = vmatpush.bf16.msra.mxu0 %v1247
    %2375 = vmatpush.bf16.msra.mxu0 %v1241
    %2376 = vmatmul.bf16.gmra.mxu0 %v2224
    %v2377 = vpop.f32.mrf.mxu0
    %v2378 = vadd.f32 %v2365, %v2377
    %v2379 = vpop.f32.mrf.mxu0
    %2380 = vdwg.mxu0
    %v2381 = vadd.f32 %v2214, %v2248
    %v2382 = vmul.f32 %v2381, 0.5
    %v2383 = vtanh.pop %v2382
    %v2384 = vmul.f32 %v2383, 0.5
    %v2385 = vadd.f32 %v2384, 0.5
    %v2386 = vadd.f32 %v2215, %v2274
    %v2387 = vmul.f32 %v2386, 0.5
    %v2388 = vtanh.pop %v2387
    %v2389 = vmul.f32 %v2388, 0.5
    %v2390 = vadd.f32 %v2389, 0.5
    %v2391 = vadd.f32 %v2300, %v1547
    %v2392 = vmul.f32 %v2385, %v2391
    %v2393 = vadd.f32 %v2216, %v2392
    %v2394 = vtanh.pop %v2393
    %v2395 = vsub.f32 1.0, %v2390
    %v2396 = vmul.f32 %v2395, %v2394
    %v2397 = vmul.f32 %v2390, %v2188
    %v2398 = vadd.f32 %v2396, %v2397
    %v2399 = vadd.f32 %v2220, %v2326
    %v2400 = vmul.f32 %v2399, 0.5
    %v2401 = vtanh.pop %v2400
    %v2402 = vmul.f32 %v2401, 0.5
    %v2403 = vadd.f32 %v2402, 0.5
    %v2404 = vadd.f32 %v2221, %v2352
    %v2405 = vmul.f32 %v2404, 0.5
    %v2406 = vtanh.pop %v2405
    %v2407 = vmul.f32 %v2406, 0.5
    %v2408 = vadd.f32 %v2407, 0.5
    %v2409 = vadd.f32 %v2378, %v1568
    %v2410 = vmul.f32 %v2403, %v2409
    %v2411 = vadd.f32 %v2222, %v2410
    %v2412 = vtanh.pop %v2411
    %v2413 = vsub.f32 1.0, %v2408
    %v2414 = vmul.f32 %v2413, %v2412
    %v2415 = vmul.f32 %v2408, %v2206
    %v2416 = vadd.f32 %v2414, %v2415
    %s2417 = scalar_lea.vmem [#allocation3], 64
    %2418 = vst [vmem:[%s2417] sm:$0xff] %v2398
    %s2419 = scalar_lea.vmem [#allocation3], 176
    %2420 = vst [vmem:[%s2419 + $0x8] sm:$0xff] %v2416
    %s2421 = smul.u32 5, 6
    %s2422 = smul.addr %s2421, 8
    %s2423 = scalar_lea.vmem [#allocation2], %s2422
    %v2424 = vld [vmem:[%s2423] sm:$0xff]
    %v2425 = vld [vmem:[%s2423 + $0x8] sm:$0xff]
    %v2426 = vld [vmem:[%s2423 + $0x10] sm:$0xff]
    %s2427 = smul.u32 10, 6
    %s2428 = smul.addr %s2427, 8
    %s2429 = scalar_lea.vmem [#allocation2], %s2428
    %v2430 = vld [vmem:[%s2429 + $0x18] sm:$0xff]
    %v2431 = vld [vmem:[%s2429 + $0x20] sm:$0xff]
    %v2432 = vld [vmem:[%s2429 + $0x28] sm:$0xff]
    %v2433 = vpack.c.bf16 %v2398, %v2398
    %v2434 = vpack.c.bf16 %v2416, %v2416
    %2435 = vmatpush.bf16.msra.mxu0 %v1230
    %2436 = vmatpush.bf16.msra.mxu0 %v1224
    %2437 = vmatpush.bf16.msra.mxu0 %v1218
    %2438 = vmatpush.bf16.msra.mxu0 %v1212
    %2439 = vmatpush.bf16.msra.mxu0 %v1206
    %2440 = vmatpush.bf16.msra.mxu0 %v1200
    %2441 = vmatpush.bf16.msra.mxu0 %v1194
    %2442 = vmatpush.bf16.msra.mxu0 %v1188
    %2443 = vmatmul.bf16.gmra.mxu0 %v2433
    %v2444 = vpop.f32.mrf.mxu0
    %v2445 = vadd.f32 0.0, %v2444
    %v2446 = vpop.f32.mrf.mxu0
    %2447 = vdwg.mxu0
    %2448 = vmatpush.bf16.msra.mxu0 %v1278
    %2449 = vmatpush.bf16.msra.mxu0 %v1272
    %2450 = vmatpush.bf16.msra.mxu0 %v1266
    %2451 = vmatpush.bf16.msra.mxu0 %v1260
    %2452 = vmatpush.bf16.msra.mxu0 %v1254
    %2453 = vmatpush.bf16.msra.mxu0 %v1248
    %2454 = vmatpush.bf16.msra.mxu0 %v1242
    %2455 = vmatpush.bf16.msra.mxu0 %v1236
    %2456 = vmatmul.bf16.gmra.mxu0 %v2434
    %v2457 = vpop.f32.mrf.mxu0
    %v2458 = vadd.f32 %v2445, %v2457
    %v2459 = vpop.f32.mrf.mxu0
    %2460 = vdwg.mxu0
    %2461 = vmatpush.bf16.msra.mxu0 %v1231
    %2462 = vmatpush.bf16.msra.mxu0 %v1225
    %2463 = vmatpush.bf16.msra.mxu0 %v1219
    %2464 = vmatpush.bf16.msra.mxu0 %v1213
    %2465 = vmatpush.bf16.msra.mxu0 %v1207
    %2466 = vmatpush.bf16.msra.mxu0 %v1201
    %2467 = vmatpush.bf16.msra.mxu0 %v1195
    %2468 = vmatpush.bf16.msra.mxu0 %v1189
    %2469 = vmatmul.bf16.gmra.mxu0 %v2433
    %v2470 = vpop.f32.mrf.mxu0
    %v2471 = vadd.f32 0.0, %v2470
    %v2472 = vpop.f32.mrf.mxu0
    %2473 = vdwg.mxu0
    %2474 = vmatpush.bf16.msra.mxu0 %v1279
    %2475 = vmatpush.bf16.msra.mxu0 %v1273
    %2476 = vmatpush.bf16.msra.mxu0 %v1267
    %2477 = vmatpush.bf16.msra.mxu0 %v1261
    %2478 = vmatpush.bf16.msra.mxu0 %v1255
    %2479 = vmatpush.bf16.msra.mxu0 %v1249
    %2480 = vmatpush.bf16.msra.mxu0 %v1243
    %2481 = vmatpush.bf16.msra.mxu0 %v1237
    %2482 = vmatmul.bf16.gmra.mxu0 %v2434
    %v2483 = vpop.f32.mrf.mxu0
    %v2484 = vadd.f32 %v2471, %v2483
    %v2485 = vpop.f32.mrf.mxu0
    %2486 = vdwg.mxu0
    %2487 = vmatpush.bf16.msra.mxu0 %v1232
    %2488 = vmatpush.bf16.msra.mxu0 %v1226
    %2489 = vmatpush.bf16.msra.mxu0 %v1220
    %2490 = vmatpush.bf16.msra.mxu0 %v1214
    %2491 = vmatpush.bf16.msra.mxu0 %v1208
    %2492 = vmatpush.bf16.msra.mxu0 %v1202
    %2493 = vmatpush.bf16.msra.mxu0 %v1196
    %2494 = vmatpush.bf16.msra.mxu0 %v1190
    %2495 = vmatmul.bf16.gmra.mxu0 %v2433
    %v2496 = vpop.f32.mrf.mxu0
    %v2497 = vadd.f32 0.0, %v2496
    %v2498 = vpop.f32.mrf.mxu0
    %2499 = vdwg.mxu0
    %2500 = vmatpush.bf16.msra.mxu0 %v1280
    %2501 = vmatpush.bf16.msra.mxu0 %v1274
    %2502 = vmatpush.bf16.msra.mxu0 %v1268
    %2503 = vmatpush.bf16.msra.mxu0 %v1262
    %2504 = vmatpush.bf16.msra.mxu0 %v1256
    %2505 = vmatpush.bf16.msra.mxu0 %v1250
    %2506 = vmatpush.bf16.msra.mxu0 %v1244
    %2507 = vmatpush.bf16.msra.mxu0 %v1238
    %2508 = vmatmul.bf16.gmra.mxu0 %v2434
    %v2509 = vpop.f32.mrf.mxu0
    %v2510 = vadd.f32 %v2497, %v2509
    %v2511 = vpop.f32.mrf.mxu0
    %2512 = vdwg.mxu0
    %2513 = vmatpush.bf16.msra.mxu0 %v1233
    %2514 = vmatpush.bf16.msra.mxu0 %v1227
    %2515 = vmatpush.bf16.msra.mxu0 %v1221
    %2516 = vmatpush.bf16.msra.mxu0 %v1215
    %2517 = vmatpush.bf16.msra.mxu0 %v1209
    %2518 = vmatpush.bf16.msra.mxu0 %v1203
    %2519 = vmatpush.bf16.msra.mxu0 %v1197
    %2520 = vmatpush.bf16.msra.mxu0 %v1191
    %2521 = vmatmul.bf16.gmra.mxu0 %v2433
    %v2522 = vpop.f32.mrf.mxu0
    %v2523 = vadd.f32 0.0, %v2522
    %v2524 = vpop.f32.mrf.mxu0
    %2525 = vdwg.mxu0
    %2526 = vmatpush.bf16.msra.mxu0 %v1281
    %2527 = vmatpush.bf16.msra.mxu0 %v1275
    %2528 = vmatpush.bf16.msra.mxu0 %v1269
    %2529 = vmatpush.bf16.msra.mxu0 %v1263
    %2530 = vmatpush.bf16.msra.mxu0 %v1257
    %2531 = vmatpush.bf16.msra.mxu0 %v1251
    %2532 = vmatpush.bf16.msra.mxu0 %v1245
    %2533 = vmatpush.bf16.msra.mxu0 %v1239
    %2534 = vmatmul.bf16.gmra.mxu0 %v2434
    %v2535 = vpop.f32.mrf.mxu0
    %v2536 = vadd.f32 %v2523, %v2535
    %v2537 = vpop.f32.mrf.mxu0
    %2538 = vdwg.mxu0
    %2539 = vmatpush.bf16.msra.mxu0 %v1234
    %2540 = vmatpush.bf16.msra.mxu0 %v1228
    %2541 = vmatpush.bf16.msra.mxu0 %v1222
    %2542 = vmatpush.bf16.msra.mxu0 %v1216
    %2543 = vmatpush.bf16.msra.mxu0 %v1210
    %2544 = vmatpush.bf16.msra.mxu0 %v1204
    %2545 = vmatpush.bf16.msra.mxu0 %v1198
    %2546 = vmatpush.bf16.msra.mxu0 %v1192
    %2547 = vmatmul.bf16.gmra.mxu0 %v2433
    %v2548 = vpop.f32.mrf.mxu0
    %v2549 = vadd.f32 0.0, %v2548
    %v2550 = vpop.f32.mrf.mxu0
    %2551 = vdwg.mxu0
    %2552 = vmatpush.bf16.msra.mxu0 %v1282
    %2553 = vmatpush.bf16.msra.mxu0 %v1276
    %2554 = vmatpush.bf16.msra.mxu0 %v1270
    %2555 = vmatpush.bf16.msra.mxu0 %v1264
    %2556 = vmatpush.bf16.msra.mxu0 %v1258
    %2557 = vmatpush.bf16.msra.mxu0 %v1252
    %2558 = vmatpush.bf16.msra.mxu0 %v1246
    %2559 = vmatpush.bf16.msra.mxu0 %v1240
    %2560 = vmatmul.bf16.gmra.mxu0 %v2434
    %v2561 = vpop.f32.mrf.mxu0
    %v2562 = vadd.f32 %v2549, %v2561
    %v2563 = vpop.f32.mrf.mxu0
    %2564 = vdwg.mxu0
    %2565 = vmatpush.bf16.msra.mxu0 %v1235
    %2566 = vmatpush.bf16.msra.mxu0 %v1229
    %2567 = vmatpush.bf16.msra.mxu0 %v1223
    %2568 = vmatpush.bf16.msra.mxu0 %v1217
    %2569 = vmatpush.bf16.msra.mxu0 %v1211
    %2570 = vmatpush.bf16.msra.mxu0 %v1205
    %2571 = vmatpush.bf16.msra.mxu0 %v1199
    %2572 = vmatpush.bf16.msra.mxu0 %v1193
    %2573 = vmatmul.bf16.gmra.mxu0 %v2433
    %v2574 = vpop.f32.mrf.mxu0
    %v2575 = vadd.f32 0.0, %v2574
    %v2576 = vpop.f32.mrf.mxu0
    %2577 = vdwg.mxu0
    %2578 = vmatpush.bf16.msra.mxu0 %v1283
    %2579 = vmatpush.bf16.msra.mxu0 %v1277
    %2580 = vmatpush.bf16.msra.mxu0 %v1271
    %2581 = vmatpush.bf16.msra.mxu0 %v1265
    %2582 = vmatpush.bf16.msra.mxu0 %v1259
    %2583 = vmatpush.bf16.msra.mxu0 %v1253
    %2584 = vmatpush.bf16.msra.mxu0 %v1247
    %2585 = vmatpush.bf16.msra.mxu0 %v1241
    %2586 = vmatmul.bf16.gmra.mxu0 %v2434
    %v2587 = vpop.f32.mrf.mxu0
    %v2588 = vadd.f32 %v2575, %v2587
    %v2589 = vpop.f32.mrf.mxu0
    %2590 = vdwg.mxu0
    %v2591 = vadd.f32 %v2424, %v2458
    %v2592 = vmul.f32 %v2591, 0.5
    %v2593 = vtanh.pop %v2592
    %v2594 = vmul.f32 %v2593, 0.5
    %v2595 = vadd.f32 %v2594, 0.5
    %v2596 = vadd.f32 %v2425, %v2484
    %v2597 = vmul.f32 %v2596, 0.5
    %v2598 = vtanh.pop %v2597
    %v2599 = vmul.f32 %v2598, 0.5
    %v2600 = vadd.f32 %v2599, 0.5
    %v2601 = vadd.f32 %v2510, %v1547
    %v2602 = vmul.f32 %v2595, %v2601
    %v2603 = vadd.f32 %v2426, %v2602
    %v2604 = vtanh.pop %v2603
    %v2605 = vsub.f32 1.0, %v2600
    %v2606 = vmul.f32 %v2605, %v2604
    %v2607 = vmul.f32 %v2600, %v2398
    %v2608 = vadd.f32 %v2606, %v2607
    %v2609 = vadd.f32 %v2430, %v2536
    %v2610 = vmul.f32 %v2609, 0.5
    %v2611 = vtanh.pop %v2610
    %v2612 = vmul.f32 %v2611, 0.5
    %v2613 = vadd.f32 %v2612, 0.5
    %v2614 = vadd.f32 %v2431, %v2562
    %v2615 = vmul.f32 %v2614, 0.5
    %v2616 = vtanh.pop %v2615
    %v2617 = vmul.f32 %v2616, 0.5
    %v2618 = vadd.f32 %v2617, 0.5
    %v2619 = vadd.f32 %v2588, %v1568
    %v2620 = vmul.f32 %v2613, %v2619
    %v2621 = vadd.f32 %v2432, %v2620
    %v2622 = vtanh.pop %v2621
    %v2623 = vsub.f32 1.0, %v2618
    %v2624 = vmul.f32 %v2623, %v2622
    %v2625 = vmul.f32 %v2618, %v2416
    %v2626 = vadd.f32 %v2624, %v2625
    %s2627 = scalar_lea.vmem [#allocation3], 80
    %2628 = vst [vmem:[%s2627] sm:$0xff] %v2608
    %s2629 = scalar_lea.vmem [#allocation3], 160
    %2630 = vst [vmem:[%s2629 + $0x8] sm:$0xff] %v2626
    %s2631 = smul.u32 6, 6
    %s2632 = smul.addr %s2631, 8
    %s2633 = scalar_lea.vmem [#allocation2], %s2632
    %v2634 = vld [vmem:[%s2633] sm:$0xff]
    %v2635 = vld [vmem:[%s2633 + $0x8] sm:$0xff]
    %v2636 = vld [vmem:[%s2633 + $0x10] sm:$0xff]
    %s2637 = smul.u32 9, 6
    %s2638 = smul.addr %s2637, 8
    %s2639 = scalar_lea.vmem [#allocation2], %s2638
    %v2640 = vld [vmem:[%s2639 + $0x18] sm:$0xff]
    %v2641 = vld [vmem:[%s2639 + $0x20] sm:$0xff]
    %v2642 = vld [vmem:[%s2639 + $0x28] sm:$0xff]
    %v2643 = vpack.c.bf16 %v2608, %v2608
    %v2644 = vpack.c.bf16 %v2626, %v2626
    %2645 = vmatpush.bf16.msra.mxu0 %v1230
    %2646 = vmatpush.bf16.msra.mxu0 %v1224
    %2647 = vmatpush.bf16.msra.mxu0 %v1218
    %2648 = vmatpush.bf16.msra.mxu0 %v1212
    %2649 = vmatpush.bf16.msra.mxu0 %v1206
    %2650 = vmatpush.bf16.msra.mxu0 %v1200
    %2651 = vmatpush.bf16.msra.mxu0 %v1194
    %2652 = vmatpush.bf16.msra.mxu0 %v1188
    %2653 = vmatmul.bf16.gmra.mxu0 %v2643
    %v2654 = vpop.f32.mrf.mxu0
    %v2655 = vadd.f32 0.0, %v2654
    %v2656 = vpop.f32.mrf.mxu0
    %2657 = vdwg.mxu0
    %2658 = vmatpush.bf16.msra.mxu0 %v1278
    %2659 = vmatpush.bf16.msra.mxu0 %v1272
    %2660 = vmatpush.bf16.msra.mxu0 %v1266
    %2661 = vmatpush.bf16.msra.mxu0 %v1260
    %2662 = vmatpush.bf16.msra.mxu0 %v1254
    %2663 = vmatpush.bf16.msra.mxu0 %v1248
    %2664 = vmatpush.bf16.msra.mxu0 %v1242
    %2665 = vmatpush.bf16.msra.mxu0 %v1236
    %2666 = vmatmul.bf16.gmra.mxu0 %v2644
    %v2667 = vpop.f32.mrf.mxu0
    %v2668 = vadd.f32 %v2655, %v2667
    %v2669 = vpop.f32.mrf.mxu0
    %2670 = vdwg.mxu0
    %2671 = vmatpush.bf16.msra.mxu0 %v1231
    %2672 = vmatpush.bf16.msra.mxu0 %v1225
    %2673 = vmatpush.bf16.msra.mxu0 %v1219
    %2674 = vmatpush.bf16.msra.mxu0 %v1213
    %2675 = vmatpush.bf16.msra.mxu0 %v1207
    %2676 = vmatpush.bf16.msra.mxu0 %v1201
    %2677 = vmatpush.bf16.msra.mxu0 %v1195
    %2678 = vmatpush.bf16.msra.mxu0 %v1189
    %2679 = vmatmul.bf16.gmra.mxu0 %v2643
    %v2680 = vpop.f32.mrf.mxu0
    %v2681 = vadd.f32 0.0, %v2680
    %v2682 = vpop.f32.mrf.mxu0
    %2683 = vdwg.mxu0
    %2684 = vmatpush.bf16.msra.mxu0 %v1279
    %2685 = vmatpush.bf16.msra.mxu0 %v1273
    %2686 = vmatpush.bf16.msra.mxu0 %v1267
    %2687 = vmatpush.bf16.msra.mxu0 %v1261
    %2688 = vmatpush.bf16.msra.mxu0 %v1255
    %2689 = vmatpush.bf16.msra.mxu0 %v1249
    %2690 = vmatpush.bf16.msra.mxu0 %v1243
    %2691 = vmatpush.bf16.msra.mxu0 %v1237
    %2692 = vmatmul.bf16.gmra.mxu0 %v2644
    %v2693 = vpop.f32.mrf.mxu0
    %v2694 = vadd.f32 %v2681, %v2693
    %v2695 = vpop.f32.mrf.mxu0
    %2696 = vdwg.mxu0
    %2697 = vmatpush.bf16.msra.mxu0 %v1232
    %2698 = vmatpush.bf16.msra.mxu0 %v1226
    %2699 = vmatpush.bf16.msra.mxu0 %v1220
    %2700 = vmatpush.bf16.msra.mxu0 %v1214
    %2701 = vmatpush.bf16.msra.mxu0 %v1208
    %2702 = vmatpush.bf16.msra.mxu0 %v1202
    %2703 = vmatpush.bf16.msra.mxu0 %v1196
    %2704 = vmatpush.bf16.msra.mxu0 %v1190
    %2705 = vmatmul.bf16.gmra.mxu0 %v2643
    %v2706 = vpop.f32.mrf.mxu0
    %v2707 = vadd.f32 0.0, %v2706
    %v2708 = vpop.f32.mrf.mxu0
    %2709 = vdwg.mxu0
    %2710 = vmatpush.bf16.msra.mxu0 %v1280
    %2711 = vmatpush.bf16.msra.mxu0 %v1274
    %2712 = vmatpush.bf16.msra.mxu0 %v1268
    %2713 = vmatpush.bf16.msra.mxu0 %v1262
    %2714 = vmatpush.bf16.msra.mxu0 %v1256
    %2715 = vmatpush.bf16.msra.mxu0 %v1250
    %2716 = vmatpush.bf16.msra.mxu0 %v1244
    %2717 = vmatpush.bf16.msra.mxu0 %v1238
    %2718 = vmatmul.bf16.gmra.mxu0 %v2644
    %v2719 = vpop.f32.mrf.mxu0
    %v2720 = vadd.f32 %v2707, %v2719
    %v2721 = vpop.f32.mrf.mxu0
    %2722 = vdwg.mxu0
    %2723 = vmatpush.bf16.msra.mxu0 %v1233
    %2724 = vmatpush.bf16.msra.mxu0 %v1227
    %2725 = vmatpush.bf16.msra.mxu0 %v1221
    %2726 = vmatpush.bf16.msra.mxu0 %v1215
    %2727 = vmatpush.bf16.msra.mxu0 %v1209
    %2728 = vmatpush.bf16.msra.mxu0 %v1203
    %2729 = vmatpush.bf16.msra.mxu0 %v1197
    %2730 = vmatpush.bf16.msra.mxu0 %v1191
    %2731 = vmatmul.bf16.gmra.mxu0 %v2643
    %v2732 = vpop.f32.mrf.mxu0
    %v2733 = vadd.f32 0.0, %v2732
    %v2734 = vpop.f32.mrf.mxu0
    %2735 = vdwg.mxu0
    %2736 = vmatpush.bf16.msra.mxu0 %v1281
    %2737 = vmatpush.bf16.msra.mxu0 %v1275
    %2738 = vmatpush.bf16.msra.mxu0 %v1269
    %2739 = vmatpush.bf16.msra.mxu0 %v1263
    %2740 = vmatpush.bf16.msra.mxu0 %v1257
    %2741 = vmatpush.bf16.msra.mxu0 %v1251
    %2742 = vmatpush.bf16.msra.mxu0 %v1245
    %2743 = vmatpush.bf16.msra.mxu0 %v1239
    %2744 = vmatmul.bf16.gmra.mxu0 %v2644
    %v2745 = vpop.f32.mrf.mxu0
    %v2746 = vadd.f32 %v2733, %v2745
    %v2747 = vpop.f32.mrf.mxu0
    %2748 = vdwg.mxu0
    %2749 = vmatpush.bf16.msra.mxu0 %v1234
    %2750 = vmatpush.bf16.msra.mxu0 %v1228
    %2751 = vmatpush.bf16.msra.mxu0 %v1222
    %2752 = vmatpush.bf16.msra.mxu0 %v1216
    %2753 = vmatpush.bf16.msra.mxu0 %v1210
    %2754 = vmatpush.bf16.msra.mxu0 %v1204
    %2755 = vmatpush.bf16.msra.mxu0 %v1198
    %2756 = vmatpush.bf16.msra.mxu0 %v1192
    %2757 = vmatmul.bf16.gmra.mxu0 %v2643
    %v2758 = vpop.f32.mrf.mxu0
    %v2759 = vadd.f32 0.0, %v2758
    %v2760 = vpop.f32.mrf.mxu0
    %2761 = vdwg.mxu0
    %2762 = vmatpush.bf16.msra.mxu0 %v1282
    %2763 = vmatpush.bf16.msra.mxu0 %v1276
    %2764 = vmatpush.bf16.msra.mxu0 %v1270
    %2765 = vmatpush.bf16.msra.mxu0 %v1264
    %2766 = vmatpush.bf16.msra.mxu0 %v1258
    %2767 = vmatpush.bf16.msra.mxu0 %v1252
    %2768 = vmatpush.bf16.msra.mxu0 %v1246
    %2769 = vmatpush.bf16.msra.mxu0 %v1240
    %2770 = vmatmul.bf16.gmra.mxu0 %v2644
    %v2771 = vpop.f32.mrf.mxu0
    %v2772 = vadd.f32 %v2759, %v2771
    %v2773 = vpop.f32.mrf.mxu0
    %2774 = vdwg.mxu0
    %2775 = vmatpush.bf16.msra.mxu0 %v1235
    %2776 = vmatpush.bf16.msra.mxu0 %v1229
    %2777 = vmatpush.bf16.msra.mxu0 %v1223
    %2778 = vmatpush.bf16.msra.mxu0 %v1217
    %2779 = vmatpush.bf16.msra.mxu0 %v1211
    %2780 = vmatpush.bf16.msra.mxu0 %v1205
    %2781 = vmatpush.bf16.msra.mxu0 %v1199
    %2782 = vmatpush.bf16.msra.mxu0 %v1193
    %2783 = vmatmul.bf16.gmra.mxu0 %v2643
    %v2784 = vpop.f32.mrf.mxu0
    %v2785 = vadd.f32 0.0, %v2784
    %v2786 = vpop.f32.mrf.mxu0
    %2787 = vdwg.mxu0
    %2788 = vmatpush.bf16.msra.mxu0 %v1283
    %2789 = vmatpush.bf16.msra.mxu0 %v1277
    %2790 = vmatpush.bf16.msra.mxu0 %v1271
    %2791 = vmatpush.bf16.msra.mxu0 %v1265
    %2792 = vmatpush.bf16.msra.mxu0 %v1259
    %2793 = vmatpush.bf16.msra.mxu0 %v1253
    %2794 = vmatpush.bf16.msra.mxu0 %v1247
    %2795 = vmatpush.bf16.msra.mxu0 %v1241
    %2796 = vmatmul.bf16.gmra.mxu0 %v2644
    %v2797 = vpop.f32.mrf.mxu0
    %v2798 = vadd.f32 %v2785, %v2797
    %v2799 = vpop.f32.mrf.mxu0
    %2800 = vdwg.mxu0
    %v2801 = vadd.f32 %v2634, %v2668
    %v2802 = vmul.f32 %v2801, 0.5
    %v2803 = vtanh.pop %v2802
    %v2804 = vmul.f32 %v2803, 0.5
    %v2805 = vadd.f32 %v2804, 0.5
    %v2806 = vadd.f32 %v2635, %v2694
    %v2807 = vmul.f32 %v2806, 0.5
    %v2808 = vtanh.pop %v2807
    %v2809 = vmul.f32 %v2808, 0.5
    %v2810 = vadd.f32 %v2809, 0.5
    %v2811 = vadd.f32 %v2720, %v1547
    %v2812 = vmul.f32 %v2805, %v2811
    %v2813 = vadd.f32 %v2636, %v2812
    %v2814 = vtanh.pop %v2813
    %v2815 = vsub.f32 1.0, %v2810
    %v2816 = vmul.f32 %v2815, %v2814
    %v2817 = vmul.f32 %v2810, %v2608
    %v2818 = vadd.f32 %v2816, %v2817
    %v2819 = vadd.f32 %v2640, %v2746
    %v2820 = vmul.f32 %v2819, 0.5
    %v2821 = vtanh.pop %v2820
    %v2822 = vmul.f32 %v2821, 0.5
    %v2823 = vadd.f32 %v2822, 0.5
    %v2824 = vadd.f32 %v2641, %v2772
    %v2825 = vmul.f32 %v2824, 0.5
    %v2826 = vtanh.pop %v2825
    %v2827 = vmul.f32 %v2826, 0.5
    %v2828 = vadd.f32 %v2827, 0.5
    %v2829 = vadd.f32 %v2798, %v1568
    %v2830 = vmul.f32 %v2823, %v2829
    %v2831 = vadd.f32 %v2642, %v2830
    %v2832 = vtanh.pop %v2831
    %v2833 = vsub.f32 1.0, %v2828
    %v2834 = vmul.f32 %v2833, %v2832
    %v2835 = vmul.f32 %v2828, %v2626
    %v2836 = vadd.f32 %v2834, %v2835
    %s2837 = scalar_lea.vmem [#allocation3], 96
    %2838 = vst [vmem:[%s2837] sm:$0xff] %v2818
    %s2839 = scalar_lea.vmem [#allocation3], 144
    %2840 = vst [vmem:[%s2839 + $0x8] sm:$0xff] %v2836
    %s2841 = smul.u32 7, 6
    %s2842 = smul.addr %s2841, 8
    %s2843 = scalar_lea.vmem [#allocation2], %s2842
    %v2844 = vld [vmem:[%s2843] sm:$0xff]
    %v2845 = vld [vmem:[%s2843 + $0x8] sm:$0xff]
    %v2846 = vld [vmem:[%s2843 + $0x10] sm:$0xff]
    %s2847 = smul.u32 8, 6
    %s2848 = smul.addr %s2847, 8
    %s2849 = scalar_lea.vmem [#allocation2], %s2848
    %v2850 = vld [vmem:[%s2849 + $0x18] sm:$0xff]
    %v2851 = vld [vmem:[%s2849 + $0x20] sm:$0xff]
    %v2852 = vld [vmem:[%s2849 + $0x28] sm:$0xff]
    %v2853 = vpack.c.bf16 %v2818, %v2818
    %v2854 = vpack.c.bf16 %v2836, %v2836
    %2855 = vmatpush.bf16.msra.mxu0 %v1230
    %2856 = vmatpush.bf16.msra.mxu0 %v1224
    %2857 = vmatpush.bf16.msra.mxu0 %v1218
    %2858 = vmatpush.bf16.msra.mxu0 %v1212
    %2859 = vmatpush.bf16.msra.mxu0 %v1206
    %2860 = vmatpush.bf16.msra.mxu0 %v1200
    %2861 = vmatpush.bf16.msra.mxu0 %v1194
    %2862 = vmatpush.bf16.msra.mxu0 %v1188
    %2863 = vmatmul.bf16.gmra.mxu0 %v2853
    %v2864 = vpop.f32.mrf.mxu0
    %v2865 = vadd.f32 0.0, %v2864
    %v2866 = vpop.f32.mrf.mxu0
    %2867 = vdwg.mxu0
    %2868 = vmatpush.bf16.msra.mxu0 %v1278
    %2869 = vmatpush.bf16.msra.mxu0 %v1272
    %2870 = vmatpush.bf16.msra.mxu0 %v1266
    %2871 = vmatpush.bf16.msra.mxu0 %v1260
    %2872 = vmatpush.bf16.msra.mxu0 %v1254
    %2873 = vmatpush.bf16.msra.mxu0 %v1248
    %2874 = vmatpush.bf16.msra.mxu0 %v1242
    %2875 = vmatpush.bf16.msra.mxu0 %v1236
    %2876 = vmatmul.bf16.gmra.mxu0 %v2854
    %v2877 = vpop.f32.mrf.mxu0
    %v2878 = vadd.f32 %v2865, %v2877
    %v2879 = vpop.f32.mrf.mxu0
    %2880 = vdwg.mxu0
    %2881 = vmatpush.bf16.msra.mxu0 %v1231
    %2882 = vmatpush.bf16.msra.mxu0 %v1225
    %2883 = vmatpush.bf16.msra.mxu0 %v1219
    %2884 = vmatpush.bf16.msra.mxu0 %v1213
    %2885 = vmatpush.bf16.msra.mxu0 %v1207
    %2886 = vmatpush.bf16.msra.mxu0 %v1201
    %2887 = vmatpush.bf16.msra.mxu0 %v1195
    %2888 = vmatpush.bf16.msra.mxu0 %v1189
    %2889 = vmatmul.bf16.gmra.mxu0 %v2853
    %v2890 = vpop.f32.mrf.mxu0
    %v2891 = vadd.f32 0.0, %v2890
    %v2892 = vpop.f32.mrf.mxu0
    %2893 = vdwg.mxu0
    %2894 = vmatpush.bf16.msra.mxu0 %v1279
    %2895 = vmatpush.bf16.msra.mxu0 %v1273
    %2896 = vmatpush.bf16.msra.mxu0 %v1267
    %2897 = vmatpush.bf16.msra.mxu0 %v1261
    %2898 = vmatpush.bf16.msra.mxu0 %v1255
    %2899 = vmatpush.bf16.msra.mxu0 %v1249
    %2900 = vmatpush.bf16.msra.mxu0 %v1243
    %2901 = vmatpush.bf16.msra.mxu0 %v1237
    %2902 = vmatmul.bf16.gmra.mxu0 %v2854
    %v2903 = vpop.f32.mrf.mxu0
    %v2904 = vadd.f32 %v2891, %v2903
    %v2905 = vpop.f32.mrf.mxu0
    %2906 = vdwg.mxu0
    %2907 = vmatpush.bf16.msra.mxu0 %v1232
    %2908 = vmatpush.bf16.msra.mxu0 %v1226
    %2909 = vmatpush.bf16.msra.mxu0 %v1220
    %2910 = vmatpush.bf16.msra.mxu0 %v1214
    %2911 = vmatpush.bf16.msra.mxu0 %v1208
    %2912 = vmatpush.bf16.msra.mxu0 %v1202
    %2913 = vmatpush.bf16.msra.mxu0 %v1196
    %2914 = vmatpush.bf16.msra.mxu0 %v1190
    %2915 = vmatmul.bf16.gmra.mxu0 %v2853
    %v2916 = vpop.f32.mrf.mxu0
    %v2917 = vadd.f32 0.0, %v2916
    %v2918 = vpop.f32.mrf.mxu0
    %2919 = vdwg.mxu0
    %2920 = vmatpush.bf16.msra.mxu0 %v1280
    %2921 = vmatpush.bf16.msra.mxu0 %v1274
    %2922 = vmatpush.bf16.msra.mxu0 %v1268
    %2923 = vmatpush.bf16.msra.mxu0 %v1262
    %2924 = vmatpush.bf16.msra.mxu0 %v1256
    %2925 = vmatpush.bf16.msra.mxu0 %v1250
    %2926 = vmatpush.bf16.msra.mxu0 %v1244
    %2927 = vmatpush.bf16.msra.mxu0 %v1238
    %2928 = vmatmul.bf16.gmra.mxu0 %v2854
    %v2929 = vpop.f32.mrf.mxu0
    %v2930 = vadd.f32 %v2917, %v2929
    %v2931 = vpop.f32.mrf.mxu0
    %2932 = vdwg.mxu0
    %2933 = vmatpush.bf16.msra.mxu0 %v1233
    %2934 = vmatpush.bf16.msra.mxu0 %v1227
    %2935 = vmatpush.bf16.msra.mxu0 %v1221
    %2936 = vmatpush.bf16.msra.mxu0 %v1215
    %2937 = vmatpush.bf16.msra.mxu0 %v1209
    %2938 = vmatpush.bf16.msra.mxu0 %v1203
    %2939 = vmatpush.bf16.msra.mxu0 %v1197
    %2940 = vmatpush.bf16.msra.mxu0 %v1191
    %2941 = vmatmul.bf16.gmra.mxu0 %v2853
    %v2942 = vpop.f32.mrf.mxu0
    %v2943 = vadd.f32 0.0, %v2942
    %v2944 = vpop.f32.mrf.mxu0
    %2945 = vdwg.mxu0
    %2946 = vmatpush.bf16.msra.mxu0 %v1281
    %2947 = vmatpush.bf16.msra.mxu0 %v1275
    %2948 = vmatpush.bf16.msra.mxu0 %v1269
    %2949 = vmatpush.bf16.msra.mxu0 %v1263
    %2950 = vmatpush.bf16.msra.mxu0 %v1257
    %2951 = vmatpush.bf16.msra.mxu0 %v1251
    %2952 = vmatpush.bf16.msra.mxu0 %v1245
    %2953 = vmatpush.bf16.msra.mxu0 %v1239
    %2954 = vmatmul.bf16.gmra.mxu0 %v2854
    %v2955 = vpop.f32.mrf.mxu0
    %v2956 = vadd.f32 %v2943, %v2955
    %v2957 = vpop.f32.mrf.mxu0
    %2958 = vdwg.mxu0
    %2959 = vmatpush.bf16.msra.mxu0 %v1234
    %2960 = vmatpush.bf16.msra.mxu0 %v1228
    %2961 = vmatpush.bf16.msra.mxu0 %v1222
    %2962 = vmatpush.bf16.msra.mxu0 %v1216
    %2963 = vmatpush.bf16.msra.mxu0 %v1210
    %2964 = vmatpush.bf16.msra.mxu0 %v1204
    %2965 = vmatpush.bf16.msra.mxu0 %v1198
    %2966 = vmatpush.bf16.msra.mxu0 %v1192
    %2967 = vmatmul.bf16.gmra.mxu0 %v2853
    %v2968 = vpop.f32.mrf.mxu0
    %v2969 = vadd.f32 0.0, %v2968
    %v2970 = vpop.f32.mrf.mxu0
    %2971 = vdwg.mxu0
    %2972 = vmatpush.bf16.msra.mxu0 %v1282
    %2973 = vmatpush.bf16.msra.mxu0 %v1276
    %2974 = vmatpush.bf16.msra.mxu0 %v1270
    %2975 = vmatpush.bf16.msra.mxu0 %v1264
    %2976 = vmatpush.bf16.msra.mxu0 %v1258
    %2977 = vmatpush.bf16.msra.mxu0 %v1252
    %2978 = vmatpush.bf16.msra.mxu0 %v1246
    %2979 = vmatpush.bf16.msra.mxu0 %v1240
    %2980 = vmatmul.bf16.gmra.mxu0 %v2854
    %v2981 = vpop.f32.mrf.mxu0
    %v2982 = vadd.f32 %v2969, %v2981
    %v2983 = vpop.f32.mrf.mxu0
    %2984 = vdwg.mxu0
    %2985 = vmatpush.bf16.msra.mxu0 %v1235
    %2986 = vmatpush.bf16.msra.mxu0 %v1229
    %2987 = vmatpush.bf16.msra.mxu0 %v1223
    %2988 = vmatpush.bf16.msra.mxu0 %v1217
    %2989 = vmatpush.bf16.msra.mxu0 %v1211
    %2990 = vmatpush.bf16.msra.mxu0 %v1205
    %2991 = vmatpush.bf16.msra.mxu0 %v1199
    %2992 = vmatpush.bf16.msra.mxu0 %v1193
    %2993 = vmatmul.bf16.gmra.mxu0 %v2853
    %v2994 = vpop.f32.mrf.mxu0
    %v2995 = vadd.f32 0.0, %v2994
    %v2996 = vpop.f32.mrf.mxu0
    %2997 = vdwg.mxu0
    %2998 = vmatpush.bf16.msra.mxu0 %v1283
    %2999 = vmatpush.bf16.msra.mxu0 %v1277
    %3000 = vmatpush.bf16.msra.mxu0 %v1271
    %3001 = vmatpush.bf16.msra.mxu0 %v1265
    %3002 = vmatpush.bf16.msra.mxu0 %v1259
    %3003 = vmatpush.bf16.msra.mxu0 %v1253
    %3004 = vmatpush.bf16.msra.mxu0 %v1247
    %3005 = vmatpush.bf16.msra.mxu0 %v1241
    %3006 = vmatmul.bf16.gmra.mxu0 %v2854
    %v3007 = vpop.f32.mrf.mxu0
    %v3008 = vadd.f32 %v2995, %v3007
    %v3009 = vpop.f32.mrf.mxu0
    %3010 = vdwg.mxu0
    %v3011 = vadd.f32 %v2844, %v2878
    %v3012 = vmul.f32 %v3011, 0.5
    %v3013 = vtanh.pop %v3012
    %v3014 = vmul.f32 %v3013, 0.5
    %v3015 = vadd.f32 %v3014, 0.5
    %v3016 = vadd.f32 %v2845, %v2904
    %v3017 = vmul.f32 %v3016, 0.5
    %v3018 = vtanh.pop %v3017
    %v3019 = vmul.f32 %v3018, 0.5
    %v3020 = vadd.f32 %v3019, 0.5
    %v3021 = vadd.f32 %v2930, %v1547
    %v3022 = vmul.f32 %v3015, %v3021
    %v3023 = vadd.f32 %v2846, %v3022
    %v3024 = vtanh.pop %v3023
    %v3025 = vsub.f32 1.0, %v3020
    %v3026 = vmul.f32 %v3025, %v3024
    %v3027 = vmul.f32 %v3020, %v2818
    %v3028 = vadd.f32 %v3026, %v3027
    %v3029 = vadd.f32 %v2850, %v2956
    %v3030 = vmul.f32 %v3029, 0.5
    %v3031 = vtanh.pop %v3030
    %v3032 = vmul.f32 %v3031, 0.5
    %v3033 = vadd.f32 %v3032, 0.5
    %v3034 = vadd.f32 %v2851, %v2982
    %v3035 = vmul.f32 %v3034, 0.5
    %v3036 = vtanh.pop %v3035
    %v3037 = vmul.f32 %v3036, 0.5
    %v3038 = vadd.f32 %v3037, 0.5
    %v3039 = vadd.f32 %v3008, %v1568
    %v3040 = vmul.f32 %v3033, %v3039
    %v3041 = vadd.f32 %v2852, %v3040
    %v3042 = vtanh.pop %v3041
    %v3043 = vsub.f32 1.0, %v3038
    %v3044 = vmul.f32 %v3043, %v3042
    %v3045 = vmul.f32 %v3038, %v2836
    %v3046 = vadd.f32 %v3044, %v3045
    %s3047 = scalar_lea.vmem [#allocation3], 112
    %3048 = vst [vmem:[%s3047] sm:$0xff] %v3028
    %s3049 = scalar_lea.vmem [#allocation3], 128
    %3050 = vst [vmem:[%s3049 + $0x8] sm:$0xff] %v3046
    %v3051 = vld [vmem:[%s2849] sm:$0xff]
    %v3052 = vld [vmem:[%s2849 + $0x8] sm:$0xff]
    %v3053 = vld [vmem:[%s2849 + $0x10] sm:$0xff]
    %v3054 = vld [vmem:[%s2843 + $0x18] sm:$0xff]
    %v3055 = vld [vmem:[%s2843 + $0x20] sm:$0xff]
    %v3056 = vld [vmem:[%s2843 + $0x28] sm:$0xff]
    %v3057 = vpack.c.bf16 %v3028, %v3028
    %v3058 = vpack.c.bf16 %v3046, %v3046
    %3059 = vmatpush.bf16.msra.mxu0 %v1230
    %3060 = vmatpush.bf16.msra.mxu0 %v1224
    %3061 = vmatpush.bf16.msra.mxu0 %v1218
    %3062 = vmatpush.bf16.msra.mxu0 %v1212
    %3063 = vmatpush.bf16.msra.mxu0 %v1206
    %3064 = vmatpush.bf16.msra.mxu0 %v1200
    %3065 = vmatpush.bf16.msra.mxu0 %v1194
    %3066 = vmatpush.bf16.msra.mxu0 %v1188
    %3067 = vmatmul.bf16.gmra.mxu0 %v3057
    %v3068 = vpop.f32.mrf.mxu0
    %v3069 = vadd.f32 0.0, %v3068
    %v3070 = vpop.f32.mrf.mxu0
    %3071 = vdwg.mxu0
    %3072 = vmatpush.bf16.msra.mxu0 %v1278
    %3073 = vmatpush.bf16.msra.mxu0 %v1272
    %3074 = vmatpush.bf16.msra.mxu0 %v1266
    %3075 = vmatpush.bf16.msra.mxu0 %v1260
    %3076 = vmatpush.bf16.msra.mxu0 %v1254
    %3077 = vmatpush.bf16.msra.mxu0 %v1248
    %3078 = vmatpush.bf16.msra.mxu0 %v1242
    %3079 = vmatpush.bf16.msra.mxu0 %v1236
    %3080 = vmatmul.bf16.gmra.mxu0 %v3058
    %v3081 = vpop.f32.mrf.mxu0
    %v3082 = vadd.f32 %v3069, %v3081
    %v3083 = vpop.f32.mrf.mxu0
    %3084 = vdwg.mxu0
    %3085 = vmatpush.bf16.msra.mxu0 %v1231
    %3086 = vmatpush.bf16.msra.mxu0 %v1225
    %3087 = vmatpush.bf16.msra.mxu0 %v1219
    %3088 = vmatpush.bf16.msra.mxu0 %v1213
    %3089 = vmatpush.bf16.msra.mxu0 %v1207
    %3090 = vmatpush.bf16.msra.mxu0 %v1201
    %3091 = vmatpush.bf16.msra.mxu0 %v1195
    %3092 = vmatpush.bf16.msra.mxu0 %v1189
    %3093 = vmatmul.bf16.gmra.mxu0 %v3057
    %v3094 = vpop.f32.mrf.mxu0
    %v3095 = vadd.f32 0.0, %v3094
    %v3096 = vpop.f32.mrf.mxu0
    %3097 = vdwg.mxu0
    %3098 = vmatpush.bf16.msra.mxu0 %v1279
    %3099 = vmatpush.bf16.msra.mxu0 %v1273
    %3100 = vmatpush.bf16.msra.mxu0 %v1267
    %3101 = vmatpush.bf16.msra.mxu0 %v1261
    %3102 = vmatpush.bf16.msra.mxu0 %v1255
    %3103 = vmatpush.bf16.msra.mxu0 %v1249
    %3104 = vmatpush.bf16.msra.mxu0 %v1243
    %3105 = vmatpush.bf16.msra.mxu0 %v1237
    %3106 = vmatmul.bf16.gmra.mxu0 %v3058
    %v3107 = vpop.f32.mrf.mxu0
    %v3108 = vadd.f32 %v3095, %v3107
    %v3109 = vpop.f32.mrf.mxu0
    %3110 = vdwg.mxu0
    %3111 = vmatpush.bf16.msra.mxu0 %v1232
    %3112 = vmatpush.bf16.msra.mxu0 %v1226
    %3113 = vmatpush.bf16.msra.mxu0 %v1220
    %3114 = vmatpush.bf16.msra.mxu0 %v1214
    %3115 = vmatpush.bf16.msra.mxu0 %v1208
    %3116 = vmatpush.bf16.msra.mxu0 %v1202
    %3117 = vmatpush.bf16.msra.mxu0 %v1196
    %3118 = vmatpush.bf16.msra.mxu0 %v1190
    %3119 = vmatmul.bf16.gmra.mxu0 %v3057
    %v3120 = vpop.f32.mrf.mxu0
    %v3121 = vadd.f32 0.0, %v3120
    %v3122 = vpop.f32.mrf.mxu0
    %3123 = vdwg.mxu0
    %3124 = vmatpush.bf16.msra.mxu0 %v1280
    %3125 = vmatpush.bf16.msra.mxu0 %v1274
    %3126 = vmatpush.bf16.msra.mxu0 %v1268
    %3127 = vmatpush.bf16.msra.mxu0 %v1262
    %3128 = vmatpush.bf16.msra.mxu0 %v1256
    %3129 = vmatpush.bf16.msra.mxu0 %v1250
    %3130 = vmatpush.bf16.msra.mxu0 %v1244
    %3131 = vmatpush.bf16.msra.mxu0 %v1238
    %3132 = vmatmul.bf16.gmra.mxu0 %v3058
    %v3133 = vpop.f32.mrf.mxu0
    %v3134 = vadd.f32 %v3121, %v3133
    %v3135 = vpop.f32.mrf.mxu0
    %3136 = vdwg.mxu0
    %3137 = vmatpush.bf16.msra.mxu0 %v1233
    %3138 = vmatpush.bf16.msra.mxu0 %v1227
    %3139 = vmatpush.bf16.msra.mxu0 %v1221
    %3140 = vmatpush.bf16.msra.mxu0 %v1215
    %3141 = vmatpush.bf16.msra.mxu0 %v1209
    %3142 = vmatpush.bf16.msra.mxu0 %v1203
    %3143 = vmatpush.bf16.msra.mxu0 %v1197
    %3144 = vmatpush.bf16.msra.mxu0 %v1191
    %3145 = vmatmul.bf16.gmra.mxu0 %v3057
    %v3146 = vpop.f32.mrf.mxu0
    %v3147 = vadd.f32 0.0, %v3146
    %v3148 = vpop.f32.mrf.mxu0
    %3149 = vdwg.mxu0
    %3150 = vmatpush.bf16.msra.mxu0 %v1281
    %3151 = vmatpush.bf16.msra.mxu0 %v1275
    %3152 = vmatpush.bf16.msra.mxu0 %v1269
    %3153 = vmatpush.bf16.msra.mxu0 %v1263
    %3154 = vmatpush.bf16.msra.mxu0 %v1257
    %3155 = vmatpush.bf16.msra.mxu0 %v1251
    %3156 = vmatpush.bf16.msra.mxu0 %v1245
    %3157 = vmatpush.bf16.msra.mxu0 %v1239
    %3158 = vmatmul.bf16.gmra.mxu0 %v3058
    %v3159 = vpop.f32.mrf.mxu0
    %v3160 = vadd.f32 %v3147, %v3159
    %v3161 = vpop.f32.mrf.mxu0
    %3162 = vdwg.mxu0
    %3163 = vmatpush.bf16.msra.mxu0 %v1234
    %3164 = vmatpush.bf16.msra.mxu0 %v1228
    %3165 = vmatpush.bf16.msra.mxu0 %v1222
    %3166 = vmatpush.bf16.msra.mxu0 %v1216
    %3167 = vmatpush.bf16.msra.mxu0 %v1210
    %3168 = vmatpush.bf16.msra.mxu0 %v1204
    %3169 = vmatpush.bf16.msra.mxu0 %v1198
    %3170 = vmatpush.bf16.msra.mxu0 %v1192
    %3171 = vmatmul.bf16.gmra.mxu0 %v3057
    %v3172 = vpop.f32.mrf.mxu0
    %v3173 = vadd.f32 0.0, %v3172
    %v3174 = vpop.f32.mrf.mxu0
    %3175 = vdwg.mxu0
    %3176 = vmatpush.bf16.msra.mxu0 %v1282
    %3177 = vmatpush.bf16.msra.mxu0 %v1276
    %3178 = vmatpush.bf16.msra.mxu0 %v1270
    %3179 = vmatpush.bf16.msra.mxu0 %v1264
    %3180 = vmatpush.bf16.msra.mxu0 %v1258
    %3181 = vmatpush.bf16.msra.mxu0 %v1252
    %3182 = vmatpush.bf16.msra.mxu0 %v1246
    %3183 = vmatpush.bf16.msra.mxu0 %v1240
    %3184 = vmatmul.bf16.gmra.mxu0 %v3058
    %v3185 = vpop.f32.mrf.mxu0
    %v3186 = vadd.f32 %v3173, %v3185
    %v3187 = vpop.f32.mrf.mxu0
    %3188 = vdwg.mxu0
    %3189 = vmatpush.bf16.msra.mxu0 %v1235
    %3190 = vmatpush.bf16.msra.mxu0 %v1229
    %3191 = vmatpush.bf16.msra.mxu0 %v1223
    %3192 = vmatpush.bf16.msra.mxu0 %v1217
    %3193 = vmatpush.bf16.msra.mxu0 %v1211
    %3194 = vmatpush.bf16.msra.mxu0 %v1205
    %3195 = vmatpush.bf16.msra.mxu0 %v1199
    %3196 = vmatpush.bf16.msra.mxu0 %v1193
    %3197 = vmatmul.bf16.gmra.mxu0 %v3057
    %v3198 = vpop.f32.mrf.mxu0
    %v3199 = vadd.f32 0.0, %v3198
    %v3200 = vpop.f32.mrf.mxu0
    %3201 = vdwg.mxu0
    %3202 = vmatpush.bf16.msra.mxu0 %v1283
    %3203 = vmatpush.bf16.msra.mxu0 %v1277
    %3204 = vmatpush.bf16.msra.mxu0 %v1271
    %3205 = vmatpush.bf16.msra.mxu0 %v1265
    %3206 = vmatpush.bf16.msra.mxu0 %v1259
    %3207 = vmatpush.bf16.msra.mxu0 %v1253
    %3208 = vmatpush.bf16.msra.mxu0 %v1247
    %3209 = vmatpush.bf16.msra.mxu0 %v1241
    %3210 = vmatmul.bf16.gmra.mxu0 %v3058
    %v3211 = vpop.f32.mrf.mxu0
    %v3212 = vadd.f32 %v3199, %v3211
    %v3213 = vpop.f32.mrf.mxu0
    %3214 = vdwg.mxu0
    %v3215 = vadd.f32 %v3051, %v3082
    %v3216 = vmul.f32 %v3215, 0.5
    %v3217 = vtanh.pop %v3216
    %v3218 = vmul.f32 %v3217, 0.5
    %v3219 = vadd.f32 %v3218, 0.5
    %v3220 = vadd.f32 %v3052, %v3108
    %v3221 = vmul.f32 %v3220, 0.5
    %v3222 = vtanh.pop %v3221
    %v3223 = vmul.f32 %v3222, 0.5
    %v3224 = vadd.f32 %v3223, 0.5
    %v3225 = vadd.f32 %v3134, %v1547
    %v3226 = vmul.f32 %v3219, %v3225
    %v3227 = vadd.f32 %v3053, %v3226
    %v3228 = vtanh.pop %v3227
    %v3229 = vsub.f32 1.0, %v3224
    %v3230 = vmul.f32 %v3229, %v3228
    %v3231 = vmul.f32 %v3224, %v3028
    %v3232 = vadd.f32 %v3230, %v3231
    %v3233 = vadd.f32 %v3054, %v3160
    %v3234 = vmul.f32 %v3233, 0.5
    %v3235 = vtanh.pop %v3234
    %v3236 = vmul.f32 %v3235, 0.5
    %v3237 = vadd.f32 %v3236, 0.5
    %v3238 = vadd.f32 %v3055, %v3186
    %v3239 = vmul.f32 %v3238, 0.5
    %v3240 = vtanh.pop %v3239
    %v3241 = vmul.f32 %v3240, 0.5
    %v3242 = vadd.f32 %v3241, 0.5
    %v3243 = vadd.f32 %v3212, %v1568
    %v3244 = vmul.f32 %v3237, %v3243
    %v3245 = vadd.f32 %v3056, %v3244
    %v3246 = vtanh.pop %v3245
    %v3247 = vsub.f32 1.0, %v3242
    %v3248 = vmul.f32 %v3247, %v3246
    %v3249 = vmul.f32 %v3242, %v3046
    %v3250 = vadd.f32 %v3248, %v3249
    %3251 = vst [vmem:[%s3049] sm:$0xff] %v3232
    %3252 = vst [vmem:[%s3047 + $0x8] sm:$0xff] %v3250
    %v3253 = vld [vmem:[%s2639] sm:$0xff]
    %v3254 = vld [vmem:[%s2639 + $0x8] sm:$0xff]
    %v3255 = vld [vmem:[%s2639 + $0x10] sm:$0xff]
    %v3256 = vld [vmem:[%s2633 + $0x18] sm:$0xff]
    %v3257 = vld [vmem:[%s2633 + $0x20] sm:$0xff]
    %v3258 = vld [vmem:[%s2633 + $0x28] sm:$0xff]
    %v3259 = vpack.c.bf16 %v3232, %v3232
    %v3260 = vpack.c.bf16 %v3250, %v3250
    %3261 = vmatpush.bf16.msra.mxu0 %v1230
    %3262 = vmatpush.bf16.msra.mxu0 %v1224
    %3263 = vmatpush.bf16.msra.mxu0 %v1218
    %3264 = vmatpush.bf16.msra.mxu0 %v1212
    %3265 = vmatpush.bf16.msra.mxu0 %v1206
    %3266 = vmatpush.bf16.msra.mxu0 %v1200
    %3267 = vmatpush.bf16.msra.mxu0 %v1194
    %3268 = vmatpush.bf16.msra.mxu0 %v1188
    %3269 = vmatmul.bf16.gmra.mxu0 %v3259
    %v3270 = vpop.f32.mrf.mxu0
    %v3271 = vadd.f32 0.0, %v3270
    %v3272 = vpop.f32.mrf.mxu0
    %3273 = vdwg.mxu0
    %3274 = vmatpush.bf16.msra.mxu0 %v1278
    %3275 = vmatpush.bf16.msra.mxu0 %v1272
    %3276 = vmatpush.bf16.msra.mxu0 %v1266
    %3277 = vmatpush.bf16.msra.mxu0 %v1260
    %3278 = vmatpush.bf16.msra.mxu0 %v1254
    %3279 = vmatpush.bf16.msra.mxu0 %v1248
    %3280 = vmatpush.bf16.msra.mxu0 %v1242
    %3281 = vmatpush.bf16.msra.mxu0 %v1236
    %3282 = vmatmul.bf16.gmra.mxu0 %v3260
    %v3283 = vpop.f32.mrf.mxu0
    %v3284 = vadd.f32 %v3271, %v3283
    %v3285 = vpop.f32.mrf.mxu0
    %3286 = vdwg.mxu0
    %3287 = vmatpush.bf16.msra.mxu0 %v1231
    %3288 = vmatpush.bf16.msra.mxu0 %v1225
    %3289 = vmatpush.bf16.msra.mxu0 %v1219
    %3290 = vmatpush.bf16.msra.mxu0 %v1213
    %3291 = vmatpush.bf16.msra.mxu0 %v1207
    %3292 = vmatpush.bf16.msra.mxu0 %v1201
    %3293 = vmatpush.bf16.msra.mxu0 %v1195
    %3294 = vmatpush.bf16.msra.mxu0 %v1189
    %3295 = vmatmul.bf16.gmra.mxu0 %v3259
    %v3296 = vpop.f32.mrf.mxu0
    %v3297 = vadd.f32 0.0, %v3296
    %v3298 = vpop.f32.mrf.mxu0
    %3299 = vdwg.mxu0
    %3300 = vmatpush.bf16.msra.mxu0 %v1279
    %3301 = vmatpush.bf16.msra.mxu0 %v1273
    %3302 = vmatpush.bf16.msra.mxu0 %v1267
    %3303 = vmatpush.bf16.msra.mxu0 %v1261
    %3304 = vmatpush.bf16.msra.mxu0 %v1255
    %3305 = vmatpush.bf16.msra.mxu0 %v1249
    %3306 = vmatpush.bf16.msra.mxu0 %v1243
    %3307 = vmatpush.bf16.msra.mxu0 %v1237
    %3308 = vmatmul.bf16.gmra.mxu0 %v3260
    %v3309 = vpop.f32.mrf.mxu0
    %v3310 = vadd.f32 %v3297, %v3309
    %v3311 = vpop.f32.mrf.mxu0
    %3312 = vdwg.mxu0
    %3313 = vmatpush.bf16.msra.mxu0 %v1232
    %3314 = vmatpush.bf16.msra.mxu0 %v1226
    %3315 = vmatpush.bf16.msra.mxu0 %v1220
    %3316 = vmatpush.bf16.msra.mxu0 %v1214
    %3317 = vmatpush.bf16.msra.mxu0 %v1208
    %3318 = vmatpush.bf16.msra.mxu0 %v1202
    %3319 = vmatpush.bf16.msra.mxu0 %v1196
    %3320 = vmatpush.bf16.msra.mxu0 %v1190
    %3321 = vmatmul.bf16.gmra.mxu0 %v3259
    %v3322 = vpop.f32.mrf.mxu0
    %v3323 = vadd.f32 0.0, %v3322
    %v3324 = vpop.f32.mrf.mxu0
    %3325 = vdwg.mxu0
    %3326 = vmatpush.bf16.msra.mxu0 %v1280
    %3327 = vmatpush.bf16.msra.mxu0 %v1274
    %3328 = vmatpush.bf16.msra.mxu0 %v1268
    %3329 = vmatpush.bf16.msra.mxu0 %v1262
    %3330 = vmatpush.bf16.msra.mxu0 %v1256
    %3331 = vmatpush.bf16.msra.mxu0 %v1250
    %3332 = vmatpush.bf16.msra.mxu0 %v1244
    %3333 = vmatpush.bf16.msra.mxu0 %v1238
    %3334 = vmatmul.bf16.gmra.mxu0 %v3260
    %v3335 = vpop.f32.mrf.mxu0
    %v3336 = vadd.f32 %v3323, %v3335
    %v3337 = vpop.f32.mrf.mxu0
    %3338 = vdwg.mxu0
    %3339 = vmatpush.bf16.msra.mxu0 %v1233
    %3340 = vmatpush.bf16.msra.mxu0 %v1227
    %3341 = vmatpush.bf16.msra.mxu0 %v1221
    %3342 = vmatpush.bf16.msra.mxu0 %v1215
    %3343 = vmatpush.bf16.msra.mxu0 %v1209
    %3344 = vmatpush.bf16.msra.mxu0 %v1203
    %3345 = vmatpush.bf16.msra.mxu0 %v1197
    %3346 = vmatpush.bf16.msra.mxu0 %v1191
    %3347 = vmatmul.bf16.gmra.mxu0 %v3259
    %v3348 = vpop.f32.mrf.mxu0
    %v3349 = vadd.f32 0.0, %v3348
    %v3350 = vpop.f32.mrf.mxu0
    %3351 = vdwg.mxu0
    %3352 = vmatpush.bf16.msra.mxu0 %v1281
    %3353 = vmatpush.bf16.msra.mxu0 %v1275
    %3354 = vmatpush.bf16.msra.mxu0 %v1269
    %3355 = vmatpush.bf16.msra.mxu0 %v1263
    %3356 = vmatpush.bf16.msra.mxu0 %v1257
    %3357 = vmatpush.bf16.msra.mxu0 %v1251
    %3358 = vmatpush.bf16.msra.mxu0 %v1245
    %3359 = vmatpush.bf16.msra.mxu0 %v1239
    %3360 = vmatmul.bf16.gmra.mxu0 %v3260
    %v3361 = vpop.f32.mrf.mxu0
    %v3362 = vadd.f32 %v3349, %v3361
    %v3363 = vpop.f32.mrf.mxu0
    %3364 = vdwg.mxu0
    %3365 = vmatpush.bf16.msra.mxu0 %v1234
    %3366 = vmatpush.bf16.msra.mxu0 %v1228
    %3367 = vmatpush.bf16.msra.mxu0 %v1222
    %3368 = vmatpush.bf16.msra.mxu0 %v1216
    %3369 = vmatpush.bf16.msra.mxu0 %v1210
    %3370 = vmatpush.bf16.msra.mxu0 %v1204
    %3371 = vmatpush.bf16.msra.mxu0 %v1198
    %3372 = vmatpush.bf16.msra.mxu0 %v1192
    %3373 = vmatmul.bf16.gmra.mxu0 %v3259
    %v3374 = vpop.f32.mrf.mxu0
    %v3375 = vadd.f32 0.0, %v3374
    %v3376 = vpop.f32.mrf.mxu0
    %3377 = vdwg.mxu0
    %3378 = vmatpush.bf16.msra.mxu0 %v1282
    %3379 = vmatpush.bf16.msra.mxu0 %v1276
    %3380 = vmatpush.bf16.msra.mxu0 %v1270
    %3381 = vmatpush.bf16.msra.mxu0 %v1264
    %3382 = vmatpush.bf16.msra.mxu0 %v1258
    %3383 = vmatpush.bf16.msra.mxu0 %v1252
    %3384 = vmatpush.bf16.msra.mxu0 %v1246
    %3385 = vmatpush.bf16.msra.mxu0 %v1240
    %3386 = vmatmul.bf16.gmra.mxu0 %v3260
    %v3387 = vpop.f32.mrf.mxu0
    %v3388 = vadd.f32 %v3375, %v3387
    %v3389 = vpop.f32.mrf.mxu0
    %3390 = vdwg.mxu0
    %3391 = vmatpush.bf16.msra.mxu0 %v1235
    %3392 = vmatpush.bf16.msra.mxu0 %v1229
    %3393 = vmatpush.bf16.msra.mxu0 %v1223
    %3394 = vmatpush.bf16.msra.mxu0 %v1217
    %3395 = vmatpush.bf16.msra.mxu0 %v1211
    %3396 = vmatpush.bf16.msra.mxu0 %v1205
    %3397 = vmatpush.bf16.msra.mxu0 %v1199
    %3398 = vmatpush.bf16.msra.mxu0 %v1193
    %3399 = vmatmul.bf16.gmra.mxu0 %v3259
    %v3400 = vpop.f32.mrf.mxu0
    %v3401 = vadd.f32 0.0, %v3400
    %v3402 = vpop.f32.mrf.mxu0
    %3403 = vdwg.mxu0
    %3404 = vmatpush.bf16.msra.mxu0 %v1283
    %3405 = vmatpush.bf16.msra.mxu0 %v1277
    %3406 = vmatpush.bf16.msra.mxu0 %v1271
    %3407 = vmatpush.bf16.msra.mxu0 %v1265
    %3408 = vmatpush.bf16.msra.mxu0 %v1259
    %3409 = vmatpush.bf16.msra.mxu0 %v1253
    %3410 = vmatpush.bf16.msra.mxu0 %v1247
    %3411 = vmatpush.bf16.msra.mxu0 %v1241
    %3412 = vmatmul.bf16.gmra.mxu0 %v3260
    %v3413 = vpop.f32.mrf.mxu0
    %v3414 = vadd.f32 %v3401, %v3413
    %v3415 = vpop.f32.mrf.mxu0
    %3416 = vdwg.mxu0
    %v3417 = vadd.f32 %v3253, %v3284
    %v3418 = vmul.f32 %v3417, 0.5
    %v3419 = vtanh.pop %v3418
    %v3420 = vmul.f32 %v3419, 0.5
    %v3421 = vadd.f32 %v3420, 0.5
    %v3422 = vadd.f32 %v3254, %v3310
    %v3423 = vmul.f32 %v3422, 0.5
    %v3424 = vtanh.pop %v3423
    %v3425 = vmul.f32 %v3424, 0.5
    %v3426 = vadd.f32 %v3425, 0.5
    %v3427 = vadd.f32 %v3336, %v1547
    %v3428 = vmul.f32 %v3421, %v3427
    %v3429 = vadd.f32 %v3255, %v3428
    %v3430 = vtanh.pop %v3429
    %v3431 = vsub.f32 1.0, %v3426
    %v3432 = vmul.f32 %v3431, %v3430
    %v3433 = vmul.f32 %v3426, %v3232
    %v3434 = vadd.f32 %v3432, %v3433
    %v3435 = vadd.f32 %v3256, %v3362
    %v3436 = vmul.f32 %v3435, 0.5
    %v3437 = vtanh.pop %v3436
    %v3438 = vmul.f32 %v3437, 0.5
    %v3439 = vadd.f32 %v3438, 0.5
    %v3440 = vadd.f32 %v3257, %v3388
    %v3441 = vmul.f32 %v3440, 0.5
    %v3442 = vtanh.pop %v3441
    %v3443 = vmul.f32 %v3442, 0.5
    %v3444 = vadd.f32 %v3443, 0.5
    %v3445 = vadd.f32 %v3414, %v1568
    %v3446 = vmul.f32 %v3439, %v3445
    %v3447 = vadd.f32 %v3258, %v3446
    %v3448 = vtanh.pop %v3447
    %v3449 = vsub.f32 1.0, %v3444
    %v3450 = vmul.f32 %v3449, %v3448
    %v3451 = vmul.f32 %v3444, %v3250
    %v3452 = vadd.f32 %v3450, %v3451
    %3453 = vst [vmem:[%s2839] sm:$0xff] %v3434
    %3454 = vst [vmem:[%s2837 + $0x8] sm:$0xff] %v3452
    %v3455 = vld [vmem:[%s2429] sm:$0xff]
    %v3456 = vld [vmem:[%s2429 + $0x8] sm:$0xff]
    %v3457 = vld [vmem:[%s2429 + $0x10] sm:$0xff]
    %v3458 = vld [vmem:[%s2423 + $0x18] sm:$0xff]
    %v3459 = vld [vmem:[%s2423 + $0x20] sm:$0xff]
    %v3460 = vld [vmem:[%s2423 + $0x28] sm:$0xff]
    %v3461 = vpack.c.bf16 %v3434, %v3434
    %v3462 = vpack.c.bf16 %v3452, %v3452
    %3463 = vmatpush.bf16.msra.mxu0 %v1230
    %3464 = vmatpush.bf16.msra.mxu0 %v1224
    %3465 = vmatpush.bf16.msra.mxu0 %v1218
    %3466 = vmatpush.bf16.msra.mxu0 %v1212
    %3467 = vmatpush.bf16.msra.mxu0 %v1206
    %3468 = vmatpush.bf16.msra.mxu0 %v1200
    %3469 = vmatpush.bf16.msra.mxu0 %v1194
    %3470 = vmatpush.bf16.msra.mxu0 %v1188
    %3471 = vmatmul.bf16.gmra.mxu0 %v3461
    %v3472 = vpop.f32.mrf.mxu0
    %v3473 = vadd.f32 0.0, %v3472
    %v3474 = vpop.f32.mrf.mxu0
    %3475 = vdwg.mxu0
    %3476 = vmatpush.bf16.msra.mxu0 %v1278
    %3477 = vmatpush.bf16.msra.mxu0 %v1272
    %3478 = vmatpush.bf16.msra.mxu0 %v1266
    %3479 = vmatpush.bf16.msra.mxu0 %v1260
    %3480 = vmatpush.bf16.msra.mxu0 %v1254
    %3481 = vmatpush.bf16.msra.mxu0 %v1248
    %3482 = vmatpush.bf16.msra.mxu0 %v1242
    %3483 = vmatpush.bf16.msra.mxu0 %v1236
    %3484 = vmatmul.bf16.gmra.mxu0 %v3462
    %v3485 = vpop.f32.mrf.mxu0
    %v3486 = vadd.f32 %v3473, %v3485
    %v3487 = vpop.f32.mrf.mxu0
    %3488 = vdwg.mxu0
    %3489 = vmatpush.bf16.msra.mxu0 %v1231
    %3490 = vmatpush.bf16.msra.mxu0 %v1225
    %3491 = vmatpush.bf16.msra.mxu0 %v1219
    %3492 = vmatpush.bf16.msra.mxu0 %v1213
    %3493 = vmatpush.bf16.msra.mxu0 %v1207
    %3494 = vmatpush.bf16.msra.mxu0 %v1201
    %3495 = vmatpush.bf16.msra.mxu0 %v1195
    %3496 = vmatpush.bf16.msra.mxu0 %v1189
    %3497 = vmatmul.bf16.gmra.mxu0 %v3461
    %v3498 = vpop.f32.mrf.mxu0
    %v3499 = vadd.f32 0.0, %v3498
    %v3500 = vpop.f32.mrf.mxu0
    %3501 = vdwg.mxu0
    %3502 = vmatpush.bf16.msra.mxu0 %v1279
    %3503 = vmatpush.bf16.msra.mxu0 %v1273
    %3504 = vmatpush.bf16.msra.mxu0 %v1267
    %3505 = vmatpush.bf16.msra.mxu0 %v1261
    %3506 = vmatpush.bf16.msra.mxu0 %v1255
    %3507 = vmatpush.bf16.msra.mxu0 %v1249
    %3508 = vmatpush.bf16.msra.mxu0 %v1243
    %3509 = vmatpush.bf16.msra.mxu0 %v1237
    %3510 = vmatmul.bf16.gmra.mxu0 %v3462
    %v3511 = vpop.f32.mrf.mxu0
    %v3512 = vadd.f32 %v3499, %v3511
    %v3513 = vpop.f32.mrf.mxu0
    %3514 = vdwg.mxu0
    %3515 = vmatpush.bf16.msra.mxu0 %v1232
    %3516 = vmatpush.bf16.msra.mxu0 %v1226
    %3517 = vmatpush.bf16.msra.mxu0 %v1220
    %3518 = vmatpush.bf16.msra.mxu0 %v1214
    %3519 = vmatpush.bf16.msra.mxu0 %v1208
    %3520 = vmatpush.bf16.msra.mxu0 %v1202
    %3521 = vmatpush.bf16.msra.mxu0 %v1196
    %3522 = vmatpush.bf16.msra.mxu0 %v1190
    %3523 = vmatmul.bf16.gmra.mxu0 %v3461
    %v3524 = vpop.f32.mrf.mxu0
    %v3525 = vadd.f32 0.0, %v3524
    %v3526 = vpop.f32.mrf.mxu0
    %3527 = vdwg.mxu0
    %3528 = vmatpush.bf16.msra.mxu0 %v1280
    %3529 = vmatpush.bf16.msra.mxu0 %v1274
    %3530 = vmatpush.bf16.msra.mxu0 %v1268
    %3531 = vmatpush.bf16.msra.mxu0 %v1262
    %3532 = vmatpush.bf16.msra.mxu0 %v1256
    %3533 = vmatpush.bf16.msra.mxu0 %v1250
    %3534 = vmatpush.bf16.msra.mxu0 %v1244
    %3535 = vmatpush.bf16.msra.mxu0 %v1238
    %3536 = vmatmul.bf16.gmra.mxu0 %v3462
    %v3537 = vpop.f32.mrf.mxu0
    %v3538 = vadd.f32 %v3525, %v3537
    %v3539 = vpop.f32.mrf.mxu0
    %3540 = vdwg.mxu0
    %3541 = vmatpush.bf16.msra.mxu0 %v1233
    %3542 = vmatpush.bf16.msra.mxu0 %v1227
    %3543 = vmatpush.bf16.msra.mxu0 %v1221
    %3544 = vmatpush.bf16.msra.mxu0 %v1215
    %3545 = vmatpush.bf16.msra.mxu0 %v1209
    %3546 = vmatpush.bf16.msra.mxu0 %v1203
    %3547 = vmatpush.bf16.msra.mxu0 %v1197
    %3548 = vmatpush.bf16.msra.mxu0 %v1191
    %3549 = vmatmul.bf16.gmra.mxu0 %v3461
    %v3550 = vpop.f32.mrf.mxu0
    %v3551 = vadd.f32 0.0, %v3550
    %v3552 = vpop.f32.mrf.mxu0
    %3553 = vdwg.mxu0
    %3554 = vmatpush.bf16.msra.mxu0 %v1281
    %3555 = vmatpush.bf16.msra.mxu0 %v1275
    %3556 = vmatpush.bf16.msra.mxu0 %v1269
    %3557 = vmatpush.bf16.msra.mxu0 %v1263
    %3558 = vmatpush.bf16.msra.mxu0 %v1257
    %3559 = vmatpush.bf16.msra.mxu0 %v1251
    %3560 = vmatpush.bf16.msra.mxu0 %v1245
    %3561 = vmatpush.bf16.msra.mxu0 %v1239
    %3562 = vmatmul.bf16.gmra.mxu0 %v3462
    %v3563 = vpop.f32.mrf.mxu0
    %v3564 = vadd.f32 %v3551, %v3563
    %v3565 = vpop.f32.mrf.mxu0
    %3566 = vdwg.mxu0
    %3567 = vmatpush.bf16.msra.mxu0 %v1234
    %3568 = vmatpush.bf16.msra.mxu0 %v1228
    %3569 = vmatpush.bf16.msra.mxu0 %v1222
    %3570 = vmatpush.bf16.msra.mxu0 %v1216
    %3571 = vmatpush.bf16.msra.mxu0 %v1210
    %3572 = vmatpush.bf16.msra.mxu0 %v1204
    %3573 = vmatpush.bf16.msra.mxu0 %v1198
    %3574 = vmatpush.bf16.msra.mxu0 %v1192
    %3575 = vmatmul.bf16.gmra.mxu0 %v3461
    %v3576 = vpop.f32.mrf.mxu0
    %v3577 = vadd.f32 0.0, %v3576
    %v3578 = vpop.f32.mrf.mxu0
    %3579 = vdwg.mxu0
    %3580 = vmatpush.bf16.msra.mxu0 %v1282
    %3581 = vmatpush.bf16.msra.mxu0 %v1276
    %3582 = vmatpush.bf16.msra.mxu0 %v1270
    %3583 = vmatpush.bf16.msra.mxu0 %v1264
    %3584 = vmatpush.bf16.msra.mxu0 %v1258
    %3585 = vmatpush.bf16.msra.mxu0 %v1252
    %3586 = vmatpush.bf16.msra.mxu0 %v1246
    %3587 = vmatpush.bf16.msra.mxu0 %v1240
    %3588 = vmatmul.bf16.gmra.mxu0 %v3462
    %v3589 = vpop.f32.mrf.mxu0
    %v3590 = vadd.f32 %v3577, %v3589
    %v3591 = vpop.f32.mrf.mxu0
    %3592 = vdwg.mxu0
    %3593 = vmatpush.bf16.msra.mxu0 %v1235
    %3594 = vmatpush.bf16.msra.mxu0 %v1229
    %3595 = vmatpush.bf16.msra.mxu0 %v1223
    %3596 = vmatpush.bf16.msra.mxu0 %v1217
    %3597 = vmatpush.bf16.msra.mxu0 %v1211
    %3598 = vmatpush.bf16.msra.mxu0 %v1205
    %3599 = vmatpush.bf16.msra.mxu0 %v1199
    %3600 = vmatpush.bf16.msra.mxu0 %v1193
    %3601 = vmatmul.bf16.gmra.mxu0 %v3461
    %v3602 = vpop.f32.mrf.mxu0
    %v3603 = vadd.f32 0.0, %v3602
    %v3604 = vpop.f32.mrf.mxu0
    %3605 = vdwg.mxu0
    %3606 = vmatpush.bf16.msra.mxu0 %v1283
    %3607 = vmatpush.bf16.msra.mxu0 %v1277
    %3608 = vmatpush.bf16.msra.mxu0 %v1271
    %3609 = vmatpush.bf16.msra.mxu0 %v1265
    %3610 = vmatpush.bf16.msra.mxu0 %v1259
    %3611 = vmatpush.bf16.msra.mxu0 %v1253
    %3612 = vmatpush.bf16.msra.mxu0 %v1247
    %3613 = vmatpush.bf16.msra.mxu0 %v1241
    %3614 = vmatmul.bf16.gmra.mxu0 %v3462
    %v3615 = vpop.f32.mrf.mxu0
    %v3616 = vadd.f32 %v3603, %v3615
    %v3617 = vpop.f32.mrf.mxu0
    %3618 = vdwg.mxu0
    %v3619 = vadd.f32 %v3455, %v3486
    %v3620 = vmul.f32 %v3619, 0.5
    %v3621 = vtanh.pop %v3620
    %v3622 = vmul.f32 %v3621, 0.5
    %v3623 = vadd.f32 %v3622, 0.5
    %v3624 = vadd.f32 %v3456, %v3512
    %v3625 = vmul.f32 %v3624, 0.5
    %v3626 = vtanh.pop %v3625
    %v3627 = vmul.f32 %v3626, 0.5
    %v3628 = vadd.f32 %v3627, 0.5
    %v3629 = vadd.f32 %v3538, %v1547
    %v3630 = vmul.f32 %v3623, %v3629
    %v3631 = vadd.f32 %v3457, %v3630
    %v3632 = vtanh.pop %v3631
    %v3633 = vsub.f32 1.0, %v3628
    %v3634 = vmul.f32 %v3633, %v3632
    %v3635 = vmul.f32 %v3628, %v3434
    %v3636 = vadd.f32 %v3634, %v3635
    %v3637 = vadd.f32 %v3458, %v3564
    %v3638 = vmul.f32 %v3637, 0.5
    %v3639 = vtanh.pop %v3638
    %v3640 = vmul.f32 %v3639, 0.5
    %v3641 = vadd.f32 %v3640, 0.5
    %v3642 = vadd.f32 %v3459, %v3590
    %v3643 = vmul.f32 %v3642, 0.5
    %v3644 = vtanh.pop %v3643
    %v3645 = vmul.f32 %v3644, 0.5
    %v3646 = vadd.f32 %v3645, 0.5
    %v3647 = vadd.f32 %v3616, %v1568
    %v3648 = vmul.f32 %v3641, %v3647
    %v3649 = vadd.f32 %v3460, %v3648
    %v3650 = vtanh.pop %v3649
    %v3651 = vsub.f32 1.0, %v3646
    %v3652 = vmul.f32 %v3651, %v3650
    %v3653 = vmul.f32 %v3646, %v3452
    %v3654 = vadd.f32 %v3652, %v3653
    %3655 = vst [vmem:[%s2629] sm:$0xff] %v3636
    %3656 = vst [vmem:[%s2627 + $0x8] sm:$0xff] %v3654
    %v3657 = vld [vmem:[%s2219] sm:$0xff]
    %v3658 = vld [vmem:[%s2219 + $0x8] sm:$0xff]
    %v3659 = vld [vmem:[%s2219 + $0x10] sm:$0xff]
    %v3660 = vld [vmem:[%s2213 + $0x18] sm:$0xff]
    %v3661 = vld [vmem:[%s2213 + $0x20] sm:$0xff]
    %v3662 = vld [vmem:[%s2213 + $0x28] sm:$0xff]
    %v3663 = vpack.c.bf16 %v3636, %v3636
    %v3664 = vpack.c.bf16 %v3654, %v3654
    %3665 = vmatpush.bf16.msra.mxu0 %v1230
    %3666 = vmatpush.bf16.msra.mxu0 %v1224
    %3667 = vmatpush.bf16.msra.mxu0 %v1218
    %3668 = vmatpush.bf16.msra.mxu0 %v1212
    %3669 = vmatpush.bf16.msra.mxu0 %v1206
    %3670 = vmatpush.bf16.msra.mxu0 %v1200
    %3671 = vmatpush.bf16.msra.mxu0 %v1194
    %3672 = vmatpush.bf16.msra.mxu0 %v1188
    %3673 = vmatmul.bf16.gmra.mxu0 %v3663
    %v3674 = vpop.f32.mrf.mxu0
    %v3675 = vadd.f32 0.0, %v3674
    %v3676 = vpop.f32.mrf.mxu0
    %3677 = vdwg.mxu0
    %3678 = vmatpush.bf16.msra.mxu0 %v1278
    %3679 = vmatpush.bf16.msra.mxu0 %v1272
    %3680 = vmatpush.bf16.msra.mxu0 %v1266
    %3681 = vmatpush.bf16.msra.mxu0 %v1260
    %3682 = vmatpush.bf16.msra.mxu0 %v1254
    %3683 = vmatpush.bf16.msra.mxu0 %v1248
    %3684 = vmatpush.bf16.msra.mxu0 %v1242
    %3685 = vmatpush.bf16.msra.mxu0 %v1236
    %3686 = vmatmul.bf16.gmra.mxu0 %v3664
    %v3687 = vpop.f32.mrf.mxu0
    %v3688 = vadd.f32 %v3675, %v3687
    %v3689 = vpop.f32.mrf.mxu0
    %3690 = vdwg.mxu0
    %3691 = vmatpush.bf16.msra.mxu0 %v1231
    %3692 = vmatpush.bf16.msra.mxu0 %v1225
    %3693 = vmatpush.bf16.msra.mxu0 %v1219
    %3694 = vmatpush.bf16.msra.mxu0 %v1213
    %3695 = vmatpush.bf16.msra.mxu0 %v1207
    %3696 = vmatpush.bf16.msra.mxu0 %v1201
    %3697 = vmatpush.bf16.msra.mxu0 %v1195
    %3698 = vmatpush.bf16.msra.mxu0 %v1189
    %3699 = vmatmul.bf16.gmra.mxu0 %v3663
    %v3700 = vpop.f32.mrf.mxu0
    %v3701 = vadd.f32 0.0, %v3700
    %v3702 = vpop.f32.mrf.mxu0
    %3703 = vdwg.mxu0
    %3704 = vmatpush.bf16.msra.mxu0 %v1279
    %3705 = vmatpush.bf16.msra.mxu0 %v1273
    %3706 = vmatpush.bf16.msra.mxu0 %v1267
    %3707 = vmatpush.bf16.msra.mxu0 %v1261
    %3708 = vmatpush.bf16.msra.mxu0 %v1255
    %3709 = vmatpush.bf16.msra.mxu0 %v1249
    %3710 = vmatpush.bf16.msra.mxu0 %v1243
    %3711 = vmatpush.bf16.msra.mxu0 %v1237
    %3712 = vmatmul.bf16.gmra.mxu0 %v3664
    %v3713 = vpop.f32.mrf.mxu0
    %v3714 = vadd.f32 %v3701, %v3713
    %v3715 = vpop.f32.mrf.mxu0
    %3716 = vdwg.mxu0
    %3717 = vmatpush.bf16.msra.mxu0 %v1232
    %3718 = vmatpush.bf16.msra.mxu0 %v1226
    %3719 = vmatpush.bf16.msra.mxu0 %v1220
    %3720 = vmatpush.bf16.msra.mxu0 %v1214
    %3721 = vmatpush.bf16.msra.mxu0 %v1208
    %3722 = vmatpush.bf16.msra.mxu0 %v1202
    %3723 = vmatpush.bf16.msra.mxu0 %v1196
    %3724 = vmatpush.bf16.msra.mxu0 %v1190
    %3725 = vmatmul.bf16.gmra.mxu0 %v3663
    %v3726 = vpop.f32.mrf.mxu0
    %v3727 = vadd.f32 0.0, %v3726
    %v3728 = vpop.f32.mrf.mxu0
    %3729 = vdwg.mxu0
    %3730 = vmatpush.bf16.msra.mxu0 %v1280
    %3731 = vmatpush.bf16.msra.mxu0 %v1274
    %3732 = vmatpush.bf16.msra.mxu0 %v1268
    %3733 = vmatpush.bf16.msra.mxu0 %v1262
    %3734 = vmatpush.bf16.msra.mxu0 %v1256
    %3735 = vmatpush.bf16.msra.mxu0 %v1250
    %3736 = vmatpush.bf16.msra.mxu0 %v1244
    %3737 = vmatpush.bf16.msra.mxu0 %v1238
    %3738 = vmatmul.bf16.gmra.mxu0 %v3664
    %v3739 = vpop.f32.mrf.mxu0
    %v3740 = vadd.f32 %v3727, %v3739
    %v3741 = vpop.f32.mrf.mxu0
    %3742 = vdwg.mxu0
    %3743 = vmatpush.bf16.msra.mxu0 %v1233
    %3744 = vmatpush.bf16.msra.mxu0 %v1227
    %3745 = vmatpush.bf16.msra.mxu0 %v1221
    %3746 = vmatpush.bf16.msra.mxu0 %v1215
    %3747 = vmatpush.bf16.msra.mxu0 %v1209
    %3748 = vmatpush.bf16.msra.mxu0 %v1203
    %3749 = vmatpush.bf16.msra.mxu0 %v1197
    %3750 = vmatpush.bf16.msra.mxu0 %v1191
    %3751 = vmatmul.bf16.gmra.mxu0 %v3663
    %v3752 = vpop.f32.mrf.mxu0
    %v3753 = vadd.f32 0.0, %v3752
    %v3754 = vpop.f32.mrf.mxu0
    %3755 = vdwg.mxu0
    %3756 = vmatpush.bf16.msra.mxu0 %v1281
    %3757 = vmatpush.bf16.msra.mxu0 %v1275
    %3758 = vmatpush.bf16.msra.mxu0 %v1269
    %3759 = vmatpush.bf16.msra.mxu0 %v1263
    %3760 = vmatpush.bf16.msra.mxu0 %v1257
    %3761 = vmatpush.bf16.msra.mxu0 %v1251
    %3762 = vmatpush.bf16.msra.mxu0 %v1245
    %3763 = vmatpush.bf16.msra.mxu0 %v1239
    %3764 = vmatmul.bf16.gmra.mxu0 %v3664
    %v3765 = vpop.f32.mrf.mxu0
    %v3766 = vadd.f32 %v3753, %v3765
    %v3767 = vpop.f32.mrf.mxu0
    %3768 = vdwg.mxu0
    %3769 = vmatpush.bf16.msra.mxu0 %v1234
    %3770 = vmatpush.bf16.msra.mxu0 %v1228
    %3771 = vmatpush.bf16.msra.mxu0 %v1222
    %3772 = vmatpush.bf16.msra.mxu0 %v1216
    %3773 = vmatpush.bf16.msra.mxu0 %v1210
    %3774 = vmatpush.bf16.msra.mxu0 %v1204
    %3775 = vmatpush.bf16.msra.mxu0 %v1198
    %3776 = vmatpush.bf16.msra.mxu0 %v1192
    %3777 = vmatmul.bf16.gmra.mxu0 %v3663
    %v3778 = vpop.f32.mrf.mxu0
    %v3779 = vadd.f32 0.0, %v3778
    %v3780 = vpop.f32.mrf.mxu0
    %3781 = vdwg.mxu0
    %3782 = vmatpush.bf16.msra.mxu0 %v1282
    %3783 = vmatpush.bf16.msra.mxu0 %v1276
    %3784 = vmatpush.bf16.msra.mxu0 %v1270
    %3785 = vmatpush.bf16.msra.mxu0 %v1264
    %3786 = vmatpush.bf16.msra.mxu0 %v1258
    %3787 = vmatpush.bf16.msra.mxu0 %v1252
    %3788 = vmatpush.bf16.msra.mxu0 %v1246
    %3789 = vmatpush.bf16.msra.mxu0 %v1240
    %3790 = vmatmul.bf16.gmra.mxu0 %v3664
    %v3791 = vpop.f32.mrf.mxu0
    %v3792 = vadd.f32 %v3779, %v3791
    %v3793 = vpop.f32.mrf.mxu0
    %3794 = vdwg.mxu0
    %3795 = vmatpush.bf16.msra.mxu0 %v1235
    %3796 = vmatpush.bf16.msra.mxu0 %v1229
    %3797 = vmatpush.bf16.msra.mxu0 %v1223
    %3798 = vmatpush.bf16.msra.mxu0 %v1217
    %3799 = vmatpush.bf16.msra.mxu0 %v1211
    %3800 = vmatpush.bf16.msra.mxu0 %v1205
    %3801 = vmatpush.bf16.msra.mxu0 %v1199
    %3802 = vmatpush.bf16.msra.mxu0 %v1193
    %3803 = vmatmul.bf16.gmra.mxu0 %v3663
    %v3804 = vpop.f32.mrf.mxu0
    %v3805 = vadd.f32 0.0, %v3804
    %v3806 = vpop.f32.mrf.mxu0
    %3807 = vdwg.mxu0
    %3808 = vmatpush.bf16.msra.mxu0 %v1283
    %3809 = vmatpush.bf16.msra.mxu0 %v1277
    %3810 = vmatpush.bf16.msra.mxu0 %v1271
    %3811 = vmatpush.bf16.msra.mxu0 %v1265
    %3812 = vmatpush.bf16.msra.mxu0 %v1259
    %3813 = vmatpush.bf16.msra.mxu0 %v1253
    %3814 = vmatpush.bf16.msra.mxu0 %v1247
    %3815 = vmatpush.bf16.msra.mxu0 %v1241
    %3816 = vmatmul.bf16.gmra.mxu0 %v3664
    %v3817 = vpop.f32.mrf.mxu0
    %v3818 = vadd.f32 %v3805, %v3817
    %v3819 = vpop.f32.mrf.mxu0
    %3820 = vdwg.mxu0
    %v3821 = vadd.f32 %v3657, %v3688
    %v3822 = vmul.f32 %v3821, 0.5
    %v3823 = vtanh.pop %v3822
    %v3824 = vmul.f32 %v3823, 0.5
    %v3825 = vadd.f32 %v3824, 0.5
    %v3826 = vadd.f32 %v3658, %v3714
    %v3827 = vmul.f32 %v3826, 0.5
    %v3828 = vtanh.pop %v3827
    %v3829 = vmul.f32 %v3828, 0.5
    %v3830 = vadd.f32 %v3829, 0.5
    %v3831 = vadd.f32 %v3740, %v1547
    %v3832 = vmul.f32 %v3825, %v3831
    %v3833 = vadd.f32 %v3659, %v3832
    %v3834 = vtanh.pop %v3833
    %v3835 = vsub.f32 1.0, %v3830
    %v3836 = vmul.f32 %v3835, %v3834
    %v3837 = vmul.f32 %v3830, %v3636
    %v3838 = vadd.f32 %v3836, %v3837
    %v3839 = vadd.f32 %v3660, %v3766
    %v3840 = vmul.f32 %v3839, 0.5
    %v3841 = vtanh.pop %v3840
    %v3842 = vmul.f32 %v3841, 0.5
    %v3843 = vadd.f32 %v3842, 0.5
    %v3844 = vadd.f32 %v3661, %v3792
    %v3845 = vmul.f32 %v3844, 0.5
    %v3846 = vtanh.pop %v3845
    %v3847 = vmul.f32 %v3846, 0.5
    %v3848 = vadd.f32 %v3847, 0.5
    %v3849 = vadd.f32 %v3818, %v1568
    %v3850 = vmul.f32 %v3843, %v3849
    %v3851 = vadd.f32 %v3662, %v3850
    %v3852 = vtanh.pop %v3851
    %v3853 = vsub.f32 1.0, %v3848
    %v3854 = vmul.f32 %v3853, %v3852
    %v3855 = vmul.f32 %v3848, %v3654
    %v3856 = vadd.f32 %v3854, %v3855
    %3857 = vst [vmem:[%s2419] sm:$0xff] %v3838
    %3858 = vst [vmem:[%s2417 + $0x8] sm:$0xff] %v3856
    %v3859 = vld [vmem:[%s2009] sm:$0xff]
    %v3860 = vld [vmem:[%s2009 + $0x8] sm:$0xff]
    %v3861 = vld [vmem:[%s2009 + $0x10] sm:$0xff]
    %v3862 = vld [vmem:[%s2003 + $0x18] sm:$0xff]
    %v3863 = vld [vmem:[%s2003 + $0x20] sm:$0xff]
    %v3864 = vld [vmem:[%s2003 + $0x28] sm:$0xff]
    %v3865 = vpack.c.bf16 %v3838, %v3838
    %v3866 = vpack.c.bf16 %v3856, %v3856
    %3867 = vmatpush.bf16.msra.mxu0 %v1230
    %3868 = vmatpush.bf16.msra.mxu0 %v1224
    %3869 = vmatpush.bf16.msra.mxu0 %v1218
    %3870 = vmatpush.bf16.msra.mxu0 %v1212
    %3871 = vmatpush.bf16.msra.mxu0 %v1206
    %3872 = vmatpush.bf16.msra.mxu0 %v1200
    %3873 = vmatpush.bf16.msra.mxu0 %v1194
    %3874 = vmatpush.bf16.msra.mxu0 %v1188
    %3875 = vmatmul.bf16.gmra.mxu0 %v3865
    %v3876 = vpop.f32.mrf.mxu0
    %v3877 = vadd.f32 0.0, %v3876
    %v3878 = vpop.f32.mrf.mxu0
    %3879 = vdwg.mxu0
    %3880 = vmatpush.bf16.msra.mxu0 %v1278
    %3881 = vmatpush.bf16.msra.mxu0 %v1272
    %3882 = vmatpush.bf16.msra.mxu0 %v1266
    %3883 = vmatpush.bf16.msra.mxu0 %v1260
    %3884 = vmatpush.bf16.msra.mxu0 %v1254
    %3885 = vmatpush.bf16.msra.mxu0 %v1248
    %3886 = vmatpush.bf16.msra.mxu0 %v1242
    %3887 = vmatpush.bf16.msra.mxu0 %v1236
    %3888 = vmatmul.bf16.gmra.mxu0 %v3866
    %v3889 = vpop.f32.mrf.mxu0
    %v3890 = vadd.f32 %v3877, %v3889
    %v3891 = vpop.f32.mrf.mxu0
    %3892 = vdwg.mxu0
    %3893 = vmatpush.bf16.msra.mxu0 %v1231
    %3894 = vmatpush.bf16.msra.mxu0 %v1225
    %3895 = vmatpush.bf16.msra.mxu0 %v1219
    %3896 = vmatpush.bf16.msra.mxu0 %v1213
    %3897 = vmatpush.bf16.msra.mxu0 %v1207
    %3898 = vmatpush.bf16.msra.mxu0 %v1201
    %3899 = vmatpush.bf16.msra.mxu0 %v1195
    %3900 = vmatpush.bf16.msra.mxu0 %v1189
    %3901 = vmatmul.bf16.gmra.mxu0 %v3865
    %v3902 = vpop.f32.mrf.mxu0
    %v3903 = vadd.f32 0.0, %v3902
    %v3904 = vpop.f32.mrf.mxu0
    %3905 = vdwg.mxu0
    %3906 = vmatpush.bf16.msra.mxu0 %v1279
    %3907 = vmatpush.bf16.msra.mxu0 %v1273
    %3908 = vmatpush.bf16.msra.mxu0 %v1267
    %3909 = vmatpush.bf16.msra.mxu0 %v1261
    %3910 = vmatpush.bf16.msra.mxu0 %v1255
    %3911 = vmatpush.bf16.msra.mxu0 %v1249
    %3912 = vmatpush.bf16.msra.mxu0 %v1243
    %3913 = vmatpush.bf16.msra.mxu0 %v1237
    %3914 = vmatmul.bf16.gmra.mxu0 %v3866
    %v3915 = vpop.f32.mrf.mxu0
    %v3916 = vadd.f32 %v3903, %v3915
    %v3917 = vpop.f32.mrf.mxu0
    %3918 = vdwg.mxu0
    %3919 = vmatpush.bf16.msra.mxu0 %v1232
    %3920 = vmatpush.bf16.msra.mxu0 %v1226
    %3921 = vmatpush.bf16.msra.mxu0 %v1220
    %3922 = vmatpush.bf16.msra.mxu0 %v1214
    %3923 = vmatpush.bf16.msra.mxu0 %v1208
    %3924 = vmatpush.bf16.msra.mxu0 %v1202
    %3925 = vmatpush.bf16.msra.mxu0 %v1196
    %3926 = vmatpush.bf16.msra.mxu0 %v1190
    %3927 = vmatmul.bf16.gmra.mxu0 %v3865
    %v3928 = vpop.f32.mrf.mxu0
    %v3929 = vadd.f32 0.0, %v3928
    %v3930 = vpop.f32.mrf.mxu0
    %3931 = vdwg.mxu0
    %3932 = vmatpush.bf16.msra.mxu0 %v1280
    %3933 = vmatpush.bf16.msra.mxu0 %v1274
    %3934 = vmatpush.bf16.msra.mxu0 %v1268
    %3935 = vmatpush.bf16.msra.mxu0 %v1262
    %3936 = vmatpush.bf16.msra.mxu0 %v1256
    %3937 = vmatpush.bf16.msra.mxu0 %v1250
    %3938 = vmatpush.bf16.msra.mxu0 %v1244
    %3939 = vmatpush.bf16.msra.mxu0 %v1238
    %3940 = vmatmul.bf16.gmra.mxu0 %v3866
    %v3941 = vpop.f32.mrf.mxu0
    %v3942 = vadd.f32 %v3929, %v3941
    %v3943 = vpop.f32.mrf.mxu0
    %3944 = vdwg.mxu0
    %3945 = vmatpush.bf16.msra.mxu0 %v1233
    %3946 = vmatpush.bf16.msra.mxu0 %v1227
    %3947 = vmatpush.bf16.msra.mxu0 %v1221
    %3948 = vmatpush.bf16.msra.mxu0 %v1215
    %3949 = vmatpush.bf16.msra.mxu0 %v1209
    %3950 = vmatpush.bf16.msra.mxu0 %v1203
    %3951 = vmatpush.bf16.msra.mxu0 %v1197
    %3952 = vmatpush.bf16.msra.mxu0 %v1191
    %3953 = vmatmul.bf16.gmra.mxu0 %v3865
    %v3954 = vpop.f32.mrf.mxu0
    %v3955 = vadd.f32 0.0, %v3954
    %v3956 = vpop.f32.mrf.mxu0
    %3957 = vdwg.mxu0
    %3958 = vmatpush.bf16.msra.mxu0 %v1281
    %3959 = vmatpush.bf16.msra.mxu0 %v1275
    %3960 = vmatpush.bf16.msra.mxu0 %v1269
    %3961 = vmatpush.bf16.msra.mxu0 %v1263
    %3962 = vmatpush.bf16.msra.mxu0 %v1257
    %3963 = vmatpush.bf16.msra.mxu0 %v1251
    %3964 = vmatpush.bf16.msra.mxu0 %v1245
    %3965 = vmatpush.bf16.msra.mxu0 %v1239
    %3966 = vmatmul.bf16.gmra.mxu0 %v3866
    %v3967 = vpop.f32.mrf.mxu0
    %v3968 = vadd.f32 %v3955, %v3967
    %v3969 = vpop.f32.mrf.mxu0
    %3970 = vdwg.mxu0
    %3971 = vmatpush.bf16.msra.mxu0 %v1234
    %3972 = vmatpush.bf16.msra.mxu0 %v1228
    %3973 = vmatpush.bf16.msra.mxu0 %v1222
    %3974 = vmatpush.bf16.msra.mxu0 %v1216
    %3975 = vmatpush.bf16.msra.mxu0 %v1210
    %3976 = vmatpush.bf16.msra.mxu0 %v1204
    %3977 = vmatpush.bf16.msra.mxu0 %v1198
    %3978 = vmatpush.bf16.msra.mxu0 %v1192
    %3979 = vmatmul.bf16.gmra.mxu0 %v3865
    %v3980 = vpop.f32.mrf.mxu0
    %v3981 = vadd.f32 0.0, %v3980
    %v3982 = vpop.f32.mrf.mxu0
    %3983 = vdwg.mxu0
    %3984 = vmatpush.bf16.msra.mxu0 %v1282
    %3985 = vmatpush.bf16.msra.mxu0 %v1276
    %3986 = vmatpush.bf16.msra.mxu0 %v1270
    %3987 = vmatpush.bf16.msra.mxu0 %v1264
    %3988 = vmatpush.bf16.msra.mxu0 %v1258
    %3989 = vmatpush.bf16.msra.mxu0 %v1252
    %3990 = vmatpush.bf16.msra.mxu0 %v1246
    %3991 = vmatpush.bf16.msra.mxu0 %v1240
    %3992 = vmatmul.bf16.gmra.mxu0 %v3866
    %v3993 = vpop.f32.mrf.mxu0
    %v3994 = vadd.f32 %v3981, %v3993
    %v3995 = vpop.f32.mrf.mxu0
    %3996 = vdwg.mxu0
    %3997 = vmatpush.bf16.msra.mxu0 %v1235
    %3998 = vmatpush.bf16.msra.mxu0 %v1229
    %3999 = vmatpush.bf16.msra.mxu0 %v1223
    %4000 = vmatpush.bf16.msra.mxu0 %v1217
    %4001 = vmatpush.bf16.msra.mxu0 %v1211
    %4002 = vmatpush.bf16.msra.mxu0 %v1205
    %4003 = vmatpush.bf16.msra.mxu0 %v1199
    %4004 = vmatpush.bf16.msra.mxu0 %v1193
    %4005 = vmatmul.bf16.gmra.mxu0 %v3865
    %v4006 = vpop.f32.mrf.mxu0
    %v4007 = vadd.f32 0.0, %v4006
    %v4008 = vpop.f32.mrf.mxu0
    %4009 = vdwg.mxu0
    %4010 = vmatpush.bf16.msra.mxu0 %v1283
    %4011 = vmatpush.bf16.msra.mxu0 %v1277
    %4012 = vmatpush.bf16.msra.mxu0 %v1271
    %4013 = vmatpush.bf16.msra.mxu0 %v1265
    %4014 = vmatpush.bf16.msra.mxu0 %v1259
    %4015 = vmatpush.bf16.msra.mxu0 %v1253
    %4016 = vmatpush.bf16.msra.mxu0 %v1247
    %4017 = vmatpush.bf16.msra.mxu0 %v1241
    %4018 = vmatmul.bf16.gmra.mxu0 %v3866
    %v4019 = vpop.f32.mrf.mxu0
    %v4020 = vadd.f32 %v4007, %v4019
    %v4021 = vpop.f32.mrf.mxu0
    %4022 = vdwg.mxu0
    %v4023 = vadd.f32 %v3859, %v3890
    %v4024 = vmul.f32 %v4023, 0.5
    %v4025 = vtanh.pop %v4024
    %v4026 = vmul.f32 %v4025, 0.5
    %v4027 = vadd.f32 %v4026, 0.5
    %v4028 = vadd.f32 %v3860, %v3916
    %v4029 = vmul.f32 %v4028, 0.5
    %v4030 = vtanh.pop %v4029
    %v4031 = vmul.f32 %v4030, 0.5
    %v4032 = vadd.f32 %v4031, 0.5
    %v4033 = vadd.f32 %v3942, %v1547
    %v4034 = vmul.f32 %v4027, %v4033
    %v4035 = vadd.f32 %v3861, %v4034
    %v4036 = vtanh.pop %v4035
    %v4037 = vsub.f32 1.0, %v4032
    %v4038 = vmul.f32 %v4037, %v4036
    %v4039 = vmul.f32 %v4032, %v3838
    %v4040 = vadd.f32 %v4038, %v4039
    %v4041 = vadd.f32 %v3862, %v3968
    %v4042 = vmul.f32 %v4041, 0.5
    %v4043 = vtanh.pop %v4042
    %v4044 = vmul.f32 %v4043, 0.5
    %v4045 = vadd.f32 %v4044, 0.5
    %v4046 = vadd.f32 %v3863, %v3994
    %v4047 = vmul.f32 %v4046, 0.5
    %v4048 = vtanh.pop %v4047
    %v4049 = vmul.f32 %v4048, 0.5
    %v4050 = vadd.f32 %v4049, 0.5
    %v4051 = vadd.f32 %v4020, %v1568
    %v4052 = vmul.f32 %v4045, %v4051
    %v4053 = vadd.f32 %v3864, %v4052
    %v4054 = vtanh.pop %v4053
    %v4055 = vsub.f32 1.0, %v4050
    %v4056 = vmul.f32 %v4055, %v4054
    %v4057 = vmul.f32 %v4050, %v3856
    %v4058 = vadd.f32 %v4056, %v4057
    %4059 = vst [vmem:[%s2209] sm:$0xff] %v4040
    %4060 = vst [vmem:[%s2207 + $0x8] sm:$0xff] %v4058
    %v4061 = vld [vmem:[%s1799] sm:$0xff]
    %v4062 = vld [vmem:[%s1799 + $0x8] sm:$0xff]
    %v4063 = vld [vmem:[%s1799 + $0x10] sm:$0xff]
    %v4064 = vld [vmem:[%s1793 + $0x18] sm:$0xff]
    %v4065 = vld [vmem:[%s1793 + $0x20] sm:$0xff]
    %v4066 = vld [vmem:[%s1793 + $0x28] sm:$0xff]
    %v4067 = vpack.c.bf16 %v4040, %v4040
    %v4068 = vpack.c.bf16 %v4058, %v4058
    %4069 = vmatpush.bf16.msra.mxu0 %v1230
    %4070 = vmatpush.bf16.msra.mxu0 %v1224
    %4071 = vmatpush.bf16.msra.mxu0 %v1218
    %4072 = vmatpush.bf16.msra.mxu0 %v1212
    %4073 = vmatpush.bf16.msra.mxu0 %v1206
    %4074 = vmatpush.bf16.msra.mxu0 %v1200
    %4075 = vmatpush.bf16.msra.mxu0 %v1194
    %4076 = vmatpush.bf16.msra.mxu0 %v1188
    %4077 = vmatmul.bf16.gmra.mxu0 %v4067
    %v4078 = vpop.f32.mrf.mxu0
    %v4079 = vadd.f32 0.0, %v4078
    %v4080 = vpop.f32.mrf.mxu0
    %4081 = vdwg.mxu0
    %4082 = vmatpush.bf16.msra.mxu0 %v1278
    %4083 = vmatpush.bf16.msra.mxu0 %v1272
    %4084 = vmatpush.bf16.msra.mxu0 %v1266
    %4085 = vmatpush.bf16.msra.mxu0 %v1260
    %4086 = vmatpush.bf16.msra.mxu0 %v1254
    %4087 = vmatpush.bf16.msra.mxu0 %v1248
    %4088 = vmatpush.bf16.msra.mxu0 %v1242
    %4089 = vmatpush.bf16.msra.mxu0 %v1236
    %4090 = vmatmul.bf16.gmra.mxu0 %v4068
    %v4091 = vpop.f32.mrf.mxu0
    %v4092 = vadd.f32 %v4079, %v4091
    %v4093 = vpop.f32.mrf.mxu0
    %4094 = vdwg.mxu0
    %4095 = vmatpush.bf16.msra.mxu0 %v1231
    %4096 = vmatpush.bf16.msra.mxu0 %v1225
    %4097 = vmatpush.bf16.msra.mxu0 %v1219
    %4098 = vmatpush.bf16.msra.mxu0 %v1213
    %4099 = vmatpush.bf16.msra.mxu0 %v1207
    %4100 = vmatpush.bf16.msra.mxu0 %v1201
    %4101 = vmatpush.bf16.msra.mxu0 %v1195
    %4102 = vmatpush.bf16.msra.mxu0 %v1189
    %4103 = vmatmul.bf16.gmra.mxu0 %v4067
    %v4104 = vpop.f32.mrf.mxu0
    %v4105 = vadd.f32 0.0, %v4104
    %v4106 = vpop.f32.mrf.mxu0
    %4107 = vdwg.mxu0
    %4108 = vmatpush.bf16.msra.mxu0 %v1279
    %4109 = vmatpush.bf16.msra.mxu0 %v1273
    %4110 = vmatpush.bf16.msra.mxu0 %v1267
    %4111 = vmatpush.bf16.msra.mxu0 %v1261
    %4112 = vmatpush.bf16.msra.mxu0 %v1255
    %4113 = vmatpush.bf16.msra.mxu0 %v1249
    %4114 = vmatpush.bf16.msra.mxu0 %v1243
    %4115 = vmatpush.bf16.msra.mxu0 %v1237
    %4116 = vmatmul.bf16.gmra.mxu0 %v4068
    %v4117 = vpop.f32.mrf.mxu0
    %v4118 = vadd.f32 %v4105, %v4117
    %v4119 = vpop.f32.mrf.mxu0
    %4120 = vdwg.mxu0
    %4121 = vmatpush.bf16.msra.mxu0 %v1232
    %4122 = vmatpush.bf16.msra.mxu0 %v1226
    %4123 = vmatpush.bf16.msra.mxu0 %v1220
    %4124 = vmatpush.bf16.msra.mxu0 %v1214
    %4125 = vmatpush.bf16.msra.mxu0 %v1208
    %4126 = vmatpush.bf16.msra.mxu0 %v1202
    %4127 = vmatpush.bf16.msra.mxu0 %v1196
    %4128 = vmatpush.bf16.msra.mxu0 %v1190
    %4129 = vmatmul.bf16.gmra.mxu0 %v4067
    %v4130 = vpop.f32.mrf.mxu0
    %v4131 = vadd.f32 0.0, %v4130
    %v4132 = vpop.f32.mrf.mxu0
    %4133 = vdwg.mxu0
    %4134 = vmatpush.bf16.msra.mxu0 %v1280
    %4135 = vmatpush.bf16.msra.mxu0 %v1274
    %4136 = vmatpush.bf16.msra.mxu0 %v1268
    %4137 = vmatpush.bf16.msra.mxu0 %v1262
    %4138 = vmatpush.bf16.msra.mxu0 %v1256
    %4139 = vmatpush.bf16.msra.mxu0 %v1250
    %4140 = vmatpush.bf16.msra.mxu0 %v1244
    %4141 = vmatpush.bf16.msra.mxu0 %v1238
    %4142 = vmatmul.bf16.gmra.mxu0 %v4068
    %v4143 = vpop.f32.mrf.mxu0
    %v4144 = vadd.f32 %v4131, %v4143
    %v4145 = vpop.f32.mrf.mxu0
    %4146 = vdwg.mxu0
    %4147 = vmatpush.bf16.msra.mxu0 %v1233
    %4148 = vmatpush.bf16.msra.mxu0 %v1227
    %4149 = vmatpush.bf16.msra.mxu0 %v1221
    %4150 = vmatpush.bf16.msra.mxu0 %v1215
    %4151 = vmatpush.bf16.msra.mxu0 %v1209
    %4152 = vmatpush.bf16.msra.mxu0 %v1203
    %4153 = vmatpush.bf16.msra.mxu0 %v1197
    %4154 = vmatpush.bf16.msra.mxu0 %v1191
    %4155 = vmatmul.bf16.gmra.mxu0 %v4067
    %v4156 = vpop.f32.mrf.mxu0
    %v4157 = vadd.f32 0.0, %v4156
    %v4158 = vpop.f32.mrf.mxu0
    %4159 = vdwg.mxu0
    %4160 = vmatpush.bf16.msra.mxu0 %v1281
    %4161 = vmatpush.bf16.msra.mxu0 %v1275
    %4162 = vmatpush.bf16.msra.mxu0 %v1269
    %4163 = vmatpush.bf16.msra.mxu0 %v1263
    %4164 = vmatpush.bf16.msra.mxu0 %v1257
    %4165 = vmatpush.bf16.msra.mxu0 %v1251
    %4166 = vmatpush.bf16.msra.mxu0 %v1245
    %4167 = vmatpush.bf16.msra.mxu0 %v1239
    %4168 = vmatmul.bf16.gmra.mxu0 %v4068
    %v4169 = vpop.f32.mrf.mxu0
    %v4170 = vadd.f32 %v4157, %v4169
    %v4171 = vpop.f32.mrf.mxu0
    %4172 = vdwg.mxu0
    %4173 = vmatpush.bf16.msra.mxu0 %v1234
    %4174 = vmatpush.bf16.msra.mxu0 %v1228
    %4175 = vmatpush.bf16.msra.mxu0 %v1222
    %4176 = vmatpush.bf16.msra.mxu0 %v1216
    %4177 = vmatpush.bf16.msra.mxu0 %v1210
    %4178 = vmatpush.bf16.msra.mxu0 %v1204
    %4179 = vmatpush.bf16.msra.mxu0 %v1198
    %4180 = vmatpush.bf16.msra.mxu0 %v1192
    %4181 = vmatmul.bf16.gmra.mxu0 %v4067
    %v4182 = vpop.f32.mrf.mxu0
    %v4183 = vadd.f32 0.0, %v4182
    %v4184 = vpop.f32.mrf.mxu0
    %4185 = vdwg.mxu0
    %4186 = vmatpush.bf16.msra.mxu0 %v1282
    %4187 = vmatpush.bf16.msra.mxu0 %v1276
    %4188 = vmatpush.bf16.msra.mxu0 %v1270
    %4189 = vmatpush.bf16.msra.mxu0 %v1264
    %4190 = vmatpush.bf16.msra.mxu0 %v1258
    %4191 = vmatpush.bf16.msra.mxu0 %v1252
    %4192 = vmatpush.bf16.msra.mxu0 %v1246
    %4193 = vmatpush.bf16.msra.mxu0 %v1240
    %4194 = vmatmul.bf16.gmra.mxu0 %v4068
    %v4195 = vpop.f32.mrf.mxu0
    %v4196 = vadd.f32 %v4183, %v4195
    %v4197 = vpop.f32.mrf.mxu0
    %4198 = vdwg.mxu0
    %4199 = vmatpush.bf16.msra.mxu0 %v1235
    %4200 = vmatpush.bf16.msra.mxu0 %v1229
    %4201 = vmatpush.bf16.msra.mxu0 %v1223
    %4202 = vmatpush.bf16.msra.mxu0 %v1217
    %4203 = vmatpush.bf16.msra.mxu0 %v1211
    %4204 = vmatpush.bf16.msra.mxu0 %v1205
    %4205 = vmatpush.bf16.msra.mxu0 %v1199
    %4206 = vmatpush.bf16.msra.mxu0 %v1193
    %4207 = vmatmul.bf16.gmra.mxu0 %v4067
    %v4208 = vpop.f32.mrf.mxu0
    %v4209 = vadd.f32 0.0, %v4208
    %v4210 = vpop.f32.mrf.mxu0
    %4211 = vdwg.mxu0
    %4212 = vmatpush.bf16.msra.mxu0 %v1283
    %4213 = vmatpush.bf16.msra.mxu0 %v1277
    %4214 = vmatpush.bf16.msra.mxu0 %v1271
    %4215 = vmatpush.bf16.msra.mxu0 %v1265
    %4216 = vmatpush.bf16.msra.mxu0 %v1259
    %4217 = vmatpush.bf16.msra.mxu0 %v1253
    %4218 = vmatpush.bf16.msra.mxu0 %v1247
    %4219 = vmatpush.bf16.msra.mxu0 %v1241
    %4220 = vmatmul.bf16.gmra.mxu0 %v4068
    %v4221 = vpop.f32.mrf.mxu0
    %v4222 = vadd.f32 %v4209, %v4221
    %v4223 = vpop.f32.mrf.mxu0
    %4224 = vdwg.mxu0
    %v4225 = vadd.f32 %v4061, %v4092
    %v4226 = vmul.f32 %v4225, 0.5
    %v4227 = vtanh.pop %v4226
    %v4228 = vmul.f32 %v4227, 0.5
    %v4229 = vadd.f32 %v4228, 0.5
    %v4230 = vadd.f32 %v4062, %v4118
    %v4231 = vmul.f32 %v4230, 0.5
    %v4232 = vtanh.pop %v4231
    %v4233 = vmul.f32 %v4232, 0.5
    %v4234 = vadd.f32 %v4233, 0.5
    %v4235 = vadd.f32 %v4144, %v1547
    %v4236 = vmul.f32 %v4229, %v4235
    %v4237 = vadd.f32 %v4063, %v4236
    %v4238 = vtanh.pop %v4237
    %v4239 = vsub.f32 1.0, %v4234
    %v4240 = vmul.f32 %v4239, %v4238
    %v4241 = vmul.f32 %v4234, %v4040
    %v4242 = vadd.f32 %v4240, %v4241
    %v4243 = vadd.f32 %v4064, %v4170
    %v4244 = vmul.f32 %v4243, 0.5
    %v4245 = vtanh.pop %v4244
    %v4246 = vmul.f32 %v4245, 0.5
    %v4247 = vadd.f32 %v4246, 0.5
    %v4248 = vadd.f32 %v4065, %v4196
    %v4249 = vmul.f32 %v4248, 0.5
    %v4250 = vtanh.pop %v4249
    %v4251 = vmul.f32 %v4250, 0.5
    %v4252 = vadd.f32 %v4251, 0.5
    %v4253 = vadd.f32 %v4222, %v1568
    %v4254 = vmul.f32 %v4247, %v4253
    %v4255 = vadd.f32 %v4066, %v4254
    %v4256 = vtanh.pop %v4255
    %v4257 = vsub.f32 1.0, %v4252
    %v4258 = vmul.f32 %v4257, %v4256
    %v4259 = vmul.f32 %v4252, %v4058
    %v4260 = vadd.f32 %v4258, %v4259
    %4261 = vst [vmem:[%s1999] sm:$0xff] %v4242
    %4262 = vst [vmem:[%s1997 + $0x8] sm:$0xff] %v4260
    %v4263 = vld [vmem:[%s1589] sm:$0xff]
    %v4264 = vld [vmem:[%s1589 + $0x8] sm:$0xff]
    %v4265 = vld [vmem:[%s1589 + $0x10] sm:$0xff]
    %v4266 = vld [vmem:[%s1583 + $0x18] sm:$0xff]
    %v4267 = vld [vmem:[%s1583 + $0x20] sm:$0xff]
    %v4268 = vld [vmem:[%s1583 + $0x28] sm:$0xff]
    %v4269 = vpack.c.bf16 %v4242, %v4242
    %v4270 = vpack.c.bf16 %v4260, %v4260
    %4271 = vmatpush.bf16.msra.mxu0 %v1230
    %4272 = vmatpush.bf16.msra.mxu0 %v1224
    %4273 = vmatpush.bf16.msra.mxu0 %v1218
    %4274 = vmatpush.bf16.msra.mxu0 %v1212
    %4275 = vmatpush.bf16.msra.mxu0 %v1206
    %4276 = vmatpush.bf16.msra.mxu0 %v1200
    %4277 = vmatpush.bf16.msra.mxu0 %v1194
    %4278 = vmatpush.bf16.msra.mxu0 %v1188
    %4279 = vmatmul.bf16.gmra.mxu0 %v4269
    %v4280 = vpop.f32.mrf.mxu0
    %v4281 = vadd.f32 0.0, %v4280
    %v4282 = vpop.f32.mrf.mxu0
    %4283 = vdwg.mxu0
    %4284 = vmatpush.bf16.msra.mxu0 %v1278
    %4285 = vmatpush.bf16.msra.mxu0 %v1272
    %4286 = vmatpush.bf16.msra.mxu0 %v1266
    %4287 = vmatpush.bf16.msra.mxu0 %v1260
    %4288 = vmatpush.bf16.msra.mxu0 %v1254
    %4289 = vmatpush.bf16.msra.mxu0 %v1248
    %4290 = vmatpush.bf16.msra.mxu0 %v1242
    %4291 = vmatpush.bf16.msra.mxu0 %v1236
    %4292 = vmatmul.bf16.gmra.mxu0 %v4270
    %v4293 = vpop.f32.mrf.mxu0
    %v4294 = vadd.f32 %v4281, %v4293
    %v4295 = vpop.f32.mrf.mxu0
    %4296 = vdwg.mxu0
    %4297 = vmatpush.bf16.msra.mxu0 %v1231
    %4298 = vmatpush.bf16.msra.mxu0 %v1225
    %4299 = vmatpush.bf16.msra.mxu0 %v1219
    %4300 = vmatpush.bf16.msra.mxu0 %v1213
    %4301 = vmatpush.bf16.msra.mxu0 %v1207
    %4302 = vmatpush.bf16.msra.mxu0 %v1201
    %4303 = vmatpush.bf16.msra.mxu0 %v1195
    %4304 = vmatpush.bf16.msra.mxu0 %v1189
    %4305 = vmatmul.bf16.gmra.mxu0 %v4269
    %v4306 = vpop.f32.mrf.mxu0
    %v4307 = vadd.f32 0.0, %v4306
    %v4308 = vpop.f32.mrf.mxu0
    %4309 = vdwg.mxu0
    %4310 = vmatpush.bf16.msra.mxu0 %v1279
    %4311 = vmatpush.bf16.msra.mxu0 %v1273
    %4312 = vmatpush.bf16.msra.mxu0 %v1267
    %4313 = vmatpush.bf16.msra.mxu0 %v1261
    %4314 = vmatpush.bf16.msra.mxu0 %v1255
    %4315 = vmatpush.bf16.msra.mxu0 %v1249
    %4316 = vmatpush.bf16.msra.mxu0 %v1243
    %4317 = vmatpush.bf16.msra.mxu0 %v1237
    %4318 = vmatmul.bf16.gmra.mxu0 %v4270
    %v4319 = vpop.f32.mrf.mxu0
    %v4320 = vadd.f32 %v4307, %v4319
    %v4321 = vpop.f32.mrf.mxu0
    %4322 = vdwg.mxu0
    %4323 = vmatpush.bf16.msra.mxu0 %v1232
    %4324 = vmatpush.bf16.msra.mxu0 %v1226
    %4325 = vmatpush.bf16.msra.mxu0 %v1220
    %4326 = vmatpush.bf16.msra.mxu0 %v1214
    %4327 = vmatpush.bf16.msra.mxu0 %v1208
    %4328 = vmatpush.bf16.msra.mxu0 %v1202
    %4329 = vmatpush.bf16.msra.mxu0 %v1196
    %4330 = vmatpush.bf16.msra.mxu0 %v1190
    %4331 = vmatmul.bf16.gmra.mxu0 %v4269
    %v4332 = vpop.f32.mrf.mxu0
    %v4333 = vadd.f32 0.0, %v4332
    %v4334 = vpop.f32.mrf.mxu0
    %4335 = vdwg.mxu0
    %4336 = vmatpush.bf16.msra.mxu0 %v1280
    %4337 = vmatpush.bf16.msra.mxu0 %v1274
    %4338 = vmatpush.bf16.msra.mxu0 %v1268
    %4339 = vmatpush.bf16.msra.mxu0 %v1262
    %4340 = vmatpush.bf16.msra.mxu0 %v1256
    %4341 = vmatpush.bf16.msra.mxu0 %v1250
    %4342 = vmatpush.bf16.msra.mxu0 %v1244
    %4343 = vmatpush.bf16.msra.mxu0 %v1238
    %4344 = vmatmul.bf16.gmra.mxu0 %v4270
    %v4345 = vpop.f32.mrf.mxu0
    %v4346 = vadd.f32 %v4333, %v4345
    %v4347 = vpop.f32.mrf.mxu0
    %4348 = vdwg.mxu0
    %4349 = vmatpush.bf16.msra.mxu0 %v1233
    %4350 = vmatpush.bf16.msra.mxu0 %v1227
    %4351 = vmatpush.bf16.msra.mxu0 %v1221
    %4352 = vmatpush.bf16.msra.mxu0 %v1215
    %4353 = vmatpush.bf16.msra.mxu0 %v1209
    %4354 = vmatpush.bf16.msra.mxu0 %v1203
    %4355 = vmatpush.bf16.msra.mxu0 %v1197
    %4356 = vmatpush.bf16.msra.mxu0 %v1191
    %4357 = vmatmul.bf16.gmra.mxu0 %v4269
    %v4358 = vpop.f32.mrf.mxu0
    %v4359 = vadd.f32 0.0, %v4358
    %v4360 = vpop.f32.mrf.mxu0
    %4361 = vdwg.mxu0
    %4362 = vmatpush.bf16.msra.mxu0 %v1281
    %4363 = vmatpush.bf16.msra.mxu0 %v1275
    %4364 = vmatpush.bf16.msra.mxu0 %v1269
    %4365 = vmatpush.bf16.msra.mxu0 %v1263
    %4366 = vmatpush.bf16.msra.mxu0 %v1257
    %4367 = vmatpush.bf16.msra.mxu0 %v1251
    %4368 = vmatpush.bf16.msra.mxu0 %v1245
    %4369 = vmatpush.bf16.msra.mxu0 %v1239
    %4370 = vmatmul.bf16.gmra.mxu0 %v4270
    %v4371 = vpop.f32.mrf.mxu0
    %v4372 = vadd.f32 %v4359, %v4371
    %v4373 = vpop.f32.mrf.mxu0
    %4374 = vdwg.mxu0
    %4375 = vmatpush.bf16.msra.mxu0 %v1234
    %4376 = vmatpush.bf16.msra.mxu0 %v1228
    %4377 = vmatpush.bf16.msra.mxu0 %v1222
    %4378 = vmatpush.bf16.msra.mxu0 %v1216
    %4379 = vmatpush.bf16.msra.mxu0 %v1210
    %4380 = vmatpush.bf16.msra.mxu0 %v1204
    %4381 = vmatpush.bf16.msra.mxu0 %v1198
    %4382 = vmatpush.bf16.msra.mxu0 %v1192
    %4383 = vmatmul.bf16.gmra.mxu0 %v4269
    %v4384 = vpop.f32.mrf.mxu0
    %v4385 = vadd.f32 0.0, %v4384
    %v4386 = vpop.f32.mrf.mxu0
    %4387 = vdwg.mxu0
    %4388 = vmatpush.bf16.msra.mxu0 %v1282
    %4389 = vmatpush.bf16.msra.mxu0 %v1276
    %4390 = vmatpush.bf16.msra.mxu0 %v1270
    %4391 = vmatpush.bf16.msra.mxu0 %v1264
    %4392 = vmatpush.bf16.msra.mxu0 %v1258
    %4393 = vmatpush.bf16.msra.mxu0 %v1252
    %4394 = vmatpush.bf16.msra.mxu0 %v1246
    %4395 = vmatpush.bf16.msra.mxu0 %v1240
    %4396 = vmatmul.bf16.gmra.mxu0 %v4270
    %v4397 = vpop.f32.mrf.mxu0
    %v4398 = vadd.f32 %v4385, %v4397
    %v4399 = vpop.f32.mrf.mxu0
    %4400 = vdwg.mxu0
    %4401 = vmatpush.bf16.msra.mxu0 %v1235
    %4402 = vmatpush.bf16.msra.mxu0 %v1229
    %4403 = vmatpush.bf16.msra.mxu0 %v1223
    %4404 = vmatpush.bf16.msra.mxu0 %v1217
    %4405 = vmatpush.bf16.msra.mxu0 %v1211
    %4406 = vmatpush.bf16.msra.mxu0 %v1205
    %4407 = vmatpush.bf16.msra.mxu0 %v1199
    %4408 = vmatpush.bf16.msra.mxu0 %v1193
    %4409 = vmatmul.bf16.gmra.mxu0 %v4269
    %v4410 = vpop.f32.mrf.mxu0
    %v4411 = vadd.f32 0.0, %v4410
    %v4412 = vpop.f32.mrf.mxu0
    %4413 = vdwg.mxu0
    %4414 = vmatpush.bf16.msra.mxu0 %v1283
    %4415 = vmatpush.bf16.msra.mxu0 %v1277
    %4416 = vmatpush.bf16.msra.mxu0 %v1271
    %4417 = vmatpush.bf16.msra.mxu0 %v1265
    %4418 = vmatpush.bf16.msra.mxu0 %v1259
    %4419 = vmatpush.bf16.msra.mxu0 %v1253
    %4420 = vmatpush.bf16.msra.mxu0 %v1247
    %4421 = vmatpush.bf16.msra.mxu0 %v1241
    %4422 = vmatmul.bf16.gmra.mxu0 %v4270
    %v4423 = vpop.f32.mrf.mxu0
    %v4424 = vadd.f32 %v4411, %v4423
    %v4425 = vpop.f32.mrf.mxu0
    %4426 = vdwg.mxu0
    %v4427 = vadd.f32 %v4263, %v4294
    %v4428 = vmul.f32 %v4427, 0.5
    %v4429 = vtanh.pop %v4428
    %v4430 = vmul.f32 %v4429, 0.5
    %v4431 = vadd.f32 %v4430, 0.5
    %v4432 = vadd.f32 %v4264, %v4320
    %v4433 = vmul.f32 %v4432, 0.5
    %v4434 = vtanh.pop %v4433
    %v4435 = vmul.f32 %v4434, 0.5
    %v4436 = vadd.f32 %v4435, 0.5
    %v4437 = vadd.f32 %v4346, %v1547
    %v4438 = vmul.f32 %v4431, %v4437
    %v4439 = vadd.f32 %v4265, %v4438
    %v4440 = vtanh.pop %v4439
    %v4441 = vsub.f32 1.0, %v4436
    %v4442 = vmul.f32 %v4441, %v4440
    %v4443 = vmul.f32 %v4436, %v4242
    %v4444 = vadd.f32 %v4442, %v4443
    %v4445 = vadd.f32 %v4266, %v4372
    %v4446 = vmul.f32 %v4445, 0.5
    %v4447 = vtanh.pop %v4446
    %v4448 = vmul.f32 %v4447, 0.5
    %v4449 = vadd.f32 %v4448, 0.5
    %v4450 = vadd.f32 %v4267, %v4398
    %v4451 = vmul.f32 %v4450, 0.5
    %v4452 = vtanh.pop %v4451
    %v4453 = vmul.f32 %v4452, 0.5
    %v4454 = vadd.f32 %v4453, 0.5
    %v4455 = vadd.f32 %v4424, %v1568
    %v4456 = vmul.f32 %v4449, %v4455
    %v4457 = vadd.f32 %v4268, %v4456
    %v4458 = vtanh.pop %v4457
    %v4459 = vsub.f32 1.0, %v4454
    %v4460 = vmul.f32 %v4459, %v4458
    %v4461 = vmul.f32 %v4454, %v4260
    %v4462 = vadd.f32 %v4460, %v4461
    %4463 = vst [vmem:[%s1789] sm:$0xff] %v4444
    %4464 = vst [vmem:[%s1787 + $0x8] sm:$0xff] %v4462
    %v4465 = vld [vmem:[%s896] sm:$0xff]
    %v4466 = vld [vmem:[%s896 + $0x8] sm:$0xff]
    %v4467 = vld [vmem:[%s896 + $0x10] sm:$0xff]
    %v4468 = vld [vmem:[%s890 + $0x18] sm:$0xff]
    %v4469 = vld [vmem:[%s890 + $0x20] sm:$0xff]
    %v4470 = vld [vmem:[%s890 + $0x28] sm:$0xff]
    %v4471 = vpack.c.bf16 %v4444, %v4444
    %v4472 = vpack.c.bf16 %v4462, %v4462
    %4473 = vmatpush.bf16.msra.mxu0 %v1230
    %4474 = vmatpush.bf16.msra.mxu0 %v1224
    %4475 = vmatpush.bf16.msra.mxu0 %v1218
    %4476 = vmatpush.bf16.msra.mxu0 %v1212
    %4477 = vmatpush.bf16.msra.mxu0 %v1206
    %4478 = vmatpush.bf16.msra.mxu0 %v1200
    %4479 = vmatpush.bf16.msra.mxu0 %v1194
    %4480 = vmatpush.bf16.msra.mxu0 %v1188
    %4481 = vmatmul.bf16.gmra.mxu0 %v4471
    %v4482 = vpop.f32.mrf.mxu0
    %v4483 = vadd.f32 0.0, %v4482
    %v4484 = vpop.f32.mrf.mxu0
    %4485 = vdwg.mxu0
    %4486 = vmatpush.bf16.msra.mxu0 %v1278
    %4487 = vmatpush.bf16.msra.mxu0 %v1272
    %4488 = vmatpush.bf16.msra.mxu0 %v1266
    %4489 = vmatpush.bf16.msra.mxu0 %v1260
    %4490 = vmatpush.bf16.msra.mxu0 %v1254
    %4491 = vmatpush.bf16.msra.mxu0 %v1248
    %4492 = vmatpush.bf16.msra.mxu0 %v1242
    %4493 = vmatpush.bf16.msra.mxu0 %v1236
    %4494 = vmatmul.bf16.gmra.mxu0 %v4472
    %v4495 = vpop.f32.mrf.mxu0
    %v4496 = vadd.f32 %v4483, %v4495
    %v4497 = vpop.f32.mrf.mxu0
    %4498 = vdwg.mxu0
    %4499 = vmatpush.bf16.msra.mxu0 %v1231
    %4500 = vmatpush.bf16.msra.mxu0 %v1225
    %4501 = vmatpush.bf16.msra.mxu0 %v1219
    %4502 = vmatpush.bf16.msra.mxu0 %v1213
    %4503 = vmatpush.bf16.msra.mxu0 %v1207
    %4504 = vmatpush.bf16.msra.mxu0 %v1201
    %4505 = vmatpush.bf16.msra.mxu0 %v1195
    %4506 = vmatpush.bf16.msra.mxu0 %v1189
    %4507 = vmatmul.bf16.gmra.mxu0 %v4471
    %v4508 = vpop.f32.mrf.mxu0
    %v4509 = vadd.f32 0.0, %v4508
    %v4510 = vpop.f32.mrf.mxu0
    %4511 = vdwg.mxu0
    %4512 = vmatpush.bf16.msra.mxu0 %v1279
    %4513 = vmatpush.bf16.msra.mxu0 %v1273
    %4514 = vmatpush.bf16.msra.mxu0 %v1267
    %4515 = vmatpush.bf16.msra.mxu0 %v1261
    %4516 = vmatpush.bf16.msra.mxu0 %v1255
    %4517 = vmatpush.bf16.msra.mxu0 %v1249
    %4518 = vmatpush.bf16.msra.mxu0 %v1243
    %4519 = vmatpush.bf16.msra.mxu0 %v1237
    %4520 = vmatmul.bf16.gmra.mxu0 %v4472
    %v4521 = vpop.f32.mrf.mxu0
    %v4522 = vadd.f32 %v4509, %v4521
    %v4523 = vpop.f32.mrf.mxu0
    %4524 = vdwg.mxu0
    %4525 = vmatpush.bf16.msra.mxu0 %v1232
    %4526 = vmatpush.bf16.msra.mxu0 %v1226
    %4527 = vmatpush.bf16.msra.mxu0 %v1220
    %4528 = vmatpush.bf16.msra.mxu0 %v1214
    %4529 = vmatpush.bf16.msra.mxu0 %v1208
    %4530 = vmatpush.bf16.msra.mxu0 %v1202
    %4531 = vmatpush.bf16.msra.mxu0 %v1196
    %4532 = vmatpush.bf16.msra.mxu0 %v1190
    %4533 = vmatmul.bf16.gmra.mxu0 %v4471
    %v4534 = vpop.f32.mrf.mxu0
    %v4535 = vadd.f32 0.0, %v4534
    %v4536 = vpop.f32.mrf.mxu0
    %4537 = vdwg.mxu0
    %4538 = vmatpush.bf16.msra.mxu0 %v1280
    %4539 = vmatpush.bf16.msra.mxu0 %v1274
    %4540 = vmatpush.bf16.msra.mxu0 %v1268
    %4541 = vmatpush.bf16.msra.mxu0 %v1262
    %4542 = vmatpush.bf16.msra.mxu0 %v1256
    %4543 = vmatpush.bf16.msra.mxu0 %v1250
    %4544 = vmatpush.bf16.msra.mxu0 %v1244
    %4545 = vmatpush.bf16.msra.mxu0 %v1238
    %4546 = vmatmul.bf16.gmra.mxu0 %v4472
    %v4547 = vpop.f32.mrf.mxu0
    %v4548 = vadd.f32 %v4535, %v4547
    %v4549 = vpop.f32.mrf.mxu0
    %4550 = vdwg.mxu0
    %4551 = vmatpush.bf16.msra.mxu0 %v1233
    %4552 = vmatpush.bf16.msra.mxu0 %v1227
    %4553 = vmatpush.bf16.msra.mxu0 %v1221
    %4554 = vmatpush.bf16.msra.mxu0 %v1215
    %4555 = vmatpush.bf16.msra.mxu0 %v1209
    %4556 = vmatpush.bf16.msra.mxu0 %v1203
    %4557 = vmatpush.bf16.msra.mxu0 %v1197
    %4558 = vmatpush.bf16.msra.mxu0 %v1191
    %4559 = vmatmul.bf16.gmra.mxu0 %v4471
    %v4560 = vpop.f32.mrf.mxu0
    %v4561 = vadd.f32 0.0, %v4560
    %v4562 = vpop.f32.mrf.mxu0
    %4563 = vdwg.mxu0
    %4564 = vmatpush.bf16.msra.mxu0 %v1281
    %4565 = vmatpush.bf16.msra.mxu0 %v1275
    %4566 = vmatpush.bf16.msra.mxu0 %v1269
    %4567 = vmatpush.bf16.msra.mxu0 %v1263
    %4568 = vmatpush.bf16.msra.mxu0 %v1257
    %4569 = vmatpush.bf16.msra.mxu0 %v1251
    %4570 = vmatpush.bf16.msra.mxu0 %v1245
    %4571 = vmatpush.bf16.msra.mxu0 %v1239
    %4572 = vmatmul.bf16.gmra.mxu0 %v4472
    %v4573 = vpop.f32.mrf.mxu0
    %v4574 = vadd.f32 %v4561, %v4573
    %v4575 = vpop.f32.mrf.mxu0
    %4576 = vdwg.mxu0
    %4577 = vmatpush.bf16.msra.mxu0 %v1234
    %4578 = vmatpush.bf16.msra.mxu0 %v1228
    %4579 = vmatpush.bf16.msra.mxu0 %v1222
    %4580 = vmatpush.bf16.msra.mxu0 %v1216
    %4581 = vmatpush.bf16.msra.mxu0 %v1210
    %4582 = vmatpush.bf16.msra.mxu0 %v1204
    %4583 = vmatpush.bf16.msra.mxu0 %v1198
    %4584 = vmatpush.bf16.msra.mxu0 %v1192
    %4585 = vmatmul.bf16.gmra.mxu0 %v4471
    %v4586 = vpop.f32.mrf.mxu0
    %v4587 = vadd.f32 0.0, %v4586
    %v4588 = vpop.f32.mrf.mxu0
    %4589 = vdwg.mxu0
    %4590 = vmatpush.bf16.msra.mxu0 %v1282
    %4591 = vmatpush.bf16.msra.mxu0 %v1276
    %4592 = vmatpush.bf16.msra.mxu0 %v1270
    %4593 = vmatpush.bf16.msra.mxu0 %v1264
    %4594 = vmatpush.bf16.msra.mxu0 %v1258
    %4595 = vmatpush.bf16.msra.mxu0 %v1252
    %4596 = vmatpush.bf16.msra.mxu0 %v1246
    %4597 = vmatpush.bf16.msra.mxu0 %v1240
    %4598 = vmatmul.bf16.gmra.mxu0 %v4472
    %v4599 = vpop.f32.mrf.mxu0
    %v4600 = vadd.f32 %v4587, %v4599
    %v4601 = vpop.f32.mrf.mxu0
    %4602 = vdwg.mxu0
    %4603 = vmatpush.bf16.msra.mxu0 %v1235
    %4604 = vmatpush.bf16.msra.mxu0 %v1229
    %4605 = vmatpush.bf16.msra.mxu0 %v1223
    %4606 = vmatpush.bf16.msra.mxu0 %v1217
    %4607 = vmatpush.bf16.msra.mxu0 %v1211
    %4608 = vmatpush.bf16.msra.mxu0 %v1205
    %4609 = vmatpush.bf16.msra.mxu0 %v1199
    %4610 = vmatpush.bf16.msra.mxu0 %v1193
    %4611 = vmatmul.bf16.gmra.mxu0 %v4471
    %v4612 = vpop.f32.mrf.mxu0
    %v4613 = vadd.f32 0.0, %v4612
    %v4614 = vpop.f32.mrf.mxu0
    %4615 = vdwg.mxu0
    %4616 = vmatpush.bf16.msra.mxu0 %v1283
    %4617 = vmatpush.bf16.msra.mxu0 %v1277
    %4618 = vmatpush.bf16.msra.mxu0 %v1271
    %4619 = vmatpush.bf16.msra.mxu0 %v1265
    %4620 = vmatpush.bf16.msra.mxu0 %v1259
    %4621 = vmatpush.bf16.msra.mxu0 %v1253
    %4622 = vmatpush.bf16.msra.mxu0 %v1247
    %4623 = vmatpush.bf16.msra.mxu0 %v1241
    %4624 = vmatmul.bf16.gmra.mxu0 %v4472
    %v4625 = vpop.f32.mrf.mxu0
    %v4626 = vadd.f32 %v4613, %v4625
    %v4627 = vpop.f32.mrf.mxu0
    %4628 = vdwg.mxu0
    %v4629 = vadd.f32 %v4465, %v4496
    %v4630 = vmul.f32 %v4629, 0.5
    %v4631 = vtanh.pop %v4630
    %v4632 = vmul.f32 %v4631, 0.5
    %v4633 = vadd.f32 %v4632, 0.5
    %v4634 = vadd.f32 %v4466, %v4522
    %v4635 = vmul.f32 %v4634, 0.5
    %v4636 = vtanh.pop %v4635
    %v4637 = vmul.f32 %v4636, 0.5
    %v4638 = vadd.f32 %v4637, 0.5
    %v4639 = vadd.f32 %v4548, %v1547
    %v4640 = vmul.f32 %v4633, %v4639
    %v4641 = vadd.f32 %v4467, %v4640
    %v4642 = vtanh.pop %v4641
    %v4643 = vsub.f32 1.0, %v4638
    %v4644 = vmul.f32 %v4643, %v4642
    %v4645 = vmul.f32 %v4638, %v4444
    %v4646 = vadd.f32 %v4644, %v4645
    %v4647 = vadd.f32 %v4468, %v4574
    %v4648 = vmul.f32 %v4647, 0.5
    %v4649 = vtanh.pop %v4648
    %v4650 = vmul.f32 %v4649, 0.5
    %v4651 = vadd.f32 %v4650, 0.5
    %v4652 = vadd.f32 %v4469, %v4600
    %v4653 = vmul.f32 %v4652, 0.5
    %v4654 = vtanh.pop %v4653
    %v4655 = vmul.f32 %v4654, 0.5
    %v4656 = vadd.f32 %v4655, 0.5
    %v4657 = vadd.f32 %v4626, %v1568
    %v4658 = vmul.f32 %v4651, %v4657
    %v4659 = vadd.f32 %v4470, %v4658
    %v4660 = vtanh.pop %v4659
    %v4661 = vsub.f32 1.0, %v4656
    %v4662 = vmul.f32 %v4661, %v4660
    %v4663 = vmul.f32 %v4656, %v4462
    %v4664 = vadd.f32 %v4662, %v4663
    %4665 = vst [vmem:[%s1579] sm:$0xff] %v4646
    %4666 = vst [vmem:[#allocation3 + $0x8] sm:$0xff] %v4664
    %v4667 = vpack.c.bf16 %v4646, %v4646
    %v4668 = vpack.c.bf16 %v4664, %v4664
    %v4669 = vld [vmem:[%s6] sm:$0xf]
    %v4670 = vld [vmem:[%s6 + $0x4] sm:$0xf]
    %v4671 = vld [vmem:[%s6 + $0x8] sm:$0xf]
    %v4672 = vld [vmem:[%s6 + $0xc] sm:$0xf]
    %v4673 = vld [vmem:[%s6 + $0x10] sm:$0xf]
    %v4674 = vld [vmem:[%s6 + $0x14] sm:$0xf]
    %v4675 = vld [vmem:[%s6 + $0x18] sm:$0xf]
    %v4676 = vld [vmem:[%s6 + $0x1c] sm:$0xf]
    %v4677 = vld [vmem:[%s6 + $0x20] sm:$0xf]
    %v4678 = vld [vmem:[%s6 + $0x24] sm:$0xf]
    %v4679 = vld [vmem:[%s6 + $0x28] sm:$0xf]
    %v4680 = vld [vmem:[%s6 + $0x2c] sm:$0xf]
    %v4681 = vld [vmem:[%s6 + $0x30] sm:$0xf]
    %v4682 = vld [vmem:[%s6 + $0x34] sm:$0xf]
    %v4683 = vld [vmem:[%s6 + $0x38] sm:$0xf]
    %v4684 = vld [vmem:[%s6 + $0x3c] sm:$0xf]
    %v4685 = vld [vmem:[%s6 + $0x40] sm:$0xf]
    %v4686 = vld [vmem:[%s6 + $0x44] sm:$0xf]
    %v4687 = vld [vmem:[%s6 + $0x48] sm:$0xf]
    %v4688 = vld [vmem:[%s6 + $0x4c] sm:$0xf]
    %v4689 = vld [vmem:[%s6 + $0x50] sm:$0xf]
    %v4690 = vld [vmem:[%s6 + $0x54] sm:$0xf]
    %v4691 = vld [vmem:[%s6 + $0x58] sm:$0xf]
    %v4692 = vld [vmem:[%s6 + $0x5c] sm:$0xf]
    %v4693 = vld [vmem:[%s6 + $0x60] sm:$0xf]
    %v4694 = vld [vmem:[%s6 + $0x64] sm:$0xf]
    %v4695 = vld [vmem:[%s6 + $0x68] sm:$0xf]
    %v4696 = vld [vmem:[%s6 + $0x6c] sm:$0xf]
    %v4697 = vld [vmem:[%s6 + $0x70] sm:$0xf]
    %v4698 = vld [vmem:[%s6 + $0x74] sm:$0xf]
    %v4699 = vld [vmem:[%s6 + $0x78] sm:$0xf]
    %v4700 = vld [vmem:[%s6 + $0x7c] sm:$0xf]
    %v4701 = vld [vmem:[%s7] sm:$0x1]
    %v4703 = vperm.slane %v4701, 0
    %v4737 = vunpack.c.l.b16 %v4669
    %v4738 = vunpack.c.l.b16 %v4670
    %v4739 = vunpack.c.l.b16 %v4671
    %v4740 = vunpack.c.l.b16 %v4672
    %v4741 = vunpack.c.l.b16 %v4673
    %v4742 = vunpack.c.l.b16 %v4674
    %v4743 = vunpack.c.l.b16 %v4675
    %v4744 = vunpack.c.l.b16 %v4676
    %v4745 = vunpack.c.l.b16 %v4677
    %v4746 = vunpack.c.l.b16 %v4678
    %v4747 = vunpack.c.l.b16 %v4679
    %v4748 = vunpack.c.l.b16 %v4680
    %v4749 = vunpack.c.l.b16 %v4681
    %v4750 = vunpack.c.l.b16 %v4682
    %v4751 = vunpack.c.l.b16 %v4683
    %v4752 = vunpack.c.l.b16 %v4684
    %v4753 = vunpack.c.l.b16 %v4685
    %v4754 = vunpack.c.l.b16 %v4686
    %v4755 = vunpack.c.l.b16 %v4687
    %v4756 = vunpack.c.l.b16 %v4688
    %v4757 = vunpack.c.l.b16 %v4689
    %v4758 = vunpack.c.l.b16 %v4690
    %v4759 = vunpack.c.l.b16 %v4691
    %v4760 = vunpack.c.l.b16 %v4692
    %v4761 = vunpack.c.l.b16 %v4693
    %v4762 = vunpack.c.l.b16 %v4694
    %v4763 = vunpack.c.l.b16 %v4695
    %v4764 = vunpack.c.l.b16 %v4696
    %v4765 = vunpack.c.l.b16 %v4697
    %v4766 = vunpack.c.l.b16 %v4698
    %v4767 = vunpack.c.l.b16 %v4699
    %v4768 = vunpack.c.l.b16 %v4700
    %v4769 = vpack.c.b16 %v4738, %v4737
    %v4770 = vpack.c.b16 %v4740, %v4739
    %v4771 = vpack.c.b16 %v4742, %v4741
    %v4772 = vpack.c.b16 %v4744, %v4743
    %v4773 = vpack.c.b16 %v4746, %v4745
    %v4774 = vpack.c.b16 %v4748, %v4747
    %v4775 = vpack.c.b16 %v4750, %v4749
    %v4776 = vpack.c.b16 %v4752, %v4751
    %v4777 = vpack.c.b16 %v4754, %v4753
    %v4778 = vpack.c.b16 %v4756, %v4755
    %v4779 = vpack.c.b16 %v4758, %v4757
    %v4780 = vpack.c.b16 %v4760, %v4759
    %v4781 = vpack.c.b16 %v4762, %v4761
    %v4782 = vpack.c.b16 %v4764, %v4763
    %v4783 = vpack.c.b16 %v4766, %v4765
    %v4784 = vpack.c.b16 %v4768, %v4767
    %4801 = vmatpush.bf16.msra.mxu0 %v4776
    %4802 = vmatpush.bf16.msra.mxu0 %v4775
    %4803 = vmatpush.bf16.msra.mxu0 %v4774
    %4804 = vmatpush.bf16.msra.mxu0 %v4773
    %4805 = vmatpush.bf16.msra.mxu0 %v4772
    %4806 = vmatpush.bf16.msra.mxu0 %v4771
    %4807 = vmatpush.bf16.msra.mxu0 %v4770
    %4808 = vmatpush.bf16.msra.mxu0 %v4769
    %4809 = vmatmul.bf16.gmra.mxu0 %v4667
    %v4810 = vpop.f32.mrf.mxu0
    %v4811 = vadd.f32 %v4703, %v4810
    %v4812 = vpop.f32.mrf.mxu0
    %4813 = vdwg.mxu0
    %4814 = vmatpush.bf16.msra.mxu0 %v4784
    %4815 = vmatpush.bf16.msra.mxu0 %v4783
    %4816 = vmatpush.bf16.msra.mxu0 %v4782
    %4817 = vmatpush.bf16.msra.mxu0 %v4781
    %4818 = vmatpush.bf16.msra.mxu0 %v4780
    %4819 = vmatpush.bf16.msra.mxu0 %v4779
    %4820 = vmatpush.bf16.msra.mxu0 %v4778
    %4821 = vmatpush.bf16.msra.mxu0 %v4777
    %4822 = vmatmul.bf16.gmra.mxu0 %v4668
    %v4823 = vpop.f32.mrf.mxu0
    %v4824 = vadd.f32 %v4811, %v4823
    %v4825 = vpop.f32.mrf.mxu0
    %4826 = vdwg.mxu0
    %v4827 = vtanh.pop %v4824
    %4828 = vst [vmem:[#allocation5] sm:$0xff] %v4827
    // Predicated region
    $region34: #{attn_encoder_gru_forward.1} parent=1 // pred_check
      _
    $region35: #{attn_encoder_gru_forward.1} parent=1 // pred_check_branch
      %4830 = sbr.rel (0) target = $region37
    $region36: #{attn_encoder_gru_forward.1} parent=1 // pred_region
      %4832 = vsyncadd [#allocation4], 0
      %s4833 = sshll.u32 [#allocation3], 4
      %s4834 = int_to_ptr.vmem [resolvable:$true] %s4833
      %s4835 = sshll.u32 %s8, 4
      %s4836 = int_to_ptr.hbm [resolvable:$true] %s4835
      %4841 = dma.vmem_to_hbm [thread:$0]  %s4834, 4096, %s4836, [#allocation4], 256, 256, 16
    $region37: #{attn_encoder_gru_forward.1} parent=1 // pred_fallthru
      _
    // Predicated region
    $region38: #{attn_encoder_gru_forward.1} parent=1 // pred_check
      _
    $region39: #{attn_encoder_gru_forward.1} parent=1 // pred_check_branch
      %4843 = sbr.rel (0) target = $region41
    $region40: #{attn_encoder_gru_forward.1} parent=1 // pred_region
      %4845 = vsyncadd [#allocation6], 0
      %s4847 = sshll.u32 [#allocation5], 4
      %s4848 = int_to_ptr.vmem [resolvable:$true] %s4847
      %s4849 = sshll.u32 %s9, 4
      %s4850 = int_to_ptr.hbm [resolvable:$true] %s4849
      %4852 = dma.vmem_to_hbm [thread:$0]  %s4848, 128, %s4850, [#allocation6]
    $region41: #{attn_encoder_gru_forward.1} parent=1 // pred_fallthru
      _
    // Predicated region
    $region42: #{attn_encoder_gru_forward.1} parent=1 // pred_check
      _
    $region43: #{attn_encoder_gru_forward.1} parent=1 // pred_check_branch
      %4854 = sbr.rel (0) target = $region45
    $region44: #{attn_encoder_gru_forward.1} parent=1 // pred_region
      %4856 = dma.done [#allocation4], 4096
    $region45: #{attn_encoder_gru_forward.1} parent=1 // pred_fallthru
      _
    // Predicated region
    $region46: #{attn_encoder_gru_forward.1} parent=1 // pred_check
      _
    $region47: #{attn_encoder_gru_forward.1} parent=1 // pred_check_branch
      %4858 = sbr.rel (0) target = $region49
    $region48: #{attn_encoder_gru_forward.1} parent=1 // pred_region
      %4860 = dma.done [#allocation6], 128
    $region49: #{attn_encoder_gru_forward.1} parent=1 // pred_fallthru
      _
    %4861 = vsyncpa [#allocation4], 1
    %4862 = vsyncpa [#allocation6], 1

</llo_original>
